<compile_context>
chip_gen: v5e
topology: v5e:2x2
jax: 0.10.0
libtpu: 0.0.40
codegen_flags: <defaults>
</compile_context>

<pallas_src>
import jax
import jax.numpy as jnp
from jax.experimental import pallas as pl
from jax.experimental.pallas import tpu as pltpu

_LANE = 128                               # vreg lane width
_ROW_ALIGN = 16                           # bf16 sublane packing (16 rows/vreg)
_FAST_PATH_MAX_ELEMS = 1 << 20            # <= ~2 MiB bf16: let XLA fuse the add
_TILE_BYTES_CAP_DEFAULT = 4 * 1024 * 1024  # v5e / v6e: already at roofline
_TILE_BYTES_CAP_V7X = 6 * 1024 * 1024      # v7x: bigger tiles amortize step cost


def _add_kernel(a_ref, b_ref, o_ref):
    # Elementwise VPU add on the current VMEM tile (bf16 in, bf16 out).
    o_ref[...] = a_ref[...] + b_ref[...]


def _device_info():
    """Return (tensorcores_per_device, vmem_capacity_bytes, is_v7x)."""
    kind = ""
    try:
        kind = jax.devices()[0].device_kind or ""
    except Exception:
        pass
    is_v7x = "7" in kind.lower()
    num_cores = 2 if is_v7x else 1
    try:
        num_cores = int(getattr(jax.devices()[0], "num_cores", num_cores) or num_cores)
    except Exception:
        pass
    num_cores = max(1, num_cores)
    vmem_capacity = 64 * 1024 * 1024  # conservative (v7x-sized) fallback
    try:
        vmem_capacity = int(pltpu.get_tpu_info().vmem_capacity_bytes)
    except Exception:
        pass
    return num_cores, vmem_capacity, is_v7x


def _choose_slab(total, last_dim):
    """Pick a lane-dense (rows, cols) layout for `total` elements."""
    for cols in (4096, 2048, 1024, 512, 256, 128):
        if total % cols == 0:
            return total // cols, cols
    # Fallback: keep the original last dim on the lane axis (may be unaligned;
    # the caller routes that case to plain XLA).
    last_dim = max(int(last_dim), 1)
    return total // last_dim, last_dim


def custom_add_bf16_unroll1(a: jax.Array, b: jax.Array, *, prefer_xla_fusion: bool = False) -> jax.Array:
    """Elementwise bf16 add, matching torch.ops.custom_op.custom_add_bf16_unroll1.

    Set prefer_xla_fusion=True when this add sits inside a larger jit'd model:
    a fused XLA add removes up to two full-array HBM round trips, which no
    standalone kernel can match.
    """
    assert a.shape == b.shape, "custom_add expects identically-shaped inputs"
    orig_shape = a.shape
    # "bf16 only": non-bf16 inputs are downcast, matching the TPC op contract.
    a = a.astype(jnp.bfloat16)
    b = b.astype(jnp.bfloat16)

    total = a.size
    if prefer_xla_fusion or total <= _FAST_PATH_MAX_ELEMS:
        # Launch + DMA prime overhead dominates at these sizes; XLA is at roofline.
        return a + b

    last_dim = orig_shape[-1] if len(orig_shape) >= 1 else 1
    rows, cols = _choose_slab(total, last_dim)

    # Non-lane-aligned layouts would force masked vst.msk partial stores and
    # partial-block DMAs — the documented worst case.  XLA wins there.
    if cols % _LANE != 0 or rows < 1:
        return a + b

    num_cores, vmem_capacity, is_v7x = _device_info()

    a2 = a.reshape(rows, cols)
    b2 = b.reshape(rows, cols)

    # --- tile sizing from the VMEM budget (6 live buffers) ---
    tile_cap = _TILE_BYTES_CAP_V7X if is_v7x else _TILE_BYTES_CAP_DEFAULT
    buffer_budget = (vmem_capacity * 3) // 5
    tile_bytes = min(tile_cap, max(buffer_budget // 6, _ROW_ALIGN * _LANE * 2))
    max_elems = tile_bytes // 2  # bf16 = 2 bytes/elem

    # Column tiling (only needed for very wide fallback layouts).
    row_unit = _ROW_ALIGN if rows >= _ROW_ALIGN else max(rows, 1)
    if cols * row_unit <= max_elems:
        tile_cols = cols                       # full dim (always allowed)
    else:
        tile_cols = max(_LANE, (max_elems // row_unit) // _LANE * _LANE)
    grid_c = pl.cdiv(cols, tile_cols)

    # Row tiling from the remaining budget (multiple of 16 for bf16 packing).
    tile_rows = min(rows, max(row_unit, max_elems // tile_cols))
    if tile_rows < rows:
        tile_rows = max(_ROW_ALIGN, (tile_rows // _ROW_ALIGN) * _ROW_ALIGN)
    grid_r = pl.cdiv(rows, tile_rows)

    # Multi-TC parts (v7x): make sure there is at least one row tile per core.
    # Single-TC parts (v5e/v6e): never shrink tiles just to add grid steps.
    if num_cores > 1 and grid_r < num_cores and rows >= num_cores * _ROW_ALIGN:
        cand = pl.cdiv(rows, num_cores)
        cand = max(_ROW_ALIGN, pl.cdiv(cand, _ROW_ALIGN) * _ROW_ALIGN)
        if cand < tile_rows:
            tile_rows = cand
            grid_r = pl.cdiv(rows, tile_rows)

    # Tight scoped-VMEM limit: 6 live buffers + a few MiB for Mosaic scratch.
    actual_tile_bytes = tile_rows * tile_cols * 2
    vmem_limit = min(6 * actual_tile_bytes + 8 * 1024 * 1024, vmem_capacity)

    def _run(grid, semantics, index_map):
        return pl.pallas_call(
            _add_kernel,
            out_shape=jax.ShapeDtypeStruct((rows, cols), jnp.bfloat16),
            grid_spec=pltpu.PrefetchScalarGridSpec(
                num_scalar_prefetch=0,
                grid=grid,
                in_specs=[
                    pl.BlockSpec((tile_rows, tile_cols), index_map),
                    pl.BlockSpec((tile_rows, tile_cols), index_map),
                ],
                out_specs=pl.BlockSpec((tile_rows, tile_cols), index_map),
            ),
            compiler_params=pltpu.CompilerParams(
                dimension_semantics=semantics,
                vmem_limit_bytes=int(vmem_limit),
            ),
        )(a2, b2)

    out2 = None
    core_parallel = getattr(pltpu, "CORE_PARALLEL", None)
    if (num_cores > 1 and core_parallel is not None
            and grid_r >= num_cores and grid_r % num_cores == 0):
        # Explicit cross-TC split: leading axis = core count, each core streams
        # a contiguous band of row tiles.
        per_core = grid_r // num_cores

        def core_map(c, i, j):
            return (c * per_core + i, j)

        try:
            out2 = _run((num_cores, per_core, grid_c),
                        (core_parallel, "arbitrary", "arbitrary"),
                        core_map)
        except Exception:
            # TODO(synk): verify CORE_PARALLEL row split in a trace on real v7x.
            out2 = None

    if out2 is None:
        out2 = _run((grid_r, grid_c), ("parallel", "parallel"),
                    lambda i, j: (i, j))

    return out2.reshape(orig_shape)


class CustomAddUnroll1:
    """JAX analogue of the PyTorch CustomAddUnroll1 module (bf16 only)."""

    def __init__(self, prefer_xla_fusion: bool = False):
        # prefer_xla_fusion=True lets XLA fuse the add into producers/consumers
        # when this module is embedded in a larger jit'd graph.
        self.prefer_xla_fusion = prefer_xla_fusion

    def __call__(self, inputA, inputB):
        return custom_add_bf16_unroll1(
            inputA, inputB, prefer_xla_fusion=self.prefer_xla_fusion)

    def extra_repr(self):
        return "CustomAddUnroll1 for bfloat16 only"


if __name__ == "__main__":
    mod = CustomAddUnroll1()
    key = jax.random.PRNGKey(0)

    def run_and_check(shape, tag):
        ka, kb = jax.random.split(jax.random.fold_in(key, tag))
        a = jax.random.normal(ka, shape, dtype=jnp.float32).astype(jnp.bfloat16)
        b = jax.random.normal(kb, shape, dtype=jnp.float32).astype(jnp.bfloat16)
        out = jax.block_until_ready(mod(a, b))
        ref = (a + b).astype(jnp.bfloat16)
        assert out.shape == tuple(shape) and out.dtype == jnp.bfloat16
        assert jnp.array_equal(
            out.astype(jnp.float32), ref.astype(jnp.float32)
        ), f"mismatch vs reference add for shape {shape}"

    # Small NCHW-style shape (matches original demo): served by the XLA fast path.
    run_and_check((2, 4, 16, 16), 0)
    # Larger shape: exercises the lane-dense Pallas path
    # (flattens to a (1024, 4096) slab -> 2 row tiles of 4 MiB each).
    run_and_check((8, 128, 64, 64), 1)
    # Non-128-aligned layout: routed to the XLA fused add (avoids masked stores).
    run_and_check((130, 515), 2)

    print("KERNEL_OK")
</pallas_src>

<mosaic_0001>
module attributes {stable_mosaic.version = 11 : i64} {
  func.func @_add_kernel(%arg0: i32, %arg1: i32, %arg2: memref<512x4096xbf16, #tpu.memory_space<vmem>>, %arg3: memref<512x4096xbf16, #tpu.memory_space<vmem>>, %arg4: memref<512x4096xbf16, #tpu.memory_space<vmem>>) attributes {dimension_semantics = [#tpu.dimension_semantics<parallel>, #tpu.dimension_semantics<parallel>], iteration_bounds = array<i64: 2, 1>, scalar_prefetch = 0 : i64, scratch_operands = 0 : i64, tpu.core_type = #tpu.core_type<tc>, window_params = [{transform_indices = @transform_0, window_bounds = array<i64: 512, 4096>}, {transform_indices = @transform_1, window_bounds = array<i64: 512, 4096>}, {transform_indices = @transform_2, window_bounds = array<i64: 512, 4096>}]} {
    %c0 = arith.constant 0 : index
    %c0_0 = arith.constant 0 : index
    %0 = vector.load %arg2[%c0, %c0_0] : memref<512x4096xbf16, #tpu.memory_space<vmem>>, vector<512x4096xbf16>
    %c0_1 = arith.constant 0 : index
    %c0_2 = arith.constant 0 : index
    %1 = vector.load %arg3[%c0_1, %c0_2] : memref<512x4096xbf16, #tpu.memory_space<vmem>>, vector<512x4096xbf16>
    %2 = arith.addf %0, %1 : vector<512x4096xbf16>
    %c0_3 = arith.constant 0 : index
    %c0_4 = arith.constant 0 : index
    %3 = vector.load %arg4[%c0_3, %c0_4] : memref<512x4096xbf16, #tpu.memory_space<vmem>>, vector<512x4096xbf16>
    tpu.vector_store %arg4[%c0_3, %c0_4], %2 {strides = array<i32>} : memref<512x4096xbf16, #tpu.memory_space<vmem>>, vector<512x4096xbf16>,
    return
  }
  func.func @transform_0(%arg0: i32, %arg1: i32) -> (i32, i32) {
    %c0_i32 = arith.constant 0 : i32
    return %arg0, %arg1 : i32, i32
  }
  func.func @transform_1(%arg0: i32, %arg1: i32) -> (i32, i32) {
    %c0_i32 = arith.constant 0 : i32
    return %arg0, %arg1 : i32, i32
  }
  func.func @transform_2(%arg0: i32, %arg1: i32) -> (i32, i32) {
    %c0_i32 = arith.constant 0 : i32
    return %arg0, %arg1 : i32, i32
  }
}

</mosaic_0001>

<llo_original>
// kernel: tpu_custom_call.1
$region0: #{tpu_custom_call.1}
  #allocation0 [shape = 'u32[]', space=smem, size = 0x4, offset = 0x4, fixed_abs, tag = 'smem constant byte address 0x4 - core index']
  #allocation1 [shape = 'u32[72,128]{1,0:T(1,128)}', space=vmem, size = 0x9000, scoped, tag = 'internal scratch']
  %s0 = inlined_call_operand.hbm [shape: bf16[1024,4096], index: 0, kind: input, shape index: {}]
  %s1 = inlined_call_operand.hbm [shape: bf16[1024,4096], index: 1, kind: input, shape index: {}]
  %s2 = inlined_call_operand.hbm [shape: bf16[1024,4096], index: 2, kind: output, shape index: {}]
  %s3 = sld [smem:[#allocation0]]
  $region49: #{tpu_custom_call.1} parent=0
    _
  %s5 = ssub.s32 1, %s3
  %s6 = scalar_select 0, %s5, %s3
  $region1: #{tpu_custom_call.1} parent=0
    #allocation2 [shape = 'u8[8388608]{0}', space=vmem, size = 0x800000, scoped, tag = 'input window, operand 0']
    #allocation3 [shape = 's32[2]{0}', space=sflag, size = 0x8, scoped, tag = 'scoped memory for tpu_custom_call.1']
    #allocation4 [shape = 's32[2]{0}', space=sflag, size = 0x8, scoped, tag = 'scoped memory for tpu_custom_call.1']
    #allocation5 [shape = 'u8[8388608]{0}', space=vmem, size = 0x800000, scoped, tag = 'input window, operand 1']
    #allocation6 [shape = 's32[2]{0}', space=sflag, size = 0x8, scoped, tag = 'scoped memory for tpu_custom_call.1']
    #allocation7 [shape = 'u8[8388608]{0}', space=vmem, size = 0x800000, scoped, tag = 'output window, operand 0']
    %7 = vsyncpa [#allocation3], 0
    %s8 = scalar_lea.sflag [#allocation3], 1
    %9 = vsyncpa %s8, 0
    %10 = vsyncpa [#allocation6], 0
    %s11 = scalar_lea.sflag [#allocation6], 1
    %12 = vsyncpa %s11, 0
    %13 = vsyncpa [#allocation4], 0
    %s14 = scalar_lea.sflag [#allocation4], 1
    %15 = vsyncpa %s14, 0
    loop: start=0, step=1, limit=4
    $region2: #{tpu_custom_call.1} parent=1 // loop_pre_header
      _
    $region3: #{tpu_custom_call.1} parent=1 // loop_header
      %s17 = sphi 0, %s21
      %p18 = scmp.ge.s32.totalorder %s17, 4
      %s24 = sphi 0, %s36
      %s25 = sphi 0, %s32
      %s26 = sphi 0, %s24
      %s27 = sphi 0, %s25
      %s28 = sphi 0, %s26
      %s29 = sphi 0, %s27
      %s41 = sphi 0, %s43
      %s44 = sphi 0, %s41
      %s45 = sphi 0, %s44
      %s61 = sphi 0, %s45
      %s69 = sphi 0, %s71
      %s72 = sphi 0, %s69
      %s73 = sphi 0, %s72
      %s89 = sphi 0, %s73
      %s97 = sphi 0, %s99
      %s100 = sphi 0, %s97
      %s101 = sphi 0, %s100
      %s117 = sphi 0, %s101
    $region4: #{tpu_custom_call.1} parent=1 // loop_header_branch
      %20 = sbr.rel (%p18) target = $region8
    $region5: #{tpu_custom_call.1} parent=1 // loop_body
      %s22 = ssub.s32 %s17, 1
      %s23 = ssub.s32 %s17, 2
      %s30 = sadd.s32 1, %s25
      %p31 = scmp.ge.s32.totalorder %s30, 1
      %s32 = scalar_select %p31, 0, %s30
      %s33 = sadd.s32 1, %s24
      %s34 = scalar_select %p31, %s33, %s24
      %p35 = scmp.ge.s32.totalorder %s34, 2
      %s36 = scalar_select %p35, 0, %s34
      %s37 = ssub.s32 %s24, %s36
      %s38 = ssub.s32 %s25, %s32
      %s39 = sor.u32 %s37, %s38
      %p40 = scmp.eq.s32.totalorder %s39, 0
      %s42 = sadd.s32 %s41, 1
      %s43 = scalar_select %p40, %s41, %s42
      %p46 = pneg %p40
      %p47 = scmp.eq.s32.totalorder %s17, 1
      %p48 = por %p46, %p47
      %p49 = scmp.ne.s32.totalorder %s41, %s44
      %p50 = scmp.eq.s32.totalorder %s17, 0
      %p51 = por %p49, %p50
      %p52 = scmp.ne.s32.totalorder %s41, %s44
      %p53 = scmp.eq.s32.totalorder %s22, 1
      %p54 = por %p52, %p53
      %p55 = scmp.ne.s32.totalorder %s44, %s45
      %p56 = scmp.eq.s32.totalorder %s22, 0
      %p57 = por %p55, %p56
      %p58 = scmp.ne.s32.totalorder %s44, %s45
      %p59 = scmp.eq.s32.totalorder %s23, 1
      %p60 = por %p58, %p59
      %p62 = scmp.ne.s32.totalorder %s45, %s61
      %p63 = scmp.eq.s32.totalorder %s23, 0
      %p64 = por %p62, %p63
      %s65 = ssub.s32 %s24, %s36
      %s66 = ssub.s32 %s25, %s32
      %s67 = sor.u32 %s65, %s66
      %p68 = scmp.eq.s32.totalorder %s67, 0
      %s70 = sadd.s32 %s69, 1
      %s71 = scalar_select %p68, %s69, %s70
      %p74 = pneg %p68
      %p75 = scmp.eq.s32.totalorder %s17, 1
      %p76 = por %p74, %p75
      %p77 = scmp.ne.s32.totalorder %s69, %s72
      %p78 = scmp.eq.s32.totalorder %s17, 0
      %p79 = por %p77, %p78
      %p80 = scmp.ne.s32.totalorder %s69, %s72
      %p81 = scmp.eq.s32.totalorder %s22, 1
      %p82 = por %p80, %p81
      %p83 = scmp.ne.s32.totalorder %s72, %s73
      %p84 = scmp.eq.s32.totalorder %s22, 0
      %p85 = por %p83, %p84
      %p86 = scmp.ne.s32.totalorder %s72, %s73
      %p87 = scmp.eq.s32.totalorder %s23, 1
      %p88 = por %p86, %p87
      %p90 = scmp.ne.s32.totalorder %s73, %s89
      %p91 = scmp.eq.s32.totalorder %s23, 0
      %p92 = por %p90, %p91
      %s93 = ssub.s32 %s24, %s36
      %s94 = ssub.s32 %s25, %s32
      %s95 = sor.u32 %s93, %s94
      %p96 = scmp.eq.s32.totalorder %s95, 0
      %s98 = sadd.s32 %s97, 1
      %s99 = scalar_select %p96, %s97, %s98
      %p102 = pneg %p96
      %p103 = scmp.eq.s32.totalorder %s17, 1
      %p104 = por %p102, %p103
      %p105 = scmp.ne.s32.totalorder %s97, %s100
      %p106 = scmp.eq.s32.totalorder %s17, 0
      %p107 = por %p105, %p106
      %p108 = scmp.ne.s32.totalorder %s97, %s100
      %p109 = scmp.eq.s32.totalorder %s22, 1
      %p110 = por %p108, %p109
      %p111 = scmp.ne.s32.totalorder %s100, %s101
      %p112 = scmp.eq.s32.totalorder %s22, 0
      %p113 = por %p111, %p112
      %p114 = scmp.ne.s32.totalorder %s100, %s101
      %p115 = scmp.eq.s32.totalorder %s23, 1
      %p116 = por %p114, %p115
      %p118 = scmp.ne.s32.totalorder %s101, %s117
      %p119 = scmp.eq.s32.totalorder %s23, 0
      %p120 = por %p118, %p119
      %p121 = scmp.le.s32.totalorder 1, %s17
      %p122 = scmp.lt.s32.totalorder %s17, 3
      %p123 = pnand %p121, %p122
      %p124 = pneg %p123
      // Predicated region
      $region9: #{tpu_custom_call.1} parent=5 // pred_check
        _
      $region10: #{tpu_custom_call.1} parent=5 // pred_check_branch
        %126 = sbr.rel (%p123) target = $region12
      $region11: #{tpu_custom_call.1} parent=5 // pred_region
        %s127 = ssub.s32 %s17, 1
      $region12: #{tpu_custom_call.1} parent=5 // pred_fallthru
        _
      %p128 = scmp.lt.s32.totalorder %s17, 2
      // Predicated region
      $region13: #{tpu_custom_call.1} parent=5 // pred_check
        %p129 = pneg %p128
      $region14: #{tpu_custom_call.1} parent=5 // pred_check_branch
        %131 = sbr.rel (%p129) target = $region16
      $region15: #{tpu_custom_call.1} parent=5 // pred_region
        // Predicated region
        $region17: #{tpu_custom_call.1} parent=15 // pred_check
          %p132 = pneg %p51
        $region18: #{tpu_custom_call.1} parent=15 // pred_check_branch
          %134 = sbr.rel (%p132) target = $region20
        $region19: #{tpu_custom_call.1} parent=15 // pred_region
          %s135 = sand.u32 %s41, 1
          %s136 = scalar_lea.sflag [#allocation3], %s135
          %s137 = sand.u32 %s41, 1
          %s138 = smul.addr %s137, 8192
          %s139 = scalar_lea.vmem [#allocation2], %s138
          %s140 = smul.u32 64, %s24
          %s141 = smul.u32 32, %s25
          %143 = vsyncadd %s136, 0
          %s144 = smul.addr %s140, 32
          %s145 = sadd.s32 %s141, %s144
          %s146 = smul.addr %s145, 4
          %s147 = scalar_lea.hbm %s0, %s146
          %s148 = sshll.u32 %s147, 4
          %s149 = int_to_ptr.hbm [resolvable:$true] %s148
          %s150 = sshll.u32 %s139, 4
          %s151 = int_to_ptr.vmem [resolvable:$true] %s150
          %156 = dma.hbm_to_vmem [thread:$0]  %s149, 131072, %s151, %s136, 2048, 2048, 128
        $region20: #{tpu_custom_call.1} parent=15 // pred_fallthru
          _
        // Predicated region
        $region21: #{tpu_custom_call.1} parent=15 // pred_check
          %p157 = pneg %p79
        $region22: #{tpu_custom_call.1} parent=15 // pred_check_branch
          %159 = sbr.rel (%p157) target = $region24
        $region23: #{tpu_custom_call.1} parent=15 // pred_region
          %s160 = sand.u32 %s69, 1
          %s161 = scalar_lea.sflag [#allocation6], %s160
          %s162 = sand.u32 %s69, 1
          %s163 = smul.addr %s162, 8192
          %s164 = scalar_lea.vmem [#allocation5], %s163
          %s165 = smul.u32 64, %s24
          %s166 = smul.u32 32, %s25
          %168 = vsyncadd %s161, 0
          %s169 = smul.addr %s165, 32
          %s170 = sadd.s32 %s166, %s169
          %s171 = smul.addr %s170, 4
          %s172 = scalar_lea.hbm %s1, %s171
          %s173 = sshll.u32 %s172, 4
          %s174 = int_to_ptr.hbm [resolvable:$true] %s173
          %s175 = sshll.u32 %s164, 4
          %s176 = int_to_ptr.vmem [resolvable:$true] %s175
          %181 = dma.hbm_to_vmem [thread:$0]  %s174, 131072, %s176, %s161, 2048, 2048, 128
        $region24: #{tpu_custom_call.1} parent=15 // pred_fallthru
          _
      $region16: #{tpu_custom_call.1} parent=5 // pred_fallthru
        _
      %p182 = scmp.le.s32.totalorder 1, %s17
      %p183 = scmp.lt.s32.totalorder %s17, 3
      %p184 = pnand %p182, %p183
      %p185 = pneg %p184
      // Predicated region
      $region25: #{tpu_custom_call.1} parent=5 // pred_check
        _
      $region26: #{tpu_custom_call.1} parent=5 // pred_check_branch
        %187 = sbr.rel (%p184) target = $region28
      $region27: #{tpu_custom_call.1} parent=5 // pred_region
        %s188 = ssub.s32 %s17, 1
        %s189 = sand.u32 %s44, 1
        %s190 = scalar_lea.sflag [#allocation3], %s189
        %s191 = sand.u32 %s44, 1
        %s192 = smul.addr %s191, 8192
        %s193 = scalar_lea.vmem [#allocation2], %s192
        // Predicated region
        $region29: #{tpu_custom_call.1} parent=27 // pred_check
          %p194 = pneg %p57
        $region30: #{tpu_custom_call.1} parent=27 // pred_check_branch
          %196 = sbr.rel (%p194) target = $region32
        $region31: #{tpu_custom_call.1} parent=27 // pred_region
          %198 = dma.done %s190, 131072
        $region32: #{tpu_custom_call.1} parent=27 // pred_fallthru
          _
        %s199 = sand.u32 %s72, 1
        %s200 = scalar_lea.sflag [#allocation6], %s199
        %s201 = sand.u32 %s72, 1
        %s202 = smul.addr %s201, 8192
        %s203 = scalar_lea.vmem [#allocation5], %s202
        // Predicated region
        $region33: #{tpu_custom_call.1} parent=27 // pred_check
          %p204 = pneg %p85
        $region34: #{tpu_custom_call.1} parent=27 // pred_check_branch
          %206 = sbr.rel (%p204) target = $region36
        $region35: #{tpu_custom_call.1} parent=27 // pred_region
          %208 = dma.done %s200, 131072
        $region36: #{tpu_custom_call.1} parent=27 // pred_fallthru
          _
        %s209 = sand.u32 %s44, 1
        %s210 = scalar_lea.sflag [#allocation3], %s209
        %s211 = sand.u32 %s44, 1
        %s212 = smul.addr %s211, 8192
        %s213 = scalar_lea.vmem [#allocation2], %s212
        %p214 = pneg %p57
        %p215 = pneg %p54
        %s216 = sand.u32 %s72, 1
        %s217 = scalar_lea.sflag [#allocation6], %s216
        %s218 = sand.u32 %s72, 1
        %s219 = smul.addr %s218, 8192
        %s220 = scalar_lea.vmem [#allocation5], %s219
        %p221 = pneg %p85
        %p222 = pneg %p82
        %p223 = pneg %p113
        %p224 = pneg %p110
        %s225 = sand.u32 %s100, 1
        %s226 = scalar_lea.sflag [#allocation4], %s225
        %s227 = sand.u32 %s100, 1
        %s228 = smul.addr %s227, 8192
        %s229 = scalar_lea.vmem [#allocation7], %s228
        %s230 = smul.u32 64, %s26
        %s231 = smul.u32 32, %s27
        %s232 = smul.u32 64, %s26
        %s233 = smul.u32 32, %s27
        %s234 = smul.u32 64, %s26
        %s235 = smul.u32 32, %s27
        %v236 = vld [vmem:[%s193] sm:$0xff]
        %v237 = vld [vmem:[%s193 + $0x8] sm:$0xff]
        %v238 = vld [vmem:[%s193 + $0x10] sm:$0xff]
        %v239 = vld [vmem:[%s193 + $0x18] sm:$0xff]
        %v240 = vld [vmem:[%s193 + $0x20] sm:$0xff]
        %v241 = vld [vmem:[%s193 + $0x28] sm:$0xff]
        %v242 = vld [vmem:[%s193 + $0x30] sm:$0xff]
        %v243 = vld [vmem:[%s193 + $0x38] sm:$0xff]
        %v244 = vld [vmem:[%s193 + $0x40] sm:$0xff]
        %v245 = vld [vmem:[%s193 + $0x48] sm:$0xff]
        %v246 = vld [vmem:[%s193 + $0x50] sm:$0xff]
        %v247 = vld [vmem:[%s193 + $0x58] sm:$0xff]
        %v248 = vld [vmem:[%s193 + $0x60] sm:$0xff]
        %v249 = vld [vmem:[%s193 + $0x68] sm:$0xff]
        %v250 = vld [vmem:[%s193 + $0x70] sm:$0xff]
        %v251 = vld [vmem:[%s193 + $0x78] sm:$0xff]
        %v252 = vld [vmem:[%s193 + $0x80] sm:$0xff]
        %v253 = vld [vmem:[%s193 + $0x88] sm:$0xff]
        %v254 = vld [vmem:[%s193 + $0x90] sm:$0xff]
        %v255 = vld [vmem:[%s193 + $0x98] sm:$0xff]
        %v256 = vld [vmem:[%s193 + $0xa0] sm:$0xff]
        %v257 = vld [vmem:[%s193 + $0xa8] sm:$0xff]
        %v258 = vld [vmem:[%s193 + $0xb0] sm:$0xff]
        %v259 = vld [vmem:[%s193 + $0xb8] sm:$0xff]
        %v260 = vld [vmem:[%s193 + $0xc0] sm:$0xff]
        %v261 = vld [vmem:[%s193 + $0xc8] sm:$0xff]
        %v262 = vld [vmem:[%s193 + $0xd0] sm:$0xff]
        %v263 = vld [vmem:[%s193 + $0xd8] sm:$0xff]
        %v264 = vld [vmem:[%s193 + $0xe0] sm:$0xff]
        %v265 = vld [vmem:[%s193 + $0xe8] sm:$0xff]
        %v266 = vld [vmem:[%s193 + $0xf0] sm:$0xff]
        %v267 = vld [vmem:[%s193 + $0xf8] sm:$0xff]
        %v268 = vld [vmem:[%s193 + $0x100] sm:$0xff]
        %v269 = vld [vmem:[%s193 + $0x108] sm:$0xff]
        %v270 = vld [vmem:[%s193 + $0x110] sm:$0xff]
        %v271 = vld [vmem:[%s193 + $0x118] sm:$0xff]
        %v272 = vld [vmem:[%s193 + $0x120] sm:$0xff]
        %v273 = vld [vmem:[%s193 + $0x128] sm:$0xff]
        %v274 = vld [vmem:[%s193 + $0x130] sm:$0xff]
        %v275 = vld [vmem:[%s193 + $0x138] sm:$0xff]
        %v276 = vld [vmem:[%s193 + $0x140] sm:$0xff]
        %v277 = vld [vmem:[%s193 + $0x148] sm:$0xff]
        %v278 = vld [vmem:[%s193 + $0x150] sm:$0xff]
        %v279 = vld [vmem:[%s193 + $0x158] sm:$0xff]
        %v280 = vld [vmem:[%s193 + $0x160] sm:$0xff]
        %v281 = vld [vmem:[%s193 + $0x168] sm:$0xff]
        %v282 = vld [vmem:[%s193 + $0x170] sm:$0xff]
        %v283 = vld [vmem:[%s193 + $0x178] sm:$0xff]
        %v284 = vld [vmem:[%s193 + $0x180] sm:$0xff]
        %v285 = vld [vmem:[%s193 + $0x188] sm:$0xff]
        %v286 = vld [vmem:[%s193 + $0x190] sm:$0xff]
        %v287 = vld [vmem:[%s193 + $0x198] sm:$0xff]
        %v288 = vld [vmem:[%s193 + $0x1a0] sm:$0xff]
        %v289 = vld [vmem:[%s193 + $0x1a8] sm:$0xff]
        %v290 = vld [vmem:[%s193 + $0x1b0] sm:$0xff]
        %v291 = vld [vmem:[%s193 + $0x1b8] sm:$0xff]
        %v292 = vld [vmem:[%s193 + $0x1c0] sm:$0xff]
        %v293 = vld [vmem:[%s193 + $0x1c8] sm:$0xff]
        %v294 = vld [vmem:[%s193 + $0x1d0] sm:$0xff]
        %v295 = vld [vmem:[%s193 + $0x1d8] sm:$0xff]
        %v296 = vld [vmem:[%s193 + $0x1e0] sm:$0xff]
        %v297 = vld [vmem:[%s193 + $0x1e8] sm:$0xff]
        %v298 = vld [vmem:[%s193 + $0x1f0] sm:$0xff]
        %v299 = vld [vmem:[%s193 + $0x1f8] sm:$0xff]
        %v300 = vld [vmem:[%s193 + $0x200] sm:$0xff]
        %v301 = vld [vmem:[%s193 + $0x208] sm:$0xff]
        %v302 = vld [vmem:[%s193 + $0x210] sm:$0xff]
        %v303 = vld [vmem:[%s193 + $0x218] sm:$0xff]
        %v304 = vld [vmem:[%s193 + $0x220] sm:$0xff]
        %v305 = vld [vmem:[%s193 + $0x228] sm:$0xff]
        %v306 = vld [vmem:[%s193 + $0x230] sm:$0xff]
        %v307 = vld [vmem:[%s193 + $0x238] sm:$0xff]
        %v308 = vld [vmem:[%s193 + $0x240] sm:$0xff]
        %v309 = vld [vmem:[%s193 + $0x248] sm:$0xff]
        %v310 = vld [vmem:[%s193 + $0x250] sm:$0xff]
        %v311 = vld [vmem:[%s193 + $0x258] sm:$0xff]
        %v312 = vld [vmem:[%s193 + $0x260] sm:$0xff]
        %v313 = vld [vmem:[%s193 + $0x268] sm:$0xff]
        %v314 = vld [vmem:[%s193 + $0x270] sm:$0xff]
        %v315 = vld [vmem:[%s193 + $0x278] sm:$0xff]
        %v316 = vld [vmem:[%s193 + $0x280] sm:$0xff]
        %v317 = vld [vmem:[%s193 + $0x288] sm:$0xff]
        %v318 = vld [vmem:[%s193 + $0x290] sm:$0xff]
        %v319 = vld [vmem:[%s193 + $0x298] sm:$0xff]
        %v320 = vld [vmem:[%s193 + $0x2a0] sm:$0xff]
        %v321 = vld [vmem:[%s193 + $0x2a8] sm:$0xff]
        %v322 = vld [vmem:[%s193 + $0x2b0] sm:$0xff]
        %v323 = vld [vmem:[%s193 + $0x2b8] sm:$0xff]
        %v324 = vld [vmem:[%s193 + $0x2c0] sm:$0xff]
        %v325 = vld [vmem:[%s193 + $0x2c8] sm:$0xff]
        %v326 = vld [vmem:[%s193 + $0x2d0] sm:$0xff]
        %v327 = vld [vmem:[%s193 + $0x2d8] sm:$0xff]
        %v328 = vld [vmem:[%s193 + $0x2e0] sm:$0xff]
        %v329 = vld [vmem:[%s193 + $0x2e8] sm:$0xff]
        %v330 = vld [vmem:[%s193 + $0x2f0] sm:$0xff]
        %v331 = vld [vmem:[%s193 + $0x2f8] sm:$0xff]
        %v332 = vld [vmem:[%s193 + $0x300] sm:$0xff]
        %v333 = vld [vmem:[%s193 + $0x308] sm:$0xff]
        %v334 = vld [vmem:[%s193 + $0x310] sm:$0xff]
        %v335 = vld [vmem:[%s193 + $0x318] sm:$0xff]
        %v336 = vld [vmem:[%s193 + $0x320] sm:$0xff]
        %v337 = vld [vmem:[%s193 + $0x328] sm:$0xff]
        %v338 = vld [vmem:[%s193 + $0x330] sm:$0xff]
        %v339 = vld [vmem:[%s193 + $0x338] sm:$0xff]
        %v340 = vld [vmem:[%s193 + $0x340] sm:$0xff]
        %v341 = vld [vmem:[%s193 + $0x348] sm:$0xff]
        %v342 = vld [vmem:[%s193 + $0x350] sm:$0xff]
        %v343 = vld [vmem:[%s193 + $0x358] sm:$0xff]
        %v344 = vld [vmem:[%s193 + $0x360] sm:$0xff]
        %v345 = vld [vmem:[%s193 + $0x368] sm:$0xff]
        %v346 = vld [vmem:[%s193 + $0x370] sm:$0xff]
        %v347 = vld [vmem:[%s193 + $0x378] sm:$0xff]
        %v348 = vld [vmem:[%s193 + $0x380] sm:$0xff]
        %v349 = vld [vmem:[%s193 + $0x388] sm:$0xff]
        %v350 = vld [vmem:[%s193 + $0x390] sm:$0xff]
        %v351 = vld [vmem:[%s193 + $0x398] sm:$0xff]
        %v352 = vld [vmem:[%s193 + $0x3a0] sm:$0xff]
        %v353 = vld [vmem:[%s193 + $0x3a8] sm:$0xff]
        %v354 = vld [vmem:[%s193 + $0x3b0] sm:$0xff]
        %v355 = vld [vmem:[%s193 + $0x3b8] sm:$0xff]
        %v356 = vld [vmem:[%s193 + $0x3c0] sm:$0xff]
        %v357 = vld [vmem:[%s193 + $0x3c8] sm:$0xff]
        %v358 = vld [vmem:[%s193 + $0x3d0] sm:$0xff]
        %v359 = vld [vmem:[%s193 + $0x3d8] sm:$0xff]
        %v360 = vld [vmem:[%s193 + $0x3e0] sm:$0xff]
        %v361 = vld [vmem:[%s193 + $0x3e8] sm:$0xff]
        %v362 = vld [vmem:[%s193 + $0x3f0] sm:$0xff]
        %v363 = vld [vmem:[%s193 + $0x3f8] sm:$0xff]
        %v364 = vld [vmem:[%s193 + $0x400] sm:$0xff]
        %v365 = vld [vmem:[%s193 + $0x408] sm:$0xff]
        %v366 = vld [vmem:[%s193 + $0x410] sm:$0xff]
        %v367 = vld [vmem:[%s193 + $0x418] sm:$0xff]
        %v368 = vld [vmem:[%s193 + $0x420] sm:$0xff]
        %v369 = vld [vmem:[%s193 + $0x428] sm:$0xff]
        %v370 = vld [vmem:[%s193 + $0x430] sm:$0xff]
        %v371 = vld [vmem:[%s193 + $0x438] sm:$0xff]
        %v372 = vld [vmem:[%s193 + $0x440] sm:$0xff]
        %v373 = vld [vmem:[%s193 + $0x448] sm:$0xff]
        %v374 = vld [vmem:[%s193 + $0x450] sm:$0xff]
        %v375 = vld [vmem:[%s193 + $0x458] sm:$0xff]
        %v376 = vld [vmem:[%s193 + $0x460] sm:$0xff]
        %v377 = vld [vmem:[%s193 + $0x468] sm:$0xff]
        %v378 = vld [vmem:[%s193 + $0x470] sm:$0xff]
        %v379 = vld [vmem:[%s193 + $0x478] sm:$0xff]
        %v380 = vld [vmem:[%s193 + $0x480] sm:$0xff]
        %v381 = vld [vmem:[%s193 + $0x488] sm:$0xff]
        %v382 = vld [vmem:[%s193 + $0x490] sm:$0xff]
        %v383 = vld [vmem:[%s193 + $0x498] sm:$0xff]
        %v384 = vld [vmem:[%s193 + $0x4a0] sm:$0xff]
        %v385 = vld [vmem:[%s193 + $0x4a8] sm:$0xff]
        %v386 = vld [vmem:[%s193 + $0x4b0] sm:$0xff]
        %v387 = vld [vmem:[%s193 + $0x4b8] sm:$0xff]
        %v388 = vld [vmem:[%s193 + $0x4c0] sm:$0xff]
        %v389 = vld [vmem:[%s193 + $0x4c8] sm:$0xff]
        %v390 = vld [vmem:[%s193 + $0x4d0] sm:$0xff]
        %v391 = vld [vmem:[%s193 + $0x4d8] sm:$0xff]
        %v392 = vld [vmem:[%s193 + $0x4e0] sm:$0xff]
        %v393 = vld [vmem:[%s193 + $0x4e8] sm:$0xff]
        %v394 = vld [vmem:[%s193 + $0x4f0] sm:$0xff]
        %v395 = vld [vmem:[%s193 + $0x4f8] sm:$0xff]
        %v396 = vld [vmem:[%s193 + $0x500] sm:$0xff]
        %v397 = vld [vmem:[%s193 + $0x508] sm:$0xff]
        %v398 = vld [vmem:[%s193 + $0x510] sm:$0xff]
        %v399 = vld [vmem:[%s193 + $0x518] sm:$0xff]
        %v400 = vld [vmem:[%s193 + $0x520] sm:$0xff]
        %v401 = vld [vmem:[%s193 + $0x528] sm:$0xff]
        %v402 = vld [vmem:[%s193 + $0x530] sm:$0xff]
        %v403 = vld [vmem:[%s193 + $0x538] sm:$0xff]
        %v404 = vld [vmem:[%s193 + $0x540] sm:$0xff]
        %v405 = vld [vmem:[%s193 + $0x548] sm:$0xff]
        %v406 = vld [vmem:[%s193 + $0x550] sm:$0xff]
        %v407 = vld [vmem:[%s193 + $0x558] sm:$0xff]
        %v408 = vld [vmem:[%s193 + $0x560] sm:$0xff]
        %v409 = vld [vmem:[%s193 + $0x568] sm:$0xff]
        %v410 = vld [vmem:[%s193 + $0x570] sm:$0xff]
        %v411 = vld [vmem:[%s193 + $0x578] sm:$0xff]
        %v412 = vld [vmem:[%s193 + $0x580] sm:$0xff]
        %v413 = vld [vmem:[%s193 + $0x588] sm:$0xff]
        %v414 = vld [vmem:[%s193 + $0x590] sm:$0xff]
        %v415 = vld [vmem:[%s193 + $0x598] sm:$0xff]
        %v416 = vld [vmem:[%s193 + $0x5a0] sm:$0xff]
        %v417 = vld [vmem:[%s193 + $0x5a8] sm:$0xff]
        %v418 = vld [vmem:[%s193 + $0x5b0] sm:$0xff]
        %v419 = vld [vmem:[%s193 + $0x5b8] sm:$0xff]
        %v420 = vld [vmem:[%s193 + $0x5c0] sm:$0xff]
        %v421 = vld [vmem:[%s193 + $0x5c8] sm:$0xff]
        %v422 = vld [vmem:[%s193 + $0x5d0] sm:$0xff]
        %v423 = vld [vmem:[%s193 + $0x5d8] sm:$0xff]
        %v424 = vld [vmem:[%s193 + $0x5e0] sm:$0xff]
        %v425 = vld [vmem:[%s193 + $0x5e8] sm:$0xff]
        %v426 = vld [vmem:[%s193 + $0x5f0] sm:$0xff]
        %v427 = vld [vmem:[%s193 + $0x5f8] sm:$0xff]
        %v428 = vld [vmem:[%s193 + $0x600] sm:$0xff]
        %v429 = vld [vmem:[%s193 + $0x608] sm:$0xff]
        %v430 = vld [vmem:[%s193 + $0x610] sm:$0xff]
        %v431 = vld [vmem:[%s193 + $0x618] sm:$0xff]
        %v432 = vld [vmem:[%s193 + $0x620] sm:$0xff]
        %v433 = vld [vmem:[%s193 + $0x628] sm:$0xff]
        %v434 = vld [vmem:[%s193 + $0x630] sm:$0xff]
        %v435 = vld [vmem:[%s193 + $0x638] sm:$0xff]
        %v436 = vld [vmem:[%s193 + $0x640] sm:$0xff]
        %v437 = vld [vmem:[%s193 + $0x648] sm:$0xff]
        %v438 = vld [vmem:[%s193 + $0x650] sm:$0xff]
        %v439 = vld [vmem:[%s193 + $0x658] sm:$0xff]
        %v440 = vld [vmem:[%s193 + $0x660] sm:$0xff]
        %v441 = vld [vmem:[%s193 + $0x668] sm:$0xff]
        %v442 = vld [vmem:[%s193 + $0x670] sm:$0xff]
        %v443 = vld [vmem:[%s193 + $0x678] sm:$0xff]
        %v444 = vld [vmem:[%s193 + $0x680] sm:$0xff]
        %v445 = vld [vmem:[%s193 + $0x688] sm:$0xff]
        %v446 = vld [vmem:[%s193 + $0x690] sm:$0xff]
        %v447 = vld [vmem:[%s193 + $0x698] sm:$0xff]
        %v448 = vld [vmem:[%s193 + $0x6a0] sm:$0xff]
        %v449 = vld [vmem:[%s193 + $0x6a8] sm:$0xff]
        %v450 = vld [vmem:[%s193 + $0x6b0] sm:$0xff]
        %v451 = vld [vmem:[%s193 + $0x6b8] sm:$0xff]
        %v452 = vld [vmem:[%s193 + $0x6c0] sm:$0xff]
        %v453 = vld [vmem:[%s193 + $0x6c8] sm:$0xff]
        %v454 = vld [vmem:[%s193 + $0x6d0] sm:$0xff]
        %v455 = vld [vmem:[%s193 + $0x6d8] sm:$0xff]
        %v456 = vld [vmem:[%s193 + $0x6e0] sm:$0xff]
        %v457 = vld [vmem:[%s193 + $0x6e8] sm:$0xff]
        %v458 = vld [vmem:[%s193 + $0x6f0] sm:$0xff]
        %v459 = vld [vmem:[%s193 + $0x6f8] sm:$0xff]
        %v460 = vld [vmem:[%s193 + $0x700] sm:$0xff]
        %v461 = vld [vmem:[%s193 + $0x708] sm:$0xff]
        %v462 = vld [vmem:[%s193 + $0x710] sm:$0xff]
        %v463 = vld [vmem:[%s193 + $0x718] sm:$0xff]
        %v464 = vld [vmem:[%s193 + $0x720] sm:$0xff]
        %v465 = vld [vmem:[%s193 + $0x728] sm:$0xff]
        %v466 = vld [vmem:[%s193 + $0x730] sm:$0xff]
        %v467 = vld [vmem:[%s193 + $0x738] sm:$0xff]
        %v468 = vld [vmem:[%s193 + $0x740] sm:$0xff]
        %v469 = vld [vmem:[%s193 + $0x748] sm:$0xff]
        %v470 = vld [vmem:[%s193 + $0x750] sm:$0xff]
        %v471 = vld [vmem:[%s193 + $0x758] sm:$0xff]
        %v472 = vld [vmem:[%s193 + $0x760] sm:$0xff]
        %v473 = vld [vmem:[%s193 + $0x768] sm:$0xff]
        %v474 = vld [vmem:[%s193 + $0x770] sm:$0xff]
        %v475 = vld [vmem:[%s193 + $0x778] sm:$0xff]
        %v476 = vld [vmem:[%s193 + $0x780] sm:$0xff]
        %v477 = vld [vmem:[%s193 + $0x788] sm:$0xff]
        %v478 = vld [vmem:[%s193 + $0x790] sm:$0xff]
        %v479 = vld [vmem:[%s193 + $0x798] sm:$0xff]
        %v480 = vld [vmem:[%s193 + $0x7a0] sm:$0xff]
        %v481 = vld [vmem:[%s193 + $0x7a8] sm:$0xff]
        %v482 = vld [vmem:[%s193 + $0x7b0] sm:$0xff]
        %v483 = vld [vmem:[%s193 + $0x7b8] sm:$0xff]
        %v484 = vld [vmem:[%s193 + $0x7c0] sm:$0xff]
        %v485 = vld [vmem:[%s193 + $0x7c8] sm:$0xff]
        %v486 = vld [vmem:[%s193 + $0x7d0] sm:$0xff]
        %v487 = vld [vmem:[%s193 + $0x7d8] sm:$0xff]
        %v488 = vld [vmem:[%s193 + $0x7e0] sm:$0xff]
        %v489 = vld [vmem:[%s193 + $0x7e8] sm:$0xff]
        %v490 = vld [vmem:[%s193 + $0x7f0] sm:$0xff]
        %v491 = vld [vmem:[%s193 + $0x7f8] sm:$0xff]
        %v492 = vld [vmem:[%s193 + $0x800] sm:$0xff]
        %v493 = vld [vmem:[%s193 + $0x808] sm:$0xff]
        %v494 = vld [vmem:[%s193 + $0x810] sm:$0xff]
        %v495 = vld [vmem:[%s193 + $0x818] sm:$0xff]
        %v496 = vld [vmem:[%s193 + $0x820] sm:$0xff]
        %v497 = vld [vmem:[%s193 + $0x828] sm:$0xff]
        %v498 = vld [vmem:[%s193 + $0x830] sm:$0xff]
        %v499 = vld [vmem:[%s193 + $0x838] sm:$0xff]
        %v500 = vld [vmem:[%s193 + $0x840] sm:$0xff]
        %v501 = vld [vmem:[%s193 + $0x848] sm:$0xff]
        %v502 = vld [vmem:[%s193 + $0x850] sm:$0xff]
        %v503 = vld [vmem:[%s193 + $0x858] sm:$0xff]
        %v504 = vld [vmem:[%s193 + $0x860] sm:$0xff]
        %v505 = vld [vmem:[%s193 + $0x868] sm:$0xff]
        %v506 = vld [vmem:[%s193 + $0x870] sm:$0xff]
        %v507 = vld [vmem:[%s193 + $0x878] sm:$0xff]
        %v508 = vld [vmem:[%s193 + $0x880] sm:$0xff]
        %v509 = vld [vmem:[%s193 + $0x888] sm:$0xff]
        %v510 = vld [vmem:[%s193 + $0x890] sm:$0xff]
        %v511 = vld [vmem:[%s193 + $0x898] sm:$0xff]
        %v512 = vld [vmem:[%s193 + $0x8a0] sm:$0xff]
        %v513 = vld [vmem:[%s193 + $0x8a8] sm:$0xff]
        %v514 = vld [vmem:[%s193 + $0x8b0] sm:$0xff]
        %v515 = vld [vmem:[%s193 + $0x8b8] sm:$0xff]
        %v516 = vld [vmem:[%s193 + $0x8c0] sm:$0xff]
        %v517 = vld [vmem:[%s193 + $0x8c8] sm:$0xff]
        %v518 = vld [vmem:[%s193 + $0x8d0] sm:$0xff]
        %v519 = vld [vmem:[%s193 + $0x8d8] sm:$0xff]
        %v520 = vld [vmem:[%s193 + $0x8e0] sm:$0xff]
        %v521 = vld [vmem:[%s193 + $0x8e8] sm:$0xff]
        %v522 = vld [vmem:[%s193 + $0x8f0] sm:$0xff]
        %v523 = vld [vmem:[%s193 + $0x8f8] sm:$0xff]
        %v524 = vld [vmem:[%s193 + $0x900] sm:$0xff]
        %v525 = vld [vmem:[%s193 + $0x908] sm:$0xff]
        %v526 = vld [vmem:[%s193 + $0x910] sm:$0xff]
        %v527 = vld [vmem:[%s193 + $0x918] sm:$0xff]
        %v528 = vld [vmem:[%s193 + $0x920] sm:$0xff]
        %v529 = vld [vmem:[%s193 + $0x928] sm:$0xff]
        %v530 = vld [vmem:[%s193 + $0x930] sm:$0xff]
        %v531 = vld [vmem:[%s193 + $0x938] sm:$0xff]
        %v532 = vld [vmem:[%s193 + $0x940] sm:$0xff]
        %v533 = vld [vmem:[%s193 + $0x948] sm:$0xff]
        %v534 = vld [vmem:[%s193 + $0x950] sm:$0xff]
        %v535 = vld [vmem:[%s193 + $0x958] sm:$0xff]
        %v536 = vld [vmem:[%s193 + $0x960] sm:$0xff]
        %v537 = vld [vmem:[%s193 + $0x968] sm:$0xff]
        %v538 = vld [vmem:[%s193 + $0x970] sm:$0xff]
        %v539 = vld [vmem:[%s193 + $0x978] sm:$0xff]
        %v540 = vld [vmem:[%s193 + $0x980] sm:$0xff]
        %v541 = vld [vmem:[%s193 + $0x988] sm:$0xff]
        %v542 = vld [vmem:[%s193 + $0x990] sm:$0xff]
        %v543 = vld [vmem:[%s193 + $0x998] sm:$0xff]
        %v544 = vld [vmem:[%s193 + $0x9a0] sm:$0xff]
        %v545 = vld [vmem:[%s193 + $0x9a8] sm:$0xff]
        %v546 = vld [vmem:[%s193 + $0x9b0] sm:$0xff]
        %v547 = vld [vmem:[%s193 + $0x9b8] sm:$0xff]
        %v548 = vld [vmem:[%s193 + $0x9c0] sm:$0xff]
        %v549 = vld [vmem:[%s193 + $0x9c8] sm:$0xff]
        %v550 = vld [vmem:[%s193 + $0x9d0] sm:$0xff]
        %v551 = vld [vmem:[%s193 + $0x9d8] sm:$0xff]
        %v552 = vld [vmem:[%s193 + $0x9e0] sm:$0xff]
        %v553 = vld [vmem:[%s193 + $0x9e8] sm:$0xff]
        %v554 = vld [vmem:[%s193 + $0x9f0] sm:$0xff]
        %v555 = vld [vmem:[%s193 + $0x9f8] sm:$0xff]
        %v556 = vld [vmem:[%s193 + $0xa00] sm:$0xff]
        %v557 = vld [vmem:[%s193 + $0xa08] sm:$0xff]
        %v558 = vld [vmem:[%s193 + $0xa10] sm:$0xff]
        %v559 = vld [vmem:[%s193 + $0xa18] sm:$0xff]
        %v560 = vld [vmem:[%s193 + $0xa20] sm:$0xff]
        %v561 = vld [vmem:[%s193 + $0xa28] sm:$0xff]
        %v562 = vld [vmem:[%s193 + $0xa30] sm:$0xff]
        %v563 = vld [vmem:[%s193 + $0xa38] sm:$0xff]
        %v564 = vld [vmem:[%s193 + $0xa40] sm:$0xff]
        %v565 = vld [vmem:[%s193 + $0xa48] sm:$0xff]
        %v566 = vld [vmem:[%s193 + $0xa50] sm:$0xff]
        %v567 = vld [vmem:[%s193 + $0xa58] sm:$0xff]
        %v568 = vld [vmem:[%s193 + $0xa60] sm:$0xff]
        %v569 = vld [vmem:[%s193 + $0xa68] sm:$0xff]
        %v570 = vld [vmem:[%s193 + $0xa70] sm:$0xff]
        %v571 = vld [vmem:[%s193 + $0xa78] sm:$0xff]
        %v572 = vld [vmem:[%s193 + $0xa80] sm:$0xff]
        %v573 = vld [vmem:[%s193 + $0xa88] sm:$0xff]
        %v574 = vld [vmem:[%s193 + $0xa90] sm:$0xff]
        %v575 = vld [vmem:[%s193 + $0xa98] sm:$0xff]
        %v576 = vld [vmem:[%s193 + $0xaa0] sm:$0xff]
        %v577 = vld [vmem:[%s193 + $0xaa8] sm:$0xff]
        %v578 = vld [vmem:[%s193 + $0xab0] sm:$0xff]
        %v579 = vld [vmem:[%s193 + $0xab8] sm:$0xff]
        %v580 = vld [vmem:[%s193 + $0xac0] sm:$0xff]
        %v581 = vld [vmem:[%s193 + $0xac8] sm:$0xff]
        %v582 = vld [vmem:[%s193 + $0xad0] sm:$0xff]
        %v583 = vld [vmem:[%s193 + $0xad8] sm:$0xff]
        %v584 = vld [vmem:[%s193 + $0xae0] sm:$0xff]
        %v585 = vld [vmem:[%s193 + $0xae8] sm:$0xff]
        %v586 = vld [vmem:[%s193 + $0xaf0] sm:$0xff]
        %v587 = vld [vmem:[%s193 + $0xaf8] sm:$0xff]
        %v588 = vld [vmem:[%s193 + $0xb00] sm:$0xff]
        %v589 = vld [vmem:[%s193 + $0xb08] sm:$0xff]
        %v590 = vld [vmem:[%s193 + $0xb10] sm:$0xff]
        %v591 = vld [vmem:[%s193 + $0xb18] sm:$0xff]
        %v592 = vld [vmem:[%s193 + $0xb20] sm:$0xff]
        %v593 = vld [vmem:[%s193 + $0xb28] sm:$0xff]
        %v594 = vld [vmem:[%s193 + $0xb30] sm:$0xff]
        %v595 = vld [vmem:[%s193 + $0xb38] sm:$0xff]
        %v596 = vld [vmem:[%s193 + $0xb40] sm:$0xff]
        %v597 = vld [vmem:[%s193 + $0xb48] sm:$0xff]
        %v598 = vld [vmem:[%s193 + $0xb50] sm:$0xff]
        %v599 = vld [vmem:[%s193 + $0xb58] sm:$0xff]
        %v600 = vld [vmem:[%s193 + $0xb60] sm:$0xff]
        %v601 = vld [vmem:[%s193 + $0xb68] sm:$0xff]
        %v602 = vld [vmem:[%s193 + $0xb70] sm:$0xff]
        %v603 = vld [vmem:[%s193 + $0xb78] sm:$0xff]
        %v604 = vld [vmem:[%s193 + $0xb80] sm:$0xff]
        %v605 = vld [vmem:[%s193 + $0xb88] sm:$0xff]
        %v606 = vld [vmem:[%s193 + $0xb90] sm:$0xff]
        %v607 = vld [vmem:[%s193 + $0xb98] sm:$0xff]
        %v608 = vld [vmem:[%s193 + $0xba0] sm:$0xff]
        %v609 = vld [vmem:[%s193 + $0xba8] sm:$0xff]
        %v610 = vld [vmem:[%s193 + $0xbb0] sm:$0xff]
        %v611 = vld [vmem:[%s193 + $0xbb8] sm:$0xff]
        %v612 = vld [vmem:[%s193 + $0xbc0] sm:$0xff]
        %v613 = vld [vmem:[%s193 + $0xbc8] sm:$0xff]
        %v614 = vld [vmem:[%s193 + $0xbd0] sm:$0xff]
        %v615 = vld [vmem:[%s193 + $0xbd8] sm:$0xff]
        %v616 = vld [vmem:[%s193 + $0xbe0] sm:$0xff]
        %v617 = vld [vmem:[%s193 + $0xbe8] sm:$0xff]
        %v618 = vld [vmem:[%s193 + $0xbf0] sm:$0xff]
        %v619 = vld [vmem:[%s193 + $0xbf8] sm:$0xff]
        %v620 = vld [vmem:[%s193 + $0xc00] sm:$0xff]
        %v621 = vld [vmem:[%s193 + $0xc08] sm:$0xff]
        %v622 = vld [vmem:[%s193 + $0xc10] sm:$0xff]
        %v623 = vld [vmem:[%s193 + $0xc18] sm:$0xff]
        %v624 = vld [vmem:[%s193 + $0xc20] sm:$0xff]
        %v625 = vld [vmem:[%s193 + $0xc28] sm:$0xff]
        %v626 = vld [vmem:[%s193 + $0xc30] sm:$0xff]
        %v627 = vld [vmem:[%s193 + $0xc38] sm:$0xff]
        %v628 = vld [vmem:[%s193 + $0xc40] sm:$0xff]
        %v629 = vld [vmem:[%s193 + $0xc48] sm:$0xff]
        %v630 = vld [vmem:[%s193 + $0xc50] sm:$0xff]
        %v631 = vld [vmem:[%s193 + $0xc58] sm:$0xff]
        %v632 = vld [vmem:[%s193 + $0xc60] sm:$0xff]
        %v633 = vld [vmem:[%s193 + $0xc68] sm:$0xff]
        %v634 = vld [vmem:[%s193 + $0xc70] sm:$0xff]
        %v635 = vld [vmem:[%s193 + $0xc78] sm:$0xff]
        %v636 = vld [vmem:[%s193 + $0xc80] sm:$0xff]
        %v637 = vld [vmem:[%s193 + $0xc88] sm:$0xff]
        %v638 = vld [vmem:[%s193 + $0xc90] sm:$0xff]
        %v639 = vld [vmem:[%s193 + $0xc98] sm:$0xff]
        %v640 = vld [vmem:[%s193 + $0xca0] sm:$0xff]
        %v641 = vld [vmem:[%s193 + $0xca8] sm:$0xff]
        %v642 = vld [vmem:[%s193 + $0xcb0] sm:$0xff]
        %v643 = vld [vmem:[%s193 + $0xcb8] sm:$0xff]
        %v644 = vld [vmem:[%s193 + $0xcc0] sm:$0xff]
        %v645 = vld [vmem:[%s193 + $0xcc8] sm:$0xff]
        %v646 = vld [vmem:[%s193 + $0xcd0] sm:$0xff]
        %v647 = vld [vmem:[%s193 + $0xcd8] sm:$0xff]
        %v648 = vld [vmem:[%s193 + $0xce0] sm:$0xff]
        %v649 = vld [vmem:[%s193 + $0xce8] sm:$0xff]
        %v650 = vld [vmem:[%s193 + $0xcf0] sm:$0xff]
        %v651 = vld [vmem:[%s193 + $0xcf8] sm:$0xff]
        %v652 = vld [vmem:[%s193 + $0xd00] sm:$0xff]
        %v653 = vld [vmem:[%s193 + $0xd08] sm:$0xff]
        %v654 = vld [vmem:[%s193 + $0xd10] sm:$0xff]
        %v655 = vld [vmem:[%s193 + $0xd18] sm:$0xff]
        %v656 = vld [vmem:[%s193 + $0xd20] sm:$0xff]
        %v657 = vld [vmem:[%s193 + $0xd28] sm:$0xff]
        %v658 = vld [vmem:[%s193 + $0xd30] sm:$0xff]
        %v659 = vld [vmem:[%s193 + $0xd38] sm:$0xff]
        %v660 = vld [vmem:[%s193 + $0xd40] sm:$0xff]
        %v661 = vld [vmem:[%s193 + $0xd48] sm:$0xff]
        %v662 = vld [vmem:[%s193 + $0xd50] sm:$0xff]
        %v663 = vld [vmem:[%s193 + $0xd58] sm:$0xff]
        %v664 = vld [vmem:[%s193 + $0xd60] sm:$0xff]
        %v665 = vld [vmem:[%s193 + $0xd68] sm:$0xff]
        %v666 = vld [vmem:[%s193 + $0xd70] sm:$0xff]
        %v667 = vld [vmem:[%s193 + $0xd78] sm:$0xff]
        %v668 = vld [vmem:[%s193 + $0xd80] sm:$0xff]
        %v669 = vld [vmem:[%s193 + $0xd88] sm:$0xff]
        %v670 = vld [vmem:[%s193 + $0xd90] sm:$0xff]
        %v671 = vld [vmem:[%s193 + $0xd98] sm:$0xff]
        %v672 = vld [vmem:[%s193 + $0xda0] sm:$0xff]
        %v673 = vld [vmem:[%s193 + $0xda8] sm:$0xff]
        %v674 = vld [vmem:[%s193 + $0xdb0] sm:$0xff]
        %v675 = vld [vmem:[%s193 + $0xdb8] sm:$0xff]
        %v676 = vld [vmem:[%s193 + $0xdc0] sm:$0xff]
        %v677 = vld [vmem:[%s193 + $0xdc8] sm:$0xff]
        %v678 = vld [vmem:[%s193 + $0xdd0] sm:$0xff]
        %v679 = vld [vmem:[%s193 + $0xdd8] sm:$0xff]
        %v680 = vld [vmem:[%s193 + $0xde0] sm:$0xff]
        %v681 = vld [vmem:[%s193 + $0xde8] sm:$0xff]
        %v682 = vld [vmem:[%s193 + $0xdf0] sm:$0xff]
        %v683 = vld [vmem:[%s193 + $0xdf8] sm:$0xff]
        %v684 = vld [vmem:[%s193 + $0xe00] sm:$0xff]
        %v685 = vld [vmem:[%s193 + $0xe08] sm:$0xff]
        %v686 = vld [vmem:[%s193 + $0xe10] sm:$0xff]
        %v687 = vld [vmem:[%s193 + $0xe18] sm:$0xff]
        %v688 = vld [vmem:[%s193 + $0xe20] sm:$0xff]
        %v689 = vld [vmem:[%s193 + $0xe28] sm:$0xff]
        %v690 = vld [vmem:[%s193 + $0xe30] sm:$0xff]
        %v691 = vld [vmem:[%s193 + $0xe38] sm:$0xff]
        %v692 = vld [vmem:[%s193 + $0xe40] sm:$0xff]
        %v693 = vld [vmem:[%s193 + $0xe48] sm:$0xff]
        %v694 = vld [vmem:[%s193 + $0xe50] sm:$0xff]
        %v695 = vld [vmem:[%s193 + $0xe58] sm:$0xff]
        %v696 = vld [vmem:[%s193 + $0xe60] sm:$0xff]
        %v697 = vld [vmem:[%s193 + $0xe68] sm:$0xff]
        %v698 = vld [vmem:[%s193 + $0xe70] sm:$0xff]
        %v699 = vld [vmem:[%s193 + $0xe78] sm:$0xff]
        %v700 = vld [vmem:[%s193 + $0xe80] sm:$0xff]
        %v701 = vld [vmem:[%s193 + $0xe88] sm:$0xff]
        %v702 = vld [vmem:[%s193 + $0xe90] sm:$0xff]
        %v703 = vld [vmem:[%s193 + $0xe98] sm:$0xff]
        %v704 = vld [vmem:[%s193 + $0xea0] sm:$0xff]
        %v705 = vld [vmem:[%s193 + $0xea8] sm:$0xff]
        %v706 = vld [vmem:[%s193 + $0xeb0] sm:$0xff]
        %v707 = vld [vmem:[%s193 + $0xeb8] sm:$0xff]
        %v708 = vld [vmem:[%s193 + $0xec0] sm:$0xff]
        %v709 = vld [vmem:[%s193 + $0xec8] sm:$0xff]
        %v710 = vld [vmem:[%s193 + $0xed0] sm:$0xff]
        %v711 = vld [vmem:[%s193 + $0xed8] sm:$0xff]
        %v712 = vld [vmem:[%s193 + $0xee0] sm:$0xff]
        %v713 = vld [vmem:[%s193 + $0xee8] sm:$0xff]
        %v714 = vld [vmem:[%s193 + $0xef0] sm:$0xff]
        %v715 = vld [vmem:[%s193 + $0xef8] sm:$0xff]
        %v716 = vld [vmem:[%s193 + $0xf00] sm:$0xff]
        %v717 = vld [vmem:[%s193 + $0xf08] sm:$0xff]
        %v718 = vld [vmem:[%s193 + $0xf10] sm:$0xff]
        %v719 = vld [vmem:[%s193 + $0xf18] sm:$0xff]
        %v720 = vld [vmem:[%s193 + $0xf20] sm:$0xff]
        %v721 = vld [vmem:[%s193 + $0xf28] sm:$0xff]
        %v722 = vld [vmem:[%s193 + $0xf30] sm:$0xff]
        %v723 = vld [vmem:[%s193 + $0xf38] sm:$0xff]
        %v724 = vld [vmem:[%s193 + $0xf40] sm:$0xff]
        %v725 = vld [vmem:[%s193 + $0xf48] sm:$0xff]
        %v726 = vld [vmem:[%s193 + $0xf50] sm:$0xff]
        %v727 = vld [vmem:[%s193 + $0xf58] sm:$0xff]
        %v728 = vld [vmem:[%s193 + $0xf60] sm:$0xff]
        %v729 = vld [vmem:[%s193 + $0xf68] sm:$0xff]
        %v730 = vld [vmem:[%s193 + $0xf70] sm:$0xff]
        %v731 = vld [vmem:[%s193 + $0xf78] sm:$0xff]
        %v732 = vld [vmem:[%s193 + $0xf80] sm:$0xff]
        %v733 = vld [vmem:[%s193 + $0xf88] sm:$0xff]
        %v734 = vld [vmem:[%s193 + $0xf90] sm:$0xff]
        %v735 = vld [vmem:[%s193 + $0xf98] sm:$0xff]
        %v736 = vld [vmem:[%s193 + $0xfa0] sm:$0xff]
        %v737 = vld [vmem:[%s193 + $0xfa8] sm:$0xff]
        %v738 = vld [vmem:[%s193 + $0xfb0] sm:$0xff]
        %v739 = vld [vmem:[%s193 + $0xfb8] sm:$0xff]
        %v740 = vld [vmem:[%s193 + $0xfc0] sm:$0xff]
        %v741 = vld [vmem:[%s193 + $0xfc8] sm:$0xff]
        %v742 = vld [vmem:[%s193 + $0xfd0] sm:$0xff]
        %v743 = vld [vmem:[%s193 + $0xfd8] sm:$0xff]
        %v744 = vld [vmem:[%s193 + $0xfe0] sm:$0xff]
        %v745 = vld [vmem:[%s193 + $0xfe8] sm:$0xff]
        %v746 = vld [vmem:[%s193 + $0xff0] sm:$0xff]
        %v747 = vld [vmem:[%s193 + $0xff8] sm:$0xff]
        %v748 = vld [vmem:[%s193 + $0x1000] sm:$0xff]
        %v749 = vld [vmem:[%s193 + $0x1008] sm:$0xff]
        %v750 = vld [vmem:[%s193 + $0x1010] sm:$0xff]
        %v751 = vld [vmem:[%s193 + $0x1018] sm:$0xff]
        %v752 = vld [vmem:[%s193 + $0x1020] sm:$0xff]
        %v753 = vld [vmem:[%s193 + $0x1028] sm:$0xff]
        %v754 = vld [vmem:[%s193 + $0x1030] sm:$0xff]
        %v755 = vld [vmem:[%s193 + $0x1038] sm:$0xff]
        %v756 = vld [vmem:[%s193 + $0x1040] sm:$0xff]
        %v757 = vld [vmem:[%s193 + $0x1048] sm:$0xff]
        %v758 = vld [vmem:[%s193 + $0x1050] sm:$0xff]
        %v759 = vld [vmem:[%s193 + $0x1058] sm:$0xff]
        %v760 = vld [vmem:[%s193 + $0x1060] sm:$0xff]
        %v761 = vld [vmem:[%s193 + $0x1068] sm:$0xff]
        %v762 = vld [vmem:[%s193 + $0x1070] sm:$0xff]
        %v763 = vld [vmem:[%s193 + $0x1078] sm:$0xff]
        %v764 = vld [vmem:[%s193 + $0x1080] sm:$0xff]
        %v765 = vld [vmem:[%s193 + $0x1088] sm:$0xff]
        %v766 = vld [vmem:[%s193 + $0x1090] sm:$0xff]
        %v767 = vld [vmem:[%s193 + $0x1098] sm:$0xff]
        %v768 = vld [vmem:[%s193 + $0x10a0] sm:$0xff]
        %v769 = vld [vmem:[%s193 + $0x10a8] sm:$0xff]
        %v770 = vld [vmem:[%s193 + $0x10b0] sm:$0xff]
        %v771 = vld [vmem:[%s193 + $0x10b8] sm:$0xff]
        %v772 = vld [vmem:[%s193 + $0x10c0] sm:$0xff]
        %v773 = vld [vmem:[%s193 + $0x10c8] sm:$0xff]
        %v774 = vld [vmem:[%s193 + $0x10d0] sm:$0xff]
        %v775 = vld [vmem:[%s193 + $0x10d8] sm:$0xff]
        %v776 = vld [vmem:[%s193 + $0x10e0] sm:$0xff]
        %v777 = vld [vmem:[%s193 + $0x10e8] sm:$0xff]
        %v778 = vld [vmem:[%s193 + $0x10f0] sm:$0xff]
        %v779 = vld [vmem:[%s193 + $0x10f8] sm:$0xff]
        %v780 = vld [vmem:[%s193 + $0x1100] sm:$0xff]
        %v781 = vld [vmem:[%s193 + $0x1108] sm:$0xff]
        %v782 = vld [vmem:[%s193 + $0x1110] sm:$0xff]
        %v783 = vld [vmem:[%s193 + $0x1118] sm:$0xff]
        %v784 = vld [vmem:[%s193 + $0x1120] sm:$0xff]
        %v785 = vld [vmem:[%s193 + $0x1128] sm:$0xff]
        %v786 = vld [vmem:[%s193 + $0x1130] sm:$0xff]
        %v787 = vld [vmem:[%s193 + $0x1138] sm:$0xff]
        %v788 = vld [vmem:[%s193 + $0x1140] sm:$0xff]
        %v789 = vld [vmem:[%s193 + $0x1148] sm:$0xff]
        %v790 = vld [vmem:[%s193 + $0x1150] sm:$0xff]
        %v791 = vld [vmem:[%s193 + $0x1158] sm:$0xff]
        %v792 = vld [vmem:[%s193 + $0x1160] sm:$0xff]
        %v793 = vld [vmem:[%s193 + $0x1168] sm:$0xff]
        %v794 = vld [vmem:[%s193 + $0x1170] sm:$0xff]
        %v795 = vld [vmem:[%s193 + $0x1178] sm:$0xff]
        %v796 = vld [vmem:[%s193 + $0x1180] sm:$0xff]
        %v797 = vld [vmem:[%s193 + $0x1188] sm:$0xff]
        %v798 = vld [vmem:[%s193 + $0x1190] sm:$0xff]
        %v799 = vld [vmem:[%s193 + $0x1198] sm:$0xff]
        %v800 = vld [vmem:[%s193 + $0x11a0] sm:$0xff]
        %v801 = vld [vmem:[%s193 + $0x11a8] sm:$0xff]
        %v802 = vld [vmem:[%s193 + $0x11b0] sm:$0xff]
        %v803 = vld [vmem:[%s193 + $0x11b8] sm:$0xff]
        %v804 = vld [vmem:[%s193 + $0x11c0] sm:$0xff]
        %v805 = vld [vmem:[%s193 + $0x11c8] sm:$0xff]
        %v806 = vld [vmem:[%s193 + $0x11d0] sm:$0xff]
        %v807 = vld [vmem:[%s193 + $0x11d8] sm:$0xff]
        %v808 = vld [vmem:[%s193 + $0x11e0] sm:$0xff]
        %v809 = vld [vmem:[%s193 + $0x11e8] sm:$0xff]
        %v810 = vld [vmem:[%s193 + $0x11f0] sm:$0xff]
        %v811 = vld [vmem:[%s193 + $0x11f8] sm:$0xff]
        %v812 = vld [vmem:[%s193 + $0x1200] sm:$0xff]
        %v813 = vld [vmem:[%s193 + $0x1208] sm:$0xff]
        %v814 = vld [vmem:[%s193 + $0x1210] sm:$0xff]
        %v815 = vld [vmem:[%s193 + $0x1218] sm:$0xff]
        %v816 = vld [vmem:[%s193 + $0x1220] sm:$0xff]
        %v817 = vld [vmem:[%s193 + $0x1228] sm:$0xff]
        %v818 = vld [vmem:[%s193 + $0x1230] sm:$0xff]
        %v819 = vld [vmem:[%s193 + $0x1238] sm:$0xff]
        %v820 = vld [vmem:[%s193 + $0x1240] sm:$0xff]
        %v821 = vld [vmem:[%s193 + $0x1248] sm:$0xff]
        %v822 = vld [vmem:[%s193 + $0x1250] sm:$0xff]
        %v823 = vld [vmem:[%s193 + $0x1258] sm:$0xff]
        %v824 = vld [vmem:[%s193 + $0x1260] sm:$0xff]
        %v825 = vld [vmem:[%s193 + $0x1268] sm:$0xff]
        %v826 = vld [vmem:[%s193 + $0x1270] sm:$0xff]
        %v827 = vld [vmem:[%s193 + $0x1278] sm:$0xff]
        %v828 = vld [vmem:[%s193 + $0x1280] sm:$0xff]
        %v829 = vld [vmem:[%s193 + $0x1288] sm:$0xff]
        %v830 = vld [vmem:[%s193 + $0x1290] sm:$0xff]
        %v831 = vld [vmem:[%s193 + $0x1298] sm:$0xff]
        %v832 = vld [vmem:[%s193 + $0x12a0] sm:$0xff]
        %v833 = vld [vmem:[%s193 + $0x12a8] sm:$0xff]
        %v834 = vld [vmem:[%s193 + $0x12b0] sm:$0xff]
        %v835 = vld [vmem:[%s193 + $0x12b8] sm:$0xff]
        %v836 = vld [vmem:[%s193 + $0x12c0] sm:$0xff]
        %v837 = vld [vmem:[%s193 + $0x12c8] sm:$0xff]
        %v838 = vld [vmem:[%s193 + $0x12d0] sm:$0xff]
        %v839 = vld [vmem:[%s193 + $0x12d8] sm:$0xff]
        %v840 = vld [vmem:[%s193 + $0x12e0] sm:$0xff]
        %v841 = vld [vmem:[%s193 + $0x12e8] sm:$0xff]
        %v842 = vld [vmem:[%s193 + $0x12f0] sm:$0xff]
        %v843 = vld [vmem:[%s193 + $0x12f8] sm:$0xff]
        %v844 = vld [vmem:[%s193 + $0x1300] sm:$0xff]
        %v845 = vld [vmem:[%s193 + $0x1308] sm:$0xff]
        %v846 = vld [vmem:[%s193 + $0x1310] sm:$0xff]
        %v847 = vld [vmem:[%s193 + $0x1318] sm:$0xff]
        %v848 = vld [vmem:[%s193 + $0x1320] sm:$0xff]
        %v849 = vld [vmem:[%s193 + $0x1328] sm:$0xff]
        %v850 = vld [vmem:[%s193 + $0x1330] sm:$0xff]
        %v851 = vld [vmem:[%s193 + $0x1338] sm:$0xff]
        %v852 = vld [vmem:[%s193 + $0x1340] sm:$0xff]
        %v853 = vld [vmem:[%s193 + $0x1348] sm:$0xff]
        %v854 = vld [vmem:[%s193 + $0x1350] sm:$0xff]
        %v855 = vld [vmem:[%s193 + $0x1358] sm:$0xff]
        %v856 = vld [vmem:[%s193 + $0x1360] sm:$0xff]
        %v857 = vld [vmem:[%s193 + $0x1368] sm:$0xff]
        %v858 = vld [vmem:[%s193 + $0x1370] sm:$0xff]
        %v859 = vld [vmem:[%s193 + $0x1378] sm:$0xff]
        %v860 = vld [vmem:[%s193 + $0x1380] sm:$0xff]
        %v861 = vld [vmem:[%s193 + $0x1388] sm:$0xff]
        %v862 = vld [vmem:[%s193 + $0x1390] sm:$0xff]
        %v863 = vld [vmem:[%s193 + $0x1398] sm:$0xff]
        %v864 = vld [vmem:[%s193 + $0x13a0] sm:$0xff]
        %v865 = vld [vmem:[%s193 + $0x13a8] sm:$0xff]
        %v866 = vld [vmem:[%s193 + $0x13b0] sm:$0xff]
        %v867 = vld [vmem:[%s193 + $0x13b8] sm:$0xff]
        %v868 = vld [vmem:[%s193 + $0x13c0] sm:$0xff]
        %v869 = vld [vmem:[%s193 + $0x13c8] sm:$0xff]
        %v870 = vld [vmem:[%s193 + $0x13d0] sm:$0xff]
        %v871 = vld [vmem:[%s193 + $0x13d8] sm:$0xff]
        %v872 = vld [vmem:[%s193 + $0x13e0] sm:$0xff]
        %v873 = vld [vmem:[%s193 + $0x13e8] sm:$0xff]
        %v874 = vld [vmem:[%s193 + $0x13f0] sm:$0xff]
        %v875 = vld [vmem:[%s193 + $0x13f8] sm:$0xff]
        %v876 = vld [vmem:[%s193 + $0x1400] sm:$0xff]
        %v877 = vld [vmem:[%s193 + $0x1408] sm:$0xff]
        %v878 = vld [vmem:[%s193 + $0x1410] sm:$0xff]
        %v879 = vld [vmem:[%s193 + $0x1418] sm:$0xff]
        %v880 = vld [vmem:[%s193 + $0x1420] sm:$0xff]
        %v881 = vld [vmem:[%s193 + $0x1428] sm:$0xff]
        %v882 = vld [vmem:[%s193 + $0x1430] sm:$0xff]
        %v883 = vld [vmem:[%s193 + $0x1438] sm:$0xff]
        %v884 = vld [vmem:[%s193 + $0x1440] sm:$0xff]
        %v885 = vld [vmem:[%s193 + $0x1448] sm:$0xff]
        %v886 = vld [vmem:[%s193 + $0x1450] sm:$0xff]
        %v887 = vld [vmem:[%s193 + $0x1458] sm:$0xff]
        %v888 = vld [vmem:[%s193 + $0x1460] sm:$0xff]
        %v889 = vld [vmem:[%s193 + $0x1468] sm:$0xff]
        %v890 = vld [vmem:[%s193 + $0x1470] sm:$0xff]
        %v891 = vld [vmem:[%s193 + $0x1478] sm:$0xff]
        %v892 = vld [vmem:[%s193 + $0x1480] sm:$0xff]
        %v893 = vld [vmem:[%s193 + $0x1488] sm:$0xff]
        %v894 = vld [vmem:[%s193 + $0x1490] sm:$0xff]
        %v895 = vld [vmem:[%s193 + $0x1498] sm:$0xff]
        %v896 = vld [vmem:[%s193 + $0x14a0] sm:$0xff]
        %v897 = vld [vmem:[%s193 + $0x14a8] sm:$0xff]
        %v898 = vld [vmem:[%s193 + $0x14b0] sm:$0xff]
        %v899 = vld [vmem:[%s193 + $0x14b8] sm:$0xff]
        %v900 = vld [vmem:[%s193 + $0x14c0] sm:$0xff]
        %v901 = vld [vmem:[%s193 + $0x14c8] sm:$0xff]
        %v902 = vld [vmem:[%s193 + $0x14d0] sm:$0xff]
        %v903 = vld [vmem:[%s193 + $0x14d8] sm:$0xff]
        %v904 = vld [vmem:[%s193 + $0x14e0] sm:$0xff]
        %v905 = vld [vmem:[%s193 + $0x14e8] sm:$0xff]
        %v906 = vld [vmem:[%s193 + $0x14f0] sm:$0xff]
        %v907 = vld [vmem:[%s193 + $0x14f8] sm:$0xff]
        %v908 = vld [vmem:[%s193 + $0x1500] sm:$0xff]
        %v909 = vld [vmem:[%s193 + $0x1508] sm:$0xff]
        %v910 = vld [vmem:[%s193 + $0x1510] sm:$0xff]
        %v911 = vld [vmem:[%s193 + $0x1518] sm:$0xff]
        %v912 = vld [vmem:[%s193 + $0x1520] sm:$0xff]
        %v913 = vld [vmem:[%s193 + $0x1528] sm:$0xff]
        %v914 = vld [vmem:[%s193 + $0x1530] sm:$0xff]
        %v915 = vld [vmem:[%s193 + $0x1538] sm:$0xff]
        %v916 = vld [vmem:[%s193 + $0x1540] sm:$0xff]
        %v917 = vld [vmem:[%s193 + $0x1548] sm:$0xff]
        %v918 = vld [vmem:[%s193 + $0x1550] sm:$0xff]
        %v919 = vld [vmem:[%s193 + $0x1558] sm:$0xff]
        %v920 = vld [vmem:[%s193 + $0x1560] sm:$0xff]
        %v921 = vld [vmem:[%s193 + $0x1568] sm:$0xff]
        %v922 = vld [vmem:[%s193 + $0x1570] sm:$0xff]
        %v923 = vld [vmem:[%s193 + $0x1578] sm:$0xff]
        %v924 = vld [vmem:[%s193 + $0x1580] sm:$0xff]
        %v925 = vld [vmem:[%s193 + $0x1588] sm:$0xff]
        %v926 = vld [vmem:[%s193 + $0x1590] sm:$0xff]
        %v927 = vld [vmem:[%s193 + $0x1598] sm:$0xff]
        %v928 = vld [vmem:[%s193 + $0x15a0] sm:$0xff]
        %v929 = vld [vmem:[%s193 + $0x15a8] sm:$0xff]
        %v930 = vld [vmem:[%s193 + $0x15b0] sm:$0xff]
        %v931 = vld [vmem:[%s193 + $0x15b8] sm:$0xff]
        %v932 = vld [vmem:[%s193 + $0x15c0] sm:$0xff]
        %v933 = vld [vmem:[%s193 + $0x15c8] sm:$0xff]
        %v934 = vld [vmem:[%s193 + $0x15d0] sm:$0xff]
        %v935 = vld [vmem:[%s193 + $0x15d8] sm:$0xff]
        %v936 = vld [vmem:[%s193 + $0x15e0] sm:$0xff]
        %v937 = vld [vmem:[%s193 + $0x15e8] sm:$0xff]
        %v938 = vld [vmem:[%s193 + $0x15f0] sm:$0xff]
        %v939 = vld [vmem:[%s193 + $0x15f8] sm:$0xff]
        %v940 = vld [vmem:[%s193 + $0x1600] sm:$0xff]
        %v941 = vld [vmem:[%s193 + $0x1608] sm:$0xff]
        %v942 = vld [vmem:[%s193 + $0x1610] sm:$0xff]
        %v943 = vld [vmem:[%s193 + $0x1618] sm:$0xff]
        %v944 = vld [vmem:[%s193 + $0x1620] sm:$0xff]
        %v945 = vld [vmem:[%s193 + $0x1628] sm:$0xff]
        %v946 = vld [vmem:[%s193 + $0x1630] sm:$0xff]
        %v947 = vld [vmem:[%s193 + $0x1638] sm:$0xff]
        %v948 = vld [vmem:[%s193 + $0x1640] sm:$0xff]
        %v949 = vld [vmem:[%s193 + $0x1648] sm:$0xff]
        %v950 = vld [vmem:[%s193 + $0x1650] sm:$0xff]
        %v951 = vld [vmem:[%s193 + $0x1658] sm:$0xff]
        %v952 = vld [vmem:[%s193 + $0x1660] sm:$0xff]
        %v953 = vld [vmem:[%s193 + $0x1668] sm:$0xff]
        %v954 = vld [vmem:[%s193 + $0x1670] sm:$0xff]
        %v955 = vld [vmem:[%s193 + $0x1678] sm:$0xff]
        %v956 = vld [vmem:[%s193 + $0x1680] sm:$0xff]
        %v957 = vld [vmem:[%s193 + $0x1688] sm:$0xff]
        %v958 = vld [vmem:[%s193 + $0x1690] sm:$0xff]
        %v959 = vld [vmem:[%s193 + $0x1698] sm:$0xff]
        %v960 = vld [vmem:[%s193 + $0x16a0] sm:$0xff]
        %v961 = vld [vmem:[%s193 + $0x16a8] sm:$0xff]
        %v962 = vld [vmem:[%s193 + $0x16b0] sm:$0xff]
        %v963 = vld [vmem:[%s193 + $0x16b8] sm:$0xff]
        %v964 = vld [vmem:[%s193 + $0x16c0] sm:$0xff]
        %v965 = vld [vmem:[%s193 + $0x16c8] sm:$0xff]
        %v966 = vld [vmem:[%s193 + $0x16d0] sm:$0xff]
        %v967 = vld [vmem:[%s193 + $0x16d8] sm:$0xff]
        %v968 = vld [vmem:[%s193 + $0x16e0] sm:$0xff]
        %v969 = vld [vmem:[%s193 + $0x16e8] sm:$0xff]
        %v970 = vld [vmem:[%s193 + $0x16f0] sm:$0xff]
        %v971 = vld [vmem:[%s193 + $0x16f8] sm:$0xff]
        %v972 = vld [vmem:[%s193 + $0x1700] sm:$0xff]
        %v973 = vld [vmem:[%s193 + $0x1708] sm:$0xff]
        %v974 = vld [vmem:[%s193 + $0x1710] sm:$0xff]
        %v975 = vld [vmem:[%s193 + $0x1718] sm:$0xff]
        %v976 = vld [vmem:[%s193 + $0x1720] sm:$0xff]
        %v977 = vld [vmem:[%s193 + $0x1728] sm:$0xff]
        %v978 = vld [vmem:[%s193 + $0x1730] sm:$0xff]
        %v979 = vld [vmem:[%s193 + $0x1738] sm:$0xff]
        %v980 = vld [vmem:[%s193 + $0x1740] sm:$0xff]
        %v981 = vld [vmem:[%s193 + $0x1748] sm:$0xff]
        %v982 = vld [vmem:[%s193 + $0x1750] sm:$0xff]
        %v983 = vld [vmem:[%s193 + $0x1758] sm:$0xff]
        %v984 = vld [vmem:[%s193 + $0x1760] sm:$0xff]
        %v985 = vld [vmem:[%s193 + $0x1768] sm:$0xff]
        %v986 = vld [vmem:[%s193 + $0x1770] sm:$0xff]
        %v987 = vld [vmem:[%s193 + $0x1778] sm:$0xff]
        %v988 = vld [vmem:[%s193 + $0x1780] sm:$0xff]
        %v989 = vld [vmem:[%s193 + $0x1788] sm:$0xff]
        %v990 = vld [vmem:[%s193 + $0x1790] sm:$0xff]
        %v991 = vld [vmem:[%s193 + $0x1798] sm:$0xff]
        %v992 = vld [vmem:[%s193 + $0x17a0] sm:$0xff]
        %v993 = vld [vmem:[%s193 + $0x17a8] sm:$0xff]
        %v994 = vld [vmem:[%s193 + $0x17b0] sm:$0xff]
        %v995 = vld [vmem:[%s193 + $0x17b8] sm:$0xff]
        %v996 = vld [vmem:[%s193 + $0x17c0] sm:$0xff]
        %v997 = vld [vmem:[%s193 + $0x17c8] sm:$0xff]
        %v998 = vld [vmem:[%s193 + $0x17d0] sm:$0xff]
        %v999 = vld [vmem:[%s193 + $0x17d8] sm:$0xff]
        %v1000 = vld [vmem:[%s193 + $0x17e0] sm:$0xff]
        %v1001 = vld [vmem:[%s193 + $0x17e8] sm:$0xff]
        %v1002 = vld [vmem:[%s193 + $0x17f0] sm:$0xff]
        %v1003 = vld [vmem:[%s193 + $0x17f8] sm:$0xff]
        %v1004 = vld [vmem:[%s193 + $0x1800] sm:$0xff]
        %v1005 = vld [vmem:[%s193 + $0x1808] sm:$0xff]
        %v1006 = vld [vmem:[%s193 + $0x1810] sm:$0xff]
        %v1007 = vld [vmem:[%s193 + $0x1818] sm:$0xff]
        %v1008 = vld [vmem:[%s193 + $0x1820] sm:$0xff]
        %v1009 = vld [vmem:[%s193 + $0x1828] sm:$0xff]
        %v1010 = vld [vmem:[%s193 + $0x1830] sm:$0xff]
        %v1011 = vld [vmem:[%s193 + $0x1838] sm:$0xff]
        %v1012 = vld [vmem:[%s193 + $0x1840] sm:$0xff]
        %v1013 = vld [vmem:[%s193 + $0x1848] sm:$0xff]
        %v1014 = vld [vmem:[%s193 + $0x1850] sm:$0xff]
        %v1015 = vld [vmem:[%s193 + $0x1858] sm:$0xff]
        %v1016 = vld [vmem:[%s193 + $0x1860] sm:$0xff]
        %v1017 = vld [vmem:[%s193 + $0x1868] sm:$0xff]
        %v1018 = vld [vmem:[%s193 + $0x1870] sm:$0xff]
        %v1019 = vld [vmem:[%s193 + $0x1878] sm:$0xff]
        %v1020 = vld [vmem:[%s193 + $0x1880] sm:$0xff]
        %v1021 = vld [vmem:[%s193 + $0x1888] sm:$0xff]
        %v1022 = vld [vmem:[%s193 + $0x1890] sm:$0xff]
        %v1023 = vld [vmem:[%s193 + $0x1898] sm:$0xff]
        %v1024 = vld [vmem:[%s193 + $0x18a0] sm:$0xff]
        %v1025 = vld [vmem:[%s193 + $0x18a8] sm:$0xff]
        %v1026 = vld [vmem:[%s193 + $0x18b0] sm:$0xff]
        %v1027 = vld [vmem:[%s193 + $0x18b8] sm:$0xff]
        %v1028 = vld [vmem:[%s193 + $0x18c0] sm:$0xff]
        %v1029 = vld [vmem:[%s193 + $0x18c8] sm:$0xff]
        %v1030 = vld [vmem:[%s193 + $0x18d0] sm:$0xff]
        %v1031 = vld [vmem:[%s193 + $0x18d8] sm:$0xff]
        %v1032 = vld [vmem:[%s193 + $0x18e0] sm:$0xff]
        %v1033 = vld [vmem:[%s193 + $0x18e8] sm:$0xff]
        %v1034 = vld [vmem:[%s193 + $0x18f0] sm:$0xff]
        %v1035 = vld [vmem:[%s193 + $0x18f8] sm:$0xff]
        %v1036 = vld [vmem:[%s193 + $0x1900] sm:$0xff]
        %v1037 = vld [vmem:[%s193 + $0x1908] sm:$0xff]
        %v1038 = vld [vmem:[%s193 + $0x1910] sm:$0xff]
        %v1039 = vld [vmem:[%s193 + $0x1918] sm:$0xff]
        %v1040 = vld [vmem:[%s193 + $0x1920] sm:$0xff]
        %v1041 = vld [vmem:[%s193 + $0x1928] sm:$0xff]
        %v1042 = vld [vmem:[%s193 + $0x1930] sm:$0xff]
        %v1043 = vld [vmem:[%s193 + $0x1938] sm:$0xff]
        %v1044 = vld [vmem:[%s193 + $0x1940] sm:$0xff]
        %v1045 = vld [vmem:[%s193 + $0x1948] sm:$0xff]
        %v1046 = vld [vmem:[%s193 + $0x1950] sm:$0xff]
        %v1047 = vld [vmem:[%s193 + $0x1958] sm:$0xff]
        %v1048 = vld [vmem:[%s193 + $0x1960] sm:$0xff]
        %v1049 = vld [vmem:[%s193 + $0x1968] sm:$0xff]
        %v1050 = vld [vmem:[%s193 + $0x1970] sm:$0xff]
        %v1051 = vld [vmem:[%s193 + $0x1978] sm:$0xff]
        %v1052 = vld [vmem:[%s193 + $0x1980] sm:$0xff]
        %v1053 = vld [vmem:[%s193 + $0x1988] sm:$0xff]
        %v1054 = vld [vmem:[%s193 + $0x1990] sm:$0xff]
        %v1055 = vld [vmem:[%s193 + $0x1998] sm:$0xff]
        %v1056 = vld [vmem:[%s193 + $0x19a0] sm:$0xff]
        %v1057 = vld [vmem:[%s193 + $0x19a8] sm:$0xff]
        %v1058 = vld [vmem:[%s193 + $0x19b0] sm:$0xff]
        %v1059 = vld [vmem:[%s193 + $0x19b8] sm:$0xff]
        %v1060 = vld [vmem:[%s193 + $0x19c0] sm:$0xff]
        %v1061 = vld [vmem:[%s193 + $0x19c8] sm:$0xff]
        %v1062 = vld [vmem:[%s193 + $0x19d0] sm:$0xff]
        %v1063 = vld [vmem:[%s193 + $0x19d8] sm:$0xff]
        %v1064 = vld [vmem:[%s193 + $0x19e0] sm:$0xff]
        %v1065 = vld [vmem:[%s193 + $0x19e8] sm:$0xff]
        %v1066 = vld [vmem:[%s193 + $0x19f0] sm:$0xff]
        %v1067 = vld [vmem:[%s193 + $0x19f8] sm:$0xff]
        %v1068 = vld [vmem:[%s193 + $0x1a00] sm:$0xff]
        %v1069 = vld [vmem:[%s193 + $0x1a08] sm:$0xff]
        %v1070 = vld [vmem:[%s193 + $0x1a10] sm:$0xff]
        %v1071 = vld [vmem:[%s193 + $0x1a18] sm:$0xff]
        %v1072 = vld [vmem:[%s193 + $0x1a20] sm:$0xff]
        %v1073 = vld [vmem:[%s193 + $0x1a28] sm:$0xff]
        %v1074 = vld [vmem:[%s193 + $0x1a30] sm:$0xff]
        %v1075 = vld [vmem:[%s193 + $0x1a38] sm:$0xff]
        %v1076 = vld [vmem:[%s193 + $0x1a40] sm:$0xff]
        %v1077 = vld [vmem:[%s193 + $0x1a48] sm:$0xff]
        %v1078 = vld [vmem:[%s193 + $0x1a50] sm:$0xff]
        %v1079 = vld [vmem:[%s193 + $0x1a58] sm:$0xff]
        %v1080 = vld [vmem:[%s193 + $0x1a60] sm:$0xff]
        %v1081 = vld [vmem:[%s193 + $0x1a68] sm:$0xff]
        %v1082 = vld [vmem:[%s193 + $0x1a70] sm:$0xff]
        %v1083 = vld [vmem:[%s193 + $0x1a78] sm:$0xff]
        %v1084 = vld [vmem:[%s193 + $0x1a80] sm:$0xff]
        %v1085 = vld [vmem:[%s193 + $0x1a88] sm:$0xff]
        %v1086 = vld [vmem:[%s193 + $0x1a90] sm:$0xff]
        %v1087 = vld [vmem:[%s193 + $0x1a98] sm:$0xff]
        %v1088 = vld [vmem:[%s193 + $0x1aa0] sm:$0xff]
        %v1089 = vld [vmem:[%s193 + $0x1aa8] sm:$0xff]
        %v1090 = vld [vmem:[%s193 + $0x1ab0] sm:$0xff]
        %v1091 = vld [vmem:[%s193 + $0x1ab8] sm:$0xff]
        %v1092 = vld [vmem:[%s193 + $0x1ac0] sm:$0xff]
        %v1093 = vld [vmem:[%s193 + $0x1ac8] sm:$0xff]
        %v1094 = vld [vmem:[%s193 + $0x1ad0] sm:$0xff]
        %v1095 = vld [vmem:[%s193 + $0x1ad8] sm:$0xff]
        %v1096 = vld [vmem:[%s193 + $0x1ae0] sm:$0xff]
        %v1097 = vld [vmem:[%s193 + $0x1ae8] sm:$0xff]
        %v1098 = vld [vmem:[%s193 + $0x1af0] sm:$0xff]
        %v1099 = vld [vmem:[%s193 + $0x1af8] sm:$0xff]
        %v1100 = vld [vmem:[%s193 + $0x1b00] sm:$0xff]
        %v1101 = vld [vmem:[%s193 + $0x1b08] sm:$0xff]
        %v1102 = vld [vmem:[%s193 + $0x1b10] sm:$0xff]
        %v1103 = vld [vmem:[%s193 + $0x1b18] sm:$0xff]
        %v1104 = vld [vmem:[%s193 + $0x1b20] sm:$0xff]
        %v1105 = vld [vmem:[%s193 + $0x1b28] sm:$0xff]
        %v1106 = vld [vmem:[%s193 + $0x1b30] sm:$0xff]
        %v1107 = vld [vmem:[%s193 + $0x1b38] sm:$0xff]
        %v1108 = vld [vmem:[%s193 + $0x1b40] sm:$0xff]
        %v1109 = vld [vmem:[%s193 + $0x1b48] sm:$0xff]
        %v1110 = vld [vmem:[%s193 + $0x1b50] sm:$0xff]
        %v1111 = vld [vmem:[%s193 + $0x1b58] sm:$0xff]
        %v1112 = vld [vmem:[%s193 + $0x1b60] sm:$0xff]
        %v1113 = vld [vmem:[%s193 + $0x1b68] sm:$0xff]
        %v1114 = vld [vmem:[%s193 + $0x1b70] sm:$0xff]
        %v1115 = vld [vmem:[%s193 + $0x1b78] sm:$0xff]
        %v1116 = vld [vmem:[%s193 + $0x1b80] sm:$0xff]
        %v1117 = vld [vmem:[%s193 + $0x1b88] sm:$0xff]
        %v1118 = vld [vmem:[%s193 + $0x1b90] sm:$0xff]
        %v1119 = vld [vmem:[%s193 + $0x1b98] sm:$0xff]
        %v1120 = vld [vmem:[%s193 + $0x1ba0] sm:$0xff]
        %v1121 = vld [vmem:[%s193 + $0x1ba8] sm:$0xff]
        %v1122 = vld [vmem:[%s193 + $0x1bb0] sm:$0xff]
        %v1123 = vld [vmem:[%s193 + $0x1bb8] sm:$0xff]
        %v1124 = vld [vmem:[%s193 + $0x1bc0] sm:$0xff]
        %v1125 = vld [vmem:[%s193 + $0x1bc8] sm:$0xff]
        %v1126 = vld [vmem:[%s193 + $0x1bd0] sm:$0xff]
        %v1127 = vld [vmem:[%s193 + $0x1bd8] sm:$0xff]
        %v1128 = vld [vmem:[%s193 + $0x1be0] sm:$0xff]
        %v1129 = vld [vmem:[%s193 + $0x1be8] sm:$0xff]
        %v1130 = vld [vmem:[%s193 + $0x1bf0] sm:$0xff]
        %v1131 = vld [vmem:[%s193 + $0x1bf8] sm:$0xff]
        %v1132 = vld [vmem:[%s193 + $0x1c00] sm:$0xff]
        %v1133 = vld [vmem:[%s193 + $0x1c08] sm:$0xff]
        %v1134 = vld [vmem:[%s193 + $0x1c10] sm:$0xff]
        %v1135 = vld [vmem:[%s193 + $0x1c18] sm:$0xff]
        %v1136 = vld [vmem:[%s193 + $0x1c20] sm:$0xff]
        %v1137 = vld [vmem:[%s193 + $0x1c28] sm:$0xff]
        %v1138 = vld [vmem:[%s193 + $0x1c30] sm:$0xff]
        %v1139 = vld [vmem:[%s193 + $0x1c38] sm:$0xff]
        %v1140 = vld [vmem:[%s193 + $0x1c40] sm:$0xff]
        %v1141 = vld [vmem:[%s193 + $0x1c48] sm:$0xff]
        %v1142 = vld [vmem:[%s193 + $0x1c50] sm:$0xff]
        %v1143 = vld [vmem:[%s193 + $0x1c58] sm:$0xff]
        %v1144 = vld [vmem:[%s193 + $0x1c60] sm:$0xff]
        %v1145 = vld [vmem:[%s193 + $0x1c68] sm:$0xff]
        %v1146 = vld [vmem:[%s193 + $0x1c70] sm:$0xff]
        %v1147 = vld [vmem:[%s193 + $0x1c78] sm:$0xff]
        %v1148 = vld [vmem:[%s193 + $0x1c80] sm:$0xff]
        %v1149 = vld [vmem:[%s193 + $0x1c88] sm:$0xff]
        %v1150 = vld [vmem:[%s193 + $0x1c90] sm:$0xff]
        %v1151 = vld [vmem:[%s193 + $0x1c98] sm:$0xff]
        %v1152 = vld [vmem:[%s193 + $0x1ca0] sm:$0xff]
        %v1153 = vld [vmem:[%s193 + $0x1ca8] sm:$0xff]
        %v1154 = vld [vmem:[%s193 + $0x1cb0] sm:$0xff]
        %v1155 = vld [vmem:[%s193 + $0x1cb8] sm:$0xff]
        %v1156 = vld [vmem:[%s193 + $0x1cc0] sm:$0xff]
        %v1157 = vld [vmem:[%s193 + $0x1cc8] sm:$0xff]
        %v1158 = vld [vmem:[%s193 + $0x1cd0] sm:$0xff]
        %v1159 = vld [vmem:[%s193 + $0x1cd8] sm:$0xff]
        %v1160 = vld [vmem:[%s193 + $0x1ce0] sm:$0xff]
        %v1161 = vld [vmem:[%s193 + $0x1ce8] sm:$0xff]
        %v1162 = vld [vmem:[%s193 + $0x1cf0] sm:$0xff]
        %v1163 = vld [vmem:[%s193 + $0x1cf8] sm:$0xff]
        %v1164 = vld [vmem:[%s193 + $0x1d00] sm:$0xff]
        %v1165 = vld [vmem:[%s193 + $0x1d08] sm:$0xff]
        %v1166 = vld [vmem:[%s193 + $0x1d10] sm:$0xff]
        %v1167 = vld [vmem:[%s193 + $0x1d18] sm:$0xff]
        %v1168 = vld [vmem:[%s193 + $0x1d20] sm:$0xff]
        %v1169 = vld [vmem:[%s193 + $0x1d28] sm:$0xff]
        %v1170 = vld [vmem:[%s193 + $0x1d30] sm:$0xff]
        %v1171 = vld [vmem:[%s193 + $0x1d38] sm:$0xff]
        %v1172 = vld [vmem:[%s193 + $0x1d40] sm:$0xff]
        %v1173 = vld [vmem:[%s193 + $0x1d48] sm:$0xff]
        %v1174 = vld [vmem:[%s193 + $0x1d50] sm:$0xff]
        %v1175 = vld [vmem:[%s193 + $0x1d58] sm:$0xff]
        %v1176 = vld [vmem:[%s193 + $0x1d60] sm:$0xff]
        %v1177 = vld [vmem:[%s193 + $0x1d68] sm:$0xff]
        %v1178 = vld [vmem:[%s193 + $0x1d70] sm:$0xff]
        %v1179 = vld [vmem:[%s193 + $0x1d78] sm:$0xff]
        %v1180 = vld [vmem:[%s193 + $0x1d80] sm:$0xff]
        %v1181 = vld [vmem:[%s193 + $0x1d88] sm:$0xff]
        %v1182 = vld [vmem:[%s193 + $0x1d90] sm:$0xff]
        %v1183 = vld [vmem:[%s193 + $0x1d98] sm:$0xff]
        %v1184 = vld [vmem:[%s193 + $0x1da0] sm:$0xff]
        %v1185 = vld [vmem:[%s193 + $0x1da8] sm:$0xff]
        %v1186 = vld [vmem:[%s193 + $0x1db0] sm:$0xff]
        %v1187 = vld [vmem:[%s193 + $0x1db8] sm:$0xff]
        %v1188 = vld [vmem:[%s193 + $0x1dc0] sm:$0xff]
        %v1189 = vld [vmem:[%s193 + $0x1dc8] sm:$0xff]
        %v1190 = vld [vmem:[%s193 + $0x1dd0] sm:$0xff]
        %v1191 = vld [vmem:[%s193 + $0x1dd8] sm:$0xff]
        %v1192 = vld [vmem:[%s193 + $0x1de0] sm:$0xff]
        %v1193 = vld [vmem:[%s193 + $0x1de8] sm:$0xff]
        %v1194 = vld [vmem:[%s193 + $0x1df0] sm:$0xff]
        %v1195 = vld [vmem:[%s193 + $0x1df8] sm:$0xff]
        %v1196 = vld [vmem:[%s193 + $0x1e00] sm:$0xff]
        %v1197 = vld [vmem:[%s193 + $0x1e08] sm:$0xff]
        %v1198 = vld [vmem:[%s193 + $0x1e10] sm:$0xff]
        %v1199 = vld [vmem:[%s193 + $0x1e18] sm:$0xff]
        %v1200 = vld [vmem:[%s193 + $0x1e20] sm:$0xff]
        %v1201 = vld [vmem:[%s193 + $0x1e28] sm:$0xff]
        %v1202 = vld [vmem:[%s193 + $0x1e30] sm:$0xff]
        %v1203 = vld [vmem:[%s193 + $0x1e38] sm:$0xff]
        %v1204 = vld [vmem:[%s193 + $0x1e40] sm:$0xff]
        %v1205 = vld [vmem:[%s193 + $0x1e48] sm:$0xff]
        %v1206 = vld [vmem:[%s193 + $0x1e50] sm:$0xff]
        %v1207 = vld [vmem:[%s193 + $0x1e58] sm:$0xff]
        %v1208 = vld [vmem:[%s193 + $0x1e60] sm:$0xff]
        %v1209 = vld [vmem:[%s193 + $0x1e68] sm:$0xff]
        %v1210 = vld [vmem:[%s193 + $0x1e70] sm:$0xff]
        %v1211 = vld [vmem:[%s193 + $0x1e78] sm:$0xff]
        %v1212 = vld [vmem:[%s193 + $0x1e80] sm:$0xff]
        %v1213 = vld [vmem:[%s193 + $0x1e88] sm:$0xff]
        %v1214 = vld [vmem:[%s193 + $0x1e90] sm:$0xff]
        %v1215 = vld [vmem:[%s193 + $0x1e98] sm:$0xff]
        %v1216 = vld [vmem:[%s193 + $0x1ea0] sm:$0xff]
        %v1217 = vld [vmem:[%s193 + $0x1ea8] sm:$0xff]
        %v1218 = vld [vmem:[%s193 + $0x1eb0] sm:$0xff]
        %v1219 = vld [vmem:[%s193 + $0x1eb8] sm:$0xff]
        %v1220 = vld [vmem:[%s193 + $0x1ec0] sm:$0xff]
        %v1221 = vld [vmem:[%s193 + $0x1ec8] sm:$0xff]
        %v1222 = vld [vmem:[%s193 + $0x1ed0] sm:$0xff]
        %v1223 = vld [vmem:[%s193 + $0x1ed8] sm:$0xff]
        %v1224 = vld [vmem:[%s193 + $0x1ee0] sm:$0xff]
        %v1225 = vld [vmem:[%s193 + $0x1ee8] sm:$0xff]
        %v1226 = vld [vmem:[%s193 + $0x1ef0] sm:$0xff]
        %v1227 = vld [vmem:[%s193 + $0x1ef8] sm:$0xff]
        %v1228 = vld [vmem:[%s193 + $0x1f00] sm:$0xff]
        %v1229 = vld [vmem:[%s193 + $0x1f08] sm:$0xff]
        %v1230 = vld [vmem:[%s193 + $0x1f10] sm:$0xff]
        %v1231 = vld [vmem:[%s193 + $0x1f18] sm:$0xff]
        %v1232 = vld [vmem:[%s193 + $0x1f20] sm:$0xff]
        %v1233 = vld [vmem:[%s193 + $0x1f28] sm:$0xff]
        %v1234 = vld [vmem:[%s193 + $0x1f30] sm:$0xff]
        %v1235 = vld [vmem:[%s193 + $0x1f38] sm:$0xff]
        %v1236 = vld [vmem:[%s193 + $0x1f40] sm:$0xff]
        %v1237 = vld [vmem:[%s193 + $0x1f48] sm:$0xff]
        %v1238 = vld [vmem:[%s193 + $0x1f50] sm:$0xff]
        %v1239 = vld [vmem:[%s193 + $0x1f58] sm:$0xff]
        %v1240 = vld [vmem:[%s193 + $0x1f60] sm:$0xff]
        %v1241 = vld [vmem:[%s193 + $0x1f68] sm:$0xff]
        %v1242 = vld [vmem:[%s193 + $0x1f70] sm:$0xff]
        %v1243 = vld [vmem:[%s193 + $0x1f78] sm:$0xff]
        %v1244 = vld [vmem:[%s193 + $0x1f80] sm:$0xff]
        %v1245 = vld [vmem:[%s193 + $0x1f88] sm:$0xff]
        %v1246 = vld [vmem:[%s193 + $0x1f90] sm:$0xff]
        %v1247 = vld [vmem:[%s193 + $0x1f98] sm:$0xff]
        %v1248 = vld [vmem:[%s193 + $0x1fa0] sm:$0xff]
        %v1249 = vld [vmem:[%s193 + $0x1fa8] sm:$0xff]
        %v1250 = vld [vmem:[%s193 + $0x1fb0] sm:$0xff]
        %v1251 = vld [vmem:[%s193 + $0x1fb8] sm:$0xff]
        %v1252 = vld [vmem:[%s193 + $0x1fc0] sm:$0xff]
        %v1253 = vld [vmem:[%s193 + $0x1fc8] sm:$0xff]
        %v1254 = vld [vmem:[%s193 + $0x1fd0] sm:$0xff]
        %v1255 = vld [vmem:[%s193 + $0x1fd8] sm:$0xff]
        %v1256 = vld [vmem:[%s193 + $0x1fe0] sm:$0xff]
        %v1257 = vld [vmem:[%s193 + $0x1fe8] sm:$0xff]
        %v1258 = vld [vmem:[%s193 + $0x1ff0] sm:$0xff]
        %v1259 = vld [vmem:[%s193 + $0x1ff8] sm:$0xff]
        %v1260 = vld [vmem:[%s203] sm:$0xff]
        %v1261 = vld [vmem:[%s203 + $0x8] sm:$0xff]
        %v1262 = vld [vmem:[%s203 + $0x10] sm:$0xff]
        %v1263 = vld [vmem:[%s203 + $0x18] sm:$0xff]
        %v1264 = vld [vmem:[%s203 + $0x20] sm:$0xff]
        %v1265 = vld [vmem:[%s203 + $0x28] sm:$0xff]
        %v1266 = vld [vmem:[%s203 + $0x30] sm:$0xff]
        %v1267 = vld [vmem:[%s203 + $0x38] sm:$0xff]
        %v1268 = vld [vmem:[%s203 + $0x40] sm:$0xff]
        %v1269 = vld [vmem:[%s203 + $0x48] sm:$0xff]
        %v1270 = vld [vmem:[%s203 + $0x50] sm:$0xff]
        %v1271 = vld [vmem:[%s203 + $0x58] sm:$0xff]
        %v1272 = vld [vmem:[%s203 + $0x60] sm:$0xff]
        %v1273 = vld [vmem:[%s203 + $0x68] sm:$0xff]
        %v1274 = vld [vmem:[%s203 + $0x70] sm:$0xff]
        %v1275 = vld [vmem:[%s203 + $0x78] sm:$0xff]
        %v1276 = vld [vmem:[%s203 + $0x80] sm:$0xff]
        %v1277 = vld [vmem:[%s203 + $0x88] sm:$0xff]
        %v1278 = vld [vmem:[%s203 + $0x90] sm:$0xff]
        %v1279 = vld [vmem:[%s203 + $0x98] sm:$0xff]
        %v1280 = vld [vmem:[%s203 + $0xa0] sm:$0xff]
        %v1281 = vld [vmem:[%s203 + $0xa8] sm:$0xff]
        %v1282 = vld [vmem:[%s203 + $0xb0] sm:$0xff]
        %v1283 = vld [vmem:[%s203 + $0xb8] sm:$0xff]
        %v1284 = vld [vmem:[%s203 + $0xc0] sm:$0xff]
        %v1285 = vld [vmem:[%s203 + $0xc8] sm:$0xff]
        %v1286 = vld [vmem:[%s203 + $0xd0] sm:$0xff]
        %v1287 = vld [vmem:[%s203 + $0xd8] sm:$0xff]
        %v1288 = vld [vmem:[%s203 + $0xe0] sm:$0xff]
        %v1289 = vld [vmem:[%s203 + $0xe8] sm:$0xff]
        %v1290 = vld [vmem:[%s203 + $0xf0] sm:$0xff]
        %v1291 = vld [vmem:[%s203 + $0xf8] sm:$0xff]
        %v1292 = vld [vmem:[%s203 + $0x100] sm:$0xff]
        %v1293 = vld [vmem:[%s203 + $0x108] sm:$0xff]
        %v1294 = vld [vmem:[%s203 + $0x110] sm:$0xff]
        %v1295 = vld [vmem:[%s203 + $0x118] sm:$0xff]
        %v1296 = vld [vmem:[%s203 + $0x120] sm:$0xff]
        %v1297 = vld [vmem:[%s203 + $0x128] sm:$0xff]
        %v1298 = vld [vmem:[%s203 + $0x130] sm:$0xff]
        %v1299 = vld [vmem:[%s203 + $0x138] sm:$0xff]
        %v1300 = vld [vmem:[%s203 + $0x140] sm:$0xff]
        %v1301 = vld [vmem:[%s203 + $0x148] sm:$0xff]
        %v1302 = vld [vmem:[%s203 + $0x150] sm:$0xff]
        %v1303 = vld [vmem:[%s203 + $0x158] sm:$0xff]
        %v1304 = vld [vmem:[%s203 + $0x160] sm:$0xff]
        %v1305 = vld [vmem:[%s203 + $0x168] sm:$0xff]
        %v1306 = vld [vmem:[%s203 + $0x170] sm:$0xff]
        %v1307 = vld [vmem:[%s203 + $0x178] sm:$0xff]
        %v1308 = vld [vmem:[%s203 + $0x180] sm:$0xff]
        %v1309 = vld [vmem:[%s203 + $0x188] sm:$0xff]
        %v1310 = vld [vmem:[%s203 + $0x190] sm:$0xff]
        %v1311 = vld [vmem:[%s203 + $0x198] sm:$0xff]
        %v1312 = vld [vmem:[%s203 + $0x1a0] sm:$0xff]
        %v1313 = vld [vmem:[%s203 + $0x1a8] sm:$0xff]
        %v1314 = vld [vmem:[%s203 + $0x1b0] sm:$0xff]
        %v1315 = vld [vmem:[%s203 + $0x1b8] sm:$0xff]
        %v1316 = vld [vmem:[%s203 + $0x1c0] sm:$0xff]
        %v1317 = vld [vmem:[%s203 + $0x1c8] sm:$0xff]
        %v1318 = vld [vmem:[%s203 + $0x1d0] sm:$0xff]
        %v1319 = vld [vmem:[%s203 + $0x1d8] sm:$0xff]
        %v1320 = vld [vmem:[%s203 + $0x1e0] sm:$0xff]
        %v1321 = vld [vmem:[%s203 + $0x1e8] sm:$0xff]
        %v1322 = vld [vmem:[%s203 + $0x1f0] sm:$0xff]
        %v1323 = vld [vmem:[%s203 + $0x1f8] sm:$0xff]
        %v1324 = vld [vmem:[%s203 + $0x200] sm:$0xff]
        %v1325 = vld [vmem:[%s203 + $0x208] sm:$0xff]
        %v1326 = vld [vmem:[%s203 + $0x210] sm:$0xff]
        %v1327 = vld [vmem:[%s203 + $0x218] sm:$0xff]
        %v1328 = vld [vmem:[%s203 + $0x220] sm:$0xff]
        %v1329 = vld [vmem:[%s203 + $0x228] sm:$0xff]
        %v1330 = vld [vmem:[%s203 + $0x230] sm:$0xff]
        %v1331 = vld [vmem:[%s203 + $0x238] sm:$0xff]
        %v1332 = vld [vmem:[%s203 + $0x240] sm:$0xff]
        %v1333 = vld [vmem:[%s203 + $0x248] sm:$0xff]
        %v1334 = vld [vmem:[%s203 + $0x250] sm:$0xff]
        %v1335 = vld [vmem:[%s203 + $0x258] sm:$0xff]
        %v1336 = vld [vmem:[%s203 + $0x260] sm:$0xff]
        %v1337 = vld [vmem:[%s203 + $0x268] sm:$0xff]
        %v1338 = vld [vmem:[%s203 + $0x270] sm:$0xff]
        %v1339 = vld [vmem:[%s203 + $0x278] sm:$0xff]
        %v1340 = vld [vmem:[%s203 + $0x280] sm:$0xff]
        %v1341 = vld [vmem:[%s203 + $0x288] sm:$0xff]
        %v1342 = vld [vmem:[%s203 + $0x290] sm:$0xff]
        %v1343 = vld [vmem:[%s203 + $0x298] sm:$0xff]
        %v1344 = vld [vmem:[%s203 + $0x2a0] sm:$0xff]
        %v1345 = vld [vmem:[%s203 + $0x2a8] sm:$0xff]
        %v1346 = vld [vmem:[%s203 + $0x2b0] sm:$0xff]
        %v1347 = vld [vmem:[%s203 + $0x2b8] sm:$0xff]
        %v1348 = vld [vmem:[%s203 + $0x2c0] sm:$0xff]
        %v1349 = vld [vmem:[%s203 + $0x2c8] sm:$0xff]
        %v1350 = vld [vmem:[%s203 + $0x2d0] sm:$0xff]
        %v1351 = vld [vmem:[%s203 + $0x2d8] sm:$0xff]
        %v1352 = vld [vmem:[%s203 + $0x2e0] sm:$0xff]
        %v1353 = vld [vmem:[%s203 + $0x2e8] sm:$0xff]
        %v1354 = vld [vmem:[%s203 + $0x2f0] sm:$0xff]
        %v1355 = vld [vmem:[%s203 + $0x2f8] sm:$0xff]
        %v1356 = vld [vmem:[%s203 + $0x300] sm:$0xff]
        %v1357 = vld [vmem:[%s203 + $0x308] sm:$0xff]
        %v1358 = vld [vmem:[%s203 + $0x310] sm:$0xff]
        %v1359 = vld [vmem:[%s203 + $0x318] sm:$0xff]
        %v1360 = vld [vmem:[%s203 + $0x320] sm:$0xff]
        %v1361 = vld [vmem:[%s203 + $0x328] sm:$0xff]
        %v1362 = vld [vmem:[%s203 + $0x330] sm:$0xff]
        %v1363 = vld [vmem:[%s203 + $0x338] sm:$0xff]
        %v1364 = vld [vmem:[%s203 + $0x340] sm:$0xff]
        %v1365 = vld [vmem:[%s203 + $0x348] sm:$0xff]
        %v1366 = vld [vmem:[%s203 + $0x350] sm:$0xff]
        %v1367 = vld [vmem:[%s203 + $0x358] sm:$0xff]
        %v1368 = vld [vmem:[%s203 + $0x360] sm:$0xff]
        %v1369 = vld [vmem:[%s203 + $0x368] sm:$0xff]
        %v1370 = vld [vmem:[%s203 + $0x370] sm:$0xff]
        %v1371 = vld [vmem:[%s203 + $0x378] sm:$0xff]
        %v1372 = vld [vmem:[%s203 + $0x380] sm:$0xff]
        %v1373 = vld [vmem:[%s203 + $0x388] sm:$0xff]
        %v1374 = vld [vmem:[%s203 + $0x390] sm:$0xff]
        %v1375 = vld [vmem:[%s203 + $0x398] sm:$0xff]
        %v1376 = vld [vmem:[%s203 + $0x3a0] sm:$0xff]
        %v1377 = vld [vmem:[%s203 + $0x3a8] sm:$0xff]
        %v1378 = vld [vmem:[%s203 + $0x3b0] sm:$0xff]
        %v1379 = vld [vmem:[%s203 + $0x3b8] sm:$0xff]
        %v1380 = vld [vmem:[%s203 + $0x3c0] sm:$0xff]
        %v1381 = vld [vmem:[%s203 + $0x3c8] sm:$0xff]
        %v1382 = vld [vmem:[%s203 + $0x3d0] sm:$0xff]
        %v1383 = vld [vmem:[%s203 + $0x3d8] sm:$0xff]
        %v1384 = vld [vmem:[%s203 + $0x3e0] sm:$0xff]
        %v1385 = vld [vmem:[%s203 + $0x3e8] sm:$0xff]
        %v1386 = vld [vmem:[%s203 + $0x3f0] sm:$0xff]
        %v1387 = vld [vmem:[%s203 + $0x3f8] sm:$0xff]
        %v1388 = vld [vmem:[%s203 + $0x400] sm:$0xff]
        %v1389 = vld [vmem:[%s203 + $0x408] sm:$0xff]
        %v1390 = vld [vmem:[%s203 + $0x410] sm:$0xff]
        %v1391 = vld [vmem:[%s203 + $0x418] sm:$0xff]
        %v1392 = vld [vmem:[%s203 + $0x420] sm:$0xff]
        %v1393 = vld [vmem:[%s203 + $0x428] sm:$0xff]
        %v1394 = vld [vmem:[%s203 + $0x430] sm:$0xff]
        %v1395 = vld [vmem:[%s203 + $0x438] sm:$0xff]
        %v1396 = vld [vmem:[%s203 + $0x440] sm:$0xff]
        %v1397 = vld [vmem:[%s203 + $0x448] sm:$0xff]
        %v1398 = vld [vmem:[%s203 + $0x450] sm:$0xff]
        %v1399 = vld [vmem:[%s203 + $0x458] sm:$0xff]
        %v1400 = vld [vmem:[%s203 + $0x460] sm:$0xff]
        %v1401 = vld [vmem:[%s203 + $0x468] sm:$0xff]
        %v1402 = vld [vmem:[%s203 + $0x470] sm:$0xff]
        %v1403 = vld [vmem:[%s203 + $0x478] sm:$0xff]
        %v1404 = vld [vmem:[%s203 + $0x480] sm:$0xff]
        %v1405 = vld [vmem:[%s203 + $0x488] sm:$0xff]
        %v1406 = vld [vmem:[%s203 + $0x490] sm:$0xff]
        %v1407 = vld [vmem:[%s203 + $0x498] sm:$0xff]
        %v1408 = vld [vmem:[%s203 + $0x4a0] sm:$0xff]
        %v1409 = vld [vmem:[%s203 + $0x4a8] sm:$0xff]
        %v1410 = vld [vmem:[%s203 + $0x4b0] sm:$0xff]
        %v1411 = vld [vmem:[%s203 + $0x4b8] sm:$0xff]
        %v1412 = vld [vmem:[%s203 + $0x4c0] sm:$0xff]
        %v1413 = vld [vmem:[%s203 + $0x4c8] sm:$0xff]
        %v1414 = vld [vmem:[%s203 + $0x4d0] sm:$0xff]
        %v1415 = vld [vmem:[%s203 + $0x4d8] sm:$0xff]
        %v1416 = vld [vmem:[%s203 + $0x4e0] sm:$0xff]
        %v1417 = vld [vmem:[%s203 + $0x4e8] sm:$0xff]
        %v1418 = vld [vmem:[%s203 + $0x4f0] sm:$0xff]
        %v1419 = vld [vmem:[%s203 + $0x4f8] sm:$0xff]
        %v1420 = vld [vmem:[%s203 + $0x500] sm:$0xff]
        %v1421 = vld [vmem:[%s203 + $0x508] sm:$0xff]
        %v1422 = vld [vmem:[%s203 + $0x510] sm:$0xff]
        %v1423 = vld [vmem:[%s203 + $0x518] sm:$0xff]
        %v1424 = vld [vmem:[%s203 + $0x520] sm:$0xff]
        %v1425 = vld [vmem:[%s203 + $0x528] sm:$0xff]
        %v1426 = vld [vmem:[%s203 + $0x530] sm:$0xff]
        %v1427 = vld [vmem:[%s203 + $0x538] sm:$0xff]
        %v1428 = vld [vmem:[%s203 + $0x540] sm:$0xff]
        %v1429 = vld [vmem:[%s203 + $0x548] sm:$0xff]
        %v1430 = vld [vmem:[%s203 + $0x550] sm:$0xff]
        %v1431 = vld [vmem:[%s203 + $0x558] sm:$0xff]
        %v1432 = vld [vmem:[%s203 + $0x560] sm:$0xff]
        %v1433 = vld [vmem:[%s203 + $0x568] sm:$0xff]
        %v1434 = vld [vmem:[%s203 + $0x570] sm:$0xff]
        %v1435 = vld [vmem:[%s203 + $0x578] sm:$0xff]
        %v1436 = vld [vmem:[%s203 + $0x580] sm:$0xff]
        %v1437 = vld [vmem:[%s203 + $0x588] sm:$0xff]
        %v1438 = vld [vmem:[%s203 + $0x590] sm:$0xff]
        %v1439 = vld [vmem:[%s203 + $0x598] sm:$0xff]
        %v1440 = vld [vmem:[%s203 + $0x5a0] sm:$0xff]
        %v1441 = vld [vmem:[%s203 + $0x5a8] sm:$0xff]
        %v1442 = vld [vmem:[%s203 + $0x5b0] sm:$0xff]
        %v1443 = vld [vmem:[%s203 + $0x5b8] sm:$0xff]
        %v1444 = vld [vmem:[%s203 + $0x5c0] sm:$0xff]
        %v1445 = vld [vmem:[%s203 + $0x5c8] sm:$0xff]
        %v1446 = vld [vmem:[%s203 + $0x5d0] sm:$0xff]
        %v1447 = vld [vmem:[%s203 + $0x5d8] sm:$0xff]
        %v1448 = vld [vmem:[%s203 + $0x5e0] sm:$0xff]
        %v1449 = vld [vmem:[%s203 + $0x5e8] sm:$0xff]
        %v1450 = vld [vmem:[%s203 + $0x5f0] sm:$0xff]
        %v1451 = vld [vmem:[%s203 + $0x5f8] sm:$0xff]
        %v1452 = vld [vmem:[%s203 + $0x600] sm:$0xff]
        %v1453 = vld [vmem:[%s203 + $0x608] sm:$0xff]
        %v1454 = vld [vmem:[%s203 + $0x610] sm:$0xff]
        %v1455 = vld [vmem:[%s203 + $0x618] sm:$0xff]
        %v1456 = vld [vmem:[%s203 + $0x620] sm:$0xff]
        %v1457 = vld [vmem:[%s203 + $0x628] sm:$0xff]
        %v1458 = vld [vmem:[%s203 + $0x630] sm:$0xff]
        %v1459 = vld [vmem:[%s203 + $0x638] sm:$0xff]
        %v1460 = vld [vmem:[%s203 + $0x640] sm:$0xff]
        %v1461 = vld [vmem:[%s203 + $0x648] sm:$0xff]
        %v1462 = vld [vmem:[%s203 + $0x650] sm:$0xff]
        %v1463 = vld [vmem:[%s203 + $0x658] sm:$0xff]
        %v1464 = vld [vmem:[%s203 + $0x660] sm:$0xff]
        %v1465 = vld [vmem:[%s203 + $0x668] sm:$0xff]
        %v1466 = vld [vmem:[%s203 + $0x670] sm:$0xff]
        %v1467 = vld [vmem:[%s203 + $0x678] sm:$0xff]
        %v1468 = vld [vmem:[%s203 + $0x680] sm:$0xff]
        %v1469 = vld [vmem:[%s203 + $0x688] sm:$0xff]
        %v1470 = vld [vmem:[%s203 + $0x690] sm:$0xff]
        %v1471 = vld [vmem:[%s203 + $0x698] sm:$0xff]
        %v1472 = vld [vmem:[%s203 + $0x6a0] sm:$0xff]
        %v1473 = vld [vmem:[%s203 + $0x6a8] sm:$0xff]
        %v1474 = vld [vmem:[%s203 + $0x6b0] sm:$0xff]
        %v1475 = vld [vmem:[%s203 + $0x6b8] sm:$0xff]
        %v1476 = vld [vmem:[%s203 + $0x6c0] sm:$0xff]
        %v1477 = vld [vmem:[%s203 + $0x6c8] sm:$0xff]
        %v1478 = vld [vmem:[%s203 + $0x6d0] sm:$0xff]
        %v1479 = vld [vmem:[%s203 + $0x6d8] sm:$0xff]
        %v1480 = vld [vmem:[%s203 + $0x6e0] sm:$0xff]
        %v1481 = vld [vmem:[%s203 + $0x6e8] sm:$0xff]
        %v1482 = vld [vmem:[%s203 + $0x6f0] sm:$0xff]
        %v1483 = vld [vmem:[%s203 + $0x6f8] sm:$0xff]
        %v1484 = vld [vmem:[%s203 + $0x700] sm:$0xff]
        %v1485 = vld [vmem:[%s203 + $0x708] sm:$0xff]
        %v1486 = vld [vmem:[%s203 + $0x710] sm:$0xff]
        %v1487 = vld [vmem:[%s203 + $0x718] sm:$0xff]
        %v1488 = vld [vmem:[%s203 + $0x720] sm:$0xff]
        %v1489 = vld [vmem:[%s203 + $0x728] sm:$0xff]
        %v1490 = vld [vmem:[%s203 + $0x730] sm:$0xff]
        %v1491 = vld [vmem:[%s203 + $0x738] sm:$0xff]
        %v1492 = vld [vmem:[%s203 + $0x740] sm:$0xff]
        %v1493 = vld [vmem:[%s203 + $0x748] sm:$0xff]
        %v1494 = vld [vmem:[%s203 + $0x750] sm:$0xff]
        %v1495 = vld [vmem:[%s203 + $0x758] sm:$0xff]
        %v1496 = vld [vmem:[%s203 + $0x760] sm:$0xff]
        %v1497 = vld [vmem:[%s203 + $0x768] sm:$0xff]
        %v1498 = vld [vmem:[%s203 + $0x770] sm:$0xff]
        %v1499 = vld [vmem:[%s203 + $0x778] sm:$0xff]
        %v1500 = vld [vmem:[%s203 + $0x780] sm:$0xff]
        %v1501 = vld [vmem:[%s203 + $0x788] sm:$0xff]
        %v1502 = vld [vmem:[%s203 + $0x790] sm:$0xff]
        %v1503 = vld [vmem:[%s203 + $0x798] sm:$0xff]
        %v1504 = vld [vmem:[%s203 + $0x7a0] sm:$0xff]
        %v1505 = vld [vmem:[%s203 + $0x7a8] sm:$0xff]
        %v1506 = vld [vmem:[%s203 + $0x7b0] sm:$0xff]
        %v1507 = vld [vmem:[%s203 + $0x7b8] sm:$0xff]
        %v1508 = vld [vmem:[%s203 + $0x7c0] sm:$0xff]
        %v1509 = vld [vmem:[%s203 + $0x7c8] sm:$0xff]
        %v1510 = vld [vmem:[%s203 + $0x7d0] sm:$0xff]
        %v1511 = vld [vmem:[%s203 + $0x7d8] sm:$0xff]
        %v1512 = vld [vmem:[%s203 + $0x7e0] sm:$0xff]
        %v1513 = vld [vmem:[%s203 + $0x7e8] sm:$0xff]
        %v1514 = vld [vmem:[%s203 + $0x7f0] sm:$0xff]
        %v1515 = vld [vmem:[%s203 + $0x7f8] sm:$0xff]
        %v1516 = vld [vmem:[%s203 + $0x800] sm:$0xff]
        %v1517 = vld [vmem:[%s203 + $0x808] sm:$0xff]
        %v1518 = vld [vmem:[%s203 + $0x810] sm:$0xff]
        %v1519 = vld [vmem:[%s203 + $0x818] sm:$0xff]
        %v1520 = vld [vmem:[%s203 + $0x820] sm:$0xff]
        %v1521 = vld [vmem:[%s203 + $0x828] sm:$0xff]
        %v1522 = vld [vmem:[%s203 + $0x830] sm:$0xff]
        %v1523 = vld [vmem:[%s203 + $0x838] sm:$0xff]
        %v1524 = vld [vmem:[%s203 + $0x840] sm:$0xff]
        %v1525 = vld [vmem:[%s203 + $0x848] sm:$0xff]
        %v1526 = vld [vmem:[%s203 + $0x850] sm:$0xff]
        %v1527 = vld [vmem:[%s203 + $0x858] sm:$0xff]
        %v1528 = vld [vmem:[%s203 + $0x860] sm:$0xff]
        %v1529 = vld [vmem:[%s203 + $0x868] sm:$0xff]
        %v1530 = vld [vmem:[%s203 + $0x870] sm:$0xff]
        %v1531 = vld [vmem:[%s203 + $0x878] sm:$0xff]
        %v1532 = vld [vmem:[%s203 + $0x880] sm:$0xff]
        %v1533 = vld [vmem:[%s203 + $0x888] sm:$0xff]
        %v1534 = vld [vmem:[%s203 + $0x890] sm:$0xff]
        %v1535 = vld [vmem:[%s203 + $0x898] sm:$0xff]
        %v1536 = vld [vmem:[%s203 + $0x8a0] sm:$0xff]
        %v1537 = vld [vmem:[%s203 + $0x8a8] sm:$0xff]
        %v1538 = vld [vmem:[%s203 + $0x8b0] sm:$0xff]
        %v1539 = vld [vmem:[%s203 + $0x8b8] sm:$0xff]
        %v1540 = vld [vmem:[%s203 + $0x8c0] sm:$0xff]
        %v1541 = vld [vmem:[%s203 + $0x8c8] sm:$0xff]
        %v1542 = vld [vmem:[%s203 + $0x8d0] sm:$0xff]
        %v1543 = vld [vmem:[%s203 + $0x8d8] sm:$0xff]
        %v1544 = vld [vmem:[%s203 + $0x8e0] sm:$0xff]
        %v1545 = vld [vmem:[%s203 + $0x8e8] sm:$0xff]
        %v1546 = vld [vmem:[%s203 + $0x8f0] sm:$0xff]
        %v1547 = vld [vmem:[%s203 + $0x8f8] sm:$0xff]
        %v1548 = vld [vmem:[%s203 + $0x900] sm:$0xff]
        %v1549 = vld [vmem:[%s203 + $0x908] sm:$0xff]
        %v1550 = vld [vmem:[%s203 + $0x910] sm:$0xff]
        %v1551 = vld [vmem:[%s203 + $0x918] sm:$0xff]
        %v1552 = vld [vmem:[%s203 + $0x920] sm:$0xff]
        %v1553 = vld [vmem:[%s203 + $0x928] sm:$0xff]
        %v1554 = vld [vmem:[%s203 + $0x930] sm:$0xff]
        %v1555 = vld [vmem:[%s203 + $0x938] sm:$0xff]
        %v1556 = vld [vmem:[%s203 + $0x940] sm:$0xff]
        %v1557 = vld [vmem:[%s203 + $0x948] sm:$0xff]
        %v1558 = vld [vmem:[%s203 + $0x950] sm:$0xff]
        %v1559 = vld [vmem:[%s203 + $0x958] sm:$0xff]
        %v1560 = vld [vmem:[%s203 + $0x960] sm:$0xff]
        %v1561 = vld [vmem:[%s203 + $0x968] sm:$0xff]
        %v1562 = vld [vmem:[%s203 + $0x970] sm:$0xff]
        %v1563 = vld [vmem:[%s203 + $0x978] sm:$0xff]
        %v1564 = vld [vmem:[%s203 + $0x980] sm:$0xff]
        %v1565 = vld [vmem:[%s203 + $0x988] sm:$0xff]
        %v1566 = vld [vmem:[%s203 + $0x990] sm:$0xff]
        %v1567 = vld [vmem:[%s203 + $0x998] sm:$0xff]
        %v1568 = vld [vmem:[%s203 + $0x9a0] sm:$0xff]
        %v1569 = vld [vmem:[%s203 + $0x9a8] sm:$0xff]
        %v1570 = vld [vmem:[%s203 + $0x9b0] sm:$0xff]
        %v1571 = vld [vmem:[%s203 + $0x9b8] sm:$0xff]
        %v1572 = vld [vmem:[%s203 + $0x9c0] sm:$0xff]
        %v1573 = vld [vmem:[%s203 + $0x9c8] sm:$0xff]
        %v1574 = vld [vmem:[%s203 + $0x9d0] sm:$0xff]
        %v1575 = vld [vmem:[%s203 + $0x9d8] sm:$0xff]
        %v1576 = vld [vmem:[%s203 + $0x9e0] sm:$0xff]
        %v1577 = vld [vmem:[%s203 + $0x9e8] sm:$0xff]
        %v1578 = vld [vmem:[%s203 + $0x9f0] sm:$0xff]
        %v1579 = vld [vmem:[%s203 + $0x9f8] sm:$0xff]
        %v1580 = vld [vmem:[%s203 + $0xa00] sm:$0xff]
        %v1581 = vld [vmem:[%s203 + $0xa08] sm:$0xff]
        %v1582 = vld [vmem:[%s203 + $0xa10] sm:$0xff]
        %v1583 = vld [vmem:[%s203 + $0xa18] sm:$0xff]
        %v1584 = vld [vmem:[%s203 + $0xa20] sm:$0xff]
        %v1585 = vld [vmem:[%s203 + $0xa28] sm:$0xff]
        %v1586 = vld [vmem:[%s203 + $0xa30] sm:$0xff]
        %v1587 = vld [vmem:[%s203 + $0xa38] sm:$0xff]
        %v1588 = vld [vmem:[%s203 + $0xa40] sm:$0xff]
        %v1589 = vld [vmem:[%s203 + $0xa48] sm:$0xff]
        %v1590 = vld [vmem:[%s203 + $0xa50] sm:$0xff]
        %v1591 = vld [vmem:[%s203 + $0xa58] sm:$0xff]
        %v1592 = vld [vmem:[%s203 + $0xa60] sm:$0xff]
        %v1593 = vld [vmem:[%s203 + $0xa68] sm:$0xff]
        %v1594 = vld [vmem:[%s203 + $0xa70] sm:$0xff]
        %v1595 = vld [vmem:[%s203 + $0xa78] sm:$0xff]
        %v1596 = vld [vmem:[%s203 + $0xa80] sm:$0xff]
        %v1597 = vld [vmem:[%s203 + $0xa88] sm:$0xff]
        %v1598 = vld [vmem:[%s203 + $0xa90] sm:$0xff]
        %v1599 = vld [vmem:[%s203 + $0xa98] sm:$0xff]
        %v1600 = vld [vmem:[%s203 + $0xaa0] sm:$0xff]
        %v1601 = vld [vmem:[%s203 + $0xaa8] sm:$0xff]
        %v1602 = vld [vmem:[%s203 + $0xab0] sm:$0xff]
        %v1603 = vld [vmem:[%s203 + $0xab8] sm:$0xff]
        %v1604 = vld [vmem:[%s203 + $0xac0] sm:$0xff]
        %v1605 = vld [vmem:[%s203 + $0xac8] sm:$0xff]
        %v1606 = vld [vmem:[%s203 + $0xad0] sm:$0xff]
        %v1607 = vld [vmem:[%s203 + $0xad8] sm:$0xff]
        %v1608 = vld [vmem:[%s203 + $0xae0] sm:$0xff]
        %v1609 = vld [vmem:[%s203 + $0xae8] sm:$0xff]
        %v1610 = vld [vmem:[%s203 + $0xaf0] sm:$0xff]
        %v1611 = vld [vmem:[%s203 + $0xaf8] sm:$0xff]
        %v1612 = vld [vmem:[%s203 + $0xb00] sm:$0xff]
        %v1613 = vld [vmem:[%s203 + $0xb08] sm:$0xff]
        %v1614 = vld [vmem:[%s203 + $0xb10] sm:$0xff]
        %v1615 = vld [vmem:[%s203 + $0xb18] sm:$0xff]
        %v1616 = vld [vmem:[%s203 + $0xb20] sm:$0xff]
        %v1617 = vld [vmem:[%s203 + $0xb28] sm:$0xff]
        %v1618 = vld [vmem:[%s203 + $0xb30] sm:$0xff]
        %v1619 = vld [vmem:[%s203 + $0xb38] sm:$0xff]
        %v1620 = vld [vmem:[%s203 + $0xb40] sm:$0xff]
        %v1621 = vld [vmem:[%s203 + $0xb48] sm:$0xff]
        %v1622 = vld [vmem:[%s203 + $0xb50] sm:$0xff]
        %v1623 = vld [vmem:[%s203 + $0xb58] sm:$0xff]
        %v1624 = vld [vmem:[%s203 + $0xb60] sm:$0xff]
        %v1625 = vld [vmem:[%s203 + $0xb68] sm:$0xff]
        %v1626 = vld [vmem:[%s203 + $0xb70] sm:$0xff]
        %v1627 = vld [vmem:[%s203 + $0xb78] sm:$0xff]
        %v1628 = vld [vmem:[%s203 + $0xb80] sm:$0xff]
        %v1629 = vld [vmem:[%s203 + $0xb88] sm:$0xff]
        %v1630 = vld [vmem:[%s203 + $0xb90] sm:$0xff]
        %v1631 = vld [vmem:[%s203 + $0xb98] sm:$0xff]
        %v1632 = vld [vmem:[%s203 + $0xba0] sm:$0xff]
        %v1633 = vld [vmem:[%s203 + $0xba8] sm:$0xff]
        %v1634 = vld [vmem:[%s203 + $0xbb0] sm:$0xff]
        %v1635 = vld [vmem:[%s203 + $0xbb8] sm:$0xff]
        %v1636 = vld [vmem:[%s203 + $0xbc0] sm:$0xff]
        %v1637 = vld [vmem:[%s203 + $0xbc8] sm:$0xff]
        %v1638 = vld [vmem:[%s203 + $0xbd0] sm:$0xff]
        %v1639 = vld [vmem:[%s203 + $0xbd8] sm:$0xff]
        %v1640 = vld [vmem:[%s203 + $0xbe0] sm:$0xff]
        %v1641 = vld [vmem:[%s203 + $0xbe8] sm:$0xff]
        %v1642 = vld [vmem:[%s203 + $0xbf0] sm:$0xff]
        %v1643 = vld [vmem:[%s203 + $0xbf8] sm:$0xff]
        %v1644 = vld [vmem:[%s203 + $0xc00] sm:$0xff]
        %v1645 = vld [vmem:[%s203 + $0xc08] sm:$0xff]
        %v1646 = vld [vmem:[%s203 + $0xc10] sm:$0xff]
        %v1647 = vld [vmem:[%s203 + $0xc18] sm:$0xff]
        %v1648 = vld [vmem:[%s203 + $0xc20] sm:$0xff]
        %v1649 = vld [vmem:[%s203 + $0xc28] sm:$0xff]
        %v1650 = vld [vmem:[%s203 + $0xc30] sm:$0xff]
        %v1651 = vld [vmem:[%s203 + $0xc38] sm:$0xff]
        %v1652 = vld [vmem:[%s203 + $0xc40] sm:$0xff]
        %v1653 = vld [vmem:[%s203 + $0xc48] sm:$0xff]
        %v1654 = vld [vmem:[%s203 + $0xc50] sm:$0xff]
        %v1655 = vld [vmem:[%s203 + $0xc58] sm:$0xff]
        %v1656 = vld [vmem:[%s203 + $0xc60] sm:$0xff]
        %v1657 = vld [vmem:[%s203 + $0xc68] sm:$0xff]
        %v1658 = vld [vmem:[%s203 + $0xc70] sm:$0xff]
        %v1659 = vld [vmem:[%s203 + $0xc78] sm:$0xff]
        %v1660 = vld [vmem:[%s203 + $0xc80] sm:$0xff]
        %v1661 = vld [vmem:[%s203 + $0xc88] sm:$0xff]
        %v1662 = vld [vmem:[%s203 + $0xc90] sm:$0xff]
        %v1663 = vld [vmem:[%s203 + $0xc98] sm:$0xff]
        %v1664 = vld [vmem:[%s203 + $0xca0] sm:$0xff]
        %v1665 = vld [vmem:[%s203 + $0xca8] sm:$0xff]
        %v1666 = vld [vmem:[%s203 + $0xcb0] sm:$0xff]
        %v1667 = vld [vmem:[%s203 + $0xcb8] sm:$0xff]
        %v1668 = vld [vmem:[%s203 + $0xcc0] sm:$0xff]
        %v1669 = vld [vmem:[%s203 + $0xcc8] sm:$0xff]
        %v1670 = vld [vmem:[%s203 + $0xcd0] sm:$0xff]
        %v1671 = vld [vmem:[%s203 + $0xcd8] sm:$0xff]
        %v1672 = vld [vmem:[%s203 + $0xce0] sm:$0xff]
        %v1673 = vld [vmem:[%s203 + $0xce8] sm:$0xff]
        %v1674 = vld [vmem:[%s203 + $0xcf0] sm:$0xff]
        %v1675 = vld [vmem:[%s203 + $0xcf8] sm:$0xff]
        %v1676 = vld [vmem:[%s203 + $0xd00] sm:$0xff]
        %v1677 = vld [vmem:[%s203 + $0xd08] sm:$0xff]
        %v1678 = vld [vmem:[%s203 + $0xd10] sm:$0xff]
        %v1679 = vld [vmem:[%s203 + $0xd18] sm:$0xff]
        %v1680 = vld [vmem:[%s203 + $0xd20] sm:$0xff]
        %v1681 = vld [vmem:[%s203 + $0xd28] sm:$0xff]
        %v1682 = vld [vmem:[%s203 + $0xd30] sm:$0xff]
        %v1683 = vld [vmem:[%s203 + $0xd38] sm:$0xff]
        %v1684 = vld [vmem:[%s203 + $0xd40] sm:$0xff]
        %v1685 = vld [vmem:[%s203 + $0xd48] sm:$0xff]
        %v1686 = vld [vmem:[%s203 + $0xd50] sm:$0xff]
        %v1687 = vld [vmem:[%s203 + $0xd58] sm:$0xff]
        %v1688 = vld [vmem:[%s203 + $0xd60] sm:$0xff]
        %v1689 = vld [vmem:[%s203 + $0xd68] sm:$0xff]
        %v1690 = vld [vmem:[%s203 + $0xd70] sm:$0xff]
        %v1691 = vld [vmem:[%s203 + $0xd78] sm:$0xff]
        %v1692 = vld [vmem:[%s203 + $0xd80] sm:$0xff]
        %v1693 = vld [vmem:[%s203 + $0xd88] sm:$0xff]
        %v1694 = vld [vmem:[%s203 + $0xd90] sm:$0xff]
        %v1695 = vld [vmem:[%s203 + $0xd98] sm:$0xff]
        %v1696 = vld [vmem:[%s203 + $0xda0] sm:$0xff]
        %v1697 = vld [vmem:[%s203 + $0xda8] sm:$0xff]
        %v1698 = vld [vmem:[%s203 + $0xdb0] sm:$0xff]
        %v1699 = vld [vmem:[%s203 + $0xdb8] sm:$0xff]
        %v1700 = vld [vmem:[%s203 + $0xdc0] sm:$0xff]
        %v1701 = vld [vmem:[%s203 + $0xdc8] sm:$0xff]
        %v1702 = vld [vmem:[%s203 + $0xdd0] sm:$0xff]
        %v1703 = vld [vmem:[%s203 + $0xdd8] sm:$0xff]
        %v1704 = vld [vmem:[%s203 + $0xde0] sm:$0xff]
        %v1705 = vld [vmem:[%s203 + $0xde8] sm:$0xff]
        %v1706 = vld [vmem:[%s203 + $0xdf0] sm:$0xff]
        %v1707 = vld [vmem:[%s203 + $0xdf8] sm:$0xff]
        %v1708 = vld [vmem:[%s203 + $0xe00] sm:$0xff]
        %v1709 = vld [vmem:[%s203 + $0xe08] sm:$0xff]
        %v1710 = vld [vmem:[%s203 + $0xe10] sm:$0xff]
        %v1711 = vld [vmem:[%s203 + $0xe18] sm:$0xff]
        %v1712 = vld [vmem:[%s203 + $0xe20] sm:$0xff]
        %v1713 = vld [vmem:[%s203 + $0xe28] sm:$0xff]
        %v1714 = vld [vmem:[%s203 + $0xe30] sm:$0xff]
        %v1715 = vld [vmem:[%s203 + $0xe38] sm:$0xff]
        %v1716 = vld [vmem:[%s203 + $0xe40] sm:$0xff]
        %v1717 = vld [vmem:[%s203 + $0xe48] sm:$0xff]
        %v1718 = vld [vmem:[%s203 + $0xe50] sm:$0xff]
        %v1719 = vld [vmem:[%s203 + $0xe58] sm:$0xff]
        %v1720 = vld [vmem:[%s203 + $0xe60] sm:$0xff]
        %v1721 = vld [vmem:[%s203 + $0xe68] sm:$0xff]
        %v1722 = vld [vmem:[%s203 + $0xe70] sm:$0xff]
        %v1723 = vld [vmem:[%s203 + $0xe78] sm:$0xff]
        %v1724 = vld [vmem:[%s203 + $0xe80] sm:$0xff]
        %v1725 = vld [vmem:[%s203 + $0xe88] sm:$0xff]
        %v1726 = vld [vmem:[%s203 + $0xe90] sm:$0xff]
        %v1727 = vld [vmem:[%s203 + $0xe98] sm:$0xff]
        %v1728 = vld [vmem:[%s203 + $0xea0] sm:$0xff]
        %v1729 = vld [vmem:[%s203 + $0xea8] sm:$0xff]
        %v1730 = vld [vmem:[%s203 + $0xeb0] sm:$0xff]
        %v1731 = vld [vmem:[%s203 + $0xeb8] sm:$0xff]
        %v1732 = vld [vmem:[%s203 + $0xec0] sm:$0xff]
        %v1733 = vld [vmem:[%s203 + $0xec8] sm:$0xff]
        %v1734 = vld [vmem:[%s203 + $0xed0] sm:$0xff]
        %v1735 = vld [vmem:[%s203 + $0xed8] sm:$0xff]
        %v1736 = vld [vmem:[%s203 + $0xee0] sm:$0xff]
        %v1737 = vld [vmem:[%s203 + $0xee8] sm:$0xff]
        %v1738 = vld [vmem:[%s203 + $0xef0] sm:$0xff]
        %v1739 = vld [vmem:[%s203 + $0xef8] sm:$0xff]
        %v1740 = vld [vmem:[%s203 + $0xf00] sm:$0xff]
        %v1741 = vld [vmem:[%s203 + $0xf08] sm:$0xff]
        %v1742 = vld [vmem:[%s203 + $0xf10] sm:$0xff]
        %v1743 = vld [vmem:[%s203 + $0xf18] sm:$0xff]
        %v1744 = vld [vmem:[%s203 + $0xf20] sm:$0xff]
        %v1745 = vld [vmem:[%s203 + $0xf28] sm:$0xff]
        %v1746 = vld [vmem:[%s203 + $0xf30] sm:$0xff]
        %v1747 = vld [vmem:[%s203 + $0xf38] sm:$0xff]
        %v1748 = vld [vmem:[%s203 + $0xf40] sm:$0xff]
        %v1749 = vld [vmem:[%s203 + $0xf48] sm:$0xff]
        %v1750 = vld [vmem:[%s203 + $0xf50] sm:$0xff]
        %v1751 = vld [vmem:[%s203 + $0xf58] sm:$0xff]
        %v1752 = vld [vmem:[%s203 + $0xf60] sm:$0xff]
        %v1753 = vld [vmem:[%s203 + $0xf68] sm:$0xff]
        %v1754 = vld [vmem:[%s203 + $0xf70] sm:$0xff]
        %v1755 = vld [vmem:[%s203 + $0xf78] sm:$0xff]
        %v1756 = vld [vmem:[%s203 + $0xf80] sm:$0xff]
        %v1757 = vld [vmem:[%s203 + $0xf88] sm:$0xff]
        %v1758 = vld [vmem:[%s203 + $0xf90] sm:$0xff]
        %v1759 = vld [vmem:[%s203 + $0xf98] sm:$0xff]
        %v1760 = vld [vmem:[%s203 + $0xfa0] sm:$0xff]
        %v1761 = vld [vmem:[%s203 + $0xfa8] sm:$0xff]
        %v1762 = vld [vmem:[%s203 + $0xfb0] sm:$0xff]
        %v1763 = vld [vmem:[%s203 + $0xfb8] sm:$0xff]
        %v1764 = vld [vmem:[%s203 + $0xfc0] sm:$0xff]
        %v1765 = vld [vmem:[%s203 + $0xfc8] sm:$0xff]
        %v1766 = vld [vmem:[%s203 + $0xfd0] sm:$0xff]
        %v1767 = vld [vmem:[%s203 + $0xfd8] sm:$0xff]
        %v1768 = vld [vmem:[%s203 + $0xfe0] sm:$0xff]
        %v1769 = vld [vmem:[%s203 + $0xfe8] sm:$0xff]
        %v1770 = vld [vmem:[%s203 + $0xff0] sm:$0xff]
        %v1771 = vld [vmem:[%s203 + $0xff8] sm:$0xff]
        %v1772 = vld [vmem:[%s203 + $0x1000] sm:$0xff]
        %v1773 = vld [vmem:[%s203 + $0x1008] sm:$0xff]
        %v1774 = vld [vmem:[%s203 + $0x1010] sm:$0xff]
        %v1775 = vld [vmem:[%s203 + $0x1018] sm:$0xff]
        %v1776 = vld [vmem:[%s203 + $0x1020] sm:$0xff]
        %v1777 = vld [vmem:[%s203 + $0x1028] sm:$0xff]
        %v1778 = vld [vmem:[%s203 + $0x1030] sm:$0xff]
        %v1779 = vld [vmem:[%s203 + $0x1038] sm:$0xff]
        %v1780 = vld [vmem:[%s203 + $0x1040] sm:$0xff]
        %v1781 = vld [vmem:[%s203 + $0x1048] sm:$0xff]
        %v1782 = vld [vmem:[%s203 + $0x1050] sm:$0xff]
        %v1783 = vld [vmem:[%s203 + $0x1058] sm:$0xff]
        %v1784 = vld [vmem:[%s203 + $0x1060] sm:$0xff]
        %v1785 = vld [vmem:[%s203 + $0x1068] sm:$0xff]
        %v1786 = vld [vmem:[%s203 + $0x1070] sm:$0xff]
        %v1787 = vld [vmem:[%s203 + $0x1078] sm:$0xff]
        %v1788 = vld [vmem:[%s203 + $0x1080] sm:$0xff]
        %v1789 = vld [vmem:[%s203 + $0x1088] sm:$0xff]
        %v1790 = vld [vmem:[%s203 + $0x1090] sm:$0xff]
        %v1791 = vld [vmem:[%s203 + $0x1098] sm:$0xff]
        %v1792 = vld [vmem:[%s203 + $0x10a0] sm:$0xff]
        %v1793 = vld [vmem:[%s203 + $0x10a8] sm:$0xff]
        %v1794 = vld [vmem:[%s203 + $0x10b0] sm:$0xff]
        %v1795 = vld [vmem:[%s203 + $0x10b8] sm:$0xff]
        %v1796 = vld [vmem:[%s203 + $0x10c0] sm:$0xff]
        %v1797 = vld [vmem:[%s203 + $0x10c8] sm:$0xff]
        %v1798 = vld [vmem:[%s203 + $0x10d0] sm:$0xff]
        %v1799 = vld [vmem:[%s203 + $0x10d8] sm:$0xff]
        %v1800 = vld [vmem:[%s203 + $0x10e0] sm:$0xff]
        %v1801 = vld [vmem:[%s203 + $0x10e8] sm:$0xff]
        %v1802 = vld [vmem:[%s203 + $0x10f0] sm:$0xff]
        %v1803 = vld [vmem:[%s203 + $0x10f8] sm:$0xff]
        %v1804 = vld [vmem:[%s203 + $0x1100] sm:$0xff]
        %v1805 = vld [vmem:[%s203 + $0x1108] sm:$0xff]
        %v1806 = vld [vmem:[%s203 + $0x1110] sm:$0xff]
        %v1807 = vld [vmem:[%s203 + $0x1118] sm:$0xff]
        %v1808 = vld [vmem:[%s203 + $0x1120] sm:$0xff]
        %v1809 = vld [vmem:[%s203 + $0x1128] sm:$0xff]
        %v1810 = vld [vmem:[%s203 + $0x1130] sm:$0xff]
        %v1811 = vld [vmem:[%s203 + $0x1138] sm:$0xff]
        %v1812 = vld [vmem:[%s203 + $0x1140] sm:$0xff]
        %v1813 = vld [vmem:[%s203 + $0x1148] sm:$0xff]
        %v1814 = vld [vmem:[%s203 + $0x1150] sm:$0xff]
        %v1815 = vld [vmem:[%s203 + $0x1158] sm:$0xff]
        %v1816 = vld [vmem:[%s203 + $0x1160] sm:$0xff]
        %v1817 = vld [vmem:[%s203 + $0x1168] sm:$0xff]
        %v1818 = vld [vmem:[%s203 + $0x1170] sm:$0xff]
        %v1819 = vld [vmem:[%s203 + $0x1178] sm:$0xff]
        %v1820 = vld [vmem:[%s203 + $0x1180] sm:$0xff]
        %v1821 = vld [vmem:[%s203 + $0x1188] sm:$0xff]
        %v1822 = vld [vmem:[%s203 + $0x1190] sm:$0xff]
        %v1823 = vld [vmem:[%s203 + $0x1198] sm:$0xff]
        %v1824 = vld [vmem:[%s203 + $0x11a0] sm:$0xff]
        %v1825 = vld [vmem:[%s203 + $0x11a8] sm:$0xff]
        %v1826 = vld [vmem:[%s203 + $0x11b0] sm:$0xff]
        %v1827 = vld [vmem:[%s203 + $0x11b8] sm:$0xff]
        %v1828 = vld [vmem:[%s203 + $0x11c0] sm:$0xff]
        %v1829 = vld [vmem:[%s203 + $0x11c8] sm:$0xff]
        %v1830 = vld [vmem:[%s203 + $0x11d0] sm:$0xff]
        %v1831 = vld [vmem:[%s203 + $0x11d8] sm:$0xff]
        %v1832 = vld [vmem:[%s203 + $0x11e0] sm:$0xff]
        %v1833 = vld [vmem:[%s203 + $0x11e8] sm:$0xff]
        %v1834 = vld [vmem:[%s203 + $0x11f0] sm:$0xff]
        %v1835 = vld [vmem:[%s203 + $0x11f8] sm:$0xff]
        %v1836 = vld [vmem:[%s203 + $0x1200] sm:$0xff]
        %v1837 = vld [vmem:[%s203 + $0x1208] sm:$0xff]
        %v1838 = vld [vmem:[%s203 + $0x1210] sm:$0xff]
        %v1839 = vld [vmem:[%s203 + $0x1218] sm:$0xff]
        %v1840 = vld [vmem:[%s203 + $0x1220] sm:$0xff]
        %v1841 = vld [vmem:[%s203 + $0x1228] sm:$0xff]
        %v1842 = vld [vmem:[%s203 + $0x1230] sm:$0xff]
        %v1843 = vld [vmem:[%s203 + $0x1238] sm:$0xff]
        %v1844 = vld [vmem:[%s203 + $0x1240] sm:$0xff]
        %v1845 = vld [vmem:[%s203 + $0x1248] sm:$0xff]
        %v1846 = vld [vmem:[%s203 + $0x1250] sm:$0xff]
        %v1847 = vld [vmem:[%s203 + $0x1258] sm:$0xff]
        %v1848 = vld [vmem:[%s203 + $0x1260] sm:$0xff]
        %v1849 = vld [vmem:[%s203 + $0x1268] sm:$0xff]
        %v1850 = vld [vmem:[%s203 + $0x1270] sm:$0xff]
        %v1851 = vld [vmem:[%s203 + $0x1278] sm:$0xff]
        %v1852 = vld [vmem:[%s203 + $0x1280] sm:$0xff]
        %v1853 = vld [vmem:[%s203 + $0x1288] sm:$0xff]
        %v1854 = vld [vmem:[%s203 + $0x1290] sm:$0xff]
        %v1855 = vld [vmem:[%s203 + $0x1298] sm:$0xff]
        %v1856 = vld [vmem:[%s203 + $0x12a0] sm:$0xff]
        %v1857 = vld [vmem:[%s203 + $0x12a8] sm:$0xff]
        %v1858 = vld [vmem:[%s203 + $0x12b0] sm:$0xff]
        %v1859 = vld [vmem:[%s203 + $0x12b8] sm:$0xff]
        %v1860 = vld [vmem:[%s203 + $0x12c0] sm:$0xff]
        %v1861 = vld [vmem:[%s203 + $0x12c8] sm:$0xff]
        %v1862 = vld [vmem:[%s203 + $0x12d0] sm:$0xff]
        %v1863 = vld [vmem:[%s203 + $0x12d8] sm:$0xff]
        %v1864 = vld [vmem:[%s203 + $0x12e0] sm:$0xff]
        %v1865 = vld [vmem:[%s203 + $0x12e8] sm:$0xff]
        %v1866 = vld [vmem:[%s203 + $0x12f0] sm:$0xff]
        %v1867 = vld [vmem:[%s203 + $0x12f8] sm:$0xff]
        %v1868 = vld [vmem:[%s203 + $0x1300] sm:$0xff]
        %v1869 = vld [vmem:[%s203 + $0x1308] sm:$0xff]
        %v1870 = vld [vmem:[%s203 + $0x1310] sm:$0xff]
        %v1871 = vld [vmem:[%s203 + $0x1318] sm:$0xff]
        %v1872 = vld [vmem:[%s203 + $0x1320] sm:$0xff]
        %v1873 = vld [vmem:[%s203 + $0x1328] sm:$0xff]
        %v1874 = vld [vmem:[%s203 + $0x1330] sm:$0xff]
        %v1875 = vld [vmem:[%s203 + $0x1338] sm:$0xff]
        %v1876 = vld [vmem:[%s203 + $0x1340] sm:$0xff]
        %v1877 = vld [vmem:[%s203 + $0x1348] sm:$0xff]
        %v1878 = vld [vmem:[%s203 + $0x1350] sm:$0xff]
        %v1879 = vld [vmem:[%s203 + $0x1358] sm:$0xff]
        %v1880 = vld [vmem:[%s203 + $0x1360] sm:$0xff]
        %v1881 = vld [vmem:[%s203 + $0x1368] sm:$0xff]
        %v1882 = vld [vmem:[%s203 + $0x1370] sm:$0xff]
        %v1883 = vld [vmem:[%s203 + $0x1378] sm:$0xff]
        %v1884 = vld [vmem:[%s203 + $0x1380] sm:$0xff]
        %v1885 = vld [vmem:[%s203 + $0x1388] sm:$0xff]
        %v1886 = vld [vmem:[%s203 + $0x1390] sm:$0xff]
        %v1887 = vld [vmem:[%s203 + $0x1398] sm:$0xff]
        %v1888 = vld [vmem:[%s203 + $0x13a0] sm:$0xff]
        %v1889 = vld [vmem:[%s203 + $0x13a8] sm:$0xff]
        %v1890 = vld [vmem:[%s203 + $0x13b0] sm:$0xff]
        %v1891 = vld [vmem:[%s203 + $0x13b8] sm:$0xff]
        %v1892 = vld [vmem:[%s203 + $0x13c0] sm:$0xff]
        %v1893 = vld [vmem:[%s203 + $0x13c8] sm:$0xff]
        %v1894 = vld [vmem:[%s203 + $0x13d0] sm:$0xff]
        %v1895 = vld [vmem:[%s203 + $0x13d8] sm:$0xff]
        %v1896 = vld [vmem:[%s203 + $0x13e0] sm:$0xff]
        %v1897 = vld [vmem:[%s203 + $0x13e8] sm:$0xff]
        %v1898 = vld [vmem:[%s203 + $0x13f0] sm:$0xff]
        %v1899 = vld [vmem:[%s203 + $0x13f8] sm:$0xff]
        %v1900 = vld [vmem:[%s203 + $0x1400] sm:$0xff]
        %v1901 = vld [vmem:[%s203 + $0x1408] sm:$0xff]
        %v1902 = vld [vmem:[%s203 + $0x1410] sm:$0xff]
        %v1903 = vld [vmem:[%s203 + $0x1418] sm:$0xff]
        %v1904 = vld [vmem:[%s203 + $0x1420] sm:$0xff]
        %v1905 = vld [vmem:[%s203 + $0x1428] sm:$0xff]
        %v1906 = vld [vmem:[%s203 + $0x1430] sm:$0xff]
        %v1907 = vld [vmem:[%s203 + $0x1438] sm:$0xff]
        %v1908 = vld [vmem:[%s203 + $0x1440] sm:$0xff]
        %v1909 = vld [vmem:[%s203 + $0x1448] sm:$0xff]
        %v1910 = vld [vmem:[%s203 + $0x1450] sm:$0xff]
        %v1911 = vld [vmem:[%s203 + $0x1458] sm:$0xff]
        %v1912 = vld [vmem:[%s203 + $0x1460] sm:$0xff]
        %v1913 = vld [vmem:[%s203 + $0x1468] sm:$0xff]
        %v1914 = vld [vmem:[%s203 + $0x1470] sm:$0xff]
        %v1915 = vld [vmem:[%s203 + $0x1478] sm:$0xff]
        %v1916 = vld [vmem:[%s203 + $0x1480] sm:$0xff]
        %v1917 = vld [vmem:[%s203 + $0x1488] sm:$0xff]
        %v1918 = vld [vmem:[%s203 + $0x1490] sm:$0xff]
        %v1919 = vld [vmem:[%s203 + $0x1498] sm:$0xff]
        %v1920 = vld [vmem:[%s203 + $0x14a0] sm:$0xff]
        %v1921 = vld [vmem:[%s203 + $0x14a8] sm:$0xff]
        %v1922 = vld [vmem:[%s203 + $0x14b0] sm:$0xff]
        %v1923 = vld [vmem:[%s203 + $0x14b8] sm:$0xff]
        %v1924 = vld [vmem:[%s203 + $0x14c0] sm:$0xff]
        %v1925 = vld [vmem:[%s203 + $0x14c8] sm:$0xff]
        %v1926 = vld [vmem:[%s203 + $0x14d0] sm:$0xff]
        %v1927 = vld [vmem:[%s203 + $0x14d8] sm:$0xff]
        %v1928 = vld [vmem:[%s203 + $0x14e0] sm:$0xff]
        %v1929 = vld [vmem:[%s203 + $0x14e8] sm:$0xff]
        %v1930 = vld [vmem:[%s203 + $0x14f0] sm:$0xff]
        %v1931 = vld [vmem:[%s203 + $0x14f8] sm:$0xff]
        %v1932 = vld [vmem:[%s203 + $0x1500] sm:$0xff]
        %v1933 = vld [vmem:[%s203 + $0x1508] sm:$0xff]
        %v1934 = vld [vmem:[%s203 + $0x1510] sm:$0xff]
        %v1935 = vld [vmem:[%s203 + $0x1518] sm:$0xff]
        %v1936 = vld [vmem:[%s203 + $0x1520] sm:$0xff]
        %v1937 = vld [vmem:[%s203 + $0x1528] sm:$0xff]
        %v1938 = vld [vmem:[%s203 + $0x1530] sm:$0xff]
        %v1939 = vld [vmem:[%s203 + $0x1538] sm:$0xff]
        %v1940 = vld [vmem:[%s203 + $0x1540] sm:$0xff]
        %v1941 = vld [vmem:[%s203 + $0x1548] sm:$0xff]
        %v1942 = vld [vmem:[%s203 + $0x1550] sm:$0xff]
        %v1943 = vld [vmem:[%s203 + $0x1558] sm:$0xff]
        %v1944 = vld [vmem:[%s203 + $0x1560] sm:$0xff]
        %v1945 = vld [vmem:[%s203 + $0x1568] sm:$0xff]
        %v1946 = vld [vmem:[%s203 + $0x1570] sm:$0xff]
        %v1947 = vld [vmem:[%s203 + $0x1578] sm:$0xff]
        %v1948 = vld [vmem:[%s203 + $0x1580] sm:$0xff]
        %v1949 = vld [vmem:[%s203 + $0x1588] sm:$0xff]
        %v1950 = vld [vmem:[%s203 + $0x1590] sm:$0xff]
        %v1951 = vld [vmem:[%s203 + $0x1598] sm:$0xff]
        %v1952 = vld [vmem:[%s203 + $0x15a0] sm:$0xff]
        %v1953 = vld [vmem:[%s203 + $0x15a8] sm:$0xff]
        %v1954 = vld [vmem:[%s203 + $0x15b0] sm:$0xff]
        %v1955 = vld [vmem:[%s203 + $0x15b8] sm:$0xff]
        %v1956 = vld [vmem:[%s203 + $0x15c0] sm:$0xff]
        %v1957 = vld [vmem:[%s203 + $0x15c8] sm:$0xff]
        %v1958 = vld [vmem:[%s203 + $0x15d0] sm:$0xff]
        %v1959 = vld [vmem:[%s203 + $0x15d8] sm:$0xff]
        %v1960 = vld [vmem:[%s203 + $0x15e0] sm:$0xff]
        %v1961 = vld [vmem:[%s203 + $0x15e8] sm:$0xff]
        %v1962 = vld [vmem:[%s203 + $0x15f0] sm:$0xff]
        %v1963 = vld [vmem:[%s203 + $0x15f8] sm:$0xff]
        %v1964 = vld [vmem:[%s203 + $0x1600] sm:$0xff]
        %v1965 = vld [vmem:[%s203 + $0x1608] sm:$0xff]
        %v1966 = vld [vmem:[%s203 + $0x1610] sm:$0xff]
        %v1967 = vld [vmem:[%s203 + $0x1618] sm:$0xff]
        %v1968 = vld [vmem:[%s203 + $0x1620] sm:$0xff]
        %v1969 = vld [vmem:[%s203 + $0x1628] sm:$0xff]
        %v1970 = vld [vmem:[%s203 + $0x1630] sm:$0xff]
        %v1971 = vld [vmem:[%s203 + $0x1638] sm:$0xff]
        %v1972 = vld [vmem:[%s203 + $0x1640] sm:$0xff]
        %v1973 = vld [vmem:[%s203 + $0x1648] sm:$0xff]
        %v1974 = vld [vmem:[%s203 + $0x1650] sm:$0xff]
        %v1975 = vld [vmem:[%s203 + $0x1658] sm:$0xff]
        %v1976 = vld [vmem:[%s203 + $0x1660] sm:$0xff]
        %v1977 = vld [vmem:[%s203 + $0x1668] sm:$0xff]
        %v1978 = vld [vmem:[%s203 + $0x1670] sm:$0xff]
        %v1979 = vld [vmem:[%s203 + $0x1678] sm:$0xff]
        %v1980 = vld [vmem:[%s203 + $0x1680] sm:$0xff]
        %v1981 = vld [vmem:[%s203 + $0x1688] sm:$0xff]
        %v1982 = vld [vmem:[%s203 + $0x1690] sm:$0xff]
        %v1983 = vld [vmem:[%s203 + $0x1698] sm:$0xff]
        %v1984 = vld [vmem:[%s203 + $0x16a0] sm:$0xff]
        %v1985 = vld [vmem:[%s203 + $0x16a8] sm:$0xff]
        %v1986 = vld [vmem:[%s203 + $0x16b0] sm:$0xff]
        %v1987 = vld [vmem:[%s203 + $0x16b8] sm:$0xff]
        %v1988 = vld [vmem:[%s203 + $0x16c0] sm:$0xff]
        %v1989 = vld [vmem:[%s203 + $0x16c8] sm:$0xff]
        %v1990 = vld [vmem:[%s203 + $0x16d0] sm:$0xff]
        %v1991 = vld [vmem:[%s203 + $0x16d8] sm:$0xff]
        %v1992 = vld [vmem:[%s203 + $0x16e0] sm:$0xff]
        %v1993 = vld [vmem:[%s203 + $0x16e8] sm:$0xff]
        %v1994 = vld [vmem:[%s203 + $0x16f0] sm:$0xff]
        %v1995 = vld [vmem:[%s203 + $0x16f8] sm:$0xff]
        %v1996 = vld [vmem:[%s203 + $0x1700] sm:$0xff]
        %v1997 = vld [vmem:[%s203 + $0x1708] sm:$0xff]
        %v1998 = vld [vmem:[%s203 + $0x1710] sm:$0xff]
        %v1999 = vld [vmem:[%s203 + $0x1718] sm:$0xff]
        %v2000 = vld [vmem:[%s203 + $0x1720] sm:$0xff]
        %v2001 = vld [vmem:[%s203 + $0x1728] sm:$0xff]
        %v2002 = vld [vmem:[%s203 + $0x1730] sm:$0xff]
        %v2003 = vld [vmem:[%s203 + $0x1738] sm:$0xff]
        %v2004 = vld [vmem:[%s203 + $0x1740] sm:$0xff]
        %v2005 = vld [vmem:[%s203 + $0x1748] sm:$0xff]
        %v2006 = vld [vmem:[%s203 + $0x1750] sm:$0xff]
        %v2007 = vld [vmem:[%s203 + $0x1758] sm:$0xff]
        %v2008 = vld [vmem:[%s203 + $0x1760] sm:$0xff]
        %v2009 = vld [vmem:[%s203 + $0x1768] sm:$0xff]
        %v2010 = vld [vmem:[%s203 + $0x1770] sm:$0xff]
        %v2011 = vld [vmem:[%s203 + $0x1778] sm:$0xff]
        %v2012 = vld [vmem:[%s203 + $0x1780] sm:$0xff]
        %v2013 = vld [vmem:[%s203 + $0x1788] sm:$0xff]
        %v2014 = vld [vmem:[%s203 + $0x1790] sm:$0xff]
        %v2015 = vld [vmem:[%s203 + $0x1798] sm:$0xff]
        %v2016 = vld [vmem:[%s203 + $0x17a0] sm:$0xff]
        %v2017 = vld [vmem:[%s203 + $0x17a8] sm:$0xff]
        %v2018 = vld [vmem:[%s203 + $0x17b0] sm:$0xff]
        %v2019 = vld [vmem:[%s203 + $0x17b8] sm:$0xff]
        %v2020 = vld [vmem:[%s203 + $0x17c0] sm:$0xff]
        %v2021 = vld [vmem:[%s203 + $0x17c8] sm:$0xff]
        %v2022 = vld [vmem:[%s203 + $0x17d0] sm:$0xff]
        %v2023 = vld [vmem:[%s203 + $0x17d8] sm:$0xff]
        %v2024 = vld [vmem:[%s203 + $0x17e0] sm:$0xff]
        %v2025 = vld [vmem:[%s203 + $0x17e8] sm:$0xff]
        %v2026 = vld [vmem:[%s203 + $0x17f0] sm:$0xff]
        %v2027 = vld [vmem:[%s203 + $0x17f8] sm:$0xff]
        %v2028 = vld [vmem:[%s203 + $0x1800] sm:$0xff]
        %v2029 = vld [vmem:[%s203 + $0x1808] sm:$0xff]
        %v2030 = vld [vmem:[%s203 + $0x1810] sm:$0xff]
        %v2031 = vld [vmem:[%s203 + $0x1818] sm:$0xff]
        %v2032 = vld [vmem:[%s203 + $0x1820] sm:$0xff]
        %v2033 = vld [vmem:[%s203 + $0x1828] sm:$0xff]
        %v2034 = vld [vmem:[%s203 + $0x1830] sm:$0xff]
        %v2035 = vld [vmem:[%s203 + $0x1838] sm:$0xff]
        %v2036 = vld [vmem:[%s203 + $0x1840] sm:$0xff]
        %v2037 = vld [vmem:[%s203 + $0x1848] sm:$0xff]
        %v2038 = vld [vmem:[%s203 + $0x1850] sm:$0xff]
        %v2039 = vld [vmem:[%s203 + $0x1858] sm:$0xff]
        %v2040 = vld [vmem:[%s203 + $0x1860] sm:$0xff]
        %v2041 = vld [vmem:[%s203 + $0x1868] sm:$0xff]
        %v2042 = vld [vmem:[%s203 + $0x1870] sm:$0xff]
        %v2043 = vld [vmem:[%s203 + $0x1878] sm:$0xff]
        %v2044 = vld [vmem:[%s203 + $0x1880] sm:$0xff]
        %v2045 = vld [vmem:[%s203 + $0x1888] sm:$0xff]
        %v2046 = vld [vmem:[%s203 + $0x1890] sm:$0xff]
        %v2047 = vld [vmem:[%s203 + $0x1898] sm:$0xff]
        %v2048 = vld [vmem:[%s203 + $0x18a0] sm:$0xff]
        %v2049 = vld [vmem:[%s203 + $0x18a8] sm:$0xff]
        %v2050 = vld [vmem:[%s203 + $0x18b0] sm:$0xff]
        %v2051 = vld [vmem:[%s203 + $0x18b8] sm:$0xff]
        %v2052 = vld [vmem:[%s203 + $0x18c0] sm:$0xff]
        %v2053 = vld [vmem:[%s203 + $0x18c8] sm:$0xff]
        %v2054 = vld [vmem:[%s203 + $0x18d0] sm:$0xff]
        %v2055 = vld [vmem:[%s203 + $0x18d8] sm:$0xff]
        %v2056 = vld [vmem:[%s203 + $0x18e0] sm:$0xff]
        %v2057 = vld [vmem:[%s203 + $0x18e8] sm:$0xff]
        %v2058 = vld [vmem:[%s203 + $0x18f0] sm:$0xff]
        %v2059 = vld [vmem:[%s203 + $0x18f8] sm:$0xff]
        %v2060 = vld [vmem:[%s203 + $0x1900] sm:$0xff]
        %v2061 = vld [vmem:[%s203 + $0x1908] sm:$0xff]
        %v2062 = vld [vmem:[%s203 + $0x1910] sm:$0xff]
        %v2063 = vld [vmem:[%s203 + $0x1918] sm:$0xff]
        %v2064 = vld [vmem:[%s203 + $0x1920] sm:$0xff]
        %v2065 = vld [vmem:[%s203 + $0x1928] sm:$0xff]
        %v2066 = vld [vmem:[%s203 + $0x1930] sm:$0xff]
        %v2067 = vld [vmem:[%s203 + $0x1938] sm:$0xff]
        %v2068 = vld [vmem:[%s203 + $0x1940] sm:$0xff]
        %v2069 = vld [vmem:[%s203 + $0x1948] sm:$0xff]
        %v2070 = vld [vmem:[%s203 + $0x1950] sm:$0xff]
        %v2071 = vld [vmem:[%s203 + $0x1958] sm:$0xff]
        %v2072 = vld [vmem:[%s203 + $0x1960] sm:$0xff]
        %v2073 = vld [vmem:[%s203 + $0x1968] sm:$0xff]
        %v2074 = vld [vmem:[%s203 + $0x1970] sm:$0xff]
        %v2075 = vld [vmem:[%s203 + $0x1978] sm:$0xff]
        %v2076 = vld [vmem:[%s203 + $0x1980] sm:$0xff]
        %v2077 = vld [vmem:[%s203 + $0x1988] sm:$0xff]
        %v2078 = vld [vmem:[%s203 + $0x1990] sm:$0xff]
        %v2079 = vld [vmem:[%s203 + $0x1998] sm:$0xff]
        %v2080 = vld [vmem:[%s203 + $0x19a0] sm:$0xff]
        %v2081 = vld [vmem:[%s203 + $0x19a8] sm:$0xff]
        %v2082 = vld [vmem:[%s203 + $0x19b0] sm:$0xff]
        %v2083 = vld [vmem:[%s203 + $0x19b8] sm:$0xff]
        %v2084 = vld [vmem:[%s203 + $0x19c0] sm:$0xff]
        %v2085 = vld [vmem:[%s203 + $0x19c8] sm:$0xff]
        %v2086 = vld [vmem:[%s203 + $0x19d0] sm:$0xff]
        %v2087 = vld [vmem:[%s203 + $0x19d8] sm:$0xff]
        %v2088 = vld [vmem:[%s203 + $0x19e0] sm:$0xff]
        %v2089 = vld [vmem:[%s203 + $0x19e8] sm:$0xff]
        %v2090 = vld [vmem:[%s203 + $0x19f0] sm:$0xff]
        %v2091 = vld [vmem:[%s203 + $0x19f8] sm:$0xff]
        %v2092 = vld [vmem:[%s203 + $0x1a00] sm:$0xff]
        %v2093 = vld [vmem:[%s203 + $0x1a08] sm:$0xff]
        %v2094 = vld [vmem:[%s203 + $0x1a10] sm:$0xff]
        %v2095 = vld [vmem:[%s203 + $0x1a18] sm:$0xff]
        %v2096 = vld [vmem:[%s203 + $0x1a20] sm:$0xff]
        %v2097 = vld [vmem:[%s203 + $0x1a28] sm:$0xff]
        %v2098 = vld [vmem:[%s203 + $0x1a30] sm:$0xff]
        %v2099 = vld [vmem:[%s203 + $0x1a38] sm:$0xff]
        %v2100 = vld [vmem:[%s203 + $0x1a40] sm:$0xff]
        %v2101 = vld [vmem:[%s203 + $0x1a48] sm:$0xff]
        %v2102 = vld [vmem:[%s203 + $0x1a50] sm:$0xff]
        %v2103 = vld [vmem:[%s203 + $0x1a58] sm:$0xff]
        %v2104 = vld [vmem:[%s203 + $0x1a60] sm:$0xff]
        %v2105 = vld [vmem:[%s203 + $0x1a68] sm:$0xff]
        %v2106 = vld [vmem:[%s203 + $0x1a70] sm:$0xff]
        %v2107 = vld [vmem:[%s203 + $0x1a78] sm:$0xff]
        %v2108 = vld [vmem:[%s203 + $0x1a80] sm:$0xff]
        %v2109 = vld [vmem:[%s203 + $0x1a88] sm:$0xff]
        %v2110 = vld [vmem:[%s203 + $0x1a90] sm:$0xff]
        %v2111 = vld [vmem:[%s203 + $0x1a98] sm:$0xff]
        %v2112 = vld [vmem:[%s203 + $0x1aa0] sm:$0xff]
        %v2113 = vld [vmem:[%s203 + $0x1aa8] sm:$0xff]
        %v2114 = vld [vmem:[%s203 + $0x1ab0] sm:$0xff]
        %v2115 = vld [vmem:[%s203 + $0x1ab8] sm:$0xff]
        %v2116 = vld [vmem:[%s203 + $0x1ac0] sm:$0xff]
        %v2117 = vld [vmem:[%s203 + $0x1ac8] sm:$0xff]
        %v2118 = vld [vmem:[%s203 + $0x1ad0] sm:$0xff]
        %v2119 = vld [vmem:[%s203 + $0x1ad8] sm:$0xff]
        %v2120 = vld [vmem:[%s203 + $0x1ae0] sm:$0xff]
        %v2121 = vld [vmem:[%s203 + $0x1ae8] sm:$0xff]
        %v2122 = vld [vmem:[%s203 + $0x1af0] sm:$0xff]
        %v2123 = vld [vmem:[%s203 + $0x1af8] sm:$0xff]
        %v2124 = vld [vmem:[%s203 + $0x1b00] sm:$0xff]
        %v2125 = vld [vmem:[%s203 + $0x1b08] sm:$0xff]
        %v2126 = vld [vmem:[%s203 + $0x1b10] sm:$0xff]
        %v2127 = vld [vmem:[%s203 + $0x1b18] sm:$0xff]
        %v2128 = vld [vmem:[%s203 + $0x1b20] sm:$0xff]
        %v2129 = vld [vmem:[%s203 + $0x1b28] sm:$0xff]
        %v2130 = vld [vmem:[%s203 + $0x1b30] sm:$0xff]
        %v2131 = vld [vmem:[%s203 + $0x1b38] sm:$0xff]
        %v2132 = vld [vmem:[%s203 + $0x1b40] sm:$0xff]
        %v2133 = vld [vmem:[%s203 + $0x1b48] sm:$0xff]
        %v2134 = vld [vmem:[%s203 + $0x1b50] sm:$0xff]
        %v2135 = vld [vmem:[%s203 + $0x1b58] sm:$0xff]
        %v2136 = vld [vmem:[%s203 + $0x1b60] sm:$0xff]
        %v2137 = vld [vmem:[%s203 + $0x1b68] sm:$0xff]
        %v2138 = vld [vmem:[%s203 + $0x1b70] sm:$0xff]
        %v2139 = vld [vmem:[%s203 + $0x1b78] sm:$0xff]
        %v2140 = vld [vmem:[%s203 + $0x1b80] sm:$0xff]
        %v2141 = vld [vmem:[%s203 + $0x1b88] sm:$0xff]
        %v2142 = vld [vmem:[%s203 + $0x1b90] sm:$0xff]
        %v2143 = vld [vmem:[%s203 + $0x1b98] sm:$0xff]
        %v2144 = vld [vmem:[%s203 + $0x1ba0] sm:$0xff]
        %v2145 = vld [vmem:[%s203 + $0x1ba8] sm:$0xff]
        %v2146 = vld [vmem:[%s203 + $0x1bb0] sm:$0xff]
        %v2147 = vld [vmem:[%s203 + $0x1bb8] sm:$0xff]
        %v2148 = vld [vmem:[%s203 + $0x1bc0] sm:$0xff]
        %v2149 = vld [vmem:[%s203 + $0x1bc8] sm:$0xff]
        %v2150 = vld [vmem:[%s203 + $0x1bd0] sm:$0xff]
        %v2151 = vld [vmem:[%s203 + $0x1bd8] sm:$0xff]
        %v2152 = vld [vmem:[%s203 + $0x1be0] sm:$0xff]
        %v2153 = vld [vmem:[%s203 + $0x1be8] sm:$0xff]
        %v2154 = vld [vmem:[%s203 + $0x1bf0] sm:$0xff]
        %v2155 = vld [vmem:[%s203 + $0x1bf8] sm:$0xff]
        %v2156 = vld [vmem:[%s203 + $0x1c00] sm:$0xff]
        %v2157 = vld [vmem:[%s203 + $0x1c08] sm:$0xff]
        %v2158 = vld [vmem:[%s203 + $0x1c10] sm:$0xff]
        %v2159 = vld [vmem:[%s203 + $0x1c18] sm:$0xff]
        %v2160 = vld [vmem:[%s203 + $0x1c20] sm:$0xff]
        %v2161 = vld [vmem:[%s203 + $0x1c28] sm:$0xff]
        %v2162 = vld [vmem:[%s203 + $0x1c30] sm:$0xff]
        %v2163 = vld [vmem:[%s203 + $0x1c38] sm:$0xff]
        %v2164 = vld [vmem:[%s203 + $0x1c40] sm:$0xff]
        %v2165 = vld [vmem:[%s203 + $0x1c48] sm:$0xff]
        %v2166 = vld [vmem:[%s203 + $0x1c50] sm:$0xff]
        %v2167 = vld [vmem:[%s203 + $0x1c58] sm:$0xff]
        %v2168 = vld [vmem:[%s203 + $0x1c60] sm:$0xff]
        %v2169 = vld [vmem:[%s203 + $0x1c68] sm:$0xff]
        %v2170 = vld [vmem:[%s203 + $0x1c70] sm:$0xff]
        %v2171 = vld [vmem:[%s203 + $0x1c78] sm:$0xff]
        %v2172 = vld [vmem:[%s203 + $0x1c80] sm:$0xff]
        %v2173 = vld [vmem:[%s203 + $0x1c88] sm:$0xff]
        %v2174 = vld [vmem:[%s203 + $0x1c90] sm:$0xff]
        %v2175 = vld [vmem:[%s203 + $0x1c98] sm:$0xff]
        %v2176 = vld [vmem:[%s203 + $0x1ca0] sm:$0xff]
        %v2177 = vld [vmem:[%s203 + $0x1ca8] sm:$0xff]
        %v2178 = vld [vmem:[%s203 + $0x1cb0] sm:$0xff]
        %v2179 = vld [vmem:[%s203 + $0x1cb8] sm:$0xff]
        %v2180 = vld [vmem:[%s203 + $0x1cc0] sm:$0xff]
        %v2181 = vld [vmem:[%s203 + $0x1cc8] sm:$0xff]
        %v2182 = vld [vmem:[%s203 + $0x1cd0] sm:$0xff]
        %v2183 = vld [vmem:[%s203 + $0x1cd8] sm:$0xff]
        %v2184 = vld [vmem:[%s203 + $0x1ce0] sm:$0xff]
        %v2185 = vld [vmem:[%s203 + $0x1ce8] sm:$0xff]
        %v2186 = vld [vmem:[%s203 + $0x1cf0] sm:$0xff]
        %v2187 = vld [vmem:[%s203 + $0x1cf8] sm:$0xff]
        %v2188 = vld [vmem:[%s203 + $0x1d00] sm:$0xff]
        %v2189 = vld [vmem:[%s203 + $0x1d08] sm:$0xff]
        %v2190 = vld [vmem:[%s203 + $0x1d10] sm:$0xff]
        %v2191 = vld [vmem:[%s203 + $0x1d18] sm:$0xff]
        %v2192 = vld [vmem:[%s203 + $0x1d20] sm:$0xff]
        %v2193 = vld [vmem:[%s203 + $0x1d28] sm:$0xff]
        %v2194 = vld [vmem:[%s203 + $0x1d30] sm:$0xff]
        %v2195 = vld [vmem:[%s203 + $0x1d38] sm:$0xff]
        %v2196 = vld [vmem:[%s203 + $0x1d40] sm:$0xff]
        %v2197 = vld [vmem:[%s203 + $0x1d48] sm:$0xff]
        %v2198 = vld [vmem:[%s203 + $0x1d50] sm:$0xff]
        %v2199 = vld [vmem:[%s203 + $0x1d58] sm:$0xff]
        %v2200 = vld [vmem:[%s203 + $0x1d60] sm:$0xff]
        %v2201 = vld [vmem:[%s203 + $0x1d68] sm:$0xff]
        %v2202 = vld [vmem:[%s203 + $0x1d70] sm:$0xff]
        %v2203 = vld [vmem:[%s203 + $0x1d78] sm:$0xff]
        %v2204 = vld [vmem:[%s203 + $0x1d80] sm:$0xff]
        %v2205 = vld [vmem:[%s203 + $0x1d88] sm:$0xff]
        %v2206 = vld [vmem:[%s203 + $0x1d90] sm:$0xff]
        %v2207 = vld [vmem:[%s203 + $0x1d98] sm:$0xff]
        %v2208 = vld [vmem:[%s203 + $0x1da0] sm:$0xff]
        %v2209 = vld [vmem:[%s203 + $0x1da8] sm:$0xff]
        %v2210 = vld [vmem:[%s203 + $0x1db0] sm:$0xff]
        %v2211 = vld [vmem:[%s203 + $0x1db8] sm:$0xff]
        %v2212 = vld [vmem:[%s203 + $0x1dc0] sm:$0xff]
        %v2213 = vld [vmem:[%s203 + $0x1dc8] sm:$0xff]
        %v2214 = vld [vmem:[%s203 + $0x1dd0] sm:$0xff]
        %v2215 = vld [vmem:[%s203 + $0x1dd8] sm:$0xff]
        %v2216 = vld [vmem:[%s203 + $0x1de0] sm:$0xff]
        %v2217 = vld [vmem:[%s203 + $0x1de8] sm:$0xff]
        %v2218 = vld [vmem:[%s203 + $0x1df0] sm:$0xff]
        %v2219 = vld [vmem:[%s203 + $0x1df8] sm:$0xff]
        %v2220 = vld [vmem:[%s203 + $0x1e00] sm:$0xff]
        %v2221 = vld [vmem:[%s203 + $0x1e08] sm:$0xff]
        %v2222 = vld [vmem:[%s203 + $0x1e10] sm:$0xff]
        %v2223 = vld [vmem:[%s203 + $0x1e18] sm:$0xff]
        %v2224 = vld [vmem:[%s203 + $0x1e20] sm:$0xff]
        %v2225 = vld [vmem:[%s203 + $0x1e28] sm:$0xff]
        %v2226 = vld [vmem:[%s203 + $0x1e30] sm:$0xff]
        %v2227 = vld [vmem:[%s203 + $0x1e38] sm:$0xff]
        %v2228 = vld [vmem:[%s203 + $0x1e40] sm:$0xff]
        %v2229 = vld [vmem:[%s203 + $0x1e48] sm:$0xff]
        %v2230 = vld [vmem:[%s203 + $0x1e50] sm:$0xff]
        %v2231 = vld [vmem:[%s203 + $0x1e58] sm:$0xff]
        %v2232 = vld [vmem:[%s203 + $0x1e60] sm:$0xff]
        %v2233 = vld [vmem:[%s203 + $0x1e68] sm:$0xff]
        %v2234 = vld [vmem:[%s203 + $0x1e70] sm:$0xff]
        %v2235 = vld [vmem:[%s203 + $0x1e78] sm:$0xff]
        %v2236 = vld [vmem:[%s203 + $0x1e80] sm:$0xff]
        %v2237 = vld [vmem:[%s203 + $0x1e88] sm:$0xff]
        %v2238 = vld [vmem:[%s203 + $0x1e90] sm:$0xff]
        %v2239 = vld [vmem:[%s203 + $0x1e98] sm:$0xff]
        %v2240 = vld [vmem:[%s203 + $0x1ea0] sm:$0xff]
        %v2241 = vld [vmem:[%s203 + $0x1ea8] sm:$0xff]
        %v2242 = vld [vmem:[%s203 + $0x1eb0] sm:$0xff]
        %v2243 = vld [vmem:[%s203 + $0x1eb8] sm:$0xff]
        %v2244 = vld [vmem:[%s203 + $0x1ec0] sm:$0xff]
        %v2245 = vld [vmem:[%s203 + $0x1ec8] sm:$0xff]
        %v2246 = vld [vmem:[%s203 + $0x1ed0] sm:$0xff]
        %v2247 = vld [vmem:[%s203 + $0x1ed8] sm:$0xff]
        %v2248 = vld [vmem:[%s203 + $0x1ee0] sm:$0xff]
        %v2249 = vld [vmem:[%s203 + $0x1ee8] sm:$0xff]
        %v2250 = vld [vmem:[%s203 + $0x1ef0] sm:$0xff]
        %v2251 = vld [vmem:[%s203 + $0x1ef8] sm:$0xff]
        %v2252 = vld [vmem:[%s203 + $0x1f00] sm:$0xff]
        %v2253 = vld [vmem:[%s203 + $0x1f08] sm:$0xff]
        %v2254 = vld [vmem:[%s203 + $0x1f10] sm:$0xff]
        %v2255 = vld [vmem:[%s203 + $0x1f18] sm:$0xff]
        %v2256 = vld [vmem:[%s203 + $0x1f20] sm:$0xff]
        %v2257 = vld [vmem:[%s203 + $0x1f28] sm:$0xff]
        %v2258 = vld [vmem:[%s203 + $0x1f30] sm:$0xff]
        %v2259 = vld [vmem:[%s203 + $0x1f38] sm:$0xff]
        %v2260 = vld [vmem:[%s203 + $0x1f40] sm:$0xff]
        %v2261 = vld [vmem:[%s203 + $0x1f48] sm:$0xff]
        %v2262 = vld [vmem:[%s203 + $0x1f50] sm:$0xff]
        %v2263 = vld [vmem:[%s203 + $0x1f58] sm:$0xff]
        %v2264 = vld [vmem:[%s203 + $0x1f60] sm:$0xff]
        %v2265 = vld [vmem:[%s203 + $0x1f68] sm:$0xff]
        %v2266 = vld [vmem:[%s203 + $0x1f70] sm:$0xff]
        %v2267 = vld [vmem:[%s203 + $0x1f78] sm:$0xff]
        %v2268 = vld [vmem:[%s203 + $0x1f80] sm:$0xff]
        %v2269 = vld [vmem:[%s203 + $0x1f88] sm:$0xff]
        %v2270 = vld [vmem:[%s203 + $0x1f90] sm:$0xff]
        %v2271 = vld [vmem:[%s203 + $0x1f98] sm:$0xff]
        %v2272 = vld [vmem:[%s203 + $0x1fa0] sm:$0xff]
        %v2273 = vld [vmem:[%s203 + $0x1fa8] sm:$0xff]
        %v2274 = vld [vmem:[%s203 + $0x1fb0] sm:$0xff]
        %v2275 = vld [vmem:[%s203 + $0x1fb8] sm:$0xff]
        %v2276 = vld [vmem:[%s203 + $0x1fc0] sm:$0xff]
        %v2277 = vld [vmem:[%s203 + $0x1fc8] sm:$0xff]
        %v2278 = vld [vmem:[%s203 + $0x1fd0] sm:$0xff]
        %v2279 = vld [vmem:[%s203 + $0x1fd8] sm:$0xff]
        %v2280 = vld [vmem:[%s203 + $0x1fe0] sm:$0xff]
        %v2281 = vld [vmem:[%s203 + $0x1fe8] sm:$0xff]
        %v2282 = vld [vmem:[%s203 + $0x1ff0] sm:$0xff]
        %v2283 = vld [vmem:[%s203 + $0x1ff8] sm:$0xff]
        %v2284 = vunpack.c.l.bf16 %v236
        %v2285 = vunpack.c.h.bf16 %v236
        %v2286 = vunpack.c.l.bf16 %v237
        %v2287 = vunpack.c.h.bf16 %v237
        %v2288 = vunpack.c.l.bf16 %v238
        %v2289 = vunpack.c.h.bf16 %v238
        %v2290 = vunpack.c.l.bf16 %v239
        %v2291 = vunpack.c.h.bf16 %v239
        %v2292 = vunpack.c.l.bf16 %v240
        %v2293 = vunpack.c.h.bf16 %v240
        %v2294 = vunpack.c.l.bf16 %v241
        %v2295 = vunpack.c.h.bf16 %v241
        %v2296 = vunpack.c.l.bf16 %v242
        %v2297 = vunpack.c.h.bf16 %v242
        %v2298 = vunpack.c.l.bf16 %v243
        %v2299 = vunpack.c.h.bf16 %v243
        %v2300 = vunpack.c.l.bf16 %v244
        %v2301 = vunpack.c.h.bf16 %v244
        %v2302 = vunpack.c.l.bf16 %v245
        %v2303 = vunpack.c.h.bf16 %v245
        %v2304 = vunpack.c.l.bf16 %v246
        %v2305 = vunpack.c.h.bf16 %v246
        %v2306 = vunpack.c.l.bf16 %v247
        %v2307 = vunpack.c.h.bf16 %v247
        %v2308 = vunpack.c.l.bf16 %v248
        %v2309 = vunpack.c.h.bf16 %v248
        %v2310 = vunpack.c.l.bf16 %v249
        %v2311 = vunpack.c.h.bf16 %v249
        %v2312 = vunpack.c.l.bf16 %v250
        %v2313 = vunpack.c.h.bf16 %v250
        %v2314 = vunpack.c.l.bf16 %v251
        %v2315 = vunpack.c.h.bf16 %v251
        %v2316 = vunpack.c.l.bf16 %v252
        %v2317 = vunpack.c.h.bf16 %v252
        %v2318 = vunpack.c.l.bf16 %v253
        %v2319 = vunpack.c.h.bf16 %v253
        %v2320 = vunpack.c.l.bf16 %v254
        %v2321 = vunpack.c.h.bf16 %v254
        %v2322 = vunpack.c.l.bf16 %v255
        %v2323 = vunpack.c.h.bf16 %v255
        %v2324 = vunpack.c.l.bf16 %v256
        %v2325 = vunpack.c.h.bf16 %v256
        %v2326 = vunpack.c.l.bf16 %v257
        %v2327 = vunpack.c.h.bf16 %v257
        %v2328 = vunpack.c.l.bf16 %v258
        %v2329 = vunpack.c.h.bf16 %v258
        %v2330 = vunpack.c.l.bf16 %v259
        %v2331 = vunpack.c.h.bf16 %v259
        %v2332 = vunpack.c.l.bf16 %v260
        %v2333 = vunpack.c.h.bf16 %v260
        %v2334 = vunpack.c.l.bf16 %v261
        %v2335 = vunpack.c.h.bf16 %v261
        %v2336 = vunpack.c.l.bf16 %v262
        %v2337 = vunpack.c.h.bf16 %v262
        %v2338 = vunpack.c.l.bf16 %v263
        %v2339 = vunpack.c.h.bf16 %v263
        %v2340 = vunpack.c.l.bf16 %v264
        %v2341 = vunpack.c.h.bf16 %v264
        %v2342 = vunpack.c.l.bf16 %v265
        %v2343 = vunpack.c.h.bf16 %v265
        %v2344 = vunpack.c.l.bf16 %v266
        %v2345 = vunpack.c.h.bf16 %v266
        %v2346 = vunpack.c.l.bf16 %v267
        %v2347 = vunpack.c.h.bf16 %v267
        %v2348 = vunpack.c.l.bf16 %v268
        %v2349 = vunpack.c.h.bf16 %v268
        %v2350 = vunpack.c.l.bf16 %v269
        %v2351 = vunpack.c.h.bf16 %v269
        %v2352 = vunpack.c.l.bf16 %v270
        %v2353 = vunpack.c.h.bf16 %v270
        %v2354 = vunpack.c.l.bf16 %v271
        %v2355 = vunpack.c.h.bf16 %v271
        %v2356 = vunpack.c.l.bf16 %v272
        %v2357 = vunpack.c.h.bf16 %v272
        %v2358 = vunpack.c.l.bf16 %v273
        %v2359 = vunpack.c.h.bf16 %v273
        %v2360 = vunpack.c.l.bf16 %v274
        %v2361 = vunpack.c.h.bf16 %v274
        %v2362 = vunpack.c.l.bf16 %v275
        %v2363 = vunpack.c.h.bf16 %v275
        %v2364 = vunpack.c.l.bf16 %v276
        %v2365 = vunpack.c.h.bf16 %v276
        %v2366 = vunpack.c.l.bf16 %v277
        %v2367 = vunpack.c.h.bf16 %v277
        %v2368 = vunpack.c.l.bf16 %v278
        %v2369 = vunpack.c.h.bf16 %v278
        %v2370 = vunpack.c.l.bf16 %v279
        %v2371 = vunpack.c.h.bf16 %v279
        %v2372 = vunpack.c.l.bf16 %v280
        %v2373 = vunpack.c.h.bf16 %v280
        %v2374 = vunpack.c.l.bf16 %v281
        %v2375 = vunpack.c.h.bf16 %v281
        %v2376 = vunpack.c.l.bf16 %v282
        %v2377 = vunpack.c.h.bf16 %v282
        %v2378 = vunpack.c.l.bf16 %v283
        %v2379 = vunpack.c.h.bf16 %v283
        %v2380 = vunpack.c.l.bf16 %v284
        %v2381 = vunpack.c.h.bf16 %v284
        %v2382 = vunpack.c.l.bf16 %v285
        %v2383 = vunpack.c.h.bf16 %v285
        %v2384 = vunpack.c.l.bf16 %v286
        %v2385 = vunpack.c.h.bf16 %v286
        %v2386 = vunpack.c.l.bf16 %v287
        %v2387 = vunpack.c.h.bf16 %v287
        %v2388 = vunpack.c.l.bf16 %v288
        %v2389 = vunpack.c.h.bf16 %v288
        %v2390 = vunpack.c.l.bf16 %v289
        %v2391 = vunpack.c.h.bf16 %v289
        %v2392 = vunpack.c.l.bf16 %v290
        %v2393 = vunpack.c.h.bf16 %v290
        %v2394 = vunpack.c.l.bf16 %v291
        %v2395 = vunpack.c.h.bf16 %v291
        %v2396 = vunpack.c.l.bf16 %v292
        %v2397 = vunpack.c.h.bf16 %v292
        %v2398 = vunpack.c.l.bf16 %v293
        %v2399 = vunpack.c.h.bf16 %v293
        %v2400 = vunpack.c.l.bf16 %v294
        %v2401 = vunpack.c.h.bf16 %v294
        %v2402 = vunpack.c.l.bf16 %v295
        %v2403 = vunpack.c.h.bf16 %v295
        %v2404 = vunpack.c.l.bf16 %v296
        %v2405 = vunpack.c.h.bf16 %v296
        %v2406 = vunpack.c.l.bf16 %v297
        %v2407 = vunpack.c.h.bf16 %v297
        %v2408 = vunpack.c.l.bf16 %v298
        %v2409 = vunpack.c.h.bf16 %v298
        %v2410 = vunpack.c.l.bf16 %v299
        %v2411 = vunpack.c.h.bf16 %v299
        %v2412 = vunpack.c.l.bf16 %v300
        %v2413 = vunpack.c.h.bf16 %v300
        %v2414 = vunpack.c.l.bf16 %v301
        %v2415 = vunpack.c.h.bf16 %v301
        %v2416 = vunpack.c.l.bf16 %v302
        %v2417 = vunpack.c.h.bf16 %v302
        %v2418 = vunpack.c.l.bf16 %v303
        %v2419 = vunpack.c.h.bf16 %v303
        %v2420 = vunpack.c.l.bf16 %v304
        %v2421 = vunpack.c.h.bf16 %v304
        %v2422 = vunpack.c.l.bf16 %v305
        %v2423 = vunpack.c.h.bf16 %v305
        %v2424 = vunpack.c.l.bf16 %v306
        %v2425 = vunpack.c.h.bf16 %v306
        %v2426 = vunpack.c.l.bf16 %v307
        %v2427 = vunpack.c.h.bf16 %v307
        %v2428 = vunpack.c.l.bf16 %v308
        %v2429 = vunpack.c.h.bf16 %v308
        %v2430 = vunpack.c.l.bf16 %v309
        %v2431 = vunpack.c.h.bf16 %v309
        %v2432 = vunpack.c.l.bf16 %v310
        %v2433 = vunpack.c.h.bf16 %v310
        %v2434 = vunpack.c.l.bf16 %v311
        %v2435 = vunpack.c.h.bf16 %v311
        %v2436 = vunpack.c.l.bf16 %v312
        %v2437 = vunpack.c.h.bf16 %v312
        %v2438 = vunpack.c.l.bf16 %v313
        %v2439 = vunpack.c.h.bf16 %v313
        %v2440 = vunpack.c.l.bf16 %v314
        %v2441 = vunpack.c.h.bf16 %v314
        %v2442 = vunpack.c.l.bf16 %v315
        %v2443 = vunpack.c.h.bf16 %v315
        %v2444 = vunpack.c.l.bf16 %v316
        %v2445 = vunpack.c.h.bf16 %v316
        %v2446 = vunpack.c.l.bf16 %v317
        %v2447 = vunpack.c.h.bf16 %v317
        %v2448 = vunpack.c.l.bf16 %v318
        %v2449 = vunpack.c.h.bf16 %v318
        %v2450 = vunpack.c.l.bf16 %v319
        %v2451 = vunpack.c.h.bf16 %v319
        %v2452 = vunpack.c.l.bf16 %v320
        %v2453 = vunpack.c.h.bf16 %v320
        %v2454 = vunpack.c.l.bf16 %v321
        %v2455 = vunpack.c.h.bf16 %v321
        %v2456 = vunpack.c.l.bf16 %v322
        %v2457 = vunpack.c.h.bf16 %v322
        %v2458 = vunpack.c.l.bf16 %v323
        %v2459 = vunpack.c.h.bf16 %v323
        %v2460 = vunpack.c.l.bf16 %v324
        %v2461 = vunpack.c.h.bf16 %v324
        %v2462 = vunpack.c.l.bf16 %v325
        %v2463 = vunpack.c.h.bf16 %v325
        %v2464 = vunpack.c.l.bf16 %v326
        %v2465 = vunpack.c.h.bf16 %v326
        %v2466 = vunpack.c.l.bf16 %v327
        %v2467 = vunpack.c.h.bf16 %v327
        %v2468 = vunpack.c.l.bf16 %v328
        %v2469 = vunpack.c.h.bf16 %v328
        %v2470 = vunpack.c.l.bf16 %v329
        %v2471 = vunpack.c.h.bf16 %v329
        %v2472 = vunpack.c.l.bf16 %v330
        %v2473 = vunpack.c.h.bf16 %v330
        %v2474 = vunpack.c.l.bf16 %v331
        %v2475 = vunpack.c.h.bf16 %v331
        %v2476 = vunpack.c.l.bf16 %v332
        %v2477 = vunpack.c.h.bf16 %v332
        %v2478 = vunpack.c.l.bf16 %v333
        %v2479 = vunpack.c.h.bf16 %v333
        %v2480 = vunpack.c.l.bf16 %v334
        %v2481 = vunpack.c.h.bf16 %v334
        %v2482 = vunpack.c.l.bf16 %v335
        %v2483 = vunpack.c.h.bf16 %v335
        %v2484 = vunpack.c.l.bf16 %v336
        %v2485 = vunpack.c.h.bf16 %v336
        %v2486 = vunpack.c.l.bf16 %v337
        %v2487 = vunpack.c.h.bf16 %v337
        %v2488 = vunpack.c.l.bf16 %v338
        %v2489 = vunpack.c.h.bf16 %v338
        %v2490 = vunpack.c.l.bf16 %v339
        %v2491 = vunpack.c.h.bf16 %v339
        %v2492 = vunpack.c.l.bf16 %v340
        %v2493 = vunpack.c.h.bf16 %v340
        %v2494 = vunpack.c.l.bf16 %v341
        %v2495 = vunpack.c.h.bf16 %v341
        %v2496 = vunpack.c.l.bf16 %v342
        %v2497 = vunpack.c.h.bf16 %v342
        %v2498 = vunpack.c.l.bf16 %v343
        %v2499 = vunpack.c.h.bf16 %v343
        %v2500 = vunpack.c.l.bf16 %v344
        %v2501 = vunpack.c.h.bf16 %v344
        %v2502 = vunpack.c.l.bf16 %v345
        %v2503 = vunpack.c.h.bf16 %v345
        %v2504 = vunpack.c.l.bf16 %v346
        %v2505 = vunpack.c.h.bf16 %v346
        %v2506 = vunpack.c.l.bf16 %v347
        %v2507 = vunpack.c.h.bf16 %v347
        %v2508 = vunpack.c.l.bf16 %v348
        %v2509 = vunpack.c.h.bf16 %v348
        %v2510 = vunpack.c.l.bf16 %v349
        %v2511 = vunpack.c.h.bf16 %v349
        %v2512 = vunpack.c.l.bf16 %v350
        %v2513 = vunpack.c.h.bf16 %v350
        %v2514 = vunpack.c.l.bf16 %v351
        %v2515 = vunpack.c.h.bf16 %v351
        %v2516 = vunpack.c.l.bf16 %v352
        %v2517 = vunpack.c.h.bf16 %v352
        %v2518 = vunpack.c.l.bf16 %v353
        %v2519 = vunpack.c.h.bf16 %v353
        %v2520 = vunpack.c.l.bf16 %v354
        %v2521 = vunpack.c.h.bf16 %v354
        %v2522 = vunpack.c.l.bf16 %v355
        %v2523 = vunpack.c.h.bf16 %v355
        %v2524 = vunpack.c.l.bf16 %v356
        %v2525 = vunpack.c.h.bf16 %v356
        %v2526 = vunpack.c.l.bf16 %v357
        %v2527 = vunpack.c.h.bf16 %v357
        %v2528 = vunpack.c.l.bf16 %v358
        %v2529 = vunpack.c.h.bf16 %v358
        %v2530 = vunpack.c.l.bf16 %v359
        %v2531 = vunpack.c.h.bf16 %v359
        %v2532 = vunpack.c.l.bf16 %v360
        %v2533 = vunpack.c.h.bf16 %v360
        %v2534 = vunpack.c.l.bf16 %v361
        %v2535 = vunpack.c.h.bf16 %v361
        %v2536 = vunpack.c.l.bf16 %v362
        %v2537 = vunpack.c.h.bf16 %v362
        %v2538 = vunpack.c.l.bf16 %v363
        %v2539 = vunpack.c.h.bf16 %v363
        %v2540 = vunpack.c.l.bf16 %v364
        %v2541 = vunpack.c.h.bf16 %v364
        %v2542 = vunpack.c.l.bf16 %v365
        %v2543 = vunpack.c.h.bf16 %v365
        %v2544 = vunpack.c.l.bf16 %v366
        %v2545 = vunpack.c.h.bf16 %v366
        %v2546 = vunpack.c.l.bf16 %v367
        %v2547 = vunpack.c.h.bf16 %v367
        %v2548 = vunpack.c.l.bf16 %v368
        %v2549 = vunpack.c.h.bf16 %v368
        %v2550 = vunpack.c.l.bf16 %v369
        %v2551 = vunpack.c.h.bf16 %v369
        %v2552 = vunpack.c.l.bf16 %v370
        %v2553 = vunpack.c.h.bf16 %v370
        %v2554 = vunpack.c.l.bf16 %v371
        %v2555 = vunpack.c.h.bf16 %v371
        %v2556 = vunpack.c.l.bf16 %v372
        %v2557 = vunpack.c.h.bf16 %v372
        %v2558 = vunpack.c.l.bf16 %v373
        %v2559 = vunpack.c.h.bf16 %v373
        %v2560 = vunpack.c.l.bf16 %v374
        %v2561 = vunpack.c.h.bf16 %v374
        %v2562 = vunpack.c.l.bf16 %v375
        %v2563 = vunpack.c.h.bf16 %v375
        %v2564 = vunpack.c.l.bf16 %v376
        %v2565 = vunpack.c.h.bf16 %v376
        %v2566 = vunpack.c.l.bf16 %v377
        %v2567 = vunpack.c.h.bf16 %v377
        %v2568 = vunpack.c.l.bf16 %v378
        %v2569 = vunpack.c.h.bf16 %v378
        %v2570 = vunpack.c.l.bf16 %v379
        %v2571 = vunpack.c.h.bf16 %v379
        %v2572 = vunpack.c.l.bf16 %v380
        %v2573 = vunpack.c.h.bf16 %v380
        %v2574 = vunpack.c.l.bf16 %v381
        %v2575 = vunpack.c.h.bf16 %v381
        %v2576 = vunpack.c.l.bf16 %v382
        %v2577 = vunpack.c.h.bf16 %v382
        %v2578 = vunpack.c.l.bf16 %v383
        %v2579 = vunpack.c.h.bf16 %v383
        %v2580 = vunpack.c.l.bf16 %v384
        %v2581 = vunpack.c.h.bf16 %v384
        %v2582 = vunpack.c.l.bf16 %v385
        %v2583 = vunpack.c.h.bf16 %v385
        %v2584 = vunpack.c.l.bf16 %v386
        %v2585 = vunpack.c.h.bf16 %v386
        %v2586 = vunpack.c.l.bf16 %v387
        %v2587 = vunpack.c.h.bf16 %v387
        %v2588 = vunpack.c.l.bf16 %v388
        %v2589 = vunpack.c.h.bf16 %v388
        %v2590 = vunpack.c.l.bf16 %v389
        %v2591 = vunpack.c.h.bf16 %v389
        %v2592 = vunpack.c.l.bf16 %v390
        %v2593 = vunpack.c.h.bf16 %v390
        %v2594 = vunpack.c.l.bf16 %v391
        %v2595 = vunpack.c.h.bf16 %v391
        %v2596 = vunpack.c.l.bf16 %v392
        %v2597 = vunpack.c.h.bf16 %v392
        %v2598 = vunpack.c.l.bf16 %v393
        %v2599 = vunpack.c.h.bf16 %v393
        %v2600 = vunpack.c.l.bf16 %v394
        %v2601 = vunpack.c.h.bf16 %v394
        %v2602 = vunpack.c.l.bf16 %v395
        %v2603 = vunpack.c.h.bf16 %v395
        %v2604 = vunpack.c.l.bf16 %v396
        %v2605 = vunpack.c.h.bf16 %v396
        %v2606 = vunpack.c.l.bf16 %v397
        %v2607 = vunpack.c.h.bf16 %v397
        %v2608 = vunpack.c.l.bf16 %v398
        %v2609 = vunpack.c.h.bf16 %v398
        %v2610 = vunpack.c.l.bf16 %v399
        %v2611 = vunpack.c.h.bf16 %v399
        %v2612 = vunpack.c.l.bf16 %v400
        %v2613 = vunpack.c.h.bf16 %v400
        %v2614 = vunpack.c.l.bf16 %v401
        %v2615 = vunpack.c.h.bf16 %v401
        %v2616 = vunpack.c.l.bf16 %v402
        %v2617 = vunpack.c.h.bf16 %v402
        %v2618 = vunpack.c.l.bf16 %v403
        %v2619 = vunpack.c.h.bf16 %v403
        %v2620 = vunpack.c.l.bf16 %v404
        %v2621 = vunpack.c.h.bf16 %v404
        %v2622 = vunpack.c.l.bf16 %v405
        %v2623 = vunpack.c.h.bf16 %v405
        %v2624 = vunpack.c.l.bf16 %v406
        %v2625 = vunpack.c.h.bf16 %v406
        %v2626 = vunpack.c.l.bf16 %v407
        %v2627 = vunpack.c.h.bf16 %v407
        %v2628 = vunpack.c.l.bf16 %v408
        %v2629 = vunpack.c.h.bf16 %v408
        %v2630 = vunpack.c.l.bf16 %v409
        %v2631 = vunpack.c.h.bf16 %v409
        %v2632 = vunpack.c.l.bf16 %v410
        %v2633 = vunpack.c.h.bf16 %v410
        %v2634 = vunpack.c.l.bf16 %v411
        %v2635 = vunpack.c.h.bf16 %v411
        %v2636 = vunpack.c.l.bf16 %v412
        %v2637 = vunpack.c.h.bf16 %v412
        %v2638 = vunpack.c.l.bf16 %v413
        %v2639 = vunpack.c.h.bf16 %v413
        %v2640 = vunpack.c.l.bf16 %v414
        %v2641 = vunpack.c.h.bf16 %v414
        %v2642 = vunpack.c.l.bf16 %v415
        %v2643 = vunpack.c.h.bf16 %v415
        %v2644 = vunpack.c.l.bf16 %v416
        %v2645 = vunpack.c.h.bf16 %v416
        %v2646 = vunpack.c.l.bf16 %v417
        %v2647 = vunpack.c.h.bf16 %v417
        %v2648 = vunpack.c.l.bf16 %v418
        %v2649 = vunpack.c.h.bf16 %v418
        %v2650 = vunpack.c.l.bf16 %v419
        %v2651 = vunpack.c.h.bf16 %v419
        %v2652 = vunpack.c.l.bf16 %v420
        %v2653 = vunpack.c.h.bf16 %v420
        %v2654 = vunpack.c.l.bf16 %v421
        %v2655 = vunpack.c.h.bf16 %v421
        %v2656 = vunpack.c.l.bf16 %v422
        %v2657 = vunpack.c.h.bf16 %v422
        %v2658 = vunpack.c.l.bf16 %v423
        %v2659 = vunpack.c.h.bf16 %v423
        %v2660 = vunpack.c.l.bf16 %v424
        %v2661 = vunpack.c.h.bf16 %v424
        %v2662 = vunpack.c.l.bf16 %v425
        %v2663 = vunpack.c.h.bf16 %v425
        %v2664 = vunpack.c.l.bf16 %v426
        %v2665 = vunpack.c.h.bf16 %v426
        %v2666 = vunpack.c.l.bf16 %v427
        %v2667 = vunpack.c.h.bf16 %v427
        %v2668 = vunpack.c.l.bf16 %v428
        %v2669 = vunpack.c.h.bf16 %v428
        %v2670 = vunpack.c.l.bf16 %v429
        %v2671 = vunpack.c.h.bf16 %v429
        %v2672 = vunpack.c.l.bf16 %v430
        %v2673 = vunpack.c.h.bf16 %v430
        %v2674 = vunpack.c.l.bf16 %v431
        %v2675 = vunpack.c.h.bf16 %v431
        %v2676 = vunpack.c.l.bf16 %v432
        %v2677 = vunpack.c.h.bf16 %v432
        %v2678 = vunpack.c.l.bf16 %v433
        %v2679 = vunpack.c.h.bf16 %v433
        %v2680 = vunpack.c.l.bf16 %v434
        %v2681 = vunpack.c.h.bf16 %v434
        %v2682 = vunpack.c.l.bf16 %v435
        %v2683 = vunpack.c.h.bf16 %v435
        %v2684 = vunpack.c.l.bf16 %v436
        %v2685 = vunpack.c.h.bf16 %v436
        %v2686 = vunpack.c.l.bf16 %v437
        %v2687 = vunpack.c.h.bf16 %v437
        %v2688 = vunpack.c.l.bf16 %v438
        %v2689 = vunpack.c.h.bf16 %v438
        %v2690 = vunpack.c.l.bf16 %v439
        %v2691 = vunpack.c.h.bf16 %v439
        %v2692 = vunpack.c.l.bf16 %v440
        %v2693 = vunpack.c.h.bf16 %v440
        %v2694 = vunpack.c.l.bf16 %v441
        %v2695 = vunpack.c.h.bf16 %v441
        %v2696 = vunpack.c.l.bf16 %v442
        %v2697 = vunpack.c.h.bf16 %v442
        %v2698 = vunpack.c.l.bf16 %v443
        %v2699 = vunpack.c.h.bf16 %v443
        %v2700 = vunpack.c.l.bf16 %v444
        %v2701 = vunpack.c.h.bf16 %v444
        %v2702 = vunpack.c.l.bf16 %v445
        %v2703 = vunpack.c.h.bf16 %v445
        %v2704 = vunpack.c.l.bf16 %v446
        %v2705 = vunpack.c.h.bf16 %v446
        %v2706 = vunpack.c.l.bf16 %v447
        %v2707 = vunpack.c.h.bf16 %v447
        %v2708 = vunpack.c.l.bf16 %v448
        %v2709 = vunpack.c.h.bf16 %v448
        %v2710 = vunpack.c.l.bf16 %v449
        %v2711 = vunpack.c.h.bf16 %v449
        %v2712 = vunpack.c.l.bf16 %v450
        %v2713 = vunpack.c.h.bf16 %v450
        %v2714 = vunpack.c.l.bf16 %v451
        %v2715 = vunpack.c.h.bf16 %v451
        %v2716 = vunpack.c.l.bf16 %v452
        %v2717 = vunpack.c.h.bf16 %v452
        %v2718 = vunpack.c.l.bf16 %v453
        %v2719 = vunpack.c.h.bf16 %v453
        %v2720 = vunpack.c.l.bf16 %v454
        %v2721 = vunpack.c.h.bf16 %v454
        %v2722 = vunpack.c.l.bf16 %v455
        %v2723 = vunpack.c.h.bf16 %v455
        %v2724 = vunpack.c.l.bf16 %v456
        %v2725 = vunpack.c.h.bf16 %v456
        %v2726 = vunpack.c.l.bf16 %v457
        %v2727 = vunpack.c.h.bf16 %v457
        %v2728 = vunpack.c.l.bf16 %v458
        %v2729 = vunpack.c.h.bf16 %v458
        %v2730 = vunpack.c.l.bf16 %v459
        %v2731 = vunpack.c.h.bf16 %v459
        %v2732 = vunpack.c.l.bf16 %v460
        %v2733 = vunpack.c.h.bf16 %v460
        %v2734 = vunpack.c.l.bf16 %v461
        %v2735 = vunpack.c.h.bf16 %v461
        %v2736 = vunpack.c.l.bf16 %v462
        %v2737 = vunpack.c.h.bf16 %v462
        %v2738 = vunpack.c.l.bf16 %v463
        %v2739 = vunpack.c.h.bf16 %v463
        %v2740 = vunpack.c.l.bf16 %v464
        %v2741 = vunpack.c.h.bf16 %v464
        %v2742 = vunpack.c.l.bf16 %v465
        %v2743 = vunpack.c.h.bf16 %v465
        %v2744 = vunpack.c.l.bf16 %v466
        %v2745 = vunpack.c.h.bf16 %v466
        %v2746 = vunpack.c.l.bf16 %v467
        %v2747 = vunpack.c.h.bf16 %v467
        %v2748 = vunpack.c.l.bf16 %v468
        %v2749 = vunpack.c.h.bf16 %v468
        %v2750 = vunpack.c.l.bf16 %v469
        %v2751 = vunpack.c.h.bf16 %v469
        %v2752 = vunpack.c.l.bf16 %v470
        %v2753 = vunpack.c.h.bf16 %v470
        %v2754 = vunpack.c.l.bf16 %v471
        %v2755 = vunpack.c.h.bf16 %v471
        %v2756 = vunpack.c.l.bf16 %v472
        %v2757 = vunpack.c.h.bf16 %v472
        %v2758 = vunpack.c.l.bf16 %v473
        %v2759 = vunpack.c.h.bf16 %v473
        %v2760 = vunpack.c.l.bf16 %v474
        %v2761 = vunpack.c.h.bf16 %v474
        %v2762 = vunpack.c.l.bf16 %v475
        %v2763 = vunpack.c.h.bf16 %v475
        %v2764 = vunpack.c.l.bf16 %v476
        %v2765 = vunpack.c.h.bf16 %v476
        %v2766 = vunpack.c.l.bf16 %v477
        %v2767 = vunpack.c.h.bf16 %v477
        %v2768 = vunpack.c.l.bf16 %v478
        %v2769 = vunpack.c.h.bf16 %v478
        %v2770 = vunpack.c.l.bf16 %v479
        %v2771 = vunpack.c.h.bf16 %v479
        %v2772 = vunpack.c.l.bf16 %v480
        %v2773 = vunpack.c.h.bf16 %v480
        %v2774 = vunpack.c.l.bf16 %v481
        %v2775 = vunpack.c.h.bf16 %v481
        %v2776 = vunpack.c.l.bf16 %v482
        %v2777 = vunpack.c.h.bf16 %v482
        %v2778 = vunpack.c.l.bf16 %v483
        %v2779 = vunpack.c.h.bf16 %v483
        %v2780 = vunpack.c.l.bf16 %v484
        %v2781 = vunpack.c.h.bf16 %v484
        %v2782 = vunpack.c.l.bf16 %v485
        %v2783 = vunpack.c.h.bf16 %v485
        %v2784 = vunpack.c.l.bf16 %v486
        %v2785 = vunpack.c.h.bf16 %v486
        %v2786 = vunpack.c.l.bf16 %v487
        %v2787 = vunpack.c.h.bf16 %v487
        %v2788 = vunpack.c.l.bf16 %v488
        %v2789 = vunpack.c.h.bf16 %v488
        %v2790 = vunpack.c.l.bf16 %v489
        %v2791 = vunpack.c.h.bf16 %v489
        %v2792 = vunpack.c.l.bf16 %v490
        %v2793 = vunpack.c.h.bf16 %v490
        %v2794 = vunpack.c.l.bf16 %v491
        %v2795 = vunpack.c.h.bf16 %v491
        %v2796 = vunpack.c.l.bf16 %v492
        %v2797 = vunpack.c.h.bf16 %v492
        %v2798 = vunpack.c.l.bf16 %v493
        %v2799 = vunpack.c.h.bf16 %v493
        %v2800 = vunpack.c.l.bf16 %v494
        %v2801 = vunpack.c.h.bf16 %v494
        %v2802 = vunpack.c.l.bf16 %v495
        %v2803 = vunpack.c.h.bf16 %v495
        %v2804 = vunpack.c.l.bf16 %v496
        %v2805 = vunpack.c.h.bf16 %v496
        %v2806 = vunpack.c.l.bf16 %v497
        %v2807 = vunpack.c.h.bf16 %v497
        %v2808 = vunpack.c.l.bf16 %v498
        %v2809 = vunpack.c.h.bf16 %v498
        %v2810 = vunpack.c.l.bf16 %v499
        %v2811 = vunpack.c.h.bf16 %v499
        %v2812 = vunpack.c.l.bf16 %v500
        %v2813 = vunpack.c.h.bf16 %v500
        %v2814 = vunpack.c.l.bf16 %v501
        %v2815 = vunpack.c.h.bf16 %v501
        %v2816 = vunpack.c.l.bf16 %v502
        %v2817 = vunpack.c.h.bf16 %v502
        %v2818 = vunpack.c.l.bf16 %v503
        %v2819 = vunpack.c.h.bf16 %v503
        %v2820 = vunpack.c.l.bf16 %v504
        %v2821 = vunpack.c.h.bf16 %v504
        %v2822 = vunpack.c.l.bf16 %v505
        %v2823 = vunpack.c.h.bf16 %v505
        %v2824 = vunpack.c.l.bf16 %v506
        %v2825 = vunpack.c.h.bf16 %v506
        %v2826 = vunpack.c.l.bf16 %v507
        %v2827 = vunpack.c.h.bf16 %v507
        %v2828 = vunpack.c.l.bf16 %v508
        %v2829 = vunpack.c.h.bf16 %v508
        %v2830 = vunpack.c.l.bf16 %v509
        %v2831 = vunpack.c.h.bf16 %v509
        %v2832 = vunpack.c.l.bf16 %v510
        %v2833 = vunpack.c.h.bf16 %v510
        %v2834 = vunpack.c.l.bf16 %v511
        %v2835 = vunpack.c.h.bf16 %v511
        %v2836 = vunpack.c.l.bf16 %v512
        %v2837 = vunpack.c.h.bf16 %v512
        %v2838 = vunpack.c.l.bf16 %v513
        %v2839 = vunpack.c.h.bf16 %v513
        %v2840 = vunpack.c.l.bf16 %v514
        %v2841 = vunpack.c.h.bf16 %v514
        %v2842 = vunpack.c.l.bf16 %v515
        %v2843 = vunpack.c.h.bf16 %v515
        %v2844 = vunpack.c.l.bf16 %v516
        %v2845 = vunpack.c.h.bf16 %v516
        %v2846 = vunpack.c.l.bf16 %v517
        %v2847 = vunpack.c.h.bf16 %v517
        %v2848 = vunpack.c.l.bf16 %v518
        %v2849 = vunpack.c.h.bf16 %v518
        %v2850 = vunpack.c.l.bf16 %v519
        %v2851 = vunpack.c.h.bf16 %v519
        %v2852 = vunpack.c.l.bf16 %v520
        %v2853 = vunpack.c.h.bf16 %v520
        %v2854 = vunpack.c.l.bf16 %v521
        %v2855 = vunpack.c.h.bf16 %v521
        %v2856 = vunpack.c.l.bf16 %v522
        %v2857 = vunpack.c.h.bf16 %v522
        %v2858 = vunpack.c.l.bf16 %v523
        %v2859 = vunpack.c.h.bf16 %v523
        %v2860 = vunpack.c.l.bf16 %v524
        %v2861 = vunpack.c.h.bf16 %v524
        %v2862 = vunpack.c.l.bf16 %v525
        %v2863 = vunpack.c.h.bf16 %v525
        %v2864 = vunpack.c.l.bf16 %v526
        %v2865 = vunpack.c.h.bf16 %v526
        %v2866 = vunpack.c.l.bf16 %v527
        %v2867 = vunpack.c.h.bf16 %v527
        %v2868 = vunpack.c.l.bf16 %v528
        %v2869 = vunpack.c.h.bf16 %v528
        %v2870 = vunpack.c.l.bf16 %v529
        %v2871 = vunpack.c.h.bf16 %v529
        %v2872 = vunpack.c.l.bf16 %v530
        %v2873 = vunpack.c.h.bf16 %v530
        %v2874 = vunpack.c.l.bf16 %v531
        %v2875 = vunpack.c.h.bf16 %v531
        %v2876 = vunpack.c.l.bf16 %v532
        %v2877 = vunpack.c.h.bf16 %v532
        %v2878 = vunpack.c.l.bf16 %v533
        %v2879 = vunpack.c.h.bf16 %v533
        %v2880 = vunpack.c.l.bf16 %v534
        %v2881 = vunpack.c.h.bf16 %v534
        %v2882 = vunpack.c.l.bf16 %v535
        %v2883 = vunpack.c.h.bf16 %v535
        %v2884 = vunpack.c.l.bf16 %v536
        %v2885 = vunpack.c.h.bf16 %v536
        %v2886 = vunpack.c.l.bf16 %v537
        %v2887 = vunpack.c.h.bf16 %v537
        %v2888 = vunpack.c.l.bf16 %v538
        %v2889 = vunpack.c.h.bf16 %v538
        %v2890 = vunpack.c.l.bf16 %v539
        %v2891 = vunpack.c.h.bf16 %v539
        %v2892 = vunpack.c.l.bf16 %v540
        %v2893 = vunpack.c.h.bf16 %v540
        %v2894 = vunpack.c.l.bf16 %v541
        %v2895 = vunpack.c.h.bf16 %v541
        %v2896 = vunpack.c.l.bf16 %v542
        %v2897 = vunpack.c.h.bf16 %v542
        %v2898 = vunpack.c.l.bf16 %v543
        %v2899 = vunpack.c.h.bf16 %v543
        %v2900 = vunpack.c.l.bf16 %v544
        %v2901 = vunpack.c.h.bf16 %v544
        %v2902 = vunpack.c.l.bf16 %v545
        %v2903 = vunpack.c.h.bf16 %v545
        %v2904 = vunpack.c.l.bf16 %v546
        %v2905 = vunpack.c.h.bf16 %v546
        %v2906 = vunpack.c.l.bf16 %v547
        %v2907 = vunpack.c.h.bf16 %v547
        %v2908 = vunpack.c.l.bf16 %v548
        %v2909 = vunpack.c.h.bf16 %v548
        %v2910 = vunpack.c.l.bf16 %v549
        %v2911 = vunpack.c.h.bf16 %v549
        %v2912 = vunpack.c.l.bf16 %v550
        %v2913 = vunpack.c.h.bf16 %v550
        %v2914 = vunpack.c.l.bf16 %v551
        %v2915 = vunpack.c.h.bf16 %v551
        %v2916 = vunpack.c.l.bf16 %v552
        %v2917 = vunpack.c.h.bf16 %v552
        %v2918 = vunpack.c.l.bf16 %v553
        %v2919 = vunpack.c.h.bf16 %v553
        %v2920 = vunpack.c.l.bf16 %v554
        %v2921 = vunpack.c.h.bf16 %v554
        %v2922 = vunpack.c.l.bf16 %v555
        %v2923 = vunpack.c.h.bf16 %v555
        %v2924 = vunpack.c.l.bf16 %v556
        %v2925 = vunpack.c.h.bf16 %v556
        %v2926 = vunpack.c.l.bf16 %v557
        %v2927 = vunpack.c.h.bf16 %v557
        %v2928 = vunpack.c.l.bf16 %v558
        %v2929 = vunpack.c.h.bf16 %v558
        %v2930 = vunpack.c.l.bf16 %v559
        %v2931 = vunpack.c.h.bf16 %v559
        %v2932 = vunpack.c.l.bf16 %v560
        %v2933 = vunpack.c.h.bf16 %v560
        %v2934 = vunpack.c.l.bf16 %v561
        %v2935 = vunpack.c.h.bf16 %v561
        %v2936 = vunpack.c.l.bf16 %v562
        %v2937 = vunpack.c.h.bf16 %v562
        %v2938 = vunpack.c.l.bf16 %v563
        %v2939 = vunpack.c.h.bf16 %v563
        %v2940 = vunpack.c.l.bf16 %v564
        %v2941 = vunpack.c.h.bf16 %v564
        %v2942 = vunpack.c.l.bf16 %v565
        %v2943 = vunpack.c.h.bf16 %v565
        %v2944 = vunpack.c.l.bf16 %v566
        %v2945 = vunpack.c.h.bf16 %v566
        %v2946 = vunpack.c.l.bf16 %v567
        %v2947 = vunpack.c.h.bf16 %v567
        %v2948 = vunpack.c.l.bf16 %v568
        %v2949 = vunpack.c.h.bf16 %v568
        %v2950 = vunpack.c.l.bf16 %v569
        %v2951 = vunpack.c.h.bf16 %v569
        %v2952 = vunpack.c.l.bf16 %v570
        %v2953 = vunpack.c.h.bf16 %v570
        %v2954 = vunpack.c.l.bf16 %v571
        %v2955 = vunpack.c.h.bf16 %v571
        %v2956 = vunpack.c.l.bf16 %v572
        %v2957 = vunpack.c.h.bf16 %v572
        %v2958 = vunpack.c.l.bf16 %v573
        %v2959 = vunpack.c.h.bf16 %v573
        %v2960 = vunpack.c.l.bf16 %v574
        %v2961 = vunpack.c.h.bf16 %v574
        %v2962 = vunpack.c.l.bf16 %v575
        %v2963 = vunpack.c.h.bf16 %v575
        %v2964 = vunpack.c.l.bf16 %v576
        %v2965 = vunpack.c.h.bf16 %v576
        %v2966 = vunpack.c.l.bf16 %v577
        %v2967 = vunpack.c.h.bf16 %v577
        %v2968 = vunpack.c.l.bf16 %v578
        %v2969 = vunpack.c.h.bf16 %v578
        %v2970 = vunpack.c.l.bf16 %v579
        %v2971 = vunpack.c.h.bf16 %v579
        %v2972 = vunpack.c.l.bf16 %v580
        %v2973 = vunpack.c.h.bf16 %v580
        %v2974 = vunpack.c.l.bf16 %v581
        %v2975 = vunpack.c.h.bf16 %v581
        %v2976 = vunpack.c.l.bf16 %v582
        %v2977 = vunpack.c.h.bf16 %v582
        %v2978 = vunpack.c.l.bf16 %v583
        %v2979 = vunpack.c.h.bf16 %v583
        %v2980 = vunpack.c.l.bf16 %v584
        %v2981 = vunpack.c.h.bf16 %v584
        %v2982 = vunpack.c.l.bf16 %v585
        %v2983 = vunpack.c.h.bf16 %v585
        %v2984 = vunpack.c.l.bf16 %v586
        %v2985 = vunpack.c.h.bf16 %v586
        %v2986 = vunpack.c.l.bf16 %v587
        %v2987 = vunpack.c.h.bf16 %v587
        %v2988 = vunpack.c.l.bf16 %v588
        %v2989 = vunpack.c.h.bf16 %v588
        %v2990 = vunpack.c.l.bf16 %v589
        %v2991 = vunpack.c.h.bf16 %v589
        %v2992 = vunpack.c.l.bf16 %v590
        %v2993 = vunpack.c.h.bf16 %v590
        %v2994 = vunpack.c.l.bf16 %v591
        %v2995 = vunpack.c.h.bf16 %v591
        %v2996 = vunpack.c.l.bf16 %v592
        %v2997 = vunpack.c.h.bf16 %v592
        %v2998 = vunpack.c.l.bf16 %v593
        %v2999 = vunpack.c.h.bf16 %v593
        %v3000 = vunpack.c.l.bf16 %v594
        %v3001 = vunpack.c.h.bf16 %v594
        %v3002 = vunpack.c.l.bf16 %v595
        %v3003 = vunpack.c.h.bf16 %v595
        %v3004 = vunpack.c.l.bf16 %v596
        %v3005 = vunpack.c.h.bf16 %v596
        %v3006 = vunpack.c.l.bf16 %v597
        %v3007 = vunpack.c.h.bf16 %v597
        %v3008 = vunpack.c.l.bf16 %v598
        %v3009 = vunpack.c.h.bf16 %v598
        %v3010 = vunpack.c.l.bf16 %v599
        %v3011 = vunpack.c.h.bf16 %v599
        %v3012 = vunpack.c.l.bf16 %v600
        %v3013 = vunpack.c.h.bf16 %v600
        %v3014 = vunpack.c.l.bf16 %v601
        %v3015 = vunpack.c.h.bf16 %v601
        %v3016 = vunpack.c.l.bf16 %v602
        %v3017 = vunpack.c.h.bf16 %v602
        %v3018 = vunpack.c.l.bf16 %v603
        %v3019 = vunpack.c.h.bf16 %v603
        %v3020 = vunpack.c.l.bf16 %v604
        %v3021 = vunpack.c.h.bf16 %v604
        %v3022 = vunpack.c.l.bf16 %v605
        %v3023 = vunpack.c.h.bf16 %v605
        %v3024 = vunpack.c.l.bf16 %v606
        %v3025 = vunpack.c.h.bf16 %v606
        %v3026 = vunpack.c.l.bf16 %v607
        %v3027 = vunpack.c.h.bf16 %v607
        %v3028 = vunpack.c.l.bf16 %v608
        %v3029 = vunpack.c.h.bf16 %v608
        %v3030 = vunpack.c.l.bf16 %v609
        %v3031 = vunpack.c.h.bf16 %v609
        %v3032 = vunpack.c.l.bf16 %v610
        %v3033 = vunpack.c.h.bf16 %v610
        %v3034 = vunpack.c.l.bf16 %v611
        %v3035 = vunpack.c.h.bf16 %v611
        %v3036 = vunpack.c.l.bf16 %v612
        %v3037 = vunpack.c.h.bf16 %v612
        %v3038 = vunpack.c.l.bf16 %v613
        %v3039 = vunpack.c.h.bf16 %v613
        %v3040 = vunpack.c.l.bf16 %v614
        %v3041 = vunpack.c.h.bf16 %v614
        %v3042 = vunpack.c.l.bf16 %v615
        %v3043 = vunpack.c.h.bf16 %v615
        %v3044 = vunpack.c.l.bf16 %v616
        %v3045 = vunpack.c.h.bf16 %v616
        %v3046 = vunpack.c.l.bf16 %v617
        %v3047 = vunpack.c.h.bf16 %v617
        %v3048 = vunpack.c.l.bf16 %v618
        %v3049 = vunpack.c.h.bf16 %v618
        %v3050 = vunpack.c.l.bf16 %v619
        %v3051 = vunpack.c.h.bf16 %v619
        %v3052 = vunpack.c.l.bf16 %v620
        %v3053 = vunpack.c.h.bf16 %v620
        %v3054 = vunpack.c.l.bf16 %v621
        %v3055 = vunpack.c.h.bf16 %v621
        %v3056 = vunpack.c.l.bf16 %v622
        %v3057 = vunpack.c.h.bf16 %v622
        %v3058 = vunpack.c.l.bf16 %v623
        %v3059 = vunpack.c.h.bf16 %v623
        %v3060 = vunpack.c.l.bf16 %v624
        %v3061 = vunpack.c.h.bf16 %v624
        %v3062 = vunpack.c.l.bf16 %v625
        %v3063 = vunpack.c.h.bf16 %v625
        %v3064 = vunpack.c.l.bf16 %v626
        %v3065 = vunpack.c.h.bf16 %v626
        %v3066 = vunpack.c.l.bf16 %v627
        %v3067 = vunpack.c.h.bf16 %v627
        %v3068 = vunpack.c.l.bf16 %v628
        %v3069 = vunpack.c.h.bf16 %v628
        %v3070 = vunpack.c.l.bf16 %v629
        %v3071 = vunpack.c.h.bf16 %v629
        %v3072 = vunpack.c.l.bf16 %v630
        %v3073 = vunpack.c.h.bf16 %v630
        %v3074 = vunpack.c.l.bf16 %v631
        %v3075 = vunpack.c.h.bf16 %v631
        %v3076 = vunpack.c.l.bf16 %v632
        %v3077 = vunpack.c.h.bf16 %v632
        %v3078 = vunpack.c.l.bf16 %v633
        %v3079 = vunpack.c.h.bf16 %v633
        %v3080 = vunpack.c.l.bf16 %v634
        %v3081 = vunpack.c.h.bf16 %v634
        %v3082 = vunpack.c.l.bf16 %v635
        %v3083 = vunpack.c.h.bf16 %v635
        %v3084 = vunpack.c.l.bf16 %v636
        %v3085 = vunpack.c.h.bf16 %v636
        %v3086 = vunpack.c.l.bf16 %v637
        %v3087 = vunpack.c.h.bf16 %v637
        %v3088 = vunpack.c.l.bf16 %v638
        %v3089 = vunpack.c.h.bf16 %v638
        %v3090 = vunpack.c.l.bf16 %v639
        %v3091 = vunpack.c.h.bf16 %v639
        %v3092 = vunpack.c.l.bf16 %v640
        %v3093 = vunpack.c.h.bf16 %v640
        %v3094 = vunpack.c.l.bf16 %v641
        %v3095 = vunpack.c.h.bf16 %v641
        %v3096 = vunpack.c.l.bf16 %v642
        %v3097 = vunpack.c.h.bf16 %v642
        %v3098 = vunpack.c.l.bf16 %v643
        %v3099 = vunpack.c.h.bf16 %v643
        %v3100 = vunpack.c.l.bf16 %v644
        %v3101 = vunpack.c.h.bf16 %v644
        %v3102 = vunpack.c.l.bf16 %v645
        %v3103 = vunpack.c.h.bf16 %v645
        %v3104 = vunpack.c.l.bf16 %v646
        %v3105 = vunpack.c.h.bf16 %v646
        %v3106 = vunpack.c.l.bf16 %v647
        %v3107 = vunpack.c.h.bf16 %v647
        %v3108 = vunpack.c.l.bf16 %v648
        %v3109 = vunpack.c.h.bf16 %v648
        %v3110 = vunpack.c.l.bf16 %v649
        %v3111 = vunpack.c.h.bf16 %v649
        %v3112 = vunpack.c.l.bf16 %v650
        %v3113 = vunpack.c.h.bf16 %v650
        %v3114 = vunpack.c.l.bf16 %v651
        %v3115 = vunpack.c.h.bf16 %v651
        %v3116 = vunpack.c.l.bf16 %v652
        %v3117 = vunpack.c.h.bf16 %v652
        %v3118 = vunpack.c.l.bf16 %v653
        %v3119 = vunpack.c.h.bf16 %v653
        %v3120 = vunpack.c.l.bf16 %v654
        %v3121 = vunpack.c.h.bf16 %v654
        %v3122 = vunpack.c.l.bf16 %v655
        %v3123 = vunpack.c.h.bf16 %v655
        %v3124 = vunpack.c.l.bf16 %v656
        %v3125 = vunpack.c.h.bf16 %v656
        %v3126 = vunpack.c.l.bf16 %v657
        %v3127 = vunpack.c.h.bf16 %v657
        %v3128 = vunpack.c.l.bf16 %v658
        %v3129 = vunpack.c.h.bf16 %v658
        %v3130 = vunpack.c.l.bf16 %v659
        %v3131 = vunpack.c.h.bf16 %v659
        %v3132 = vunpack.c.l.bf16 %v660
        %v3133 = vunpack.c.h.bf16 %v660
        %v3134 = vunpack.c.l.bf16 %v661
        %v3135 = vunpack.c.h.bf16 %v661
        %v3136 = vunpack.c.l.bf16 %v662
        %v3137 = vunpack.c.h.bf16 %v662
        %v3138 = vunpack.c.l.bf16 %v663
        %v3139 = vunpack.c.h.bf16 %v663
        %v3140 = vunpack.c.l.bf16 %v664
        %v3141 = vunpack.c.h.bf16 %v664
        %v3142 = vunpack.c.l.bf16 %v665
        %v3143 = vunpack.c.h.bf16 %v665
        %v3144 = vunpack.c.l.bf16 %v666
        %v3145 = vunpack.c.h.bf16 %v666
        %v3146 = vunpack.c.l.bf16 %v667
        %v3147 = vunpack.c.h.bf16 %v667
        %v3148 = vunpack.c.l.bf16 %v668
        %v3149 = vunpack.c.h.bf16 %v668
        %v3150 = vunpack.c.l.bf16 %v669
        %v3151 = vunpack.c.h.bf16 %v669
        %v3152 = vunpack.c.l.bf16 %v670
        %v3153 = vunpack.c.h.bf16 %v670
        %v3154 = vunpack.c.l.bf16 %v671
        %v3155 = vunpack.c.h.bf16 %v671
        %v3156 = vunpack.c.l.bf16 %v672
        %v3157 = vunpack.c.h.bf16 %v672
        %v3158 = vunpack.c.l.bf16 %v673
        %v3159 = vunpack.c.h.bf16 %v673
        %v3160 = vunpack.c.l.bf16 %v674
        %v3161 = vunpack.c.h.bf16 %v674
        %v3162 = vunpack.c.l.bf16 %v675
        %v3163 = vunpack.c.h.bf16 %v675
        %v3164 = vunpack.c.l.bf16 %v676
        %v3165 = vunpack.c.h.bf16 %v676
        %v3166 = vunpack.c.l.bf16 %v677
        %v3167 = vunpack.c.h.bf16 %v677
        %v3168 = vunpack.c.l.bf16 %v678
        %v3169 = vunpack.c.h.bf16 %v678
        %v3170 = vunpack.c.l.bf16 %v679
        %v3171 = vunpack.c.h.bf16 %v679
        %v3172 = vunpack.c.l.bf16 %v680
        %v3173 = vunpack.c.h.bf16 %v680
        %v3174 = vunpack.c.l.bf16 %v681
        %v3175 = vunpack.c.h.bf16 %v681
        %v3176 = vunpack.c.l.bf16 %v682
        %v3177 = vunpack.c.h.bf16 %v682
        %v3178 = vunpack.c.l.bf16 %v683
        %v3179 = vunpack.c.h.bf16 %v683
        %v3180 = vunpack.c.l.bf16 %v684
        %v3181 = vunpack.c.h.bf16 %v684
        %v3182 = vunpack.c.l.bf16 %v685
        %v3183 = vunpack.c.h.bf16 %v685
        %v3184 = vunpack.c.l.bf16 %v686
        %v3185 = vunpack.c.h.bf16 %v686
        %v3186 = vunpack.c.l.bf16 %v687
        %v3187 = vunpack.c.h.bf16 %v687
        %v3188 = vunpack.c.l.bf16 %v688
        %v3189 = vunpack.c.h.bf16 %v688
        %v3190 = vunpack.c.l.bf16 %v689
        %v3191 = vunpack.c.h.bf16 %v689
        %v3192 = vunpack.c.l.bf16 %v690
        %v3193 = vunpack.c.h.bf16 %v690
        %v3194 = vunpack.c.l.bf16 %v691
        %v3195 = vunpack.c.h.bf16 %v691
        %v3196 = vunpack.c.l.bf16 %v692
        %v3197 = vunpack.c.h.bf16 %v692
        %v3198 = vunpack.c.l.bf16 %v693
        %v3199 = vunpack.c.h.bf16 %v693
        %v3200 = vunpack.c.l.bf16 %v694
        %v3201 = vunpack.c.h.bf16 %v694
        %v3202 = vunpack.c.l.bf16 %v695
        %v3203 = vunpack.c.h.bf16 %v695
        %v3204 = vunpack.c.l.bf16 %v696
        %v3205 = vunpack.c.h.bf16 %v696
        %v3206 = vunpack.c.l.bf16 %v697
        %v3207 = vunpack.c.h.bf16 %v697
        %v3208 = vunpack.c.l.bf16 %v698
        %v3209 = vunpack.c.h.bf16 %v698
        %v3210 = vunpack.c.l.bf16 %v699
        %v3211 = vunpack.c.h.bf16 %v699
        %v3212 = vunpack.c.l.bf16 %v700
        %v3213 = vunpack.c.h.bf16 %v700
        %v3214 = vunpack.c.l.bf16 %v701
        %v3215 = vunpack.c.h.bf16 %v701
        %v3216 = vunpack.c.l.bf16 %v702
        %v3217 = vunpack.c.h.bf16 %v702
        %v3218 = vunpack.c.l.bf16 %v703
        %v3219 = vunpack.c.h.bf16 %v703
        %v3220 = vunpack.c.l.bf16 %v704
        %v3221 = vunpack.c.h.bf16 %v704
        %v3222 = vunpack.c.l.bf16 %v705
        %v3223 = vunpack.c.h.bf16 %v705
        %v3224 = vunpack.c.l.bf16 %v706
        %v3225 = vunpack.c.h.bf16 %v706
        %v3226 = vunpack.c.l.bf16 %v707
        %v3227 = vunpack.c.h.bf16 %v707
        %v3228 = vunpack.c.l.bf16 %v708
        %v3229 = vunpack.c.h.bf16 %v708
        %v3230 = vunpack.c.l.bf16 %v709
        %v3231 = vunpack.c.h.bf16 %v709
        %v3232 = vunpack.c.l.bf16 %v710
        %v3233 = vunpack.c.h.bf16 %v710
        %v3234 = vunpack.c.l.bf16 %v711
        %v3235 = vunpack.c.h.bf16 %v711
        %v3236 = vunpack.c.l.bf16 %v712
        %v3237 = vunpack.c.h.bf16 %v712
        %v3238 = vunpack.c.l.bf16 %v713
        %v3239 = vunpack.c.h.bf16 %v713
        %v3240 = vunpack.c.l.bf16 %v714
        %v3241 = vunpack.c.h.bf16 %v714
        %v3242 = vunpack.c.l.bf16 %v715
        %v3243 = vunpack.c.h.bf16 %v715
        %v3244 = vunpack.c.l.bf16 %v716
        %v3245 = vunpack.c.h.bf16 %v716
        %v3246 = vunpack.c.l.bf16 %v717
        %v3247 = vunpack.c.h.bf16 %v717
        %v3248 = vunpack.c.l.bf16 %v718
        %v3249 = vunpack.c.h.bf16 %v718
        %v3250 = vunpack.c.l.bf16 %v719
        %v3251 = vunpack.c.h.bf16 %v719
        %v3252 = vunpack.c.l.bf16 %v720
        %v3253 = vunpack.c.h.bf16 %v720
        %v3254 = vunpack.c.l.bf16 %v721
        %v3255 = vunpack.c.h.bf16 %v721
        %v3256 = vunpack.c.l.bf16 %v722
        %v3257 = vunpack.c.h.bf16 %v722
        %v3258 = vunpack.c.l.bf16 %v723
        %v3259 = vunpack.c.h.bf16 %v723
        %v3260 = vunpack.c.l.bf16 %v724
        %v3261 = vunpack.c.h.bf16 %v724
        %v3262 = vunpack.c.l.bf16 %v725
        %v3263 = vunpack.c.h.bf16 %v725
        %v3264 = vunpack.c.l.bf16 %v726
        %v3265 = vunpack.c.h.bf16 %v726
        %v3266 = vunpack.c.l.bf16 %v727
        %v3267 = vunpack.c.h.bf16 %v727
        %v3268 = vunpack.c.l.bf16 %v728
        %v3269 = vunpack.c.h.bf16 %v728
        %v3270 = vunpack.c.l.bf16 %v729
        %v3271 = vunpack.c.h.bf16 %v729
        %v3272 = vunpack.c.l.bf16 %v730
        %v3273 = vunpack.c.h.bf16 %v730
        %v3274 = vunpack.c.l.bf16 %v731
        %v3275 = vunpack.c.h.bf16 %v731
        %v3276 = vunpack.c.l.bf16 %v732
        %v3277 = vunpack.c.h.bf16 %v732
        %v3278 = vunpack.c.l.bf16 %v733
        %v3279 = vunpack.c.h.bf16 %v733
        %v3280 = vunpack.c.l.bf16 %v734
        %v3281 = vunpack.c.h.bf16 %v734
        %v3282 = vunpack.c.l.bf16 %v735
        %v3283 = vunpack.c.h.bf16 %v735
        %v3284 = vunpack.c.l.bf16 %v736
        %v3285 = vunpack.c.h.bf16 %v736
        %v3286 = vunpack.c.l.bf16 %v737
        %v3287 = vunpack.c.h.bf16 %v737
        %v3288 = vunpack.c.l.bf16 %v738
        %v3289 = vunpack.c.h.bf16 %v738
        %v3290 = vunpack.c.l.bf16 %v739
        %v3291 = vunpack.c.h.bf16 %v739
        %v3292 = vunpack.c.l.bf16 %v740
        %v3293 = vunpack.c.h.bf16 %v740
        %v3294 = vunpack.c.l.bf16 %v741
        %v3295 = vunpack.c.h.bf16 %v741
        %v3296 = vunpack.c.l.bf16 %v742
        %v3297 = vunpack.c.h.bf16 %v742
        %v3298 = vunpack.c.l.bf16 %v743
        %v3299 = vunpack.c.h.bf16 %v743
        %v3300 = vunpack.c.l.bf16 %v744
        %v3301 = vunpack.c.h.bf16 %v744
        %v3302 = vunpack.c.l.bf16 %v745
        %v3303 = vunpack.c.h.bf16 %v745
        %v3304 = vunpack.c.l.bf16 %v746
        %v3305 = vunpack.c.h.bf16 %v746
        %v3306 = vunpack.c.l.bf16 %v747
        %v3307 = vunpack.c.h.bf16 %v747
        %v3308 = vunpack.c.l.bf16 %v748
        %v3309 = vunpack.c.h.bf16 %v748
        %v3310 = vunpack.c.l.bf16 %v749
        %v3311 = vunpack.c.h.bf16 %v749
        %v3312 = vunpack.c.l.bf16 %v750
        %v3313 = vunpack.c.h.bf16 %v750
        %v3314 = vunpack.c.l.bf16 %v751
        %v3315 = vunpack.c.h.bf16 %v751
        %v3316 = vunpack.c.l.bf16 %v752
        %v3317 = vunpack.c.h.bf16 %v752
        %v3318 = vunpack.c.l.bf16 %v753
        %v3319 = vunpack.c.h.bf16 %v753
        %v3320 = vunpack.c.l.bf16 %v754
        %v3321 = vunpack.c.h.bf16 %v754
        %v3322 = vunpack.c.l.bf16 %v755
        %v3323 = vunpack.c.h.bf16 %v755
        %v3324 = vunpack.c.l.bf16 %v756
        %v3325 = vunpack.c.h.bf16 %v756
        %v3326 = vunpack.c.l.bf16 %v757
        %v3327 = vunpack.c.h.bf16 %v757
        %v3328 = vunpack.c.l.bf16 %v758
        %v3329 = vunpack.c.h.bf16 %v758
        %v3330 = vunpack.c.l.bf16 %v759
        %v3331 = vunpack.c.h.bf16 %v759
        %v3332 = vunpack.c.l.bf16 %v760
        %v3333 = vunpack.c.h.bf16 %v760
        %v3334 = vunpack.c.l.bf16 %v761
        %v3335 = vunpack.c.h.bf16 %v761
        %v3336 = vunpack.c.l.bf16 %v762
        %v3337 = vunpack.c.h.bf16 %v762
        %v3338 = vunpack.c.l.bf16 %v763
        %v3339 = vunpack.c.h.bf16 %v763
        %v3340 = vunpack.c.l.bf16 %v764
        %v3341 = vunpack.c.h.bf16 %v764
        %v3342 = vunpack.c.l.bf16 %v765
        %v3343 = vunpack.c.h.bf16 %v765
        %v3344 = vunpack.c.l.bf16 %v766
        %v3345 = vunpack.c.h.bf16 %v766
        %v3346 = vunpack.c.l.bf16 %v767
        %v3347 = vunpack.c.h.bf16 %v767
        %v3348 = vunpack.c.l.bf16 %v768
        %v3349 = vunpack.c.h.bf16 %v768
        %v3350 = vunpack.c.l.bf16 %v769
        %v3351 = vunpack.c.h.bf16 %v769
        %v3352 = vunpack.c.l.bf16 %v770
        %v3353 = vunpack.c.h.bf16 %v770
        %v3354 = vunpack.c.l.bf16 %v771
        %v3355 = vunpack.c.h.bf16 %v771
        %v3356 = vunpack.c.l.bf16 %v772
        %v3357 = vunpack.c.h.bf16 %v772
        %v3358 = vunpack.c.l.bf16 %v773
        %v3359 = vunpack.c.h.bf16 %v773
        %v3360 = vunpack.c.l.bf16 %v774
        %v3361 = vunpack.c.h.bf16 %v774
        %v3362 = vunpack.c.l.bf16 %v775
        %v3363 = vunpack.c.h.bf16 %v775
        %v3364 = vunpack.c.l.bf16 %v776
        %v3365 = vunpack.c.h.bf16 %v776
        %v3366 = vunpack.c.l.bf16 %v777
        %v3367 = vunpack.c.h.bf16 %v777
        %v3368 = vunpack.c.l.bf16 %v778
        %v3369 = vunpack.c.h.bf16 %v778
        %v3370 = vunpack.c.l.bf16 %v779
        %v3371 = vunpack.c.h.bf16 %v779
        %v3372 = vunpack.c.l.bf16 %v780
        %v3373 = vunpack.c.h.bf16 %v780
        %v3374 = vunpack.c.l.bf16 %v781
        %v3375 = vunpack.c.h.bf16 %v781
        %v3376 = vunpack.c.l.bf16 %v782
        %v3377 = vunpack.c.h.bf16 %v782
        %v3378 = vunpack.c.l.bf16 %v783
        %v3379 = vunpack.c.h.bf16 %v783
        %v3380 = vunpack.c.l.bf16 %v784
        %v3381 = vunpack.c.h.bf16 %v784
        %v3382 = vunpack.c.l.bf16 %v785
        %v3383 = vunpack.c.h.bf16 %v785
        %v3384 = vunpack.c.l.bf16 %v786
        %v3385 = vunpack.c.h.bf16 %v786
        %v3386 = vunpack.c.l.bf16 %v787
        %v3387 = vunpack.c.h.bf16 %v787
        %v3388 = vunpack.c.l.bf16 %v788
        %v3389 = vunpack.c.h.bf16 %v788
        %v3390 = vunpack.c.l.bf16 %v789
        %v3391 = vunpack.c.h.bf16 %v789
        %v3392 = vunpack.c.l.bf16 %v790
        %v3393 = vunpack.c.h.bf16 %v790
        %v3394 = vunpack.c.l.bf16 %v791
        %v3395 = vunpack.c.h.bf16 %v791
        %v3396 = vunpack.c.l.bf16 %v792
        %v3397 = vunpack.c.h.bf16 %v792
        %v3398 = vunpack.c.l.bf16 %v793
        %v3399 = vunpack.c.h.bf16 %v793
        %v3400 = vunpack.c.l.bf16 %v794
        %v3401 = vunpack.c.h.bf16 %v794
        %v3402 = vunpack.c.l.bf16 %v795
        %v3403 = vunpack.c.h.bf16 %v795
        %v3404 = vunpack.c.l.bf16 %v796
        %v3405 = vunpack.c.h.bf16 %v796
        %v3406 = vunpack.c.l.bf16 %v797
        %v3407 = vunpack.c.h.bf16 %v797
        %v3408 = vunpack.c.l.bf16 %v798
        %v3409 = vunpack.c.h.bf16 %v798
        %v3410 = vunpack.c.l.bf16 %v799
        %v3411 = vunpack.c.h.bf16 %v799
        %v3412 = vunpack.c.l.bf16 %v800
        %v3413 = vunpack.c.h.bf16 %v800
        %v3414 = vunpack.c.l.bf16 %v801
        %v3415 = vunpack.c.h.bf16 %v801
        %v3416 = vunpack.c.l.bf16 %v802
        %v3417 = vunpack.c.h.bf16 %v802
        %v3418 = vunpack.c.l.bf16 %v803
        %v3419 = vunpack.c.h.bf16 %v803
        %v3420 = vunpack.c.l.bf16 %v804
        %v3421 = vunpack.c.h.bf16 %v804
        %v3422 = vunpack.c.l.bf16 %v805
        %v3423 = vunpack.c.h.bf16 %v805
        %v3424 = vunpack.c.l.bf16 %v806
        %v3425 = vunpack.c.h.bf16 %v806
        %v3426 = vunpack.c.l.bf16 %v807
        %v3427 = vunpack.c.h.bf16 %v807
        %v3428 = vunpack.c.l.bf16 %v808
        %v3429 = vunpack.c.h.bf16 %v808
        %v3430 = vunpack.c.l.bf16 %v809
        %v3431 = vunpack.c.h.bf16 %v809
        %v3432 = vunpack.c.l.bf16 %v810
        %v3433 = vunpack.c.h.bf16 %v810
        %v3434 = vunpack.c.l.bf16 %v811
        %v3435 = vunpack.c.h.bf16 %v811
        %v3436 = vunpack.c.l.bf16 %v812
        %v3437 = vunpack.c.h.bf16 %v812
        %v3438 = vunpack.c.l.bf16 %v813
        %v3439 = vunpack.c.h.bf16 %v813
        %v3440 = vunpack.c.l.bf16 %v814
        %v3441 = vunpack.c.h.bf16 %v814
        %v3442 = vunpack.c.l.bf16 %v815
        %v3443 = vunpack.c.h.bf16 %v815
        %v3444 = vunpack.c.l.bf16 %v816
        %v3445 = vunpack.c.h.bf16 %v816
        %v3446 = vunpack.c.l.bf16 %v817
        %v3447 = vunpack.c.h.bf16 %v817
        %v3448 = vunpack.c.l.bf16 %v818
        %v3449 = vunpack.c.h.bf16 %v818
        %v3450 = vunpack.c.l.bf16 %v819
        %v3451 = vunpack.c.h.bf16 %v819
        %v3452 = vunpack.c.l.bf16 %v820
        %v3453 = vunpack.c.h.bf16 %v820
        %v3454 = vunpack.c.l.bf16 %v821
        %v3455 = vunpack.c.h.bf16 %v821
        %v3456 = vunpack.c.l.bf16 %v822
        %v3457 = vunpack.c.h.bf16 %v822
        %v3458 = vunpack.c.l.bf16 %v823
        %v3459 = vunpack.c.h.bf16 %v823
        %v3460 = vunpack.c.l.bf16 %v824
        %v3461 = vunpack.c.h.bf16 %v824
        %v3462 = vunpack.c.l.bf16 %v825
        %v3463 = vunpack.c.h.bf16 %v825
        %v3464 = vunpack.c.l.bf16 %v826
        %v3465 = vunpack.c.h.bf16 %v826
        %v3466 = vunpack.c.l.bf16 %v827
        %v3467 = vunpack.c.h.bf16 %v827
        %v3468 = vunpack.c.l.bf16 %v828
        %v3469 = vunpack.c.h.bf16 %v828
        %v3470 = vunpack.c.l.bf16 %v829
        %v3471 = vunpack.c.h.bf16 %v829
        %v3472 = vunpack.c.l.bf16 %v830
        %v3473 = vunpack.c.h.bf16 %v830
        %v3474 = vunpack.c.l.bf16 %v831
        %v3475 = vunpack.c.h.bf16 %v831
        %v3476 = vunpack.c.l.bf16 %v832
        %v3477 = vunpack.c.h.bf16 %v832
        %v3478 = vunpack.c.l.bf16 %v833
        %v3479 = vunpack.c.h.bf16 %v833
        %v3480 = vunpack.c.l.bf16 %v834
        %v3481 = vunpack.c.h.bf16 %v834
        %v3482 = vunpack.c.l.bf16 %v835
        %v3483 = vunpack.c.h.bf16 %v835
        %v3484 = vunpack.c.l.bf16 %v836
        %v3485 = vunpack.c.h.bf16 %v836
        %v3486 = vunpack.c.l.bf16 %v837
        %v3487 = vunpack.c.h.bf16 %v837
        %v3488 = vunpack.c.l.bf16 %v838
        %v3489 = vunpack.c.h.bf16 %v838
        %v3490 = vunpack.c.l.bf16 %v839
        %v3491 = vunpack.c.h.bf16 %v839
        %v3492 = vunpack.c.l.bf16 %v840
        %v3493 = vunpack.c.h.bf16 %v840
        %v3494 = vunpack.c.l.bf16 %v841
        %v3495 = vunpack.c.h.bf16 %v841
        %v3496 = vunpack.c.l.bf16 %v842
        %v3497 = vunpack.c.h.bf16 %v842
        %v3498 = vunpack.c.l.bf16 %v843
        %v3499 = vunpack.c.h.bf16 %v843
        %v3500 = vunpack.c.l.bf16 %v844
        %v3501 = vunpack.c.h.bf16 %v844
        %v3502 = vunpack.c.l.bf16 %v845
        %v3503 = vunpack.c.h.bf16 %v845
        %v3504 = vunpack.c.l.bf16 %v846
        %v3505 = vunpack.c.h.bf16 %v846
        %v3506 = vunpack.c.l.bf16 %v847
        %v3507 = vunpack.c.h.bf16 %v847
        %v3508 = vunpack.c.l.bf16 %v848
        %v3509 = vunpack.c.h.bf16 %v848
        %v3510 = vunpack.c.l.bf16 %v849
        %v3511 = vunpack.c.h.bf16 %v849
        %v3512 = vunpack.c.l.bf16 %v850
        %v3513 = vunpack.c.h.bf16 %v850
        %v3514 = vunpack.c.l.bf16 %v851
        %v3515 = vunpack.c.h.bf16 %v851
        %v3516 = vunpack.c.l.bf16 %v852
        %v3517 = vunpack.c.h.bf16 %v852
        %v3518 = vunpack.c.l.bf16 %v853
        %v3519 = vunpack.c.h.bf16 %v853
        %v3520 = vunpack.c.l.bf16 %v854
        %v3521 = vunpack.c.h.bf16 %v854
        %v3522 = vunpack.c.l.bf16 %v855
        %v3523 = vunpack.c.h.bf16 %v855
        %v3524 = vunpack.c.l.bf16 %v856
        %v3525 = vunpack.c.h.bf16 %v856
        %v3526 = vunpack.c.l.bf16 %v857
        %v3527 = vunpack.c.h.bf16 %v857
        %v3528 = vunpack.c.l.bf16 %v858
        %v3529 = vunpack.c.h.bf16 %v858
        %v3530 = vunpack.c.l.bf16 %v859
        %v3531 = vunpack.c.h.bf16 %v859
        %v3532 = vunpack.c.l.bf16 %v860
        %v3533 = vunpack.c.h.bf16 %v860
        %v3534 = vunpack.c.l.bf16 %v861
        %v3535 = vunpack.c.h.bf16 %v861
        %v3536 = vunpack.c.l.bf16 %v862
        %v3537 = vunpack.c.h.bf16 %v862
        %v3538 = vunpack.c.l.bf16 %v863
        %v3539 = vunpack.c.h.bf16 %v863
        %v3540 = vunpack.c.l.bf16 %v864
        %v3541 = vunpack.c.h.bf16 %v864
        %v3542 = vunpack.c.l.bf16 %v865
        %v3543 = vunpack.c.h.bf16 %v865
        %v3544 = vunpack.c.l.bf16 %v866
        %v3545 = vunpack.c.h.bf16 %v866
        %v3546 = vunpack.c.l.bf16 %v867
        %v3547 = vunpack.c.h.bf16 %v867
        %v3548 = vunpack.c.l.bf16 %v868
        %v3549 = vunpack.c.h.bf16 %v868
        %v3550 = vunpack.c.l.bf16 %v869
        %v3551 = vunpack.c.h.bf16 %v869
        %v3552 = vunpack.c.l.bf16 %v870
        %v3553 = vunpack.c.h.bf16 %v870
        %v3554 = vunpack.c.l.bf16 %v871
        %v3555 = vunpack.c.h.bf16 %v871
        %v3556 = vunpack.c.l.bf16 %v872
        %v3557 = vunpack.c.h.bf16 %v872
        %v3558 = vunpack.c.l.bf16 %v873
        %v3559 = vunpack.c.h.bf16 %v873
        %v3560 = vunpack.c.l.bf16 %v874
        %v3561 = vunpack.c.h.bf16 %v874
        %v3562 = vunpack.c.l.bf16 %v875
        %v3563 = vunpack.c.h.bf16 %v875
        %v3564 = vunpack.c.l.bf16 %v876
        %v3565 = vunpack.c.h.bf16 %v876
        %v3566 = vunpack.c.l.bf16 %v877
        %v3567 = vunpack.c.h.bf16 %v877
        %v3568 = vunpack.c.l.bf16 %v878
        %v3569 = vunpack.c.h.bf16 %v878
        %v3570 = vunpack.c.l.bf16 %v879
        %v3571 = vunpack.c.h.bf16 %v879
        %v3572 = vunpack.c.l.bf16 %v880
        %v3573 = vunpack.c.h.bf16 %v880
        %v3574 = vunpack.c.l.bf16 %v881
        %v3575 = vunpack.c.h.bf16 %v881
        %v3576 = vunpack.c.l.bf16 %v882
        %v3577 = vunpack.c.h.bf16 %v882
        %v3578 = vunpack.c.l.bf16 %v883
        %v3579 = vunpack.c.h.bf16 %v883
        %v3580 = vunpack.c.l.bf16 %v884
        %v3581 = vunpack.c.h.bf16 %v884
        %v3582 = vunpack.c.l.bf16 %v885
        %v3583 = vunpack.c.h.bf16 %v885
        %v3584 = vunpack.c.l.bf16 %v886
        %v3585 = vunpack.c.h.bf16 %v886
        %v3586 = vunpack.c.l.bf16 %v887
        %v3587 = vunpack.c.h.bf16 %v887
        %v3588 = vunpack.c.l.bf16 %v888
        %v3589 = vunpack.c.h.bf16 %v888
        %v3590 = vunpack.c.l.bf16 %v889
        %v3591 = vunpack.c.h.bf16 %v889
        %v3592 = vunpack.c.l.bf16 %v890
        %v3593 = vunpack.c.h.bf16 %v890
        %v3594 = vunpack.c.l.bf16 %v891
        %v3595 = vunpack.c.h.bf16 %v891
        %v3596 = vunpack.c.l.bf16 %v892
        %v3597 = vunpack.c.h.bf16 %v892
        %v3598 = vunpack.c.l.bf16 %v893
        %v3599 = vunpack.c.h.bf16 %v893
        %v3600 = vunpack.c.l.bf16 %v894
        %v3601 = vunpack.c.h.bf16 %v894
        %v3602 = vunpack.c.l.bf16 %v895
        %v3603 = vunpack.c.h.bf16 %v895
        %v3604 = vunpack.c.l.bf16 %v896
        %v3605 = vunpack.c.h.bf16 %v896
        %v3606 = vunpack.c.l.bf16 %v897
        %v3607 = vunpack.c.h.bf16 %v897
        %v3608 = vunpack.c.l.bf16 %v898
        %v3609 = vunpack.c.h.bf16 %v898
        %v3610 = vunpack.c.l.bf16 %v899
        %v3611 = vunpack.c.h.bf16 %v899
        %v3612 = vunpack.c.l.bf16 %v900
        %v3613 = vunpack.c.h.bf16 %v900
        %v3614 = vunpack.c.l.bf16 %v901
        %v3615 = vunpack.c.h.bf16 %v901
        %v3616 = vunpack.c.l.bf16 %v902
        %v3617 = vunpack.c.h.bf16 %v902
        %v3618 = vunpack.c.l.bf16 %v903
        %v3619 = vunpack.c.h.bf16 %v903
        %v3620 = vunpack.c.l.bf16 %v904
        %v3621 = vunpack.c.h.bf16 %v904
        %v3622 = vunpack.c.l.bf16 %v905
        %v3623 = vunpack.c.h.bf16 %v905
        %v3624 = vunpack.c.l.bf16 %v906
        %v3625 = vunpack.c.h.bf16 %v906
        %v3626 = vunpack.c.l.bf16 %v907
        %v3627 = vunpack.c.h.bf16 %v907
        %v3628 = vunpack.c.l.bf16 %v908
        %v3629 = vunpack.c.h.bf16 %v908
        %v3630 = vunpack.c.l.bf16 %v909
        %v3631 = vunpack.c.h.bf16 %v909
        %v3632 = vunpack.c.l.bf16 %v910
        %v3633 = vunpack.c.h.bf16 %v910
        %v3634 = vunpack.c.l.bf16 %v911
        %v3635 = vunpack.c.h.bf16 %v911
        %v3636 = vunpack.c.l.bf16 %v912
        %v3637 = vunpack.c.h.bf16 %v912
        %v3638 = vunpack.c.l.bf16 %v913
        %v3639 = vunpack.c.h.bf16 %v913
        %v3640 = vunpack.c.l.bf16 %v914
        %v3641 = vunpack.c.h.bf16 %v914
        %v3642 = vunpack.c.l.bf16 %v915
        %v3643 = vunpack.c.h.bf16 %v915
        %v3644 = vunpack.c.l.bf16 %v916
        %v3645 = vunpack.c.h.bf16 %v916
        %v3646 = vunpack.c.l.bf16 %v917
        %v3647 = vunpack.c.h.bf16 %v917
        %v3648 = vunpack.c.l.bf16 %v918
        %v3649 = vunpack.c.h.bf16 %v918
        %v3650 = vunpack.c.l.bf16 %v919
        %v3651 = vunpack.c.h.bf16 %v919
        %v3652 = vunpack.c.l.bf16 %v920
        %v3653 = vunpack.c.h.bf16 %v920
        %v3654 = vunpack.c.l.bf16 %v921
        %v3655 = vunpack.c.h.bf16 %v921
        %v3656 = vunpack.c.l.bf16 %v922
        %v3657 = vunpack.c.h.bf16 %v922
        %v3658 = vunpack.c.l.bf16 %v923
        %v3659 = vunpack.c.h.bf16 %v923
        %v3660 = vunpack.c.l.bf16 %v924
        %v3661 = vunpack.c.h.bf16 %v924
        %v3662 = vunpack.c.l.bf16 %v925
        %v3663 = vunpack.c.h.bf16 %v925
        %v3664 = vunpack.c.l.bf16 %v926
        %v3665 = vunpack.c.h.bf16 %v926
        %v3666 = vunpack.c.l.bf16 %v927
        %v3667 = vunpack.c.h.bf16 %v927
        %v3668 = vunpack.c.l.bf16 %v928
        %v3669 = vunpack.c.h.bf16 %v928
        %v3670 = vunpack.c.l.bf16 %v929
        %v3671 = vunpack.c.h.bf16 %v929
        %v3672 = vunpack.c.l.bf16 %v930
        %v3673 = vunpack.c.h.bf16 %v930
        %v3674 = vunpack.c.l.bf16 %v931
        %v3675 = vunpack.c.h.bf16 %v931
        %v3676 = vunpack.c.l.bf16 %v932
        %v3677 = vunpack.c.h.bf16 %v932
        %v3678 = vunpack.c.l.bf16 %v933
        %v3679 = vunpack.c.h.bf16 %v933
        %v3680 = vunpack.c.l.bf16 %v934
        %v3681 = vunpack.c.h.bf16 %v934
        %v3682 = vunpack.c.l.bf16 %v935
        %v3683 = vunpack.c.h.bf16 %v935
        %v3684 = vunpack.c.l.bf16 %v936
        %v3685 = vunpack.c.h.bf16 %v936
        %v3686 = vunpack.c.l.bf16 %v937
        %v3687 = vunpack.c.h.bf16 %v937
        %v3688 = vunpack.c.l.bf16 %v938
        %v3689 = vunpack.c.h.bf16 %v938
        %v3690 = vunpack.c.l.bf16 %v939
        %v3691 = vunpack.c.h.bf16 %v939
        %v3692 = vunpack.c.l.bf16 %v940
        %v3693 = vunpack.c.h.bf16 %v940
        %v3694 = vunpack.c.l.bf16 %v941
        %v3695 = vunpack.c.h.bf16 %v941
        %v3696 = vunpack.c.l.bf16 %v942
        %v3697 = vunpack.c.h.bf16 %v942
        %v3698 = vunpack.c.l.bf16 %v943
        %v3699 = vunpack.c.h.bf16 %v943
        %v3700 = vunpack.c.l.bf16 %v944
        %v3701 = vunpack.c.h.bf16 %v944
        %v3702 = vunpack.c.l.bf16 %v945
        %v3703 = vunpack.c.h.bf16 %v945
        %v3704 = vunpack.c.l.bf16 %v946
        %v3705 = vunpack.c.h.bf16 %v946
        %v3706 = vunpack.c.l.bf16 %v947
        %v3707 = vunpack.c.h.bf16 %v947
        %v3708 = vunpack.c.l.bf16 %v948
        %v3709 = vunpack.c.h.bf16 %v948
        %v3710 = vunpack.c.l.bf16 %v949
        %v3711 = vunpack.c.h.bf16 %v949
        %v3712 = vunpack.c.l.bf16 %v950
        %v3713 = vunpack.c.h.bf16 %v950
        %v3714 = vunpack.c.l.bf16 %v951
        %v3715 = vunpack.c.h.bf16 %v951
        %v3716 = vunpack.c.l.bf16 %v952
        %v3717 = vunpack.c.h.bf16 %v952
        %v3718 = vunpack.c.l.bf16 %v953
        %v3719 = vunpack.c.h.bf16 %v953
        %v3720 = vunpack.c.l.bf16 %v954
        %v3721 = vunpack.c.h.bf16 %v954
        %v3722 = vunpack.c.l.bf16 %v955
        %v3723 = vunpack.c.h.bf16 %v955
        %v3724 = vunpack.c.l.bf16 %v956
        %v3725 = vunpack.c.h.bf16 %v956
        %v3726 = vunpack.c.l.bf16 %v957
        %v3727 = vunpack.c.h.bf16 %v957
        %v3728 = vunpack.c.l.bf16 %v958
        %v3729 = vunpack.c.h.bf16 %v958
        %v3730 = vunpack.c.l.bf16 %v959
        %v3731 = vunpack.c.h.bf16 %v959
        %v3732 = vunpack.c.l.bf16 %v960
        %v3733 = vunpack.c.h.bf16 %v960
        %v3734 = vunpack.c.l.bf16 %v961
        %v3735 = vunpack.c.h.bf16 %v961
        %v3736 = vunpack.c.l.bf16 %v962
        %v3737 = vunpack.c.h.bf16 %v962
        %v3738 = vunpack.c.l.bf16 %v963
        %v3739 = vunpack.c.h.bf16 %v963
        %v3740 = vunpack.c.l.bf16 %v964
        %v3741 = vunpack.c.h.bf16 %v964
        %v3742 = vunpack.c.l.bf16 %v965
        %v3743 = vunpack.c.h.bf16 %v965
        %v3744 = vunpack.c.l.bf16 %v966
        %v3745 = vunpack.c.h.bf16 %v966
        %v3746 = vunpack.c.l.bf16 %v967
        %v3747 = vunpack.c.h.bf16 %v967
        %v3748 = vunpack.c.l.bf16 %v968
        %v3749 = vunpack.c.h.bf16 %v968
        %v3750 = vunpack.c.l.bf16 %v969
        %v3751 = vunpack.c.h.bf16 %v969
        %v3752 = vunpack.c.l.bf16 %v970
        %v3753 = vunpack.c.h.bf16 %v970
        %v3754 = vunpack.c.l.bf16 %v971
        %v3755 = vunpack.c.h.bf16 %v971
        %v3756 = vunpack.c.l.bf16 %v972
        %v3757 = vunpack.c.h.bf16 %v972
        %v3758 = vunpack.c.l.bf16 %v973
        %v3759 = vunpack.c.h.bf16 %v973
        %v3760 = vunpack.c.l.bf16 %v974
        %v3761 = vunpack.c.h.bf16 %v974
        %v3762 = vunpack.c.l.bf16 %v975
        %v3763 = vunpack.c.h.bf16 %v975
        %v3764 = vunpack.c.l.bf16 %v976
        %v3765 = vunpack.c.h.bf16 %v976
        %v3766 = vunpack.c.l.bf16 %v977
        %v3767 = vunpack.c.h.bf16 %v977
        %v3768 = vunpack.c.l.bf16 %v978
        %v3769 = vunpack.c.h.bf16 %v978
        %v3770 = vunpack.c.l.bf16 %v979
        %v3771 = vunpack.c.h.bf16 %v979
        %v3772 = vunpack.c.l.bf16 %v980
        %v3773 = vunpack.c.h.bf16 %v980
        %v3774 = vunpack.c.l.bf16 %v981
        %v3775 = vunpack.c.h.bf16 %v981
        %v3776 = vunpack.c.l.bf16 %v982
        %v3777 = vunpack.c.h.bf16 %v982
        %v3778 = vunpack.c.l.bf16 %v983
        %v3779 = vunpack.c.h.bf16 %v983
        %v3780 = vunpack.c.l.bf16 %v984
        %v3781 = vunpack.c.h.bf16 %v984
        %v3782 = vunpack.c.l.bf16 %v985
        %v3783 = vunpack.c.h.bf16 %v985
        %v3784 = vunpack.c.l.bf16 %v986
        %v3785 = vunpack.c.h.bf16 %v986
        %v3786 = vunpack.c.l.bf16 %v987
        %v3787 = vunpack.c.h.bf16 %v987
        %v3788 = vunpack.c.l.bf16 %v988
        %v3789 = vunpack.c.h.bf16 %v988
        %v3790 = vunpack.c.l.bf16 %v989
        %v3791 = vunpack.c.h.bf16 %v989
        %v3792 = vunpack.c.l.bf16 %v990
        %v3793 = vunpack.c.h.bf16 %v990
        %v3794 = vunpack.c.l.bf16 %v991
        %v3795 = vunpack.c.h.bf16 %v991
        %v3796 = vunpack.c.l.bf16 %v992
        %v3797 = vunpack.c.h.bf16 %v992
        %v3798 = vunpack.c.l.bf16 %v993
        %v3799 = vunpack.c.h.bf16 %v993
        %v3800 = vunpack.c.l.bf16 %v994
        %v3801 = vunpack.c.h.bf16 %v994
        %v3802 = vunpack.c.l.bf16 %v995
        %v3803 = vunpack.c.h.bf16 %v995
        %v3804 = vunpack.c.l.bf16 %v996
        %v3805 = vunpack.c.h.bf16 %v996
        %v3806 = vunpack.c.l.bf16 %v997
        %v3807 = vunpack.c.h.bf16 %v997
        %v3808 = vunpack.c.l.bf16 %v998
        %v3809 = vunpack.c.h.bf16 %v998
        %v3810 = vunpack.c.l.bf16 %v999
        %v3811 = vunpack.c.h.bf16 %v999
        %v3812 = vunpack.c.l.bf16 %v1000
        %v3813 = vunpack.c.h.bf16 %v1000
        %v3814 = vunpack.c.l.bf16 %v1001
        %v3815 = vunpack.c.h.bf16 %v1001
        %v3816 = vunpack.c.l.bf16 %v1002
        %v3817 = vunpack.c.h.bf16 %v1002
        %v3818 = vunpack.c.l.bf16 %v1003
        %v3819 = vunpack.c.h.bf16 %v1003
        %v3820 = vunpack.c.l.bf16 %v1004
        %v3821 = vunpack.c.h.bf16 %v1004
        %v3822 = vunpack.c.l.bf16 %v1005
        %v3823 = vunpack.c.h.bf16 %v1005
        %v3824 = vunpack.c.l.bf16 %v1006
        %v3825 = vunpack.c.h.bf16 %v1006
        %v3826 = vunpack.c.l.bf16 %v1007
        %v3827 = vunpack.c.h.bf16 %v1007
        %v3828 = vunpack.c.l.bf16 %v1008
        %v3829 = vunpack.c.h.bf16 %v1008
        %v3830 = vunpack.c.l.bf16 %v1009
        %v3831 = vunpack.c.h.bf16 %v1009
        %v3832 = vunpack.c.l.bf16 %v1010
        %v3833 = vunpack.c.h.bf16 %v1010
        %v3834 = vunpack.c.l.bf16 %v1011
        %v3835 = vunpack.c.h.bf16 %v1011
        %v3836 = vunpack.c.l.bf16 %v1012
        %v3837 = vunpack.c.h.bf16 %v1012
        %v3838 = vunpack.c.l.bf16 %v1013
        %v3839 = vunpack.c.h.bf16 %v1013
        %v3840 = vunpack.c.l.bf16 %v1014
        %v3841 = vunpack.c.h.bf16 %v1014
        %v3842 = vunpack.c.l.bf16 %v1015
        %v3843 = vunpack.c.h.bf16 %v1015
        %v3844 = vunpack.c.l.bf16 %v1016
        %v3845 = vunpack.c.h.bf16 %v1016
        %v3846 = vunpack.c.l.bf16 %v1017
        %v3847 = vunpack.c.h.bf16 %v1017
        %v3848 = vunpack.c.l.bf16 %v1018
        %v3849 = vunpack.c.h.bf16 %v1018
        %v3850 = vunpack.c.l.bf16 %v1019
        %v3851 = vunpack.c.h.bf16 %v1019
        %v3852 = vunpack.c.l.bf16 %v1020
        %v3853 = vunpack.c.h.bf16 %v1020
        %v3854 = vunpack.c.l.bf16 %v1021
        %v3855 = vunpack.c.h.bf16 %v1021
        %v3856 = vunpack.c.l.bf16 %v1022
        %v3857 = vunpack.c.h.bf16 %v1022
        %v3858 = vunpack.c.l.bf16 %v1023
        %v3859 = vunpack.c.h.bf16 %v1023
        %v3860 = vunpack.c.l.bf16 %v1024
        %v3861 = vunpack.c.h.bf16 %v1024
        %v3862 = vunpack.c.l.bf16 %v1025
        %v3863 = vunpack.c.h.bf16 %v1025
        %v3864 = vunpack.c.l.bf16 %v1026
        %v3865 = vunpack.c.h.bf16 %v1026
        %v3866 = vunpack.c.l.bf16 %v1027
        %v3867 = vunpack.c.h.bf16 %v1027
        %v3868 = vunpack.c.l.bf16 %v1028
        %v3869 = vunpack.c.h.bf16 %v1028
        %v3870 = vunpack.c.l.bf16 %v1029
        %v3871 = vunpack.c.h.bf16 %v1029
        %v3872 = vunpack.c.l.bf16 %v1030
        %v3873 = vunpack.c.h.bf16 %v1030
        %v3874 = vunpack.c.l.bf16 %v1031
        %v3875 = vunpack.c.h.bf16 %v1031
        %v3876 = vunpack.c.l.bf16 %v1032
        %v3877 = vunpack.c.h.bf16 %v1032
        %v3878 = vunpack.c.l.bf16 %v1033
        %v3879 = vunpack.c.h.bf16 %v1033
        %v3880 = vunpack.c.l.bf16 %v1034
        %v3881 = vunpack.c.h.bf16 %v1034
        %v3882 = vunpack.c.l.bf16 %v1035
        %v3883 = vunpack.c.h.bf16 %v1035
        %v3884 = vunpack.c.l.bf16 %v1036
        %v3885 = vunpack.c.h.bf16 %v1036
        %v3886 = vunpack.c.l.bf16 %v1037
        %v3887 = vunpack.c.h.bf16 %v1037
        %v3888 = vunpack.c.l.bf16 %v1038
        %v3889 = vunpack.c.h.bf16 %v1038
        %v3890 = vunpack.c.l.bf16 %v1039
        %v3891 = vunpack.c.h.bf16 %v1039
        %v3892 = vunpack.c.l.bf16 %v1040
        %v3893 = vunpack.c.h.bf16 %v1040
        %v3894 = vunpack.c.l.bf16 %v1041
        %v3895 = vunpack.c.h.bf16 %v1041
        %v3896 = vunpack.c.l.bf16 %v1042
        %v3897 = vunpack.c.h.bf16 %v1042
        %v3898 = vunpack.c.l.bf16 %v1043
        %v3899 = vunpack.c.h.bf16 %v1043
        %v3900 = vunpack.c.l.bf16 %v1044
        %v3901 = vunpack.c.h.bf16 %v1044
        %v3902 = vunpack.c.l.bf16 %v1045
        %v3903 = vunpack.c.h.bf16 %v1045
        %v3904 = vunpack.c.l.bf16 %v1046
        %v3905 = vunpack.c.h.bf16 %v1046
        %v3906 = vunpack.c.l.bf16 %v1047
        %v3907 = vunpack.c.h.bf16 %v1047
        %v3908 = vunpack.c.l.bf16 %v1048
        %v3909 = vunpack.c.h.bf16 %v1048
        %v3910 = vunpack.c.l.bf16 %v1049
        %v3911 = vunpack.c.h.bf16 %v1049
        %v3912 = vunpack.c.l.bf16 %v1050
        %v3913 = vunpack.c.h.bf16 %v1050
        %v3914 = vunpack.c.l.bf16 %v1051
        %v3915 = vunpack.c.h.bf16 %v1051
        %v3916 = vunpack.c.l.bf16 %v1052
        %v3917 = vunpack.c.h.bf16 %v1052
        %v3918 = vunpack.c.l.bf16 %v1053
        %v3919 = vunpack.c.h.bf16 %v1053
        %v3920 = vunpack.c.l.bf16 %v1054
        %v3921 = vunpack.c.h.bf16 %v1054
        %v3922 = vunpack.c.l.bf16 %v1055
        %v3923 = vunpack.c.h.bf16 %v1055
        %v3924 = vunpack.c.l.bf16 %v1056
        %v3925 = vunpack.c.h.bf16 %v1056
        %v3926 = vunpack.c.l.bf16 %v1057
        %v3927 = vunpack.c.h.bf16 %v1057
        %v3928 = vunpack.c.l.bf16 %v1058
        %v3929 = vunpack.c.h.bf16 %v1058
        %v3930 = vunpack.c.l.bf16 %v1059
        %v3931 = vunpack.c.h.bf16 %v1059
        %v3932 = vunpack.c.l.bf16 %v1060
        %v3933 = vunpack.c.h.bf16 %v1060
        %v3934 = vunpack.c.l.bf16 %v1061
        %v3935 = vunpack.c.h.bf16 %v1061
        %v3936 = vunpack.c.l.bf16 %v1062
        %v3937 = vunpack.c.h.bf16 %v1062
        %v3938 = vunpack.c.l.bf16 %v1063
        %v3939 = vunpack.c.h.bf16 %v1063
        %v3940 = vunpack.c.l.bf16 %v1064
        %v3941 = vunpack.c.h.bf16 %v1064
        %v3942 = vunpack.c.l.bf16 %v1065
        %v3943 = vunpack.c.h.bf16 %v1065
        %v3944 = vunpack.c.l.bf16 %v1066
        %v3945 = vunpack.c.h.bf16 %v1066
        %v3946 = vunpack.c.l.bf16 %v1067
        %v3947 = vunpack.c.h.bf16 %v1067
        %v3948 = vunpack.c.l.bf16 %v1068
        %v3949 = vunpack.c.h.bf16 %v1068
        %v3950 = vunpack.c.l.bf16 %v1069
        %v3951 = vunpack.c.h.bf16 %v1069
        %v3952 = vunpack.c.l.bf16 %v1070
        %v3953 = vunpack.c.h.bf16 %v1070
        %v3954 = vunpack.c.l.bf16 %v1071
        %v3955 = vunpack.c.h.bf16 %v1071
        %v3956 = vunpack.c.l.bf16 %v1072
        %v3957 = vunpack.c.h.bf16 %v1072
        %v3958 = vunpack.c.l.bf16 %v1073
        %v3959 = vunpack.c.h.bf16 %v1073
        %v3960 = vunpack.c.l.bf16 %v1074
        %v3961 = vunpack.c.h.bf16 %v1074
        %v3962 = vunpack.c.l.bf16 %v1075
        %v3963 = vunpack.c.h.bf16 %v1075
        %v3964 = vunpack.c.l.bf16 %v1076
        %v3965 = vunpack.c.h.bf16 %v1076
        %v3966 = vunpack.c.l.bf16 %v1077
        %v3967 = vunpack.c.h.bf16 %v1077
        %v3968 = vunpack.c.l.bf16 %v1078
        %v3969 = vunpack.c.h.bf16 %v1078
        %v3970 = vunpack.c.l.bf16 %v1079
        %v3971 = vunpack.c.h.bf16 %v1079
        %v3972 = vunpack.c.l.bf16 %v1080
        %v3973 = vunpack.c.h.bf16 %v1080
        %v3974 = vunpack.c.l.bf16 %v1081
        %v3975 = vunpack.c.h.bf16 %v1081
        %v3976 = vunpack.c.l.bf16 %v1082
        %v3977 = vunpack.c.h.bf16 %v1082
        %v3978 = vunpack.c.l.bf16 %v1083
        %v3979 = vunpack.c.h.bf16 %v1083
        %v3980 = vunpack.c.l.bf16 %v1084
        %v3981 = vunpack.c.h.bf16 %v1084
        %v3982 = vunpack.c.l.bf16 %v1085
        %v3983 = vunpack.c.h.bf16 %v1085
        %v3984 = vunpack.c.l.bf16 %v1086
        %v3985 = vunpack.c.h.bf16 %v1086
        %v3986 = vunpack.c.l.bf16 %v1087
        %v3987 = vunpack.c.h.bf16 %v1087
        %v3988 = vunpack.c.l.bf16 %v1088
        %v3989 = vunpack.c.h.bf16 %v1088
        %v3990 = vunpack.c.l.bf16 %v1089
        %v3991 = vunpack.c.h.bf16 %v1089
        %v3992 = vunpack.c.l.bf16 %v1090
        %v3993 = vunpack.c.h.bf16 %v1090
        %v3994 = vunpack.c.l.bf16 %v1091
        %v3995 = vunpack.c.h.bf16 %v1091
        %v3996 = vunpack.c.l.bf16 %v1092
        %v3997 = vunpack.c.h.bf16 %v1092
        %v3998 = vunpack.c.l.bf16 %v1093
        %v3999 = vunpack.c.h.bf16 %v1093
        %v4000 = vunpack.c.l.bf16 %v1094
        %v4001 = vunpack.c.h.bf16 %v1094
        %v4002 = vunpack.c.l.bf16 %v1095
        %v4003 = vunpack.c.h.bf16 %v1095
        %v4004 = vunpack.c.l.bf16 %v1096
        %v4005 = vunpack.c.h.bf16 %v1096
        %v4006 = vunpack.c.l.bf16 %v1097
        %v4007 = vunpack.c.h.bf16 %v1097
        %v4008 = vunpack.c.l.bf16 %v1098
        %v4009 = vunpack.c.h.bf16 %v1098
        %v4010 = vunpack.c.l.bf16 %v1099
        %v4011 = vunpack.c.h.bf16 %v1099
        %v4012 = vunpack.c.l.bf16 %v1100
        %v4013 = vunpack.c.h.bf16 %v1100
        %v4014 = vunpack.c.l.bf16 %v1101
        %v4015 = vunpack.c.h.bf16 %v1101
        %v4016 = vunpack.c.l.bf16 %v1102
        %v4017 = vunpack.c.h.bf16 %v1102
        %v4018 = vunpack.c.l.bf16 %v1103
        %v4019 = vunpack.c.h.bf16 %v1103
        %v4020 = vunpack.c.l.bf16 %v1104
        %v4021 = vunpack.c.h.bf16 %v1104
        %v4022 = vunpack.c.l.bf16 %v1105
        %v4023 = vunpack.c.h.bf16 %v1105
        %v4024 = vunpack.c.l.bf16 %v1106
        %v4025 = vunpack.c.h.bf16 %v1106
        %v4026 = vunpack.c.l.bf16 %v1107
        %v4027 = vunpack.c.h.bf16 %v1107
        %v4028 = vunpack.c.l.bf16 %v1108
        %v4029 = vunpack.c.h.bf16 %v1108
        %v4030 = vunpack.c.l.bf16 %v1109
        %v4031 = vunpack.c.h.bf16 %v1109
        %v4032 = vunpack.c.l.bf16 %v1110
        %v4033 = vunpack.c.h.bf16 %v1110
        %v4034 = vunpack.c.l.bf16 %v1111
        %v4035 = vunpack.c.h.bf16 %v1111
        %v4036 = vunpack.c.l.bf16 %v1112
        %v4037 = vunpack.c.h.bf16 %v1112
        %v4038 = vunpack.c.l.bf16 %v1113
        %v4039 = vunpack.c.h.bf16 %v1113
        %v4040 = vunpack.c.l.bf16 %v1114
        %v4041 = vunpack.c.h.bf16 %v1114
        %v4042 = vunpack.c.l.bf16 %v1115
        %v4043 = vunpack.c.h.bf16 %v1115
        %v4044 = vunpack.c.l.bf16 %v1116
        %v4045 = vunpack.c.h.bf16 %v1116
        %v4046 = vunpack.c.l.bf16 %v1117
        %v4047 = vunpack.c.h.bf16 %v1117
        %v4048 = vunpack.c.l.bf16 %v1118
        %v4049 = vunpack.c.h.bf16 %v1118
        %v4050 = vunpack.c.l.bf16 %v1119
        %v4051 = vunpack.c.h.bf16 %v1119
        %v4052 = vunpack.c.l.bf16 %v1120
        %v4053 = vunpack.c.h.bf16 %v1120
        %v4054 = vunpack.c.l.bf16 %v1121
        %v4055 = vunpack.c.h.bf16 %v1121
        %v4056 = vunpack.c.l.bf16 %v1122
        %v4057 = vunpack.c.h.bf16 %v1122
        %v4058 = vunpack.c.l.bf16 %v1123
        %v4059 = vunpack.c.h.bf16 %v1123
        %v4060 = vunpack.c.l.bf16 %v1124
        %v4061 = vunpack.c.h.bf16 %v1124
        %v4062 = vunpack.c.l.bf16 %v1125
        %v4063 = vunpack.c.h.bf16 %v1125
        %v4064 = vunpack.c.l.bf16 %v1126
        %v4065 = vunpack.c.h.bf16 %v1126
        %v4066 = vunpack.c.l.bf16 %v1127
        %v4067 = vunpack.c.h.bf16 %v1127
        %v4068 = vunpack.c.l.bf16 %v1128
        %v4069 = vunpack.c.h.bf16 %v1128
        %v4070 = vunpack.c.l.bf16 %v1129
        %v4071 = vunpack.c.h.bf16 %v1129
        %v4072 = vunpack.c.l.bf16 %v1130
        %v4073 = vunpack.c.h.bf16 %v1130
        %v4074 = vunpack.c.l.bf16 %v1131
        %v4075 = vunpack.c.h.bf16 %v1131
        %v4076 = vunpack.c.l.bf16 %v1132
        %v4077 = vunpack.c.h.bf16 %v1132
        %v4078 = vunpack.c.l.bf16 %v1133
        %v4079 = vunpack.c.h.bf16 %v1133
        %v4080 = vunpack.c.l.bf16 %v1134
        %v4081 = vunpack.c.h.bf16 %v1134
        %v4082 = vunpack.c.l.bf16 %v1135
        %v4083 = vunpack.c.h.bf16 %v1135
        %v4084 = vunpack.c.l.bf16 %v1136
        %v4085 = vunpack.c.h.bf16 %v1136
        %v4086 = vunpack.c.l.bf16 %v1137
        %v4087 = vunpack.c.h.bf16 %v1137
        %v4088 = vunpack.c.l.bf16 %v1138
        %v4089 = vunpack.c.h.bf16 %v1138
        %v4090 = vunpack.c.l.bf16 %v1139
        %v4091 = vunpack.c.h.bf16 %v1139
        %v4092 = vunpack.c.l.bf16 %v1140
        %v4093 = vunpack.c.h.bf16 %v1140
        %v4094 = vunpack.c.l.bf16 %v1141
        %v4095 = vunpack.c.h.bf16 %v1141
        %v4096 = vunpack.c.l.bf16 %v1142
        %v4097 = vunpack.c.h.bf16 %v1142
        %v4098 = vunpack.c.l.bf16 %v1143
        %v4099 = vunpack.c.h.bf16 %v1143
        %v4100 = vunpack.c.l.bf16 %v1144
        %v4101 = vunpack.c.h.bf16 %v1144
        %v4102 = vunpack.c.l.bf16 %v1145
        %v4103 = vunpack.c.h.bf16 %v1145
        %v4104 = vunpack.c.l.bf16 %v1146
        %v4105 = vunpack.c.h.bf16 %v1146
        %v4106 = vunpack.c.l.bf16 %v1147
        %v4107 = vunpack.c.h.bf16 %v1147
        %v4108 = vunpack.c.l.bf16 %v1148
        %v4109 = vunpack.c.h.bf16 %v1148
        %v4110 = vunpack.c.l.bf16 %v1149
        %v4111 = vunpack.c.h.bf16 %v1149
        %v4112 = vunpack.c.l.bf16 %v1150
        %v4113 = vunpack.c.h.bf16 %v1150
        %v4114 = vunpack.c.l.bf16 %v1151
        %v4115 = vunpack.c.h.bf16 %v1151
        %v4116 = vunpack.c.l.bf16 %v1152
        %v4117 = vunpack.c.h.bf16 %v1152
        %v4118 = vunpack.c.l.bf16 %v1153
        %v4119 = vunpack.c.h.bf16 %v1153
        %v4120 = vunpack.c.l.bf16 %v1154
        %v4121 = vunpack.c.h.bf16 %v1154
        %v4122 = vunpack.c.l.bf16 %v1155
        %v4123 = vunpack.c.h.bf16 %v1155
        %v4124 = vunpack.c.l.bf16 %v1156
        %v4125 = vunpack.c.h.bf16 %v1156
        %v4126 = vunpack.c.l.bf16 %v1157
        %v4127 = vunpack.c.h.bf16 %v1157
        %v4128 = vunpack.c.l.bf16 %v1158
        %v4129 = vunpack.c.h.bf16 %v1158
        %v4130 = vunpack.c.l.bf16 %v1159
        %v4131 = vunpack.c.h.bf16 %v1159
        %v4132 = vunpack.c.l.bf16 %v1160
        %v4133 = vunpack.c.h.bf16 %v1160
        %v4134 = vunpack.c.l.bf16 %v1161
        %v4135 = vunpack.c.h.bf16 %v1161
        %v4136 = vunpack.c.l.bf16 %v1162
        %v4137 = vunpack.c.h.bf16 %v1162
        %v4138 = vunpack.c.l.bf16 %v1163
        %v4139 = vunpack.c.h.bf16 %v1163
        %v4140 = vunpack.c.l.bf16 %v1164
        %v4141 = vunpack.c.h.bf16 %v1164
        %v4142 = vunpack.c.l.bf16 %v1165
        %v4143 = vunpack.c.h.bf16 %v1165
        %v4144 = vunpack.c.l.bf16 %v1166
        %v4145 = vunpack.c.h.bf16 %v1166
        %v4146 = vunpack.c.l.bf16 %v1167
        %v4147 = vunpack.c.h.bf16 %v1167
        %v4148 = vunpack.c.l.bf16 %v1168
        %v4149 = vunpack.c.h.bf16 %v1168
        %v4150 = vunpack.c.l.bf16 %v1169
        %v4151 = vunpack.c.h.bf16 %v1169
        %v4152 = vunpack.c.l.bf16 %v1170
        %v4153 = vunpack.c.h.bf16 %v1170
        %v4154 = vunpack.c.l.bf16 %v1171
        %v4155 = vunpack.c.h.bf16 %v1171
        %v4156 = vunpack.c.l.bf16 %v1172
        %v4157 = vunpack.c.h.bf16 %v1172
        %v4158 = vunpack.c.l.bf16 %v1173
        %v4159 = vunpack.c.h.bf16 %v1173
        %v4160 = vunpack.c.l.bf16 %v1174
        %v4161 = vunpack.c.h.bf16 %v1174
        %v4162 = vunpack.c.l.bf16 %v1175
        %v4163 = vunpack.c.h.bf16 %v1175
        %v4164 = vunpack.c.l.bf16 %v1176
        %v4165 = vunpack.c.h.bf16 %v1176
        %v4166 = vunpack.c.l.bf16 %v1177
        %v4167 = vunpack.c.h.bf16 %v1177
        %v4168 = vunpack.c.l.bf16 %v1178
        %v4169 = vunpack.c.h.bf16 %v1178
        %v4170 = vunpack.c.l.bf16 %v1179
        %v4171 = vunpack.c.h.bf16 %v1179
        %v4172 = vunpack.c.l.bf16 %v1180
        %v4173 = vunpack.c.h.bf16 %v1180
        %v4174 = vunpack.c.l.bf16 %v1181
        %v4175 = vunpack.c.h.bf16 %v1181
        %v4176 = vunpack.c.l.bf16 %v1182
        %v4177 = vunpack.c.h.bf16 %v1182
        %v4178 = vunpack.c.l.bf16 %v1183
        %v4179 = vunpack.c.h.bf16 %v1183
        %v4180 = vunpack.c.l.bf16 %v1184
        %v4181 = vunpack.c.h.bf16 %v1184
        %v4182 = vunpack.c.l.bf16 %v1185
        %v4183 = vunpack.c.h.bf16 %v1185
        %v4184 = vunpack.c.l.bf16 %v1186
        %v4185 = vunpack.c.h.bf16 %v1186
        %v4186 = vunpack.c.l.bf16 %v1187
        %v4187 = vunpack.c.h.bf16 %v1187
        %v4188 = vunpack.c.l.bf16 %v1188
        %v4189 = vunpack.c.h.bf16 %v1188
        %v4190 = vunpack.c.l.bf16 %v1189
        %v4191 = vunpack.c.h.bf16 %v1189
        %v4192 = vunpack.c.l.bf16 %v1190
        %v4193 = vunpack.c.h.bf16 %v1190
        %v4194 = vunpack.c.l.bf16 %v1191
        %v4195 = vunpack.c.h.bf16 %v1191
        %v4196 = vunpack.c.l.bf16 %v1192
        %v4197 = vunpack.c.h.bf16 %v1192
        %v4198 = vunpack.c.l.bf16 %v1193
        %v4199 = vunpack.c.h.bf16 %v1193
        %v4200 = vunpack.c.l.bf16 %v1194
        %v4201 = vunpack.c.h.bf16 %v1194
        %v4202 = vunpack.c.l.bf16 %v1195
        %v4203 = vunpack.c.h.bf16 %v1195
        %v4204 = vunpack.c.l.bf16 %v1196
        %v4205 = vunpack.c.h.bf16 %v1196
        %v4206 = vunpack.c.l.bf16 %v1197
        %v4207 = vunpack.c.h.bf16 %v1197
        %v4208 = vunpack.c.l.bf16 %v1198
        %v4209 = vunpack.c.h.bf16 %v1198
        %v4210 = vunpack.c.l.bf16 %v1199
        %v4211 = vunpack.c.h.bf16 %v1199
        %v4212 = vunpack.c.l.bf16 %v1200
        %v4213 = vunpack.c.h.bf16 %v1200
        %v4214 = vunpack.c.l.bf16 %v1201
        %v4215 = vunpack.c.h.bf16 %v1201
        %v4216 = vunpack.c.l.bf16 %v1202
        %v4217 = vunpack.c.h.bf16 %v1202
        %v4218 = vunpack.c.l.bf16 %v1203
        %v4219 = vunpack.c.h.bf16 %v1203
        %v4220 = vunpack.c.l.bf16 %v1204
        %v4221 = vunpack.c.h.bf16 %v1204
        %v4222 = vunpack.c.l.bf16 %v1205
        %v4223 = vunpack.c.h.bf16 %v1205
        %v4224 = vunpack.c.l.bf16 %v1206
        %v4225 = vunpack.c.h.bf16 %v1206
        %v4226 = vunpack.c.l.bf16 %v1207
        %v4227 = vunpack.c.h.bf16 %v1207
        %v4228 = vunpack.c.l.bf16 %v1208
        %v4229 = vunpack.c.h.bf16 %v1208
        %v4230 = vunpack.c.l.bf16 %v1209
        %v4231 = vunpack.c.h.bf16 %v1209
        %v4232 = vunpack.c.l.bf16 %v1210
        %v4233 = vunpack.c.h.bf16 %v1210
        %v4234 = vunpack.c.l.bf16 %v1211
        %v4235 = vunpack.c.h.bf16 %v1211
        %v4236 = vunpack.c.l.bf16 %v1212
        %v4237 = vunpack.c.h.bf16 %v1212
        %v4238 = vunpack.c.l.bf16 %v1213
        %v4239 = vunpack.c.h.bf16 %v1213
        %v4240 = vunpack.c.l.bf16 %v1214
        %v4241 = vunpack.c.h.bf16 %v1214
        %v4242 = vunpack.c.l.bf16 %v1215
        %v4243 = vunpack.c.h.bf16 %v1215
        %v4244 = vunpack.c.l.bf16 %v1216
        %v4245 = vunpack.c.h.bf16 %v1216
        %v4246 = vunpack.c.l.bf16 %v1217
        %v4247 = vunpack.c.h.bf16 %v1217
        %v4248 = vunpack.c.l.bf16 %v1218
        %v4249 = vunpack.c.h.bf16 %v1218
        %v4250 = vunpack.c.l.bf16 %v1219
        %v4251 = vunpack.c.h.bf16 %v1219
        %v4252 = vunpack.c.l.bf16 %v1220
        %v4253 = vunpack.c.h.bf16 %v1220
        %v4254 = vunpack.c.l.bf16 %v1221
        %v4255 = vunpack.c.h.bf16 %v1221
        %v4256 = vunpack.c.l.bf16 %v1222
        %v4257 = vunpack.c.h.bf16 %v1222
        %v4258 = vunpack.c.l.bf16 %v1223
        %v4259 = vunpack.c.h.bf16 %v1223
        %v4260 = vunpack.c.l.bf16 %v1224
        %v4261 = vunpack.c.h.bf16 %v1224
        %v4262 = vunpack.c.l.bf16 %v1225
        %v4263 = vunpack.c.h.bf16 %v1225
        %v4264 = vunpack.c.l.bf16 %v1226
        %v4265 = vunpack.c.h.bf16 %v1226
        %v4266 = vunpack.c.l.bf16 %v1227
        %v4267 = vunpack.c.h.bf16 %v1227
        %v4268 = vunpack.c.l.bf16 %v1228
        %v4269 = vunpack.c.h.bf16 %v1228
        %v4270 = vunpack.c.l.bf16 %v1229
        %v4271 = vunpack.c.h.bf16 %v1229
        %v4272 = vunpack.c.l.bf16 %v1230
        %v4273 = vunpack.c.h.bf16 %v1230
        %v4274 = vunpack.c.l.bf16 %v1231
        %v4275 = vunpack.c.h.bf16 %v1231
        %v4276 = vunpack.c.l.bf16 %v1232
        %v4277 = vunpack.c.h.bf16 %v1232
        %v4278 = vunpack.c.l.bf16 %v1233
        %v4279 = vunpack.c.h.bf16 %v1233
        %v4280 = vunpack.c.l.bf16 %v1234
        %v4281 = vunpack.c.h.bf16 %v1234
        %v4282 = vunpack.c.l.bf16 %v1235
        %v4283 = vunpack.c.h.bf16 %v1235
        %v4284 = vunpack.c.l.bf16 %v1236
        %v4285 = vunpack.c.h.bf16 %v1236
        %v4286 = vunpack.c.l.bf16 %v1237
        %v4287 = vunpack.c.h.bf16 %v1237
        %v4288 = vunpack.c.l.bf16 %v1238
        %v4289 = vunpack.c.h.bf16 %v1238
        %v4290 = vunpack.c.l.bf16 %v1239
        %v4291 = vunpack.c.h.bf16 %v1239
        %v4292 = vunpack.c.l.bf16 %v1240
        %v4293 = vunpack.c.h.bf16 %v1240
        %v4294 = vunpack.c.l.bf16 %v1241
        %v4295 = vunpack.c.h.bf16 %v1241
        %v4296 = vunpack.c.l.bf16 %v1242
        %v4297 = vunpack.c.h.bf16 %v1242
        %v4298 = vunpack.c.l.bf16 %v1243
        %v4299 = vunpack.c.h.bf16 %v1243
        %v4300 = vunpack.c.l.bf16 %v1244
        %v4301 = vunpack.c.h.bf16 %v1244
        %v4302 = vunpack.c.l.bf16 %v1245
        %v4303 = vunpack.c.h.bf16 %v1245
        %v4304 = vunpack.c.l.bf16 %v1246
        %v4305 = vunpack.c.h.bf16 %v1246
        %v4306 = vunpack.c.l.bf16 %v1247
        %v4307 = vunpack.c.h.bf16 %v1247
        %v4308 = vunpack.c.l.bf16 %v1248
        %v4309 = vunpack.c.h.bf16 %v1248
        %v4310 = vunpack.c.l.bf16 %v1249
        %v4311 = vunpack.c.h.bf16 %v1249
        %v4312 = vunpack.c.l.bf16 %v1250
        %v4313 = vunpack.c.h.bf16 %v1250
        %v4314 = vunpack.c.l.bf16 %v1251
        %v4315 = vunpack.c.h.bf16 %v1251
        %v4316 = vunpack.c.l.bf16 %v1252
        %v4317 = vunpack.c.h.bf16 %v1252
        %v4318 = vunpack.c.l.bf16 %v1253
        %v4319 = vunpack.c.h.bf16 %v1253
        %v4320 = vunpack.c.l.bf16 %v1254
        %v4321 = vunpack.c.h.bf16 %v1254
        %v4322 = vunpack.c.l.bf16 %v1255
        %v4323 = vunpack.c.h.bf16 %v1255
        %v4324 = vunpack.c.l.bf16 %v1256
        %v4325 = vunpack.c.h.bf16 %v1256
        %v4326 = vunpack.c.l.bf16 %v1257
        %v4327 = vunpack.c.h.bf16 %v1257
        %v4328 = vunpack.c.l.bf16 %v1258
        %v4329 = vunpack.c.h.bf16 %v1258
        %v4330 = vunpack.c.l.bf16 %v1259
        %v4331 = vunpack.c.h.bf16 %v1259
        %v4332 = vunpack.c.l.bf16 %v1260
        %v4333 = vunpack.c.h.bf16 %v1260
        %v4334 = vunpack.c.l.bf16 %v1261
        %v4335 = vunpack.c.h.bf16 %v1261
        %v4336 = vunpack.c.l.bf16 %v1262
        %v4337 = vunpack.c.h.bf16 %v1262
        %v4338 = vunpack.c.l.bf16 %v1263
        %v4339 = vunpack.c.h.bf16 %v1263
        %v4340 = vunpack.c.l.bf16 %v1264
        %v4341 = vunpack.c.h.bf16 %v1264
        %v4342 = vunpack.c.l.bf16 %v1265
        %v4343 = vunpack.c.h.bf16 %v1265
        %v4344 = vunpack.c.l.bf16 %v1266
        %v4345 = vunpack.c.h.bf16 %v1266
        %v4346 = vunpack.c.l.bf16 %v1267
        %v4347 = vunpack.c.h.bf16 %v1267
        %v4348 = vunpack.c.l.bf16 %v1268
        %v4349 = vunpack.c.h.bf16 %v1268
        %v4350 = vunpack.c.l.bf16 %v1269
        %v4351 = vunpack.c.h.bf16 %v1269
        %v4352 = vunpack.c.l.bf16 %v1270
        %v4353 = vunpack.c.h.bf16 %v1270
        %v4354 = vunpack.c.l.bf16 %v1271
        %v4355 = vunpack.c.h.bf16 %v1271
        %v4356 = vunpack.c.l.bf16 %v1272
        %v4357 = vunpack.c.h.bf16 %v1272
        %v4358 = vunpack.c.l.bf16 %v1273
        %v4359 = vunpack.c.h.bf16 %v1273
        %v4360 = vunpack.c.l.bf16 %v1274
        %v4361 = vunpack.c.h.bf16 %v1274
        %v4362 = vunpack.c.l.bf16 %v1275
        %v4363 = vunpack.c.h.bf16 %v1275
        %v4364 = vunpack.c.l.bf16 %v1276
        %v4365 = vunpack.c.h.bf16 %v1276
        %v4366 = vunpack.c.l.bf16 %v1277
        %v4367 = vunpack.c.h.bf16 %v1277
        %v4368 = vunpack.c.l.bf16 %v1278
        %v4369 = vunpack.c.h.bf16 %v1278
        %v4370 = vunpack.c.l.bf16 %v1279
        %v4371 = vunpack.c.h.bf16 %v1279
        %v4372 = vunpack.c.l.bf16 %v1280
        %v4373 = vunpack.c.h.bf16 %v1280
        %v4374 = vunpack.c.l.bf16 %v1281
        %v4375 = vunpack.c.h.bf16 %v1281
        %v4376 = vunpack.c.l.bf16 %v1282
        %v4377 = vunpack.c.h.bf16 %v1282
        %v4378 = vunpack.c.l.bf16 %v1283
        %v4379 = vunpack.c.h.bf16 %v1283
        %v4380 = vunpack.c.l.bf16 %v1284
        %v4381 = vunpack.c.h.bf16 %v1284
        %v4382 = vunpack.c.l.bf16 %v1285
        %v4383 = vunpack.c.h.bf16 %v1285
        %v4384 = vunpack.c.l.bf16 %v1286
        %v4385 = vunpack.c.h.bf16 %v1286
        %v4386 = vunpack.c.l.bf16 %v1287
        %v4387 = vunpack.c.h.bf16 %v1287
        %v4388 = vunpack.c.l.bf16 %v1288
        %v4389 = vunpack.c.h.bf16 %v1288
        %v4390 = vunpack.c.l.bf16 %v1289
        %v4391 = vunpack.c.h.bf16 %v1289
        %v4392 = vunpack.c.l.bf16 %v1290
        %v4393 = vunpack.c.h.bf16 %v1290
        %v4394 = vunpack.c.l.bf16 %v1291
        %v4395 = vunpack.c.h.bf16 %v1291
        %v4396 = vunpack.c.l.bf16 %v1292
        %v4397 = vunpack.c.h.bf16 %v1292
        %v4398 = vunpack.c.l.bf16 %v1293
        %v4399 = vunpack.c.h.bf16 %v1293
        %v4400 = vunpack.c.l.bf16 %v1294
        %v4401 = vunpack.c.h.bf16 %v1294
        %v4402 = vunpack.c.l.bf16 %v1295
        %v4403 = vunpack.c.h.bf16 %v1295
        %v4404 = vunpack.c.l.bf16 %v1296
        %v4405 = vunpack.c.h.bf16 %v1296
        %v4406 = vunpack.c.l.bf16 %v1297
        %v4407 = vunpack.c.h.bf16 %v1297
        %v4408 = vunpack.c.l.bf16 %v1298
        %v4409 = vunpack.c.h.bf16 %v1298
        %v4410 = vunpack.c.l.bf16 %v1299
        %v4411 = vunpack.c.h.bf16 %v1299
        %v4412 = vunpack.c.l.bf16 %v1300
        %v4413 = vunpack.c.h.bf16 %v1300
        %v4414 = vunpack.c.l.bf16 %v1301
        %v4415 = vunpack.c.h.bf16 %v1301
        %v4416 = vunpack.c.l.bf16 %v1302
        %v4417 = vunpack.c.h.bf16 %v1302
        %v4418 = vunpack.c.l.bf16 %v1303
        %v4419 = vunpack.c.h.bf16 %v1303
        %v4420 = vunpack.c.l.bf16 %v1304
        %v4421 = vunpack.c.h.bf16 %v1304
        %v4422 = vunpack.c.l.bf16 %v1305
        %v4423 = vunpack.c.h.bf16 %v1305
        %v4424 = vunpack.c.l.bf16 %v1306
        %v4425 = vunpack.c.h.bf16 %v1306
        %v4426 = vunpack.c.l.bf16 %v1307
        %v4427 = vunpack.c.h.bf16 %v1307
        %v4428 = vunpack.c.l.bf16 %v1308
        %v4429 = vunpack.c.h.bf16 %v1308
        %v4430 = vunpack.c.l.bf16 %v1309
        %v4431 = vunpack.c.h.bf16 %v1309
        %v4432 = vunpack.c.l.bf16 %v1310
        %v4433 = vunpack.c.h.bf16 %v1310
        %v4434 = vunpack.c.l.bf16 %v1311
        %v4435 = vunpack.c.h.bf16 %v1311
        %v4436 = vunpack.c.l.bf16 %v1312
        %v4437 = vunpack.c.h.bf16 %v1312
        %v4438 = vunpack.c.l.bf16 %v1313
        %v4439 = vunpack.c.h.bf16 %v1313
        %v4440 = vunpack.c.l.bf16 %v1314
        %v4441 = vunpack.c.h.bf16 %v1314
        %v4442 = vunpack.c.l.bf16 %v1315
        %v4443 = vunpack.c.h.bf16 %v1315
        %v4444 = vunpack.c.l.bf16 %v1316
        %v4445 = vunpack.c.h.bf16 %v1316
        %v4446 = vunpack.c.l.bf16 %v1317
        %v4447 = vunpack.c.h.bf16 %v1317
        %v4448 = vunpack.c.l.bf16 %v1318
        %v4449 = vunpack.c.h.bf16 %v1318
        %v4450 = vunpack.c.l.bf16 %v1319
        %v4451 = vunpack.c.h.bf16 %v1319
        %v4452 = vunpack.c.l.bf16 %v1320
        %v4453 = vunpack.c.h.bf16 %v1320
        %v4454 = vunpack.c.l.bf16 %v1321
        %v4455 = vunpack.c.h.bf16 %v1321
        %v4456 = vunpack.c.l.bf16 %v1322
        %v4457 = vunpack.c.h.bf16 %v1322
        %v4458 = vunpack.c.l.bf16 %v1323
        %v4459 = vunpack.c.h.bf16 %v1323
        %v4460 = vunpack.c.l.bf16 %v1324
        %v4461 = vunpack.c.h.bf16 %v1324
        %v4462 = vunpack.c.l.bf16 %v1325
        %v4463 = vunpack.c.h.bf16 %v1325
        %v4464 = vunpack.c.l.bf16 %v1326
        %v4465 = vunpack.c.h.bf16 %v1326
        %v4466 = vunpack.c.l.bf16 %v1327
        %v4467 = vunpack.c.h.bf16 %v1327
        %v4468 = vunpack.c.l.bf16 %v1328
        %v4469 = vunpack.c.h.bf16 %v1328
        %v4470 = vunpack.c.l.bf16 %v1329
        %v4471 = vunpack.c.h.bf16 %v1329
        %v4472 = vunpack.c.l.bf16 %v1330
        %v4473 = vunpack.c.h.bf16 %v1330
        %v4474 = vunpack.c.l.bf16 %v1331
        %v4475 = vunpack.c.h.bf16 %v1331
        %v4476 = vunpack.c.l.bf16 %v1332
        %v4477 = vunpack.c.h.bf16 %v1332
        %v4478 = vunpack.c.l.bf16 %v1333
        %v4479 = vunpack.c.h.bf16 %v1333
        %v4480 = vunpack.c.l.bf16 %v1334
        %v4481 = vunpack.c.h.bf16 %v1334
        %v4482 = vunpack.c.l.bf16 %v1335
        %v4483 = vunpack.c.h.bf16 %v1335
        %v4484 = vunpack.c.l.bf16 %v1336
        %v4485 = vunpack.c.h.bf16 %v1336
        %v4486 = vunpack.c.l.bf16 %v1337
        %v4487 = vunpack.c.h.bf16 %v1337
        %v4488 = vunpack.c.l.bf16 %v1338
        %v4489 = vunpack.c.h.bf16 %v1338
        %v4490 = vunpack.c.l.bf16 %v1339
        %v4491 = vunpack.c.h.bf16 %v1339
        %v4492 = vunpack.c.l.bf16 %v1340
        %v4493 = vunpack.c.h.bf16 %v1340
        %v4494 = vunpack.c.l.bf16 %v1341
        %v4495 = vunpack.c.h.bf16 %v1341
        %v4496 = vunpack.c.l.bf16 %v1342
        %v4497 = vunpack.c.h.bf16 %v1342
        %v4498 = vunpack.c.l.bf16 %v1343
        %v4499 = vunpack.c.h.bf16 %v1343
        %v4500 = vunpack.c.l.bf16 %v1344
        %v4501 = vunpack.c.h.bf16 %v1344
        %v4502 = vunpack.c.l.bf16 %v1345
        %v4503 = vunpack.c.h.bf16 %v1345
        %v4504 = vunpack.c.l.bf16 %v1346
        %v4505 = vunpack.c.h.bf16 %v1346
        %v4506 = vunpack.c.l.bf16 %v1347
        %v4507 = vunpack.c.h.bf16 %v1347
        %v4508 = vunpack.c.l.bf16 %v1348
        %v4509 = vunpack.c.h.bf16 %v1348
        %v4510 = vunpack.c.l.bf16 %v1349
        %v4511 = vunpack.c.h.bf16 %v1349
        %v4512 = vunpack.c.l.bf16 %v1350
        %v4513 = vunpack.c.h.bf16 %v1350
        %v4514 = vunpack.c.l.bf16 %v1351
        %v4515 = vunpack.c.h.bf16 %v1351
        %v4516 = vunpack.c.l.bf16 %v1352
        %v4517 = vunpack.c.h.bf16 %v1352
        %v4518 = vunpack.c.l.bf16 %v1353
        %v4519 = vunpack.c.h.bf16 %v1353
        %v4520 = vunpack.c.l.bf16 %v1354
        %v4521 = vunpack.c.h.bf16 %v1354
        %v4522 = vunpack.c.l.bf16 %v1355
        %v4523 = vunpack.c.h.bf16 %v1355
        %v4524 = vunpack.c.l.bf16 %v1356
        %v4525 = vunpack.c.h.bf16 %v1356
        %v4526 = vunpack.c.l.bf16 %v1357
        %v4527 = vunpack.c.h.bf16 %v1357
        %v4528 = vunpack.c.l.bf16 %v1358
        %v4529 = vunpack.c.h.bf16 %v1358
        %v4530 = vunpack.c.l.bf16 %v1359
        %v4531 = vunpack.c.h.bf16 %v1359
        %v4532 = vunpack.c.l.bf16 %v1360
        %v4533 = vunpack.c.h.bf16 %v1360
        %v4534 = vunpack.c.l.bf16 %v1361
        %v4535 = vunpack.c.h.bf16 %v1361
        %v4536 = vunpack.c.l.bf16 %v1362
        %v4537 = vunpack.c.h.bf16 %v1362
        %v4538 = vunpack.c.l.bf16 %v1363
        %v4539 = vunpack.c.h.bf16 %v1363
        %v4540 = vunpack.c.l.bf16 %v1364
        %v4541 = vunpack.c.h.bf16 %v1364
        %v4542 = vunpack.c.l.bf16 %v1365
        %v4543 = vunpack.c.h.bf16 %v1365
        %v4544 = vunpack.c.l.bf16 %v1366
        %v4545 = vunpack.c.h.bf16 %v1366
        %v4546 = vunpack.c.l.bf16 %v1367
        %v4547 = vunpack.c.h.bf16 %v1367
        %v4548 = vunpack.c.l.bf16 %v1368
        %v4549 = vunpack.c.h.bf16 %v1368
        %v4550 = vunpack.c.l.bf16 %v1369
        %v4551 = vunpack.c.h.bf16 %v1369
        %v4552 = vunpack.c.l.bf16 %v1370
        %v4553 = vunpack.c.h.bf16 %v1370
        %v4554 = vunpack.c.l.bf16 %v1371
        %v4555 = vunpack.c.h.bf16 %v1371
        %v4556 = vunpack.c.l.bf16 %v1372
        %v4557 = vunpack.c.h.bf16 %v1372
        %v4558 = vunpack.c.l.bf16 %v1373
        %v4559 = vunpack.c.h.bf16 %v1373
        %v4560 = vunpack.c.l.bf16 %v1374
        %v4561 = vunpack.c.h.bf16 %v1374
        %v4562 = vunpack.c.l.bf16 %v1375
        %v4563 = vunpack.c.h.bf16 %v1375
        %v4564 = vunpack.c.l.bf16 %v1376
        %v4565 = vunpack.c.h.bf16 %v1376
        %v4566 = vunpack.c.l.bf16 %v1377
        %v4567 = vunpack.c.h.bf16 %v1377
        %v4568 = vunpack.c.l.bf16 %v1378
        %v4569 = vunpack.c.h.bf16 %v1378
        %v4570 = vunpack.c.l.bf16 %v1379
        %v4571 = vunpack.c.h.bf16 %v1379
        %v4572 = vunpack.c.l.bf16 %v1380
        %v4573 = vunpack.c.h.bf16 %v1380
        %v4574 = vunpack.c.l.bf16 %v1381
        %v4575 = vunpack.c.h.bf16 %v1381
        %v4576 = vunpack.c.l.bf16 %v1382
        %v4577 = vunpack.c.h.bf16 %v1382
        %v4578 = vunpack.c.l.bf16 %v1383
        %v4579 = vunpack.c.h.bf16 %v1383
        %v4580 = vunpack.c.l.bf16 %v1384
        %v4581 = vunpack.c.h.bf16 %v1384
        %v4582 = vunpack.c.l.bf16 %v1385
        %v4583 = vunpack.c.h.bf16 %v1385
        %v4584 = vunpack.c.l.bf16 %v1386
        %v4585 = vunpack.c.h.bf16 %v1386
        %v4586 = vunpack.c.l.bf16 %v1387
        %v4587 = vunpack.c.h.bf16 %v1387
        %v4588 = vunpack.c.l.bf16 %v1388
        %v4589 = vunpack.c.h.bf16 %v1388
        %v4590 = vunpack.c.l.bf16 %v1389
        %v4591 = vunpack.c.h.bf16 %v1389
        %v4592 = vunpack.c.l.bf16 %v1390
        %v4593 = vunpack.c.h.bf16 %v1390
        %v4594 = vunpack.c.l.bf16 %v1391
        %v4595 = vunpack.c.h.bf16 %v1391
        %v4596 = vunpack.c.l.bf16 %v1392
        %v4597 = vunpack.c.h.bf16 %v1392
        %v4598 = vunpack.c.l.bf16 %v1393
        %v4599 = vunpack.c.h.bf16 %v1393
        %v4600 = vunpack.c.l.bf16 %v1394
        %v4601 = vunpack.c.h.bf16 %v1394
        %v4602 = vunpack.c.l.bf16 %v1395
        %v4603 = vunpack.c.h.bf16 %v1395
        %v4604 = vunpack.c.l.bf16 %v1396
        %v4605 = vunpack.c.h.bf16 %v1396
        %v4606 = vunpack.c.l.bf16 %v1397
        %v4607 = vunpack.c.h.bf16 %v1397
        %v4608 = vunpack.c.l.bf16 %v1398
        %v4609 = vunpack.c.h.bf16 %v1398
        %v4610 = vunpack.c.l.bf16 %v1399
        %v4611 = vunpack.c.h.bf16 %v1399
        %v4612 = vunpack.c.l.bf16 %v1400
        %v4613 = vunpack.c.h.bf16 %v1400
        %v4614 = vunpack.c.l.bf16 %v1401
        %v4615 = vunpack.c.h.bf16 %v1401
        %v4616 = vunpack.c.l.bf16 %v1402
        %v4617 = vunpack.c.h.bf16 %v1402
        %v4618 = vunpack.c.l.bf16 %v1403
        %v4619 = vunpack.c.h.bf16 %v1403
        %v4620 = vunpack.c.l.bf16 %v1404
        %v4621 = vunpack.c.h.bf16 %v1404
        %v4622 = vunpack.c.l.bf16 %v1405
        %v4623 = vunpack.c.h.bf16 %v1405
        %v4624 = vunpack.c.l.bf16 %v1406
        %v4625 = vunpack.c.h.bf16 %v1406
        %v4626 = vunpack.c.l.bf16 %v1407
        %v4627 = vunpack.c.h.bf16 %v1407
        %v4628 = vunpack.c.l.bf16 %v1408
        %v4629 = vunpack.c.h.bf16 %v1408
        %v4630 = vunpack.c.l.bf16 %v1409
        %v4631 = vunpack.c.h.bf16 %v1409
        %v4632 = vunpack.c.l.bf16 %v1410
        %v4633 = vunpack.c.h.bf16 %v1410
        %v4634 = vunpack.c.l.bf16 %v1411
        %v4635 = vunpack.c.h.bf16 %v1411
        %v4636 = vunpack.c.l.bf16 %v1412
        %v4637 = vunpack.c.h.bf16 %v1412
        %v4638 = vunpack.c.l.bf16 %v1413
        %v4639 = vunpack.c.h.bf16 %v1413
        %v4640 = vunpack.c.l.bf16 %v1414
        %v4641 = vunpack.c.h.bf16 %v1414
        %v4642 = vunpack.c.l.bf16 %v1415
        %v4643 = vunpack.c.h.bf16 %v1415
        %v4644 = vunpack.c.l.bf16 %v1416
        %v4645 = vunpack.c.h.bf16 %v1416
        %v4646 = vunpack.c.l.bf16 %v1417
        %v4647 = vunpack.c.h.bf16 %v1417
        %v4648 = vunpack.c.l.bf16 %v1418
        %v4649 = vunpack.c.h.bf16 %v1418
        %v4650 = vunpack.c.l.bf16 %v1419
        %v4651 = vunpack.c.h.bf16 %v1419
        %v4652 = vunpack.c.l.bf16 %v1420
        %v4653 = vunpack.c.h.bf16 %v1420
        %v4654 = vunpack.c.l.bf16 %v1421
        %v4655 = vunpack.c.h.bf16 %v1421
        %v4656 = vunpack.c.l.bf16 %v1422
        %v4657 = vunpack.c.h.bf16 %v1422
        %v4658 = vunpack.c.l.bf16 %v1423
        %v4659 = vunpack.c.h.bf16 %v1423
        %v4660 = vunpack.c.l.bf16 %v1424
        %v4661 = vunpack.c.h.bf16 %v1424
        %v4662 = vunpack.c.l.bf16 %v1425
        %v4663 = vunpack.c.h.bf16 %v1425
        %v4664 = vunpack.c.l.bf16 %v1426
        %v4665 = vunpack.c.h.bf16 %v1426
        %v4666 = vunpack.c.l.bf16 %v1427
        %v4667 = vunpack.c.h.bf16 %v1427
        %v4668 = vunpack.c.l.bf16 %v1428
        %v4669 = vunpack.c.h.bf16 %v1428
        %v4670 = vunpack.c.l.bf16 %v1429
        %v4671 = vunpack.c.h.bf16 %v1429
        %v4672 = vunpack.c.l.bf16 %v1430
        %v4673 = vunpack.c.h.bf16 %v1430
        %v4674 = vunpack.c.l.bf16 %v1431
        %v4675 = vunpack.c.h.bf16 %v1431
        %v4676 = vunpack.c.l.bf16 %v1432
        %v4677 = vunpack.c.h.bf16 %v1432
        %v4678 = vunpack.c.l.bf16 %v1433
        %v4679 = vunpack.c.h.bf16 %v1433
        %v4680 = vunpack.c.l.bf16 %v1434
        %v4681 = vunpack.c.h.bf16 %v1434
        %v4682 = vunpack.c.l.bf16 %v1435
        %v4683 = vunpack.c.h.bf16 %v1435
        %v4684 = vunpack.c.l.bf16 %v1436
        %v4685 = vunpack.c.h.bf16 %v1436
        %v4686 = vunpack.c.l.bf16 %v1437
        %v4687 = vunpack.c.h.bf16 %v1437
        %v4688 = vunpack.c.l.bf16 %v1438
        %v4689 = vunpack.c.h.bf16 %v1438
        %v4690 = vunpack.c.l.bf16 %v1439
        %v4691 = vunpack.c.h.bf16 %v1439
        %v4692 = vunpack.c.l.bf16 %v1440
        %v4693 = vunpack.c.h.bf16 %v1440
        %v4694 = vunpack.c.l.bf16 %v1441
        %v4695 = vunpack.c.h.bf16 %v1441
        %v4696 = vunpack.c.l.bf16 %v1442
        %v4697 = vunpack.c.h.bf16 %v1442
        %v4698 = vunpack.c.l.bf16 %v1443
        %v4699 = vunpack.c.h.bf16 %v1443
        %v4700 = vunpack.c.l.bf16 %v1444
        %v4701 = vunpack.c.h.bf16 %v1444
        %v4702 = vunpack.c.l.bf16 %v1445
        %v4703 = vunpack.c.h.bf16 %v1445
        %v4704 = vunpack.c.l.bf16 %v1446
        %v4705 = vunpack.c.h.bf16 %v1446
        %v4706 = vunpack.c.l.bf16 %v1447
        %v4707 = vunpack.c.h.bf16 %v1447
        %v4708 = vunpack.c.l.bf16 %v1448
        %v4709 = vunpack.c.h.bf16 %v1448
        %v4710 = vunpack.c.l.bf16 %v1449
        %v4711 = vunpack.c.h.bf16 %v1449
        %v4712 = vunpack.c.l.bf16 %v1450
        %v4713 = vunpack.c.h.bf16 %v1450
        %v4714 = vunpack.c.l.bf16 %v1451
        %v4715 = vunpack.c.h.bf16 %v1451
        %v4716 = vunpack.c.l.bf16 %v1452
        %v4717 = vunpack.c.h.bf16 %v1452
        %v4718 = vunpack.c.l.bf16 %v1453
        %v4719 = vunpack.c.h.bf16 %v1453
        %v4720 = vunpack.c.l.bf16 %v1454
        %v4721 = vunpack.c.h.bf16 %v1454
        %v4722 = vunpack.c.l.bf16 %v1455
        %v4723 = vunpack.c.h.bf16 %v1455
        %v4724 = vunpack.c.l.bf16 %v1456
        %v4725 = vunpack.c.h.bf16 %v1456
        %v4726 = vunpack.c.l.bf16 %v1457
        %v4727 = vunpack.c.h.bf16 %v1457
        %v4728 = vunpack.c.l.bf16 %v1458
        %v4729 = vunpack.c.h.bf16 %v1458
        %v4730 = vunpack.c.l.bf16 %v1459
        %v4731 = vunpack.c.h.bf16 %v1459
        %v4732 = vunpack.c.l.bf16 %v1460
        %v4733 = vunpack.c.h.bf16 %v1460
        %v4734 = vunpack.c.l.bf16 %v1461
        %v4735 = vunpack.c.h.bf16 %v1461
        %v4736 = vunpack.c.l.bf16 %v1462
        %v4737 = vunpack.c.h.bf16 %v1462
        %v4738 = vunpack.c.l.bf16 %v1463
        %v4739 = vunpack.c.h.bf16 %v1463
        %v4740 = vunpack.c.l.bf16 %v1464
        %v4741 = vunpack.c.h.bf16 %v1464
        %v4742 = vunpack.c.l.bf16 %v1465
        %v4743 = vunpack.c.h.bf16 %v1465
        %v4744 = vunpack.c.l.bf16 %v1466
        %v4745 = vunpack.c.h.bf16 %v1466
        %v4746 = vunpack.c.l.bf16 %v1467
        %v4747 = vunpack.c.h.bf16 %v1467
        %v4748 = vunpack.c.l.bf16 %v1468
        %v4749 = vunpack.c.h.bf16 %v1468
        %v4750 = vunpack.c.l.bf16 %v1469
        %v4751 = vunpack.c.h.bf16 %v1469
        %v4752 = vunpack.c.l.bf16 %v1470
        %v4753 = vunpack.c.h.bf16 %v1470
        %v4754 = vunpack.c.l.bf16 %v1471
        %v4755 = vunpack.c.h.bf16 %v1471
        %v4756 = vunpack.c.l.bf16 %v1472
        %v4757 = vunpack.c.h.bf16 %v1472
        %v4758 = vunpack.c.l.bf16 %v1473
        %v4759 = vunpack.c.h.bf16 %v1473
        %v4760 = vunpack.c.l.bf16 %v1474
        %v4761 = vunpack.c.h.bf16 %v1474
        %v4762 = vunpack.c.l.bf16 %v1475
        %v4763 = vunpack.c.h.bf16 %v1475
        %v4764 = vunpack.c.l.bf16 %v1476
        %v4765 = vunpack.c.h.bf16 %v1476
        %v4766 = vunpack.c.l.bf16 %v1477
        %v4767 = vunpack.c.h.bf16 %v1477
        %v4768 = vunpack.c.l.bf16 %v1478
        %v4769 = vunpack.c.h.bf16 %v1478
        %v4770 = vunpack.c.l.bf16 %v1479
        %v4771 = vunpack.c.h.bf16 %v1479
        %v4772 = vunpack.c.l.bf16 %v1480
        %v4773 = vunpack.c.h.bf16 %v1480
        %v4774 = vunpack.c.l.bf16 %v1481
        %v4775 = vunpack.c.h.bf16 %v1481
        %v4776 = vunpack.c.l.bf16 %v1482
        %v4777 = vunpack.c.h.bf16 %v1482
        %v4778 = vunpack.c.l.bf16 %v1483
        %v4779 = vunpack.c.h.bf16 %v1483
        %v4780 = vunpack.c.l.bf16 %v1484
        %v4781 = vunpack.c.h.bf16 %v1484
        %v4782 = vunpack.c.l.bf16 %v1485
        %v4783 = vunpack.c.h.bf16 %v1485
        %v4784 = vunpack.c.l.bf16 %v1486
        %v4785 = vunpack.c.h.bf16 %v1486
        %v4786 = vunpack.c.l.bf16 %v1487
        %v4787 = vunpack.c.h.bf16 %v1487
        %v4788 = vunpack.c.l.bf16 %v1488
        %v4789 = vunpack.c.h.bf16 %v1488
        %v4790 = vunpack.c.l.bf16 %v1489
        %v4791 = vunpack.c.h.bf16 %v1489
        %v4792 = vunpack.c.l.bf16 %v1490
        %v4793 = vunpack.c.h.bf16 %v1490
        %v4794 = vunpack.c.l.bf16 %v1491
        %v4795 = vunpack.c.h.bf16 %v1491
        %v4796 = vunpack.c.l.bf16 %v1492
        %v4797 = vunpack.c.h.bf16 %v1492
        %v4798 = vunpack.c.l.bf16 %v1493
        %v4799 = vunpack.c.h.bf16 %v1493
        %v4800 = vunpack.c.l.bf16 %v1494
        %v4801 = vunpack.c.h.bf16 %v1494
        %v4802 = vunpack.c.l.bf16 %v1495
        %v4803 = vunpack.c.h.bf16 %v1495
        %v4804 = vunpack.c.l.bf16 %v1496
        %v4805 = vunpack.c.h.bf16 %v1496
        %v4806 = vunpack.c.l.bf16 %v1497
        %v4807 = vunpack.c.h.bf16 %v1497
        %v4808 = vunpack.c.l.bf16 %v1498
        %v4809 = vunpack.c.h.bf16 %v1498
        %v4810 = vunpack.c.l.bf16 %v1499
        %v4811 = vunpack.c.h.bf16 %v1499
        %v4812 = vunpack.c.l.bf16 %v1500
        %v4813 = vunpack.c.h.bf16 %v1500
        %v4814 = vunpack.c.l.bf16 %v1501
        %v4815 = vunpack.c.h.bf16 %v1501
        %v4816 = vunpack.c.l.bf16 %v1502
        %v4817 = vunpack.c.h.bf16 %v1502
        %v4818 = vunpack.c.l.bf16 %v1503
        %v4819 = vunpack.c.h.bf16 %v1503
        %v4820 = vunpack.c.l.bf16 %v1504
        %v4821 = vunpack.c.h.bf16 %v1504
        %v4822 = vunpack.c.l.bf16 %v1505
        %v4823 = vunpack.c.h.bf16 %v1505
        %v4824 = vunpack.c.l.bf16 %v1506
        %v4825 = vunpack.c.h.bf16 %v1506
        %v4826 = vunpack.c.l.bf16 %v1507
        %v4827 = vunpack.c.h.bf16 %v1507
        %v4828 = vunpack.c.l.bf16 %v1508
        %v4829 = vunpack.c.h.bf16 %v1508
        %v4830 = vunpack.c.l.bf16 %v1509
        %v4831 = vunpack.c.h.bf16 %v1509
        %v4832 = vunpack.c.l.bf16 %v1510
        %v4833 = vunpack.c.h.bf16 %v1510
        %v4834 = vunpack.c.l.bf16 %v1511
        %v4835 = vunpack.c.h.bf16 %v1511
        %v4836 = vunpack.c.l.bf16 %v1512
        %v4837 = vunpack.c.h.bf16 %v1512
        %v4838 = vunpack.c.l.bf16 %v1513
        %v4839 = vunpack.c.h.bf16 %v1513
        %v4840 = vunpack.c.l.bf16 %v1514
        %v4841 = vunpack.c.h.bf16 %v1514
        %v4842 = vunpack.c.l.bf16 %v1515
        %v4843 = vunpack.c.h.bf16 %v1515
        %v4844 = vunpack.c.l.bf16 %v1516
        %v4845 = vunpack.c.h.bf16 %v1516
        %v4846 = vunpack.c.l.bf16 %v1517
        %v4847 = vunpack.c.h.bf16 %v1517
        %v4848 = vunpack.c.l.bf16 %v1518
        %v4849 = vunpack.c.h.bf16 %v1518
        %v4850 = vunpack.c.l.bf16 %v1519
        %v4851 = vunpack.c.h.bf16 %v1519
        %v4852 = vunpack.c.l.bf16 %v1520
        %v4853 = vunpack.c.h.bf16 %v1520
        %v4854 = vunpack.c.l.bf16 %v1521
        %v4855 = vunpack.c.h.bf16 %v1521
        %v4856 = vunpack.c.l.bf16 %v1522
        %v4857 = vunpack.c.h.bf16 %v1522
        %v4858 = vunpack.c.l.bf16 %v1523
        %v4859 = vunpack.c.h.bf16 %v1523
        %v4860 = vunpack.c.l.bf16 %v1524
        %v4861 = vunpack.c.h.bf16 %v1524
        %v4862 = vunpack.c.l.bf16 %v1525
        %v4863 = vunpack.c.h.bf16 %v1525
        %v4864 = vunpack.c.l.bf16 %v1526
        %v4865 = vunpack.c.h.bf16 %v1526
        %v4866 = vunpack.c.l.bf16 %v1527
        %v4867 = vunpack.c.h.bf16 %v1527
        %v4868 = vunpack.c.l.bf16 %v1528
        %v4869 = vunpack.c.h.bf16 %v1528
        %v4870 = vunpack.c.l.bf16 %v1529
        %v4871 = vunpack.c.h.bf16 %v1529
        %v4872 = vunpack.c.l.bf16 %v1530
        %v4873 = vunpack.c.h.bf16 %v1530
        %v4874 = vunpack.c.l.bf16 %v1531
        %v4875 = vunpack.c.h.bf16 %v1531
        %v4876 = vunpack.c.l.bf16 %v1532
        %v4877 = vunpack.c.h.bf16 %v1532
        %v4878 = vunpack.c.l.bf16 %v1533
        %v4879 = vunpack.c.h.bf16 %v1533
        %v4880 = vunpack.c.l.bf16 %v1534
        %v4881 = vunpack.c.h.bf16 %v1534
        %v4882 = vunpack.c.l.bf16 %v1535
        %v4883 = vunpack.c.h.bf16 %v1535
        %v4884 = vunpack.c.l.bf16 %v1536
        %v4885 = vunpack.c.h.bf16 %v1536
        %v4886 = vunpack.c.l.bf16 %v1537
        %v4887 = vunpack.c.h.bf16 %v1537
        %v4888 = vunpack.c.l.bf16 %v1538
        %v4889 = vunpack.c.h.bf16 %v1538
        %v4890 = vunpack.c.l.bf16 %v1539
        %v4891 = vunpack.c.h.bf16 %v1539
        %v4892 = vunpack.c.l.bf16 %v1540
        %v4893 = vunpack.c.h.bf16 %v1540
        %v4894 = vunpack.c.l.bf16 %v1541
        %v4895 = vunpack.c.h.bf16 %v1541
        %v4896 = vunpack.c.l.bf16 %v1542
        %v4897 = vunpack.c.h.bf16 %v1542
        %v4898 = vunpack.c.l.bf16 %v1543
        %v4899 = vunpack.c.h.bf16 %v1543
        %v4900 = vunpack.c.l.bf16 %v1544
        %v4901 = vunpack.c.h.bf16 %v1544
        %v4902 = vunpack.c.l.bf16 %v1545
        %v4903 = vunpack.c.h.bf16 %v1545
        %v4904 = vunpack.c.l.bf16 %v1546
        %v4905 = vunpack.c.h.bf16 %v1546
        %v4906 = vunpack.c.l.bf16 %v1547
        %v4907 = vunpack.c.h.bf16 %v1547
        %v4908 = vunpack.c.l.bf16 %v1548
        %v4909 = vunpack.c.h.bf16 %v1548
        %v4910 = vunpack.c.l.bf16 %v1549
        %v4911 = vunpack.c.h.bf16 %v1549
        %v4912 = vunpack.c.l.bf16 %v1550
        %v4913 = vunpack.c.h.bf16 %v1550
        %v4914 = vunpack.c.l.bf16 %v1551
        %v4915 = vunpack.c.h.bf16 %v1551
        %v4916 = vunpack.c.l.bf16 %v1552
        %v4917 = vunpack.c.h.bf16 %v1552
        %v4918 = vunpack.c.l.bf16 %v1553
        %v4919 = vunpack.c.h.bf16 %v1553
        %v4920 = vunpack.c.l.bf16 %v1554
        %v4921 = vunpack.c.h.bf16 %v1554
        %v4922 = vunpack.c.l.bf16 %v1555
        %v4923 = vunpack.c.h.bf16 %v1555
        %v4924 = vunpack.c.l.bf16 %v1556
        %v4925 = vunpack.c.h.bf16 %v1556
        %v4926 = vunpack.c.l.bf16 %v1557
        %v4927 = vunpack.c.h.bf16 %v1557
        %v4928 = vunpack.c.l.bf16 %v1558
        %v4929 = vunpack.c.h.bf16 %v1558
        %v4930 = vunpack.c.l.bf16 %v1559
        %v4931 = vunpack.c.h.bf16 %v1559
        %v4932 = vunpack.c.l.bf16 %v1560
        %v4933 = vunpack.c.h.bf16 %v1560
        %v4934 = vunpack.c.l.bf16 %v1561
        %v4935 = vunpack.c.h.bf16 %v1561
        %v4936 = vunpack.c.l.bf16 %v1562
        %v4937 = vunpack.c.h.bf16 %v1562
        %v4938 = vunpack.c.l.bf16 %v1563
        %v4939 = vunpack.c.h.bf16 %v1563
        %v4940 = vunpack.c.l.bf16 %v1564
        %v4941 = vunpack.c.h.bf16 %v1564
        %v4942 = vunpack.c.l.bf16 %v1565
        %v4943 = vunpack.c.h.bf16 %v1565
        %v4944 = vunpack.c.l.bf16 %v1566
        %v4945 = vunpack.c.h.bf16 %v1566
        %v4946 = vunpack.c.l.bf16 %v1567
        %v4947 = vunpack.c.h.bf16 %v1567
        %v4948 = vunpack.c.l.bf16 %v1568
        %v4949 = vunpack.c.h.bf16 %v1568
        %v4950 = vunpack.c.l.bf16 %v1569
        %v4951 = vunpack.c.h.bf16 %v1569
        %v4952 = vunpack.c.l.bf16 %v1570
        %v4953 = vunpack.c.h.bf16 %v1570
        %v4954 = vunpack.c.l.bf16 %v1571
        %v4955 = vunpack.c.h.bf16 %v1571
        %v4956 = vunpack.c.l.bf16 %v1572
        %v4957 = vunpack.c.h.bf16 %v1572
        %v4958 = vunpack.c.l.bf16 %v1573
        %v4959 = vunpack.c.h.bf16 %v1573
        %v4960 = vunpack.c.l.bf16 %v1574
        %v4961 = vunpack.c.h.bf16 %v1574
        %v4962 = vunpack.c.l.bf16 %v1575
        %v4963 = vunpack.c.h.bf16 %v1575
        %v4964 = vunpack.c.l.bf16 %v1576
        %v4965 = vunpack.c.h.bf16 %v1576
        %v4966 = vunpack.c.l.bf16 %v1577
        %v4967 = vunpack.c.h.bf16 %v1577
        %v4968 = vunpack.c.l.bf16 %v1578
        %v4969 = vunpack.c.h.bf16 %v1578
        %v4970 = vunpack.c.l.bf16 %v1579
        %v4971 = vunpack.c.h.bf16 %v1579
        %v4972 = vunpack.c.l.bf16 %v1580
        %v4973 = vunpack.c.h.bf16 %v1580
        %v4974 = vunpack.c.l.bf16 %v1581
        %v4975 = vunpack.c.h.bf16 %v1581
        %v4976 = vunpack.c.l.bf16 %v1582
        %v4977 = vunpack.c.h.bf16 %v1582
        %v4978 = vunpack.c.l.bf16 %v1583
        %v4979 = vunpack.c.h.bf16 %v1583
        %v4980 = vunpack.c.l.bf16 %v1584
        %v4981 = vunpack.c.h.bf16 %v1584
        %v4982 = vunpack.c.l.bf16 %v1585
        %v4983 = vunpack.c.h.bf16 %v1585
        %v4984 = vunpack.c.l.bf16 %v1586
        %v4985 = vunpack.c.h.bf16 %v1586
        %v4986 = vunpack.c.l.bf16 %v1587
        %v4987 = vunpack.c.h.bf16 %v1587
        %v4988 = vunpack.c.l.bf16 %v1588
        %v4989 = vunpack.c.h.bf16 %v1588
        %v4990 = vunpack.c.l.bf16 %v1589
        %v4991 = vunpack.c.h.bf16 %v1589
        %v4992 = vunpack.c.l.bf16 %v1590
        %v4993 = vunpack.c.h.bf16 %v1590
        %v4994 = vunpack.c.l.bf16 %v1591
        %v4995 = vunpack.c.h.bf16 %v1591
        %v4996 = vunpack.c.l.bf16 %v1592
        %v4997 = vunpack.c.h.bf16 %v1592
        %v4998 = vunpack.c.l.bf16 %v1593
        %v4999 = vunpack.c.h.bf16 %v1593
        %v5000 = vunpack.c.l.bf16 %v1594
        %v5001 = vunpack.c.h.bf16 %v1594
        %v5002 = vunpack.c.l.bf16 %v1595
        %v5003 = vunpack.c.h.bf16 %v1595
        %v5004 = vunpack.c.l.bf16 %v1596
        %v5005 = vunpack.c.h.bf16 %v1596
        %v5006 = vunpack.c.l.bf16 %v1597
        %v5007 = vunpack.c.h.bf16 %v1597
        %v5008 = vunpack.c.l.bf16 %v1598
        %v5009 = vunpack.c.h.bf16 %v1598
        %v5010 = vunpack.c.l.bf16 %v1599
        %v5011 = vunpack.c.h.bf16 %v1599
        %v5012 = vunpack.c.l.bf16 %v1600
        %v5013 = vunpack.c.h.bf16 %v1600
        %v5014 = vunpack.c.l.bf16 %v1601
        %v5015 = vunpack.c.h.bf16 %v1601
        %v5016 = vunpack.c.l.bf16 %v1602
        %v5017 = vunpack.c.h.bf16 %v1602
        %v5018 = vunpack.c.l.bf16 %v1603
        %v5019 = vunpack.c.h.bf16 %v1603
        %v5020 = vunpack.c.l.bf16 %v1604
        %v5021 = vunpack.c.h.bf16 %v1604
        %v5022 = vunpack.c.l.bf16 %v1605
        %v5023 = vunpack.c.h.bf16 %v1605
        %v5024 = vunpack.c.l.bf16 %v1606
        %v5025 = vunpack.c.h.bf16 %v1606
        %v5026 = vunpack.c.l.bf16 %v1607
        %v5027 = vunpack.c.h.bf16 %v1607
        %v5028 = vunpack.c.l.bf16 %v1608
        %v5029 = vunpack.c.h.bf16 %v1608
        %v5030 = vunpack.c.l.bf16 %v1609
        %v5031 = vunpack.c.h.bf16 %v1609
        %v5032 = vunpack.c.l.bf16 %v1610
        %v5033 = vunpack.c.h.bf16 %v1610
        %v5034 = vunpack.c.l.bf16 %v1611
        %v5035 = vunpack.c.h.bf16 %v1611
        %v5036 = vunpack.c.l.bf16 %v1612
        %v5037 = vunpack.c.h.bf16 %v1612
        %v5038 = vunpack.c.l.bf16 %v1613
        %v5039 = vunpack.c.h.bf16 %v1613
        %v5040 = vunpack.c.l.bf16 %v1614
        %v5041 = vunpack.c.h.bf16 %v1614
        %v5042 = vunpack.c.l.bf16 %v1615
        %v5043 = vunpack.c.h.bf16 %v1615
        %v5044 = vunpack.c.l.bf16 %v1616
        %v5045 = vunpack.c.h.bf16 %v1616
        %v5046 = vunpack.c.l.bf16 %v1617
        %v5047 = vunpack.c.h.bf16 %v1617
        %v5048 = vunpack.c.l.bf16 %v1618
        %v5049 = vunpack.c.h.bf16 %v1618
        %v5050 = vunpack.c.l.bf16 %v1619
        %v5051 = vunpack.c.h.bf16 %v1619
        %v5052 = vunpack.c.l.bf16 %v1620
        %v5053 = vunpack.c.h.bf16 %v1620
        %v5054 = vunpack.c.l.bf16 %v1621
        %v5055 = vunpack.c.h.bf16 %v1621
        %v5056 = vunpack.c.l.bf16 %v1622
        %v5057 = vunpack.c.h.bf16 %v1622
        %v5058 = vunpack.c.l.bf16 %v1623
        %v5059 = vunpack.c.h.bf16 %v1623
        %v5060 = vunpack.c.l.bf16 %v1624
        %v5061 = vunpack.c.h.bf16 %v1624
        %v5062 = vunpack.c.l.bf16 %v1625
        %v5063 = vunpack.c.h.bf16 %v1625
        %v5064 = vunpack.c.l.bf16 %v1626
        %v5065 = vunpack.c.h.bf16 %v1626
        %v5066 = vunpack.c.l.bf16 %v1627
        %v5067 = vunpack.c.h.bf16 %v1627
        %v5068 = vunpack.c.l.bf16 %v1628
        %v5069 = vunpack.c.h.bf16 %v1628
        %v5070 = vunpack.c.l.bf16 %v1629
        %v5071 = vunpack.c.h.bf16 %v1629
        %v5072 = vunpack.c.l.bf16 %v1630
        %v5073 = vunpack.c.h.bf16 %v1630
        %v5074 = vunpack.c.l.bf16 %v1631
        %v5075 = vunpack.c.h.bf16 %v1631
        %v5076 = vunpack.c.l.bf16 %v1632
        %v5077 = vunpack.c.h.bf16 %v1632
        %v5078 = vunpack.c.l.bf16 %v1633
        %v5079 = vunpack.c.h.bf16 %v1633
        %v5080 = vunpack.c.l.bf16 %v1634
        %v5081 = vunpack.c.h.bf16 %v1634
        %v5082 = vunpack.c.l.bf16 %v1635
        %v5083 = vunpack.c.h.bf16 %v1635
        %v5084 = vunpack.c.l.bf16 %v1636
        %v5085 = vunpack.c.h.bf16 %v1636
        %v5086 = vunpack.c.l.bf16 %v1637
        %v5087 = vunpack.c.h.bf16 %v1637
        %v5088 = vunpack.c.l.bf16 %v1638
        %v5089 = vunpack.c.h.bf16 %v1638
        %v5090 = vunpack.c.l.bf16 %v1639
        %v5091 = vunpack.c.h.bf16 %v1639
        %v5092 = vunpack.c.l.bf16 %v1640
        %v5093 = vunpack.c.h.bf16 %v1640
        %v5094 = vunpack.c.l.bf16 %v1641
        %v5095 = vunpack.c.h.bf16 %v1641
        %v5096 = vunpack.c.l.bf16 %v1642
        %v5097 = vunpack.c.h.bf16 %v1642
        %v5098 = vunpack.c.l.bf16 %v1643
        %v5099 = vunpack.c.h.bf16 %v1643
        %v5100 = vunpack.c.l.bf16 %v1644
        %v5101 = vunpack.c.h.bf16 %v1644
        %v5102 = vunpack.c.l.bf16 %v1645
        %v5103 = vunpack.c.h.bf16 %v1645
        %v5104 = vunpack.c.l.bf16 %v1646
        %v5105 = vunpack.c.h.bf16 %v1646
        %v5106 = vunpack.c.l.bf16 %v1647
        %v5107 = vunpack.c.h.bf16 %v1647
        %v5108 = vunpack.c.l.bf16 %v1648
        %v5109 = vunpack.c.h.bf16 %v1648
        %v5110 = vunpack.c.l.bf16 %v1649
        %v5111 = vunpack.c.h.bf16 %v1649
        %v5112 = vunpack.c.l.bf16 %v1650
        %v5113 = vunpack.c.h.bf16 %v1650
        %v5114 = vunpack.c.l.bf16 %v1651
        %v5115 = vunpack.c.h.bf16 %v1651
        %v5116 = vunpack.c.l.bf16 %v1652
        %v5117 = vunpack.c.h.bf16 %v1652
        %v5118 = vunpack.c.l.bf16 %v1653
        %v5119 = vunpack.c.h.bf16 %v1653
        %v5120 = vunpack.c.l.bf16 %v1654
        %v5121 = vunpack.c.h.bf16 %v1654
        %v5122 = vunpack.c.l.bf16 %v1655
        %v5123 = vunpack.c.h.bf16 %v1655
        %v5124 = vunpack.c.l.bf16 %v1656
        %v5125 = vunpack.c.h.bf16 %v1656
        %v5126 = vunpack.c.l.bf16 %v1657
        %v5127 = vunpack.c.h.bf16 %v1657
        %v5128 = vunpack.c.l.bf16 %v1658
        %v5129 = vunpack.c.h.bf16 %v1658
        %v5130 = vunpack.c.l.bf16 %v1659
        %v5131 = vunpack.c.h.bf16 %v1659
        %v5132 = vunpack.c.l.bf16 %v1660
        %v5133 = vunpack.c.h.bf16 %v1660
        %v5134 = vunpack.c.l.bf16 %v1661
        %v5135 = vunpack.c.h.bf16 %v1661
        %v5136 = vunpack.c.l.bf16 %v1662
        %v5137 = vunpack.c.h.bf16 %v1662
        %v5138 = vunpack.c.l.bf16 %v1663
        %v5139 = vunpack.c.h.bf16 %v1663
        %v5140 = vunpack.c.l.bf16 %v1664
        %v5141 = vunpack.c.h.bf16 %v1664
        %v5142 = vunpack.c.l.bf16 %v1665
        %v5143 = vunpack.c.h.bf16 %v1665
        %v5144 = vunpack.c.l.bf16 %v1666
        %v5145 = vunpack.c.h.bf16 %v1666
        %v5146 = vunpack.c.l.bf16 %v1667
        %v5147 = vunpack.c.h.bf16 %v1667
        %v5148 = vunpack.c.l.bf16 %v1668
        %v5149 = vunpack.c.h.bf16 %v1668
        %v5150 = vunpack.c.l.bf16 %v1669
        %v5151 = vunpack.c.h.bf16 %v1669
        %v5152 = vunpack.c.l.bf16 %v1670
        %v5153 = vunpack.c.h.bf16 %v1670
        %v5154 = vunpack.c.l.bf16 %v1671
        %v5155 = vunpack.c.h.bf16 %v1671
        %v5156 = vunpack.c.l.bf16 %v1672
        %v5157 = vunpack.c.h.bf16 %v1672
        %v5158 = vunpack.c.l.bf16 %v1673
        %v5159 = vunpack.c.h.bf16 %v1673
        %v5160 = vunpack.c.l.bf16 %v1674
        %v5161 = vunpack.c.h.bf16 %v1674
        %v5162 = vunpack.c.l.bf16 %v1675
        %v5163 = vunpack.c.h.bf16 %v1675
        %v5164 = vunpack.c.l.bf16 %v1676
        %v5165 = vunpack.c.h.bf16 %v1676
        %v5166 = vunpack.c.l.bf16 %v1677
        %v5167 = vunpack.c.h.bf16 %v1677
        %v5168 = vunpack.c.l.bf16 %v1678
        %v5169 = vunpack.c.h.bf16 %v1678
        %v5170 = vunpack.c.l.bf16 %v1679
        %v5171 = vunpack.c.h.bf16 %v1679
        %v5172 = vunpack.c.l.bf16 %v1680
        %v5173 = vunpack.c.h.bf16 %v1680
        %v5174 = vunpack.c.l.bf16 %v1681
        %v5175 = vunpack.c.h.bf16 %v1681
        %v5176 = vunpack.c.l.bf16 %v1682
        %v5177 = vunpack.c.h.bf16 %v1682
        %v5178 = vunpack.c.l.bf16 %v1683
        %v5179 = vunpack.c.h.bf16 %v1683
        %v5180 = vunpack.c.l.bf16 %v1684
        %v5181 = vunpack.c.h.bf16 %v1684
        %v5182 = vunpack.c.l.bf16 %v1685
        %v5183 = vunpack.c.h.bf16 %v1685
        %v5184 = vunpack.c.l.bf16 %v1686
        %v5185 = vunpack.c.h.bf16 %v1686
        %v5186 = vunpack.c.l.bf16 %v1687
        %v5187 = vunpack.c.h.bf16 %v1687
        %v5188 = vunpack.c.l.bf16 %v1688
        %v5189 = vunpack.c.h.bf16 %v1688
        %v5190 = vunpack.c.l.bf16 %v1689
        %v5191 = vunpack.c.h.bf16 %v1689
        %v5192 = vunpack.c.l.bf16 %v1690
        %v5193 = vunpack.c.h.bf16 %v1690
        %v5194 = vunpack.c.l.bf16 %v1691
        %v5195 = vunpack.c.h.bf16 %v1691
        %v5196 = vunpack.c.l.bf16 %v1692
        %v5197 = vunpack.c.h.bf16 %v1692
        %v5198 = vunpack.c.l.bf16 %v1693
        %v5199 = vunpack.c.h.bf16 %v1693
        %v5200 = vunpack.c.l.bf16 %v1694
        %v5201 = vunpack.c.h.bf16 %v1694
        %v5202 = vunpack.c.l.bf16 %v1695
        %v5203 = vunpack.c.h.bf16 %v1695
        %v5204 = vunpack.c.l.bf16 %v1696
        %v5205 = vunpack.c.h.bf16 %v1696
        %v5206 = vunpack.c.l.bf16 %v1697
        %v5207 = vunpack.c.h.bf16 %v1697
        %v5208 = vunpack.c.l.bf16 %v1698
        %v5209 = vunpack.c.h.bf16 %v1698
        %v5210 = vunpack.c.l.bf16 %v1699
        %v5211 = vunpack.c.h.bf16 %v1699
        %v5212 = vunpack.c.l.bf16 %v1700
        %v5213 = vunpack.c.h.bf16 %v1700
        %v5214 = vunpack.c.l.bf16 %v1701
        %v5215 = vunpack.c.h.bf16 %v1701
        %v5216 = vunpack.c.l.bf16 %v1702
        %v5217 = vunpack.c.h.bf16 %v1702
        %v5218 = vunpack.c.l.bf16 %v1703
        %v5219 = vunpack.c.h.bf16 %v1703
        %v5220 = vunpack.c.l.bf16 %v1704
        %v5221 = vunpack.c.h.bf16 %v1704
        %v5222 = vunpack.c.l.bf16 %v1705
        %v5223 = vunpack.c.h.bf16 %v1705
        %v5224 = vunpack.c.l.bf16 %v1706
        %v5225 = vunpack.c.h.bf16 %v1706
        %v5226 = vunpack.c.l.bf16 %v1707
        %v5227 = vunpack.c.h.bf16 %v1707
        %v5228 = vunpack.c.l.bf16 %v1708
        %v5229 = vunpack.c.h.bf16 %v1708
        %v5230 = vunpack.c.l.bf16 %v1709
        %v5231 = vunpack.c.h.bf16 %v1709
        %v5232 = vunpack.c.l.bf16 %v1710
        %v5233 = vunpack.c.h.bf16 %v1710
        %v5234 = vunpack.c.l.bf16 %v1711
        %v5235 = vunpack.c.h.bf16 %v1711
        %v5236 = vunpack.c.l.bf16 %v1712
        %v5237 = vunpack.c.h.bf16 %v1712
        %v5238 = vunpack.c.l.bf16 %v1713
        %v5239 = vunpack.c.h.bf16 %v1713
        %v5240 = vunpack.c.l.bf16 %v1714
        %v5241 = vunpack.c.h.bf16 %v1714
        %v5242 = vunpack.c.l.bf16 %v1715
        %v5243 = vunpack.c.h.bf16 %v1715
        %v5244 = vunpack.c.l.bf16 %v1716
        %v5245 = vunpack.c.h.bf16 %v1716
        %v5246 = vunpack.c.l.bf16 %v1717
        %v5247 = vunpack.c.h.bf16 %v1717
        %v5248 = vunpack.c.l.bf16 %v1718
        %v5249 = vunpack.c.h.bf16 %v1718
        %v5250 = vunpack.c.l.bf16 %v1719
        %v5251 = vunpack.c.h.bf16 %v1719
        %v5252 = vunpack.c.l.bf16 %v1720
        %v5253 = vunpack.c.h.bf16 %v1720
        %v5254 = vunpack.c.l.bf16 %v1721
        %v5255 = vunpack.c.h.bf16 %v1721
        %v5256 = vunpack.c.l.bf16 %v1722
        %v5257 = vunpack.c.h.bf16 %v1722
        %v5258 = vunpack.c.l.bf16 %v1723
        %v5259 = vunpack.c.h.bf16 %v1723
        %v5260 = vunpack.c.l.bf16 %v1724
        %v5261 = vunpack.c.h.bf16 %v1724
        %v5262 = vunpack.c.l.bf16 %v1725
        %v5263 = vunpack.c.h.bf16 %v1725
        %v5264 = vunpack.c.l.bf16 %v1726
        %v5265 = vunpack.c.h.bf16 %v1726
        %v5266 = vunpack.c.l.bf16 %v1727
        %v5267 = vunpack.c.h.bf16 %v1727
        %v5268 = vunpack.c.l.bf16 %v1728
        %v5269 = vunpack.c.h.bf16 %v1728
        %v5270 = vunpack.c.l.bf16 %v1729
        %v5271 = vunpack.c.h.bf16 %v1729
        %v5272 = vunpack.c.l.bf16 %v1730
        %v5273 = vunpack.c.h.bf16 %v1730
        %v5274 = vunpack.c.l.bf16 %v1731
        %v5275 = vunpack.c.h.bf16 %v1731
        %v5276 = vunpack.c.l.bf16 %v1732
        %v5277 = vunpack.c.h.bf16 %v1732
        %v5278 = vunpack.c.l.bf16 %v1733
        %v5279 = vunpack.c.h.bf16 %v1733
        %v5280 = vunpack.c.l.bf16 %v1734
        %v5281 = vunpack.c.h.bf16 %v1734
        %v5282 = vunpack.c.l.bf16 %v1735
        %v5283 = vunpack.c.h.bf16 %v1735
        %v5284 = vunpack.c.l.bf16 %v1736
        %v5285 = vunpack.c.h.bf16 %v1736
        %v5286 = vunpack.c.l.bf16 %v1737
        %v5287 = vunpack.c.h.bf16 %v1737
        %v5288 = vunpack.c.l.bf16 %v1738
        %v5289 = vunpack.c.h.bf16 %v1738
        %v5290 = vunpack.c.l.bf16 %v1739
        %v5291 = vunpack.c.h.bf16 %v1739
        %v5292 = vunpack.c.l.bf16 %v1740
        %v5293 = vunpack.c.h.bf16 %v1740
        %v5294 = vunpack.c.l.bf16 %v1741
        %v5295 = vunpack.c.h.bf16 %v1741
        %v5296 = vunpack.c.l.bf16 %v1742
        %v5297 = vunpack.c.h.bf16 %v1742
        %v5298 = vunpack.c.l.bf16 %v1743
        %v5299 = vunpack.c.h.bf16 %v1743
        %v5300 = vunpack.c.l.bf16 %v1744
        %v5301 = vunpack.c.h.bf16 %v1744
        %v5302 = vunpack.c.l.bf16 %v1745
        %v5303 = vunpack.c.h.bf16 %v1745
        %v5304 = vunpack.c.l.bf16 %v1746
        %v5305 = vunpack.c.h.bf16 %v1746
        %v5306 = vunpack.c.l.bf16 %v1747
        %v5307 = vunpack.c.h.bf16 %v1747
        %v5308 = vunpack.c.l.bf16 %v1748
        %v5309 = vunpack.c.h.bf16 %v1748
        %v5310 = vunpack.c.l.bf16 %v1749
        %v5311 = vunpack.c.h.bf16 %v1749
        %v5312 = vunpack.c.l.bf16 %v1750
        %v5313 = vunpack.c.h.bf16 %v1750
        %v5314 = vunpack.c.l.bf16 %v1751
        %v5315 = vunpack.c.h.bf16 %v1751
        %v5316 = vunpack.c.l.bf16 %v1752
        %v5317 = vunpack.c.h.bf16 %v1752
        %v5318 = vunpack.c.l.bf16 %v1753
        %v5319 = vunpack.c.h.bf16 %v1753
        %v5320 = vunpack.c.l.bf16 %v1754
        %v5321 = vunpack.c.h.bf16 %v1754
        %v5322 = vunpack.c.l.bf16 %v1755
        %v5323 = vunpack.c.h.bf16 %v1755
        %v5324 = vunpack.c.l.bf16 %v1756
        %v5325 = vunpack.c.h.bf16 %v1756
        %v5326 = vunpack.c.l.bf16 %v1757
        %v5327 = vunpack.c.h.bf16 %v1757
        %v5328 = vunpack.c.l.bf16 %v1758
        %v5329 = vunpack.c.h.bf16 %v1758
        %v5330 = vunpack.c.l.bf16 %v1759
        %v5331 = vunpack.c.h.bf16 %v1759
        %v5332 = vunpack.c.l.bf16 %v1760
        %v5333 = vunpack.c.h.bf16 %v1760
        %v5334 = vunpack.c.l.bf16 %v1761
        %v5335 = vunpack.c.h.bf16 %v1761
        %v5336 = vunpack.c.l.bf16 %v1762
        %v5337 = vunpack.c.h.bf16 %v1762
        %v5338 = vunpack.c.l.bf16 %v1763
        %v5339 = vunpack.c.h.bf16 %v1763
        %v5340 = vunpack.c.l.bf16 %v1764
        %v5341 = vunpack.c.h.bf16 %v1764
        %v5342 = vunpack.c.l.bf16 %v1765
        %v5343 = vunpack.c.h.bf16 %v1765
        %v5344 = vunpack.c.l.bf16 %v1766
        %v5345 = vunpack.c.h.bf16 %v1766
        %v5346 = vunpack.c.l.bf16 %v1767
        %v5347 = vunpack.c.h.bf16 %v1767
        %v5348 = vunpack.c.l.bf16 %v1768
        %v5349 = vunpack.c.h.bf16 %v1768
        %v5350 = vunpack.c.l.bf16 %v1769
        %v5351 = vunpack.c.h.bf16 %v1769
        %v5352 = vunpack.c.l.bf16 %v1770
        %v5353 = vunpack.c.h.bf16 %v1770
        %v5354 = vunpack.c.l.bf16 %v1771
        %v5355 = vunpack.c.h.bf16 %v1771
        %v5356 = vunpack.c.l.bf16 %v1772
        %v5357 = vunpack.c.h.bf16 %v1772
        %v5358 = vunpack.c.l.bf16 %v1773
        %v5359 = vunpack.c.h.bf16 %v1773
        %v5360 = vunpack.c.l.bf16 %v1774
        %v5361 = vunpack.c.h.bf16 %v1774
        %v5362 = vunpack.c.l.bf16 %v1775
        %v5363 = vunpack.c.h.bf16 %v1775
        %v5364 = vunpack.c.l.bf16 %v1776
        %v5365 = vunpack.c.h.bf16 %v1776
        %v5366 = vunpack.c.l.bf16 %v1777
        %v5367 = vunpack.c.h.bf16 %v1777
        %v5368 = vunpack.c.l.bf16 %v1778
        %v5369 = vunpack.c.h.bf16 %v1778
        %v5370 = vunpack.c.l.bf16 %v1779
        %v5371 = vunpack.c.h.bf16 %v1779
        %v5372 = vunpack.c.l.bf16 %v1780
        %v5373 = vunpack.c.h.bf16 %v1780
        %v5374 = vunpack.c.l.bf16 %v1781
        %v5375 = vunpack.c.h.bf16 %v1781
        %v5376 = vunpack.c.l.bf16 %v1782
        %v5377 = vunpack.c.h.bf16 %v1782
        %v5378 = vunpack.c.l.bf16 %v1783
        %v5379 = vunpack.c.h.bf16 %v1783
        %v5380 = vunpack.c.l.bf16 %v1784
        %v5381 = vunpack.c.h.bf16 %v1784
        %v5382 = vunpack.c.l.bf16 %v1785
        %v5383 = vunpack.c.h.bf16 %v1785
        %v5384 = vunpack.c.l.bf16 %v1786
        %v5385 = vunpack.c.h.bf16 %v1786
        %v5386 = vunpack.c.l.bf16 %v1787
        %v5387 = vunpack.c.h.bf16 %v1787
        %v5388 = vunpack.c.l.bf16 %v1788
        %v5389 = vunpack.c.h.bf16 %v1788
        %v5390 = vunpack.c.l.bf16 %v1789
        %v5391 = vunpack.c.h.bf16 %v1789
        %v5392 = vunpack.c.l.bf16 %v1790
        %v5393 = vunpack.c.h.bf16 %v1790
        %v5394 = vunpack.c.l.bf16 %v1791
        %v5395 = vunpack.c.h.bf16 %v1791
        %v5396 = vunpack.c.l.bf16 %v1792
        %v5397 = vunpack.c.h.bf16 %v1792
        %v5398 = vunpack.c.l.bf16 %v1793
        %v5399 = vunpack.c.h.bf16 %v1793
        %v5400 = vunpack.c.l.bf16 %v1794
        %v5401 = vunpack.c.h.bf16 %v1794
        %v5402 = vunpack.c.l.bf16 %v1795
        %v5403 = vunpack.c.h.bf16 %v1795
        %v5404 = vunpack.c.l.bf16 %v1796
        %v5405 = vunpack.c.h.bf16 %v1796
        %v5406 = vunpack.c.l.bf16 %v1797
        %v5407 = vunpack.c.h.bf16 %v1797
        %v5408 = vunpack.c.l.bf16 %v1798
        %v5409 = vunpack.c.h.bf16 %v1798
        %v5410 = vunpack.c.l.bf16 %v1799
        %v5411 = vunpack.c.h.bf16 %v1799
        %v5412 = vunpack.c.l.bf16 %v1800
        %v5413 = vunpack.c.h.bf16 %v1800
        %v5414 = vunpack.c.l.bf16 %v1801
        %v5415 = vunpack.c.h.bf16 %v1801
        %v5416 = vunpack.c.l.bf16 %v1802
        %v5417 = vunpack.c.h.bf16 %v1802
        %v5418 = vunpack.c.l.bf16 %v1803
        %v5419 = vunpack.c.h.bf16 %v1803
        %v5420 = vunpack.c.l.bf16 %v1804
        %v5421 = vunpack.c.h.bf16 %v1804
        %v5422 = vunpack.c.l.bf16 %v1805
        %v5423 = vunpack.c.h.bf16 %v1805
        %v5424 = vunpack.c.l.bf16 %v1806
        %v5425 = vunpack.c.h.bf16 %v1806
        %v5426 = vunpack.c.l.bf16 %v1807
        %v5427 = vunpack.c.h.bf16 %v1807
        %v5428 = vunpack.c.l.bf16 %v1808
        %v5429 = vunpack.c.h.bf16 %v1808
        %v5430 = vunpack.c.l.bf16 %v1809
        %v5431 = vunpack.c.h.bf16 %v1809
        %v5432 = vunpack.c.l.bf16 %v1810
        %v5433 = vunpack.c.h.bf16 %v1810
        %v5434 = vunpack.c.l.bf16 %v1811
        %v5435 = vunpack.c.h.bf16 %v1811
        %v5436 = vunpack.c.l.bf16 %v1812
        %v5437 = vunpack.c.h.bf16 %v1812
        %v5438 = vunpack.c.l.bf16 %v1813
        %v5439 = vunpack.c.h.bf16 %v1813
        %v5440 = vunpack.c.l.bf16 %v1814
        %v5441 = vunpack.c.h.bf16 %v1814
        %v5442 = vunpack.c.l.bf16 %v1815
        %v5443 = vunpack.c.h.bf16 %v1815
        %v5444 = vunpack.c.l.bf16 %v1816
        %v5445 = vunpack.c.h.bf16 %v1816
        %v5446 = vunpack.c.l.bf16 %v1817
        %v5447 = vunpack.c.h.bf16 %v1817
        %v5448 = vunpack.c.l.bf16 %v1818
        %v5449 = vunpack.c.h.bf16 %v1818
        %v5450 = vunpack.c.l.bf16 %v1819
        %v5451 = vunpack.c.h.bf16 %v1819
        %v5452 = vunpack.c.l.bf16 %v1820
        %v5453 = vunpack.c.h.bf16 %v1820
        %v5454 = vunpack.c.l.bf16 %v1821
        %v5455 = vunpack.c.h.bf16 %v1821
        %v5456 = vunpack.c.l.bf16 %v1822
        %v5457 = vunpack.c.h.bf16 %v1822
        %v5458 = vunpack.c.l.bf16 %v1823
        %v5459 = vunpack.c.h.bf16 %v1823
        %v5460 = vunpack.c.l.bf16 %v1824
        %v5461 = vunpack.c.h.bf16 %v1824
        %v5462 = vunpack.c.l.bf16 %v1825
        %v5463 = vunpack.c.h.bf16 %v1825
        %v5464 = vunpack.c.l.bf16 %v1826
        %v5465 = vunpack.c.h.bf16 %v1826
        %v5466 = vunpack.c.l.bf16 %v1827
        %v5467 = vunpack.c.h.bf16 %v1827
        %v5468 = vunpack.c.l.bf16 %v1828
        %v5469 = vunpack.c.h.bf16 %v1828
        %v5470 = vunpack.c.l.bf16 %v1829
        %v5471 = vunpack.c.h.bf16 %v1829
        %v5472 = vunpack.c.l.bf16 %v1830
        %v5473 = vunpack.c.h.bf16 %v1830
        %v5474 = vunpack.c.l.bf16 %v1831
        %v5475 = vunpack.c.h.bf16 %v1831
        %v5476 = vunpack.c.l.bf16 %v1832
        %v5477 = vunpack.c.h.bf16 %v1832
        %v5478 = vunpack.c.l.bf16 %v1833
        %v5479 = vunpack.c.h.bf16 %v1833
        %v5480 = vunpack.c.l.bf16 %v1834
        %v5481 = vunpack.c.h.bf16 %v1834
        %v5482 = vunpack.c.l.bf16 %v1835
        %v5483 = vunpack.c.h.bf16 %v1835
        %v5484 = vunpack.c.l.bf16 %v1836
        %v5485 = vunpack.c.h.bf16 %v1836
        %v5486 = vunpack.c.l.bf16 %v1837
        %v5487 = vunpack.c.h.bf16 %v1837
        %v5488 = vunpack.c.l.bf16 %v1838
        %v5489 = vunpack.c.h.bf16 %v1838
        %v5490 = vunpack.c.l.bf16 %v1839
        %v5491 = vunpack.c.h.bf16 %v1839
        %v5492 = vunpack.c.l.bf16 %v1840
        %v5493 = vunpack.c.h.bf16 %v1840
        %v5494 = vunpack.c.l.bf16 %v1841
        %v5495 = vunpack.c.h.bf16 %v1841
        %v5496 = vunpack.c.l.bf16 %v1842
        %v5497 = vunpack.c.h.bf16 %v1842
        %v5498 = vunpack.c.l.bf16 %v1843
        %v5499 = vunpack.c.h.bf16 %v1843
        %v5500 = vunpack.c.l.bf16 %v1844
        %v5501 = vunpack.c.h.bf16 %v1844
        %v5502 = vunpack.c.l.bf16 %v1845
        %v5503 = vunpack.c.h.bf16 %v1845
        %v5504 = vunpack.c.l.bf16 %v1846
        %v5505 = vunpack.c.h.bf16 %v1846
        %v5506 = vunpack.c.l.bf16 %v1847
        %v5507 = vunpack.c.h.bf16 %v1847
        %v5508 = vunpack.c.l.bf16 %v1848
        %v5509 = vunpack.c.h.bf16 %v1848
        %v5510 = vunpack.c.l.bf16 %v1849
        %v5511 = vunpack.c.h.bf16 %v1849
        %v5512 = vunpack.c.l.bf16 %v1850
        %v5513 = vunpack.c.h.bf16 %v1850
        %v5514 = vunpack.c.l.bf16 %v1851
        %v5515 = vunpack.c.h.bf16 %v1851
        %v5516 = vunpack.c.l.bf16 %v1852
        %v5517 = vunpack.c.h.bf16 %v1852
        %v5518 = vunpack.c.l.bf16 %v1853
        %v5519 = vunpack.c.h.bf16 %v1853
        %v5520 = vunpack.c.l.bf16 %v1854
        %v5521 = vunpack.c.h.bf16 %v1854
        %v5522 = vunpack.c.l.bf16 %v1855
        %v5523 = vunpack.c.h.bf16 %v1855
        %v5524 = vunpack.c.l.bf16 %v1856
        %v5525 = vunpack.c.h.bf16 %v1856
        %v5526 = vunpack.c.l.bf16 %v1857
        %v5527 = vunpack.c.h.bf16 %v1857
        %v5528 = vunpack.c.l.bf16 %v1858
        %v5529 = vunpack.c.h.bf16 %v1858
        %v5530 = vunpack.c.l.bf16 %v1859
        %v5531 = vunpack.c.h.bf16 %v1859
        %v5532 = vunpack.c.l.bf16 %v1860
        %v5533 = vunpack.c.h.bf16 %v1860
        %v5534 = vunpack.c.l.bf16 %v1861
        %v5535 = vunpack.c.h.bf16 %v1861
        %v5536 = vunpack.c.l.bf16 %v1862
        %v5537 = vunpack.c.h.bf16 %v1862
        %v5538 = vunpack.c.l.bf16 %v1863
        %v5539 = vunpack.c.h.bf16 %v1863
        %v5540 = vunpack.c.l.bf16 %v1864
        %v5541 = vunpack.c.h.bf16 %v1864
        %v5542 = vunpack.c.l.bf16 %v1865
        %v5543 = vunpack.c.h.bf16 %v1865
        %v5544 = vunpack.c.l.bf16 %v1866
        %v5545 = vunpack.c.h.bf16 %v1866
        %v5546 = vunpack.c.l.bf16 %v1867
        %v5547 = vunpack.c.h.bf16 %v1867
        %v5548 = vunpack.c.l.bf16 %v1868
        %v5549 = vunpack.c.h.bf16 %v1868
        %v5550 = vunpack.c.l.bf16 %v1869
        %v5551 = vunpack.c.h.bf16 %v1869
        %v5552 = vunpack.c.l.bf16 %v1870
        %v5553 = vunpack.c.h.bf16 %v1870
        %v5554 = vunpack.c.l.bf16 %v1871
        %v5555 = vunpack.c.h.bf16 %v1871
        %v5556 = vunpack.c.l.bf16 %v1872
        %v5557 = vunpack.c.h.bf16 %v1872
        %v5558 = vunpack.c.l.bf16 %v1873
        %v5559 = vunpack.c.h.bf16 %v1873
        %v5560 = vunpack.c.l.bf16 %v1874
        %v5561 = vunpack.c.h.bf16 %v1874
        %v5562 = vunpack.c.l.bf16 %v1875
        %v5563 = vunpack.c.h.bf16 %v1875
        %v5564 = vunpack.c.l.bf16 %v1876
        %v5565 = vunpack.c.h.bf16 %v1876
        %v5566 = vunpack.c.l.bf16 %v1877
        %v5567 = vunpack.c.h.bf16 %v1877
        %v5568 = vunpack.c.l.bf16 %v1878
        %v5569 = vunpack.c.h.bf16 %v1878
        %v5570 = vunpack.c.l.bf16 %v1879
        %v5571 = vunpack.c.h.bf16 %v1879
        %v5572 = vunpack.c.l.bf16 %v1880
        %v5573 = vunpack.c.h.bf16 %v1880
        %v5574 = vunpack.c.l.bf16 %v1881
        %v5575 = vunpack.c.h.bf16 %v1881
        %v5576 = vunpack.c.l.bf16 %v1882
        %v5577 = vunpack.c.h.bf16 %v1882
        %v5578 = vunpack.c.l.bf16 %v1883
        %v5579 = vunpack.c.h.bf16 %v1883
        %v5580 = vunpack.c.l.bf16 %v1884
        %v5581 = vunpack.c.h.bf16 %v1884
        %v5582 = vunpack.c.l.bf16 %v1885
        %v5583 = vunpack.c.h.bf16 %v1885
        %v5584 = vunpack.c.l.bf16 %v1886
        %v5585 = vunpack.c.h.bf16 %v1886
        %v5586 = vunpack.c.l.bf16 %v1887
        %v5587 = vunpack.c.h.bf16 %v1887
        %v5588 = vunpack.c.l.bf16 %v1888
        %v5589 = vunpack.c.h.bf16 %v1888
        %v5590 = vunpack.c.l.bf16 %v1889
        %v5591 = vunpack.c.h.bf16 %v1889
        %v5592 = vunpack.c.l.bf16 %v1890
        %v5593 = vunpack.c.h.bf16 %v1890
        %v5594 = vunpack.c.l.bf16 %v1891
        %v5595 = vunpack.c.h.bf16 %v1891
        %v5596 = vunpack.c.l.bf16 %v1892
        %v5597 = vunpack.c.h.bf16 %v1892
        %v5598 = vunpack.c.l.bf16 %v1893
        %v5599 = vunpack.c.h.bf16 %v1893
        %v5600 = vunpack.c.l.bf16 %v1894
        %v5601 = vunpack.c.h.bf16 %v1894
        %v5602 = vunpack.c.l.bf16 %v1895
        %v5603 = vunpack.c.h.bf16 %v1895
        %v5604 = vunpack.c.l.bf16 %v1896
        %v5605 = vunpack.c.h.bf16 %v1896
        %v5606 = vunpack.c.l.bf16 %v1897
        %v5607 = vunpack.c.h.bf16 %v1897
        %v5608 = vunpack.c.l.bf16 %v1898
        %v5609 = vunpack.c.h.bf16 %v1898
        %v5610 = vunpack.c.l.bf16 %v1899
        %v5611 = vunpack.c.h.bf16 %v1899
        %v5612 = vunpack.c.l.bf16 %v1900
        %v5613 = vunpack.c.h.bf16 %v1900
        %v5614 = vunpack.c.l.bf16 %v1901
        %v5615 = vunpack.c.h.bf16 %v1901
        %v5616 = vunpack.c.l.bf16 %v1902
        %v5617 = vunpack.c.h.bf16 %v1902
        %v5618 = vunpack.c.l.bf16 %v1903
        %v5619 = vunpack.c.h.bf16 %v1903
        %v5620 = vunpack.c.l.bf16 %v1904
        %v5621 = vunpack.c.h.bf16 %v1904
        %v5622 = vunpack.c.l.bf16 %v1905
        %v5623 = vunpack.c.h.bf16 %v1905
        %v5624 = vunpack.c.l.bf16 %v1906
        %v5625 = vunpack.c.h.bf16 %v1906
        %v5626 = vunpack.c.l.bf16 %v1907
        %v5627 = vunpack.c.h.bf16 %v1907
        %v5628 = vunpack.c.l.bf16 %v1908
        %v5629 = vunpack.c.h.bf16 %v1908
        %v5630 = vunpack.c.l.bf16 %v1909
        %v5631 = vunpack.c.h.bf16 %v1909
        %v5632 = vunpack.c.l.bf16 %v1910
        %v5633 = vunpack.c.h.bf16 %v1910
        %v5634 = vunpack.c.l.bf16 %v1911
        %v5635 = vunpack.c.h.bf16 %v1911
        %v5636 = vunpack.c.l.bf16 %v1912
        %v5637 = vunpack.c.h.bf16 %v1912
        %v5638 = vunpack.c.l.bf16 %v1913
        %v5639 = vunpack.c.h.bf16 %v1913
        %v5640 = vunpack.c.l.bf16 %v1914
        %v5641 = vunpack.c.h.bf16 %v1914
        %v5642 = vunpack.c.l.bf16 %v1915
        %v5643 = vunpack.c.h.bf16 %v1915
        %v5644 = vunpack.c.l.bf16 %v1916
        %v5645 = vunpack.c.h.bf16 %v1916
        %v5646 = vunpack.c.l.bf16 %v1917
        %v5647 = vunpack.c.h.bf16 %v1917
        %v5648 = vunpack.c.l.bf16 %v1918
        %v5649 = vunpack.c.h.bf16 %v1918
        %v5650 = vunpack.c.l.bf16 %v1919
        %v5651 = vunpack.c.h.bf16 %v1919
        %v5652 = vunpack.c.l.bf16 %v1920
        %v5653 = vunpack.c.h.bf16 %v1920
        %v5654 = vunpack.c.l.bf16 %v1921
        %v5655 = vunpack.c.h.bf16 %v1921
        %v5656 = vunpack.c.l.bf16 %v1922
        %v5657 = vunpack.c.h.bf16 %v1922
        %v5658 = vunpack.c.l.bf16 %v1923
        %v5659 = vunpack.c.h.bf16 %v1923
        %v5660 = vunpack.c.l.bf16 %v1924
        %v5661 = vunpack.c.h.bf16 %v1924
        %v5662 = vunpack.c.l.bf16 %v1925
        %v5663 = vunpack.c.h.bf16 %v1925
        %v5664 = vunpack.c.l.bf16 %v1926
        %v5665 = vunpack.c.h.bf16 %v1926
        %v5666 = vunpack.c.l.bf16 %v1927
        %v5667 = vunpack.c.h.bf16 %v1927
        %v5668 = vunpack.c.l.bf16 %v1928
        %v5669 = vunpack.c.h.bf16 %v1928
        %v5670 = vunpack.c.l.bf16 %v1929
        %v5671 = vunpack.c.h.bf16 %v1929
        %v5672 = vunpack.c.l.bf16 %v1930
        %v5673 = vunpack.c.h.bf16 %v1930
        %v5674 = vunpack.c.l.bf16 %v1931
        %v5675 = vunpack.c.h.bf16 %v1931
        %v5676 = vunpack.c.l.bf16 %v1932
        %v5677 = vunpack.c.h.bf16 %v1932
        %v5678 = vunpack.c.l.bf16 %v1933
        %v5679 = vunpack.c.h.bf16 %v1933
        %v5680 = vunpack.c.l.bf16 %v1934
        %v5681 = vunpack.c.h.bf16 %v1934
        %v5682 = vunpack.c.l.bf16 %v1935
        %v5683 = vunpack.c.h.bf16 %v1935
        %v5684 = vunpack.c.l.bf16 %v1936
        %v5685 = vunpack.c.h.bf16 %v1936
        %v5686 = vunpack.c.l.bf16 %v1937
        %v5687 = vunpack.c.h.bf16 %v1937
        %v5688 = vunpack.c.l.bf16 %v1938
        %v5689 = vunpack.c.h.bf16 %v1938
        %v5690 = vunpack.c.l.bf16 %v1939
        %v5691 = vunpack.c.h.bf16 %v1939
        %v5692 = vunpack.c.l.bf16 %v1940
        %v5693 = vunpack.c.h.bf16 %v1940
        %v5694 = vunpack.c.l.bf16 %v1941
        %v5695 = vunpack.c.h.bf16 %v1941
        %v5696 = vunpack.c.l.bf16 %v1942
        %v5697 = vunpack.c.h.bf16 %v1942
        %v5698 = vunpack.c.l.bf16 %v1943
        %v5699 = vunpack.c.h.bf16 %v1943
        %v5700 = vunpack.c.l.bf16 %v1944
        %v5701 = vunpack.c.h.bf16 %v1944
        %v5702 = vunpack.c.l.bf16 %v1945
        %v5703 = vunpack.c.h.bf16 %v1945
        %v5704 = vunpack.c.l.bf16 %v1946
        %v5705 = vunpack.c.h.bf16 %v1946
        %v5706 = vunpack.c.l.bf16 %v1947
        %v5707 = vunpack.c.h.bf16 %v1947
        %v5708 = vunpack.c.l.bf16 %v1948
        %v5709 = vunpack.c.h.bf16 %v1948
        %v5710 = vunpack.c.l.bf16 %v1949
        %v5711 = vunpack.c.h.bf16 %v1949
        %v5712 = vunpack.c.l.bf16 %v1950
        %v5713 = vunpack.c.h.bf16 %v1950
        %v5714 = vunpack.c.l.bf16 %v1951
        %v5715 = vunpack.c.h.bf16 %v1951
        %v5716 = vunpack.c.l.bf16 %v1952
        %v5717 = vunpack.c.h.bf16 %v1952
        %v5718 = vunpack.c.l.bf16 %v1953
        %v5719 = vunpack.c.h.bf16 %v1953
        %v5720 = vunpack.c.l.bf16 %v1954
        %v5721 = vunpack.c.h.bf16 %v1954
        %v5722 = vunpack.c.l.bf16 %v1955
        %v5723 = vunpack.c.h.bf16 %v1955
        %v5724 = vunpack.c.l.bf16 %v1956
        %v5725 = vunpack.c.h.bf16 %v1956
        %v5726 = vunpack.c.l.bf16 %v1957
        %v5727 = vunpack.c.h.bf16 %v1957
        %v5728 = vunpack.c.l.bf16 %v1958
        %v5729 = vunpack.c.h.bf16 %v1958
        %v5730 = vunpack.c.l.bf16 %v1959
        %v5731 = vunpack.c.h.bf16 %v1959
        %v5732 = vunpack.c.l.bf16 %v1960
        %v5733 = vunpack.c.h.bf16 %v1960
        %v5734 = vunpack.c.l.bf16 %v1961
        %v5735 = vunpack.c.h.bf16 %v1961
        %v5736 = vunpack.c.l.bf16 %v1962
        %v5737 = vunpack.c.h.bf16 %v1962
        %v5738 = vunpack.c.l.bf16 %v1963
        %v5739 = vunpack.c.h.bf16 %v1963
        %v5740 = vunpack.c.l.bf16 %v1964
        %v5741 = vunpack.c.h.bf16 %v1964
        %v5742 = vunpack.c.l.bf16 %v1965
        %v5743 = vunpack.c.h.bf16 %v1965
        %v5744 = vunpack.c.l.bf16 %v1966
        %v5745 = vunpack.c.h.bf16 %v1966
        %v5746 = vunpack.c.l.bf16 %v1967
        %v5747 = vunpack.c.h.bf16 %v1967
        %v5748 = vunpack.c.l.bf16 %v1968
        %v5749 = vunpack.c.h.bf16 %v1968
        %v5750 = vunpack.c.l.bf16 %v1969
        %v5751 = vunpack.c.h.bf16 %v1969
        %v5752 = vunpack.c.l.bf16 %v1970
        %v5753 = vunpack.c.h.bf16 %v1970
        %v5754 = vunpack.c.l.bf16 %v1971
        %v5755 = vunpack.c.h.bf16 %v1971
        %v5756 = vunpack.c.l.bf16 %v1972
        %v5757 = vunpack.c.h.bf16 %v1972
        %v5758 = vunpack.c.l.bf16 %v1973
        %v5759 = vunpack.c.h.bf16 %v1973
        %v5760 = vunpack.c.l.bf16 %v1974
        %v5761 = vunpack.c.h.bf16 %v1974
        %v5762 = vunpack.c.l.bf16 %v1975
        %v5763 = vunpack.c.h.bf16 %v1975
        %v5764 = vunpack.c.l.bf16 %v1976
        %v5765 = vunpack.c.h.bf16 %v1976
        %v5766 = vunpack.c.l.bf16 %v1977
        %v5767 = vunpack.c.h.bf16 %v1977
        %v5768 = vunpack.c.l.bf16 %v1978
        %v5769 = vunpack.c.h.bf16 %v1978
        %v5770 = vunpack.c.l.bf16 %v1979
        %v5771 = vunpack.c.h.bf16 %v1979
        %v5772 = vunpack.c.l.bf16 %v1980
        %v5773 = vunpack.c.h.bf16 %v1980
        %v5774 = vunpack.c.l.bf16 %v1981
        %v5775 = vunpack.c.h.bf16 %v1981
        %v5776 = vunpack.c.l.bf16 %v1982
        %v5777 = vunpack.c.h.bf16 %v1982
        %v5778 = vunpack.c.l.bf16 %v1983
        %v5779 = vunpack.c.h.bf16 %v1983
        %v5780 = vunpack.c.l.bf16 %v1984
        %v5781 = vunpack.c.h.bf16 %v1984
        %v5782 = vunpack.c.l.bf16 %v1985
        %v5783 = vunpack.c.h.bf16 %v1985
        %v5784 = vunpack.c.l.bf16 %v1986
        %v5785 = vunpack.c.h.bf16 %v1986
        %v5786 = vunpack.c.l.bf16 %v1987
        %v5787 = vunpack.c.h.bf16 %v1987
        %v5788 = vunpack.c.l.bf16 %v1988
        %v5789 = vunpack.c.h.bf16 %v1988
        %v5790 = vunpack.c.l.bf16 %v1989
        %v5791 = vunpack.c.h.bf16 %v1989
        %v5792 = vunpack.c.l.bf16 %v1990
        %v5793 = vunpack.c.h.bf16 %v1990
        %v5794 = vunpack.c.l.bf16 %v1991
        %v5795 = vunpack.c.h.bf16 %v1991
        %v5796 = vunpack.c.l.bf16 %v1992
        %v5797 = vunpack.c.h.bf16 %v1992
        %v5798 = vunpack.c.l.bf16 %v1993
        %v5799 = vunpack.c.h.bf16 %v1993
        %v5800 = vunpack.c.l.bf16 %v1994
        %v5801 = vunpack.c.h.bf16 %v1994
        %v5802 = vunpack.c.l.bf16 %v1995
        %v5803 = vunpack.c.h.bf16 %v1995
        %v5804 = vunpack.c.l.bf16 %v1996
        %v5805 = vunpack.c.h.bf16 %v1996
        %v5806 = vunpack.c.l.bf16 %v1997
        %v5807 = vunpack.c.h.bf16 %v1997
        %v5808 = vunpack.c.l.bf16 %v1998
        %v5809 = vunpack.c.h.bf16 %v1998
        %v5810 = vunpack.c.l.bf16 %v1999
        %v5811 = vunpack.c.h.bf16 %v1999
        %v5812 = vunpack.c.l.bf16 %v2000
        %v5813 = vunpack.c.h.bf16 %v2000
        %v5814 = vunpack.c.l.bf16 %v2001
        %v5815 = vunpack.c.h.bf16 %v2001
        %v5816 = vunpack.c.l.bf16 %v2002
        %v5817 = vunpack.c.h.bf16 %v2002
        %v5818 = vunpack.c.l.bf16 %v2003
        %v5819 = vunpack.c.h.bf16 %v2003
        %v5820 = vunpack.c.l.bf16 %v2004
        %v5821 = vunpack.c.h.bf16 %v2004
        %v5822 = vunpack.c.l.bf16 %v2005
        %v5823 = vunpack.c.h.bf16 %v2005
        %v5824 = vunpack.c.l.bf16 %v2006
        %v5825 = vunpack.c.h.bf16 %v2006
        %v5826 = vunpack.c.l.bf16 %v2007
        %v5827 = vunpack.c.h.bf16 %v2007
        %v5828 = vunpack.c.l.bf16 %v2008
        %v5829 = vunpack.c.h.bf16 %v2008
        %v5830 = vunpack.c.l.bf16 %v2009
        %v5831 = vunpack.c.h.bf16 %v2009
        %v5832 = vunpack.c.l.bf16 %v2010
        %v5833 = vunpack.c.h.bf16 %v2010
        %v5834 = vunpack.c.l.bf16 %v2011
        %v5835 = vunpack.c.h.bf16 %v2011
        %v5836 = vunpack.c.l.bf16 %v2012
        %v5837 = vunpack.c.h.bf16 %v2012
        %v5838 = vunpack.c.l.bf16 %v2013
        %v5839 = vunpack.c.h.bf16 %v2013
        %v5840 = vunpack.c.l.bf16 %v2014
        %v5841 = vunpack.c.h.bf16 %v2014
        %v5842 = vunpack.c.l.bf16 %v2015
        %v5843 = vunpack.c.h.bf16 %v2015
        %v5844 = vunpack.c.l.bf16 %v2016
        %v5845 = vunpack.c.h.bf16 %v2016
        %v5846 = vunpack.c.l.bf16 %v2017
        %v5847 = vunpack.c.h.bf16 %v2017
        %v5848 = vunpack.c.l.bf16 %v2018
        %v5849 = vunpack.c.h.bf16 %v2018
        %v5850 = vunpack.c.l.bf16 %v2019
        %v5851 = vunpack.c.h.bf16 %v2019
        %v5852 = vunpack.c.l.bf16 %v2020
        %v5853 = vunpack.c.h.bf16 %v2020
        %v5854 = vunpack.c.l.bf16 %v2021
        %v5855 = vunpack.c.h.bf16 %v2021
        %v5856 = vunpack.c.l.bf16 %v2022
        %v5857 = vunpack.c.h.bf16 %v2022
        %v5858 = vunpack.c.l.bf16 %v2023
        %v5859 = vunpack.c.h.bf16 %v2023
        %v5860 = vunpack.c.l.bf16 %v2024
        %v5861 = vunpack.c.h.bf16 %v2024
        %v5862 = vunpack.c.l.bf16 %v2025
        %v5863 = vunpack.c.h.bf16 %v2025
        %v5864 = vunpack.c.l.bf16 %v2026
        %v5865 = vunpack.c.h.bf16 %v2026
        %v5866 = vunpack.c.l.bf16 %v2027
        %v5867 = vunpack.c.h.bf16 %v2027
        %v5868 = vunpack.c.l.bf16 %v2028
        %v5869 = vunpack.c.h.bf16 %v2028
        %v5870 = vunpack.c.l.bf16 %v2029
        %v5871 = vunpack.c.h.bf16 %v2029
        %v5872 = vunpack.c.l.bf16 %v2030
        %v5873 = vunpack.c.h.bf16 %v2030
        %v5874 = vunpack.c.l.bf16 %v2031
        %v5875 = vunpack.c.h.bf16 %v2031
        %v5876 = vunpack.c.l.bf16 %v2032
        %v5877 = vunpack.c.h.bf16 %v2032
        %v5878 = vunpack.c.l.bf16 %v2033
        %v5879 = vunpack.c.h.bf16 %v2033
        %v5880 = vunpack.c.l.bf16 %v2034
        %v5881 = vunpack.c.h.bf16 %v2034
        %v5882 = vunpack.c.l.bf16 %v2035
        %v5883 = vunpack.c.h.bf16 %v2035
        %v5884 = vunpack.c.l.bf16 %v2036
        %v5885 = vunpack.c.h.bf16 %v2036
        %v5886 = vunpack.c.l.bf16 %v2037
        %v5887 = vunpack.c.h.bf16 %v2037
        %v5888 = vunpack.c.l.bf16 %v2038
        %v5889 = vunpack.c.h.bf16 %v2038
        %v5890 = vunpack.c.l.bf16 %v2039
        %v5891 = vunpack.c.h.bf16 %v2039
        %v5892 = vunpack.c.l.bf16 %v2040
        %v5893 = vunpack.c.h.bf16 %v2040
        %v5894 = vunpack.c.l.bf16 %v2041
        %v5895 = vunpack.c.h.bf16 %v2041
        %v5896 = vunpack.c.l.bf16 %v2042
        %v5897 = vunpack.c.h.bf16 %v2042
        %v5898 = vunpack.c.l.bf16 %v2043
        %v5899 = vunpack.c.h.bf16 %v2043
        %v5900 = vunpack.c.l.bf16 %v2044
        %v5901 = vunpack.c.h.bf16 %v2044
        %v5902 = vunpack.c.l.bf16 %v2045
        %v5903 = vunpack.c.h.bf16 %v2045
        %v5904 = vunpack.c.l.bf16 %v2046
        %v5905 = vunpack.c.h.bf16 %v2046
        %v5906 = vunpack.c.l.bf16 %v2047
        %v5907 = vunpack.c.h.bf16 %v2047
        %v5908 = vunpack.c.l.bf16 %v2048
        %v5909 = vunpack.c.h.bf16 %v2048
        %v5910 = vunpack.c.l.bf16 %v2049
        %v5911 = vunpack.c.h.bf16 %v2049
        %v5912 = vunpack.c.l.bf16 %v2050
        %v5913 = vunpack.c.h.bf16 %v2050
        %v5914 = vunpack.c.l.bf16 %v2051
        %v5915 = vunpack.c.h.bf16 %v2051
        %v5916 = vunpack.c.l.bf16 %v2052
        %v5917 = vunpack.c.h.bf16 %v2052
        %v5918 = vunpack.c.l.bf16 %v2053
        %v5919 = vunpack.c.h.bf16 %v2053
        %v5920 = vunpack.c.l.bf16 %v2054
        %v5921 = vunpack.c.h.bf16 %v2054
        %v5922 = vunpack.c.l.bf16 %v2055
        %v5923 = vunpack.c.h.bf16 %v2055
        %v5924 = vunpack.c.l.bf16 %v2056
        %v5925 = vunpack.c.h.bf16 %v2056
        %v5926 = vunpack.c.l.bf16 %v2057
        %v5927 = vunpack.c.h.bf16 %v2057
        %v5928 = vunpack.c.l.bf16 %v2058
        %v5929 = vunpack.c.h.bf16 %v2058
        %v5930 = vunpack.c.l.bf16 %v2059
        %v5931 = vunpack.c.h.bf16 %v2059
        %v5932 = vunpack.c.l.bf16 %v2060
        %v5933 = vunpack.c.h.bf16 %v2060
        %v5934 = vunpack.c.l.bf16 %v2061
        %v5935 = vunpack.c.h.bf16 %v2061
        %v5936 = vunpack.c.l.bf16 %v2062
        %v5937 = vunpack.c.h.bf16 %v2062
        %v5938 = vunpack.c.l.bf16 %v2063
        %v5939 = vunpack.c.h.bf16 %v2063
        %v5940 = vunpack.c.l.bf16 %v2064
        %v5941 = vunpack.c.h.bf16 %v2064
        %v5942 = vunpack.c.l.bf16 %v2065
        %v5943 = vunpack.c.h.bf16 %v2065
        %v5944 = vunpack.c.l.bf16 %v2066
        %v5945 = vunpack.c.h.bf16 %v2066
        %v5946 = vunpack.c.l.bf16 %v2067
        %v5947 = vunpack.c.h.bf16 %v2067
        %v5948 = vunpack.c.l.bf16 %v2068
        %v5949 = vunpack.c.h.bf16 %v2068
        %v5950 = vunpack.c.l.bf16 %v2069
        %v5951 = vunpack.c.h.bf16 %v2069
        %v5952 = vunpack.c.l.bf16 %v2070
        %v5953 = vunpack.c.h.bf16 %v2070
        %v5954 = vunpack.c.l.bf16 %v2071
        %v5955 = vunpack.c.h.bf16 %v2071
        %v5956 = vunpack.c.l.bf16 %v2072
        %v5957 = vunpack.c.h.bf16 %v2072
        %v5958 = vunpack.c.l.bf16 %v2073
        %v5959 = vunpack.c.h.bf16 %v2073
        %v5960 = vunpack.c.l.bf16 %v2074
        %v5961 = vunpack.c.h.bf16 %v2074
        %v5962 = vunpack.c.l.bf16 %v2075
        %v5963 = vunpack.c.h.bf16 %v2075
        %v5964 = vunpack.c.l.bf16 %v2076
        %v5965 = vunpack.c.h.bf16 %v2076
        %v5966 = vunpack.c.l.bf16 %v2077
        %v5967 = vunpack.c.h.bf16 %v2077
        %v5968 = vunpack.c.l.bf16 %v2078
        %v5969 = vunpack.c.h.bf16 %v2078
        %v5970 = vunpack.c.l.bf16 %v2079
        %v5971 = vunpack.c.h.bf16 %v2079
        %v5972 = vunpack.c.l.bf16 %v2080
        %v5973 = vunpack.c.h.bf16 %v2080
        %v5974 = vunpack.c.l.bf16 %v2081
        %v5975 = vunpack.c.h.bf16 %v2081
        %v5976 = vunpack.c.l.bf16 %v2082
        %v5977 = vunpack.c.h.bf16 %v2082
        %v5978 = vunpack.c.l.bf16 %v2083
        %v5979 = vunpack.c.h.bf16 %v2083
        %v5980 = vunpack.c.l.bf16 %v2084
        %v5981 = vunpack.c.h.bf16 %v2084
        %v5982 = vunpack.c.l.bf16 %v2085
        %v5983 = vunpack.c.h.bf16 %v2085
        %v5984 = vunpack.c.l.bf16 %v2086
        %v5985 = vunpack.c.h.bf16 %v2086
        %v5986 = vunpack.c.l.bf16 %v2087
        %v5987 = vunpack.c.h.bf16 %v2087
        %v5988 = vunpack.c.l.bf16 %v2088
        %v5989 = vunpack.c.h.bf16 %v2088
        %v5990 = vunpack.c.l.bf16 %v2089
        %v5991 = vunpack.c.h.bf16 %v2089
        %v5992 = vunpack.c.l.bf16 %v2090
        %v5993 = vunpack.c.h.bf16 %v2090
        %v5994 = vunpack.c.l.bf16 %v2091
        %v5995 = vunpack.c.h.bf16 %v2091
        %v5996 = vunpack.c.l.bf16 %v2092
        %v5997 = vunpack.c.h.bf16 %v2092
        %v5998 = vunpack.c.l.bf16 %v2093
        %v5999 = vunpack.c.h.bf16 %v2093
        %v6000 = vunpack.c.l.bf16 %v2094
        %v6001 = vunpack.c.h.bf16 %v2094
        %v6002 = vunpack.c.l.bf16 %v2095
        %v6003 = vunpack.c.h.bf16 %v2095
        %v6004 = vunpack.c.l.bf16 %v2096
        %v6005 = vunpack.c.h.bf16 %v2096
        %v6006 = vunpack.c.l.bf16 %v2097
        %v6007 = vunpack.c.h.bf16 %v2097
        %v6008 = vunpack.c.l.bf16 %v2098
        %v6009 = vunpack.c.h.bf16 %v2098
        %v6010 = vunpack.c.l.bf16 %v2099
        %v6011 = vunpack.c.h.bf16 %v2099
        %v6012 = vunpack.c.l.bf16 %v2100
        %v6013 = vunpack.c.h.bf16 %v2100
        %v6014 = vunpack.c.l.bf16 %v2101
        %v6015 = vunpack.c.h.bf16 %v2101
        %v6016 = vunpack.c.l.bf16 %v2102
        %v6017 = vunpack.c.h.bf16 %v2102
        %v6018 = vunpack.c.l.bf16 %v2103
        %v6019 = vunpack.c.h.bf16 %v2103
        %v6020 = vunpack.c.l.bf16 %v2104
        %v6021 = vunpack.c.h.bf16 %v2104
        %v6022 = vunpack.c.l.bf16 %v2105
        %v6023 = vunpack.c.h.bf16 %v2105
        %v6024 = vunpack.c.l.bf16 %v2106
        %v6025 = vunpack.c.h.bf16 %v2106
        %v6026 = vunpack.c.l.bf16 %v2107
        %v6027 = vunpack.c.h.bf16 %v2107
        %v6028 = vunpack.c.l.bf16 %v2108
        %v6029 = vunpack.c.h.bf16 %v2108
        %v6030 = vunpack.c.l.bf16 %v2109
        %v6031 = vunpack.c.h.bf16 %v2109
        %v6032 = vunpack.c.l.bf16 %v2110
        %v6033 = vunpack.c.h.bf16 %v2110
        %v6034 = vunpack.c.l.bf16 %v2111
        %v6035 = vunpack.c.h.bf16 %v2111
        %v6036 = vunpack.c.l.bf16 %v2112
        %v6037 = vunpack.c.h.bf16 %v2112
        %v6038 = vunpack.c.l.bf16 %v2113
        %v6039 = vunpack.c.h.bf16 %v2113
        %v6040 = vunpack.c.l.bf16 %v2114
        %v6041 = vunpack.c.h.bf16 %v2114
        %v6042 = vunpack.c.l.bf16 %v2115
        %v6043 = vunpack.c.h.bf16 %v2115
        %v6044 = vunpack.c.l.bf16 %v2116
        %v6045 = vunpack.c.h.bf16 %v2116
        %v6046 = vunpack.c.l.bf16 %v2117
        %v6047 = vunpack.c.h.bf16 %v2117
        %v6048 = vunpack.c.l.bf16 %v2118
        %v6049 = vunpack.c.h.bf16 %v2118
        %v6050 = vunpack.c.l.bf16 %v2119
        %v6051 = vunpack.c.h.bf16 %v2119
        %v6052 = vunpack.c.l.bf16 %v2120
        %v6053 = vunpack.c.h.bf16 %v2120
        %v6054 = vunpack.c.l.bf16 %v2121
        %v6055 = vunpack.c.h.bf16 %v2121
        %v6056 = vunpack.c.l.bf16 %v2122
        %v6057 = vunpack.c.h.bf16 %v2122
        %v6058 = vunpack.c.l.bf16 %v2123
        %v6059 = vunpack.c.h.bf16 %v2123
        %v6060 = vunpack.c.l.bf16 %v2124
        %v6061 = vunpack.c.h.bf16 %v2124
        %v6062 = vunpack.c.l.bf16 %v2125
        %v6063 = vunpack.c.h.bf16 %v2125
        %v6064 = vunpack.c.l.bf16 %v2126
        %v6065 = vunpack.c.h.bf16 %v2126
        %v6066 = vunpack.c.l.bf16 %v2127
        %v6067 = vunpack.c.h.bf16 %v2127
        %v6068 = vunpack.c.l.bf16 %v2128
        %v6069 = vunpack.c.h.bf16 %v2128
        %v6070 = vunpack.c.l.bf16 %v2129
        %v6071 = vunpack.c.h.bf16 %v2129
        %v6072 = vunpack.c.l.bf16 %v2130
        %v6073 = vunpack.c.h.bf16 %v2130
        %v6074 = vunpack.c.l.bf16 %v2131
        %v6075 = vunpack.c.h.bf16 %v2131
        %v6076 = vunpack.c.l.bf16 %v2132
        %v6077 = vunpack.c.h.bf16 %v2132
        %v6078 = vunpack.c.l.bf16 %v2133
        %v6079 = vunpack.c.h.bf16 %v2133
        %v6080 = vunpack.c.l.bf16 %v2134
        %v6081 = vunpack.c.h.bf16 %v2134
        %v6082 = vunpack.c.l.bf16 %v2135
        %v6083 = vunpack.c.h.bf16 %v2135
        %v6084 = vunpack.c.l.bf16 %v2136
        %v6085 = vunpack.c.h.bf16 %v2136
        %v6086 = vunpack.c.l.bf16 %v2137
        %v6087 = vunpack.c.h.bf16 %v2137
        %v6088 = vunpack.c.l.bf16 %v2138
        %v6089 = vunpack.c.h.bf16 %v2138
        %v6090 = vunpack.c.l.bf16 %v2139
        %v6091 = vunpack.c.h.bf16 %v2139
        %v6092 = vunpack.c.l.bf16 %v2140
        %v6093 = vunpack.c.h.bf16 %v2140
        %v6094 = vunpack.c.l.bf16 %v2141
        %v6095 = vunpack.c.h.bf16 %v2141
        %v6096 = vunpack.c.l.bf16 %v2142
        %v6097 = vunpack.c.h.bf16 %v2142
        %v6098 = vunpack.c.l.bf16 %v2143
        %v6099 = vunpack.c.h.bf16 %v2143
        %v6100 = vunpack.c.l.bf16 %v2144
        %v6101 = vunpack.c.h.bf16 %v2144
        %v6102 = vunpack.c.l.bf16 %v2145
        %v6103 = vunpack.c.h.bf16 %v2145
        %v6104 = vunpack.c.l.bf16 %v2146
        %v6105 = vunpack.c.h.bf16 %v2146
        %v6106 = vunpack.c.l.bf16 %v2147
        %v6107 = vunpack.c.h.bf16 %v2147
        %v6108 = vunpack.c.l.bf16 %v2148
        %v6109 = vunpack.c.h.bf16 %v2148
        %v6110 = vunpack.c.l.bf16 %v2149
        %v6111 = vunpack.c.h.bf16 %v2149
        %v6112 = vunpack.c.l.bf16 %v2150
        %v6113 = vunpack.c.h.bf16 %v2150
        %v6114 = vunpack.c.l.bf16 %v2151
        %v6115 = vunpack.c.h.bf16 %v2151
        %v6116 = vunpack.c.l.bf16 %v2152
        %v6117 = vunpack.c.h.bf16 %v2152
        %v6118 = vunpack.c.l.bf16 %v2153
        %v6119 = vunpack.c.h.bf16 %v2153
        %v6120 = vunpack.c.l.bf16 %v2154
        %v6121 = vunpack.c.h.bf16 %v2154
        %v6122 = vunpack.c.l.bf16 %v2155
        %v6123 = vunpack.c.h.bf16 %v2155
        %v6124 = vunpack.c.l.bf16 %v2156
        %v6125 = vunpack.c.h.bf16 %v2156
        %v6126 = vunpack.c.l.bf16 %v2157
        %v6127 = vunpack.c.h.bf16 %v2157
        %v6128 = vunpack.c.l.bf16 %v2158
        %v6129 = vunpack.c.h.bf16 %v2158
        %v6130 = vunpack.c.l.bf16 %v2159
        %v6131 = vunpack.c.h.bf16 %v2159
        %v6132 = vunpack.c.l.bf16 %v2160
        %v6133 = vunpack.c.h.bf16 %v2160
        %v6134 = vunpack.c.l.bf16 %v2161
        %v6135 = vunpack.c.h.bf16 %v2161
        %v6136 = vunpack.c.l.bf16 %v2162
        %v6137 = vunpack.c.h.bf16 %v2162
        %v6138 = vunpack.c.l.bf16 %v2163
        %v6139 = vunpack.c.h.bf16 %v2163
        %v6140 = vunpack.c.l.bf16 %v2164
        %v6141 = vunpack.c.h.bf16 %v2164
        %v6142 = vunpack.c.l.bf16 %v2165
        %v6143 = vunpack.c.h.bf16 %v2165
        %v6144 = vunpack.c.l.bf16 %v2166
        %v6145 = vunpack.c.h.bf16 %v2166
        %v6146 = vunpack.c.l.bf16 %v2167
        %v6147 = vunpack.c.h.bf16 %v2167
        %v6148 = vunpack.c.l.bf16 %v2168
        %v6149 = vunpack.c.h.bf16 %v2168
        %v6150 = vunpack.c.l.bf16 %v2169
        %v6151 = vunpack.c.h.bf16 %v2169
        %v6152 = vunpack.c.l.bf16 %v2170
        %v6153 = vunpack.c.h.bf16 %v2170
        %v6154 = vunpack.c.l.bf16 %v2171
        %v6155 = vunpack.c.h.bf16 %v2171
        %v6156 = vunpack.c.l.bf16 %v2172
        %v6157 = vunpack.c.h.bf16 %v2172
        %v6158 = vunpack.c.l.bf16 %v2173
        %v6159 = vunpack.c.h.bf16 %v2173
        %v6160 = vunpack.c.l.bf16 %v2174
        %v6161 = vunpack.c.h.bf16 %v2174
        %v6162 = vunpack.c.l.bf16 %v2175
        %v6163 = vunpack.c.h.bf16 %v2175
        %v6164 = vunpack.c.l.bf16 %v2176
        %v6165 = vunpack.c.h.bf16 %v2176
        %v6166 = vunpack.c.l.bf16 %v2177
        %v6167 = vunpack.c.h.bf16 %v2177
        %v6168 = vunpack.c.l.bf16 %v2178
        %v6169 = vunpack.c.h.bf16 %v2178
        %v6170 = vunpack.c.l.bf16 %v2179
        %v6171 = vunpack.c.h.bf16 %v2179
        %v6172 = vunpack.c.l.bf16 %v2180
        %v6173 = vunpack.c.h.bf16 %v2180
        %v6174 = vunpack.c.l.bf16 %v2181
        %v6175 = vunpack.c.h.bf16 %v2181
        %v6176 = vunpack.c.l.bf16 %v2182
        %v6177 = vunpack.c.h.bf16 %v2182
        %v6178 = vunpack.c.l.bf16 %v2183
        %v6179 = vunpack.c.h.bf16 %v2183
        %v6180 = vunpack.c.l.bf16 %v2184
        %v6181 = vunpack.c.h.bf16 %v2184
        %v6182 = vunpack.c.l.bf16 %v2185
        %v6183 = vunpack.c.h.bf16 %v2185
        %v6184 = vunpack.c.l.bf16 %v2186
        %v6185 = vunpack.c.h.bf16 %v2186
        %v6186 = vunpack.c.l.bf16 %v2187
        %v6187 = vunpack.c.h.bf16 %v2187
        %v6188 = vunpack.c.l.bf16 %v2188
        %v6189 = vunpack.c.h.bf16 %v2188
        %v6190 = vunpack.c.l.bf16 %v2189
        %v6191 = vunpack.c.h.bf16 %v2189
        %v6192 = vunpack.c.l.bf16 %v2190
        %v6193 = vunpack.c.h.bf16 %v2190
        %v6194 = vunpack.c.l.bf16 %v2191
        %v6195 = vunpack.c.h.bf16 %v2191
        %v6196 = vunpack.c.l.bf16 %v2192
        %v6197 = vunpack.c.h.bf16 %v2192
        %v6198 = vunpack.c.l.bf16 %v2193
        %v6199 = vunpack.c.h.bf16 %v2193
        %v6200 = vunpack.c.l.bf16 %v2194
        %v6201 = vunpack.c.h.bf16 %v2194
        %v6202 = vunpack.c.l.bf16 %v2195
        %v6203 = vunpack.c.h.bf16 %v2195
        %v6204 = vunpack.c.l.bf16 %v2196
        %v6205 = vunpack.c.h.bf16 %v2196
        %v6206 = vunpack.c.l.bf16 %v2197
        %v6207 = vunpack.c.h.bf16 %v2197
        %v6208 = vunpack.c.l.bf16 %v2198
        %v6209 = vunpack.c.h.bf16 %v2198
        %v6210 = vunpack.c.l.bf16 %v2199
        %v6211 = vunpack.c.h.bf16 %v2199
        %v6212 = vunpack.c.l.bf16 %v2200
        %v6213 = vunpack.c.h.bf16 %v2200
        %v6214 = vunpack.c.l.bf16 %v2201
        %v6215 = vunpack.c.h.bf16 %v2201
        %v6216 = vunpack.c.l.bf16 %v2202
        %v6217 = vunpack.c.h.bf16 %v2202
        %v6218 = vunpack.c.l.bf16 %v2203
        %v6219 = vunpack.c.h.bf16 %v2203
        %v6220 = vunpack.c.l.bf16 %v2204
        %v6221 = vunpack.c.h.bf16 %v2204
        %v6222 = vunpack.c.l.bf16 %v2205
        %v6223 = vunpack.c.h.bf16 %v2205
        %v6224 = vunpack.c.l.bf16 %v2206
        %v6225 = vunpack.c.h.bf16 %v2206
        %v6226 = vunpack.c.l.bf16 %v2207
        %v6227 = vunpack.c.h.bf16 %v2207
        %v6228 = vunpack.c.l.bf16 %v2208
        %v6229 = vunpack.c.h.bf16 %v2208
        %v6230 = vunpack.c.l.bf16 %v2209
        %v6231 = vunpack.c.h.bf16 %v2209
        %v6232 = vunpack.c.l.bf16 %v2210
        %v6233 = vunpack.c.h.bf16 %v2210
        %v6234 = vunpack.c.l.bf16 %v2211
        %v6235 = vunpack.c.h.bf16 %v2211
        %v6236 = vunpack.c.l.bf16 %v2212
        %v6237 = vunpack.c.h.bf16 %v2212
        %v6238 = vunpack.c.l.bf16 %v2213
        %v6239 = vunpack.c.h.bf16 %v2213
        %v6240 = vunpack.c.l.bf16 %v2214
        %v6241 = vunpack.c.h.bf16 %v2214
        %v6242 = vunpack.c.l.bf16 %v2215
        %v6243 = vunpack.c.h.bf16 %v2215
        %v6244 = vunpack.c.l.bf16 %v2216
        %v6245 = vunpack.c.h.bf16 %v2216
        %v6246 = vunpack.c.l.bf16 %v2217
        %v6247 = vunpack.c.h.bf16 %v2217
        %v6248 = vunpack.c.l.bf16 %v2218
        %v6249 = vunpack.c.h.bf16 %v2218
        %v6250 = vunpack.c.l.bf16 %v2219
        %v6251 = vunpack.c.h.bf16 %v2219
        %v6252 = vunpack.c.l.bf16 %v2220
        %v6253 = vunpack.c.h.bf16 %v2220
        %v6254 = vunpack.c.l.bf16 %v2221
        %v6255 = vunpack.c.h.bf16 %v2221
        %v6256 = vunpack.c.l.bf16 %v2222
        %v6257 = vunpack.c.h.bf16 %v2222
        %v6258 = vunpack.c.l.bf16 %v2223
        %v6259 = vunpack.c.h.bf16 %v2223
        %v6260 = vunpack.c.l.bf16 %v2224
        %v6261 = vunpack.c.h.bf16 %v2224
        %v6262 = vunpack.c.l.bf16 %v2225
        %v6263 = vunpack.c.h.bf16 %v2225
        %v6264 = vunpack.c.l.bf16 %v2226
        %v6265 = vunpack.c.h.bf16 %v2226
        %v6266 = vunpack.c.l.bf16 %v2227
        %v6267 = vunpack.c.h.bf16 %v2227
        %v6268 = vunpack.c.l.bf16 %v2228
        %v6269 = vunpack.c.h.bf16 %v2228
        %v6270 = vunpack.c.l.bf16 %v2229
        %v6271 = vunpack.c.h.bf16 %v2229
        %v6272 = vunpack.c.l.bf16 %v2230
        %v6273 = vunpack.c.h.bf16 %v2230
        %v6274 = vunpack.c.l.bf16 %v2231
        %v6275 = vunpack.c.h.bf16 %v2231
        %v6276 = vunpack.c.l.bf16 %v2232
        %v6277 = vunpack.c.h.bf16 %v2232
        %v6278 = vunpack.c.l.bf16 %v2233
        %v6279 = vunpack.c.h.bf16 %v2233
        %v6280 = vunpack.c.l.bf16 %v2234
        %v6281 = vunpack.c.h.bf16 %v2234
        %v6282 = vunpack.c.l.bf16 %v2235
        %v6283 = vunpack.c.h.bf16 %v2235
        %v6284 = vunpack.c.l.bf16 %v2236
        %v6285 = vunpack.c.h.bf16 %v2236
        %v6286 = vunpack.c.l.bf16 %v2237
        %v6287 = vunpack.c.h.bf16 %v2237
        %v6288 = vunpack.c.l.bf16 %v2238
        %v6289 = vunpack.c.h.bf16 %v2238
        %v6290 = vunpack.c.l.bf16 %v2239
        %v6291 = vunpack.c.h.bf16 %v2239
        %v6292 = vunpack.c.l.bf16 %v2240
        %v6293 = vunpack.c.h.bf16 %v2240
        %v6294 = vunpack.c.l.bf16 %v2241
        %v6295 = vunpack.c.h.bf16 %v2241
        %v6296 = vunpack.c.l.bf16 %v2242
        %v6297 = vunpack.c.h.bf16 %v2242
        %v6298 = vunpack.c.l.bf16 %v2243
        %v6299 = vunpack.c.h.bf16 %v2243
        %v6300 = vunpack.c.l.bf16 %v2244
        %v6301 = vunpack.c.h.bf16 %v2244
        %v6302 = vunpack.c.l.bf16 %v2245
        %v6303 = vunpack.c.h.bf16 %v2245
        %v6304 = vunpack.c.l.bf16 %v2246
        %v6305 = vunpack.c.h.bf16 %v2246
        %v6306 = vunpack.c.l.bf16 %v2247
        %v6307 = vunpack.c.h.bf16 %v2247
        %v6308 = vunpack.c.l.bf16 %v2248
        %v6309 = vunpack.c.h.bf16 %v2248
        %v6310 = vunpack.c.l.bf16 %v2249
        %v6311 = vunpack.c.h.bf16 %v2249
        %v6312 = vunpack.c.l.bf16 %v2250
        %v6313 = vunpack.c.h.bf16 %v2250
        %v6314 = vunpack.c.l.bf16 %v2251
        %v6315 = vunpack.c.h.bf16 %v2251
        %v6316 = vunpack.c.l.bf16 %v2252
        %v6317 = vunpack.c.h.bf16 %v2252
        %v6318 = vunpack.c.l.bf16 %v2253
        %v6319 = vunpack.c.h.bf16 %v2253
        %v6320 = vunpack.c.l.bf16 %v2254
        %v6321 = vunpack.c.h.bf16 %v2254
        %v6322 = vunpack.c.l.bf16 %v2255
        %v6323 = vunpack.c.h.bf16 %v2255
        %v6324 = vunpack.c.l.bf16 %v2256
        %v6325 = vunpack.c.h.bf16 %v2256
        %v6326 = vunpack.c.l.bf16 %v2257
        %v6327 = vunpack.c.h.bf16 %v2257
        %v6328 = vunpack.c.l.bf16 %v2258
        %v6329 = vunpack.c.h.bf16 %v2258
        %v6330 = vunpack.c.l.bf16 %v2259
        %v6331 = vunpack.c.h.bf16 %v2259
        %v6332 = vunpack.c.l.bf16 %v2260
        %v6333 = vunpack.c.h.bf16 %v2260
        %v6334 = vunpack.c.l.bf16 %v2261
        %v6335 = vunpack.c.h.bf16 %v2261
        %v6336 = vunpack.c.l.bf16 %v2262
        %v6337 = vunpack.c.h.bf16 %v2262
        %v6338 = vunpack.c.l.bf16 %v2263
        %v6339 = vunpack.c.h.bf16 %v2263
        %v6340 = vunpack.c.l.bf16 %v2264
        %v6341 = vunpack.c.h.bf16 %v2264
        %v6342 = vunpack.c.l.bf16 %v2265
        %v6343 = vunpack.c.h.bf16 %v2265
        %v6344 = vunpack.c.l.bf16 %v2266
        %v6345 = vunpack.c.h.bf16 %v2266
        %v6346 = vunpack.c.l.bf16 %v2267
        %v6347 = vunpack.c.h.bf16 %v2267
        %v6348 = vunpack.c.l.bf16 %v2268
        %v6349 = vunpack.c.h.bf16 %v2268
        %v6350 = vunpack.c.l.bf16 %v2269
        %v6351 = vunpack.c.h.bf16 %v2269
        %v6352 = vunpack.c.l.bf16 %v2270
        %v6353 = vunpack.c.h.bf16 %v2270
        %v6354 = vunpack.c.l.bf16 %v2271
        %v6355 = vunpack.c.h.bf16 %v2271
        %v6356 = vunpack.c.l.bf16 %v2272
        %v6357 = vunpack.c.h.bf16 %v2272
        %v6358 = vunpack.c.l.bf16 %v2273
        %v6359 = vunpack.c.h.bf16 %v2273
        %v6360 = vunpack.c.l.bf16 %v2274
        %v6361 = vunpack.c.h.bf16 %v2274
        %v6362 = vunpack.c.l.bf16 %v2275
        %v6363 = vunpack.c.h.bf16 %v2275
        %v6364 = vunpack.c.l.bf16 %v2276
        %v6365 = vunpack.c.h.bf16 %v2276
        %v6366 = vunpack.c.l.bf16 %v2277
        %v6367 = vunpack.c.h.bf16 %v2277
        %v6368 = vunpack.c.l.bf16 %v2278
        %v6369 = vunpack.c.h.bf16 %v2278
        %v6370 = vunpack.c.l.bf16 %v2279
        %v6371 = vunpack.c.h.bf16 %v2279
        %v6372 = vunpack.c.l.bf16 %v2280
        %v6373 = vunpack.c.h.bf16 %v2280
        %v6374 = vunpack.c.l.bf16 %v2281
        %v6375 = vunpack.c.h.bf16 %v2281
        %v6376 = vunpack.c.l.bf16 %v2282
        %v6377 = vunpack.c.h.bf16 %v2282
        %v6378 = vunpack.c.l.bf16 %v2283
        %v6379 = vunpack.c.h.bf16 %v2283
        %v6380 = vadd.f32 %v2284, %v4332
        %v6381 = vadd.f32 %v2285, %v4333
        %v6382 = vadd.f32 %v2286, %v4334
        %v6383 = vadd.f32 %v2287, %v4335
        %v6384 = vadd.f32 %v2288, %v4336
        %v6385 = vadd.f32 %v2289, %v4337
        %v6386 = vadd.f32 %v2290, %v4338
        %v6387 = vadd.f32 %v2291, %v4339
        %v6388 = vadd.f32 %v2292, %v4340
        %v6389 = vadd.f32 %v2293, %v4341
        %v6390 = vadd.f32 %v2294, %v4342
        %v6391 = vadd.f32 %v2295, %v4343
        %v6392 = vadd.f32 %v2296, %v4344
        %v6393 = vadd.f32 %v2297, %v4345
        %v6394 = vadd.f32 %v2298, %v4346
        %v6395 = vadd.f32 %v2299, %v4347
        %v6396 = vadd.f32 %v2300, %v4348
        %v6397 = vadd.f32 %v2301, %v4349
        %v6398 = vadd.f32 %v2302, %v4350
        %v6399 = vadd.f32 %v2303, %v4351
        %v6400 = vadd.f32 %v2304, %v4352
        %v6401 = vadd.f32 %v2305, %v4353
        %v6402 = vadd.f32 %v2306, %v4354
        %v6403 = vadd.f32 %v2307, %v4355
        %v6404 = vadd.f32 %v2308, %v4356
        %v6405 = vadd.f32 %v2309, %v4357
        %v6406 = vadd.f32 %v2310, %v4358
        %v6407 = vadd.f32 %v2311, %v4359
        %v6408 = vadd.f32 %v2312, %v4360
        %v6409 = vadd.f32 %v2313, %v4361
        %v6410 = vadd.f32 %v2314, %v4362
        %v6411 = vadd.f32 %v2315, %v4363
        %v6412 = vadd.f32 %v2316, %v4364
        %v6413 = vadd.f32 %v2317, %v4365
        %v6414 = vadd.f32 %v2318, %v4366
        %v6415 = vadd.f32 %v2319, %v4367
        %v6416 = vadd.f32 %v2320, %v4368
        %v6417 = vadd.f32 %v2321, %v4369
        %v6418 = vadd.f32 %v2322, %v4370
        %v6419 = vadd.f32 %v2323, %v4371
        %v6420 = vadd.f32 %v2324, %v4372
        %v6421 = vadd.f32 %v2325, %v4373
        %v6422 = vadd.f32 %v2326, %v4374
        %v6423 = vadd.f32 %v2327, %v4375
        %v6424 = vadd.f32 %v2328, %v4376
        %v6425 = vadd.f32 %v2329, %v4377
        %v6426 = vadd.f32 %v2330, %v4378
        %v6427 = vadd.f32 %v2331, %v4379
        %v6428 = vadd.f32 %v2332, %v4380
        %v6429 = vadd.f32 %v2333, %v4381
        %v6430 = vadd.f32 %v2334, %v4382
        %v6431 = vadd.f32 %v2335, %v4383
        %v6432 = vadd.f32 %v2336, %v4384
        %v6433 = vadd.f32 %v2337, %v4385
        %v6434 = vadd.f32 %v2338, %v4386
        %v6435 = vadd.f32 %v2339, %v4387
        %v6436 = vadd.f32 %v2340, %v4388
        %v6437 = vadd.f32 %v2341, %v4389
        %v6438 = vadd.f32 %v2342, %v4390
        %v6439 = vadd.f32 %v2343, %v4391
        %v6440 = vadd.f32 %v2344, %v4392
        %v6441 = vadd.f32 %v2345, %v4393
        %v6442 = vadd.f32 %v2346, %v4394
        %v6443 = vadd.f32 %v2347, %v4395
        %v6444 = vadd.f32 %v2348, %v4396
        %v6445 = vadd.f32 %v2349, %v4397
        %v6446 = vadd.f32 %v2350, %v4398
        %v6447 = vadd.f32 %v2351, %v4399
        %v6448 = vadd.f32 %v2352, %v4400
        %v6449 = vadd.f32 %v2353, %v4401
        %v6450 = vadd.f32 %v2354, %v4402
        %v6451 = vadd.f32 %v2355, %v4403
        %v6452 = vadd.f32 %v2356, %v4404
        %v6453 = vadd.f32 %v2357, %v4405
        %v6454 = vadd.f32 %v2358, %v4406
        %v6455 = vadd.f32 %v2359, %v4407
        %v6456 = vadd.f32 %v2360, %v4408
        %v6457 = vadd.f32 %v2361, %v4409
        %v6458 = vadd.f32 %v2362, %v4410
        %v6459 = vadd.f32 %v2363, %v4411
        %v6460 = vadd.f32 %v2364, %v4412
        %v6461 = vadd.f32 %v2365, %v4413
        %v6462 = vadd.f32 %v2366, %v4414
        %v6463 = vadd.f32 %v2367, %v4415
        %v6464 = vadd.f32 %v2368, %v4416
        %v6465 = vadd.f32 %v2369, %v4417
        %v6466 = vadd.f32 %v2370, %v4418
        %v6467 = vadd.f32 %v2371, %v4419
        %v6468 = vadd.f32 %v2372, %v4420
        %v6469 = vadd.f32 %v2373, %v4421
        %v6470 = vadd.f32 %v2374, %v4422
        %v6471 = vadd.f32 %v2375, %v4423
        %v6472 = vadd.f32 %v2376, %v4424
        %v6473 = vadd.f32 %v2377, %v4425
        %v6474 = vadd.f32 %v2378, %v4426
        %v6475 = vadd.f32 %v2379, %v4427
        %v6476 = vadd.f32 %v2380, %v4428
        %v6477 = vadd.f32 %v2381, %v4429
        %v6478 = vadd.f32 %v2382, %v4430
        %v6479 = vadd.f32 %v2383, %v4431
        %v6480 = vadd.f32 %v2384, %v4432
        %v6481 = vadd.f32 %v2385, %v4433
        %v6482 = vadd.f32 %v2386, %v4434
        %v6483 = vadd.f32 %v2387, %v4435
        %v6484 = vadd.f32 %v2388, %v4436
        %v6485 = vadd.f32 %v2389, %v4437
        %v6486 = vadd.f32 %v2390, %v4438
        %v6487 = vadd.f32 %v2391, %v4439
        %v6488 = vadd.f32 %v2392, %v4440
        %v6489 = vadd.f32 %v2393, %v4441
        %v6490 = vadd.f32 %v2394, %v4442
        %v6491 = vadd.f32 %v2395, %v4443
        %v6492 = vadd.f32 %v2396, %v4444
        %v6493 = vadd.f32 %v2397, %v4445
        %v6494 = vadd.f32 %v2398, %v4446
        %v6495 = vadd.f32 %v2399, %v4447
        %v6496 = vadd.f32 %v2400, %v4448
        %v6497 = vadd.f32 %v2401, %v4449
        %v6498 = vadd.f32 %v2402, %v4450
        %v6499 = vadd.f32 %v2403, %v4451
        %v6500 = vadd.f32 %v2404, %v4452
        %v6501 = vadd.f32 %v2405, %v4453
        %v6502 = vadd.f32 %v2406, %v4454
        %v6503 = vadd.f32 %v2407, %v4455
        %v6504 = vadd.f32 %v2408, %v4456
        %v6505 = vadd.f32 %v2409, %v4457
        %v6506 = vadd.f32 %v2410, %v4458
        %v6507 = vadd.f32 %v2411, %v4459
        %v6508 = vadd.f32 %v2412, %v4460
        %v6509 = vadd.f32 %v2413, %v4461
        %v6510 = vadd.f32 %v2414, %v4462
        %v6511 = vadd.f32 %v2415, %v4463
        %v6512 = vadd.f32 %v2416, %v4464
        %v6513 = vadd.f32 %v2417, %v4465
        %v6514 = vadd.f32 %v2418, %v4466
        %v6515 = vadd.f32 %v2419, %v4467
        %v6516 = vadd.f32 %v2420, %v4468
        %v6517 = vadd.f32 %v2421, %v4469
        %v6518 = vadd.f32 %v2422, %v4470
        %v6519 = vadd.f32 %v2423, %v4471
        %v6520 = vadd.f32 %v2424, %v4472
        %v6521 = vadd.f32 %v2425, %v4473
        %v6522 = vadd.f32 %v2426, %v4474
        %v6523 = vadd.f32 %v2427, %v4475
        %v6524 = vadd.f32 %v2428, %v4476
        %v6525 = vadd.f32 %v2429, %v4477
        %v6526 = vadd.f32 %v2430, %v4478
        %v6527 = vadd.f32 %v2431, %v4479
        %v6528 = vadd.f32 %v2432, %v4480
        %v6529 = vadd.f32 %v2433, %v4481
        %v6530 = vadd.f32 %v2434, %v4482
        %v6531 = vadd.f32 %v2435, %v4483
        %v6532 = vadd.f32 %v2436, %v4484
        %v6533 = vadd.f32 %v2437, %v4485
        %v6534 = vadd.f32 %v2438, %v4486
        %v6535 = vadd.f32 %v2439, %v4487
        %v6536 = vadd.f32 %v2440, %v4488
        %v6537 = vadd.f32 %v2441, %v4489
        %v6538 = vadd.f32 %v2442, %v4490
        %v6539 = vadd.f32 %v2443, %v4491
        %v6540 = vadd.f32 %v2444, %v4492
        %v6541 = vadd.f32 %v2445, %v4493
        %v6542 = vadd.f32 %v2446, %v4494
        %v6543 = vadd.f32 %v2447, %v4495
        %v6544 = vadd.f32 %v2448, %v4496
        %v6545 = vadd.f32 %v2449, %v4497
        %v6546 = vadd.f32 %v2450, %v4498
        %v6547 = vadd.f32 %v2451, %v4499
        %v6548 = vadd.f32 %v2452, %v4500
        %v6549 = vadd.f32 %v2453, %v4501
        %v6550 = vadd.f32 %v2454, %v4502
        %v6551 = vadd.f32 %v2455, %v4503
        %v6552 = vadd.f32 %v2456, %v4504
        %v6553 = vadd.f32 %v2457, %v4505
        %v6554 = vadd.f32 %v2458, %v4506
        %v6555 = vadd.f32 %v2459, %v4507
        %v6556 = vadd.f32 %v2460, %v4508
        %v6557 = vadd.f32 %v2461, %v4509
        %v6558 = vadd.f32 %v2462, %v4510
        %v6559 = vadd.f32 %v2463, %v4511
        %v6560 = vadd.f32 %v2464, %v4512
        %v6561 = vadd.f32 %v2465, %v4513
        %v6562 = vadd.f32 %v2466, %v4514
        %v6563 = vadd.f32 %v2467, %v4515
        %v6564 = vadd.f32 %v2468, %v4516
        %v6565 = vadd.f32 %v2469, %v4517
        %v6566 = vadd.f32 %v2470, %v4518
        %v6567 = vadd.f32 %v2471, %v4519
        %v6568 = vadd.f32 %v2472, %v4520
        %v6569 = vadd.f32 %v2473, %v4521
        %v6570 = vadd.f32 %v2474, %v4522
        %v6571 = vadd.f32 %v2475, %v4523
        %v6572 = vadd.f32 %v2476, %v4524
        %v6573 = vadd.f32 %v2477, %v4525
        %v6574 = vadd.f32 %v2478, %v4526
        %v6575 = vadd.f32 %v2479, %v4527
        %v6576 = vadd.f32 %v2480, %v4528
        %v6577 = vadd.f32 %v2481, %v4529
        %v6578 = vadd.f32 %v2482, %v4530
        %v6579 = vadd.f32 %v2483, %v4531
        %v6580 = vadd.f32 %v2484, %v4532
        %v6581 = vadd.f32 %v2485, %v4533
        %v6582 = vadd.f32 %v2486, %v4534
        %v6583 = vadd.f32 %v2487, %v4535
        %v6584 = vadd.f32 %v2488, %v4536
        %v6585 = vadd.f32 %v2489, %v4537
        %v6586 = vadd.f32 %v2490, %v4538
        %v6587 = vadd.f32 %v2491, %v4539
        %v6588 = vadd.f32 %v2492, %v4540
        %v6589 = vadd.f32 %v2493, %v4541
        %v6590 = vadd.f32 %v2494, %v4542
        %v6591 = vadd.f32 %v2495, %v4543
        %v6592 = vadd.f32 %v2496, %v4544
        %v6593 = vadd.f32 %v2497, %v4545
        %v6594 = vadd.f32 %v2498, %v4546
        %v6595 = vadd.f32 %v2499, %v4547
        %v6596 = vadd.f32 %v2500, %v4548
        %v6597 = vadd.f32 %v2501, %v4549
        %v6598 = vadd.f32 %v2502, %v4550
        %v6599 = vadd.f32 %v2503, %v4551
        %v6600 = vadd.f32 %v2504, %v4552
        %v6601 = vadd.f32 %v2505, %v4553
        %v6602 = vadd.f32 %v2506, %v4554
        %v6603 = vadd.f32 %v2507, %v4555
        %v6604 = vadd.f32 %v2508, %v4556
        %v6605 = vadd.f32 %v2509, %v4557
        %v6606 = vadd.f32 %v2510, %v4558
        %v6607 = vadd.f32 %v2511, %v4559
        %v6608 = vadd.f32 %v2512, %v4560
        %v6609 = vadd.f32 %v2513, %v4561
        %v6610 = vadd.f32 %v2514, %v4562
        %v6611 = vadd.f32 %v2515, %v4563
        %v6612 = vadd.f32 %v2516, %v4564
        %v6613 = vadd.f32 %v2517, %v4565
        %v6614 = vadd.f32 %v2518, %v4566
        %v6615 = vadd.f32 %v2519, %v4567
        %v6616 = vadd.f32 %v2520, %v4568
        %v6617 = vadd.f32 %v2521, %v4569
        %v6618 = vadd.f32 %v2522, %v4570
        %v6619 = vadd.f32 %v2523, %v4571
        %v6620 = vadd.f32 %v2524, %v4572
        %v6621 = vadd.f32 %v2525, %v4573
        %v6622 = vadd.f32 %v2526, %v4574
        %v6623 = vadd.f32 %v2527, %v4575
        %v6624 = vadd.f32 %v2528, %v4576
        %v6625 = vadd.f32 %v2529, %v4577
        %v6626 = vadd.f32 %v2530, %v4578
        %v6627 = vadd.f32 %v2531, %v4579
        %v6628 = vadd.f32 %v2532, %v4580
        %v6629 = vadd.f32 %v2533, %v4581
        %v6630 = vadd.f32 %v2534, %v4582
        %v6631 = vadd.f32 %v2535, %v4583
        %v6632 = vadd.f32 %v2536, %v4584
        %v6633 = vadd.f32 %v2537, %v4585
        %v6634 = vadd.f32 %v2538, %v4586
        %v6635 = vadd.f32 %v2539, %v4587
        %v6636 = vadd.f32 %v2540, %v4588
        %v6637 = vadd.f32 %v2541, %v4589
        %v6638 = vadd.f32 %v2542, %v4590
        %v6639 = vadd.f32 %v2543, %v4591
        %v6640 = vadd.f32 %v2544, %v4592
        %v6641 = vadd.f32 %v2545, %v4593
        %v6642 = vadd.f32 %v2546, %v4594
        %v6643 = vadd.f32 %v2547, %v4595
        %v6644 = vadd.f32 %v2548, %v4596
        %v6645 = vadd.f32 %v2549, %v4597
        %v6646 = vadd.f32 %v2550, %v4598
        %v6647 = vadd.f32 %v2551, %v4599
        %v6648 = vadd.f32 %v2552, %v4600
        %v6649 = vadd.f32 %v2553, %v4601
        %v6650 = vadd.f32 %v2554, %v4602
        %v6651 = vadd.f32 %v2555, %v4603
        %v6652 = vadd.f32 %v2556, %v4604
        %v6653 = vadd.f32 %v2557, %v4605
        %v6654 = vadd.f32 %v2558, %v4606
        %v6655 = vadd.f32 %v2559, %v4607
        %v6656 = vadd.f32 %v2560, %v4608
        %v6657 = vadd.f32 %v2561, %v4609
        %v6658 = vadd.f32 %v2562, %v4610
        %v6659 = vadd.f32 %v2563, %v4611
        %v6660 = vadd.f32 %v2564, %v4612
        %v6661 = vadd.f32 %v2565, %v4613
        %v6662 = vadd.f32 %v2566, %v4614
        %v6663 = vadd.f32 %v2567, %v4615
        %v6664 = vadd.f32 %v2568, %v4616
        %v6665 = vadd.f32 %v2569, %v4617
        %v6666 = vadd.f32 %v2570, %v4618
        %v6667 = vadd.f32 %v2571, %v4619
        %v6668 = vadd.f32 %v2572, %v4620
        %v6669 = vadd.f32 %v2573, %v4621
        %v6670 = vadd.f32 %v2574, %v4622
        %v6671 = vadd.f32 %v2575, %v4623
        %v6672 = vadd.f32 %v2576, %v4624
        %v6673 = vadd.f32 %v2577, %v4625
        %v6674 = vadd.f32 %v2578, %v4626
        %v6675 = vadd.f32 %v2579, %v4627
        %v6676 = vadd.f32 %v2580, %v4628
        %v6677 = vadd.f32 %v2581, %v4629
        %v6678 = vadd.f32 %v2582, %v4630
        %v6679 = vadd.f32 %v2583, %v4631
        %v6680 = vadd.f32 %v2584, %v4632
        %v6681 = vadd.f32 %v2585, %v4633
        %v6682 = vadd.f32 %v2586, %v4634
        %v6683 = vadd.f32 %v2587, %v4635
        %v6684 = vadd.f32 %v2588, %v4636
        %v6685 = vadd.f32 %v2589, %v4637
        %v6686 = vadd.f32 %v2590, %v4638
        %v6687 = vadd.f32 %v2591, %v4639
        %v6688 = vadd.f32 %v2592, %v4640
        %v6689 = vadd.f32 %v2593, %v4641
        %v6690 = vadd.f32 %v2594, %v4642
        %v6691 = vadd.f32 %v2595, %v4643
        %v6692 = vadd.f32 %v2596, %v4644
        %v6693 = vadd.f32 %v2597, %v4645
        %v6694 = vadd.f32 %v2598, %v4646
        %v6695 = vadd.f32 %v2599, %v4647
        %v6696 = vadd.f32 %v2600, %v4648
        %v6697 = vadd.f32 %v2601, %v4649
        %v6698 = vadd.f32 %v2602, %v4650
        %v6699 = vadd.f32 %v2603, %v4651
        %v6700 = vadd.f32 %v2604, %v4652
        %v6701 = vadd.f32 %v2605, %v4653
        %v6702 = vadd.f32 %v2606, %v4654
        %v6703 = vadd.f32 %v2607, %v4655
        %v6704 = vadd.f32 %v2608, %v4656
        %v6705 = vadd.f32 %v2609, %v4657
        %v6706 = vadd.f32 %v2610, %v4658
        %v6707 = vadd.f32 %v2611, %v4659
        %v6708 = vadd.f32 %v2612, %v4660
        %v6709 = vadd.f32 %v2613, %v4661
        %v6710 = vadd.f32 %v2614, %v4662
        %v6711 = vadd.f32 %v2615, %v4663
        %v6712 = vadd.f32 %v2616, %v4664
        %v6713 = vadd.f32 %v2617, %v4665
        %v6714 = vadd.f32 %v2618, %v4666
        %v6715 = vadd.f32 %v2619, %v4667
        %v6716 = vadd.f32 %v2620, %v4668
        %v6717 = vadd.f32 %v2621, %v4669
        %v6718 = vadd.f32 %v2622, %v4670
        %v6719 = vadd.f32 %v2623, %v4671
        %v6720 = vadd.f32 %v2624, %v4672
        %v6721 = vadd.f32 %v2625, %v4673
        %v6722 = vadd.f32 %v2626, %v4674
        %v6723 = vadd.f32 %v2627, %v4675
        %v6724 = vadd.f32 %v2628, %v4676
        %v6725 = vadd.f32 %v2629, %v4677
        %v6726 = vadd.f32 %v2630, %v4678
        %v6727 = vadd.f32 %v2631, %v4679
        %v6728 = vadd.f32 %v2632, %v4680
        %v6729 = vadd.f32 %v2633, %v4681
        %v6730 = vadd.f32 %v2634, %v4682
        %v6731 = vadd.f32 %v2635, %v4683
        %v6732 = vadd.f32 %v2636, %v4684
        %v6733 = vadd.f32 %v2637, %v4685
        %v6734 = vadd.f32 %v2638, %v4686
        %v6735 = vadd.f32 %v2639, %v4687
        %v6736 = vadd.f32 %v2640, %v4688
        %v6737 = vadd.f32 %v2641, %v4689
        %v6738 = vadd.f32 %v2642, %v4690
        %v6739 = vadd.f32 %v2643, %v4691
        %v6740 = vadd.f32 %v2644, %v4692
        %v6741 = vadd.f32 %v2645, %v4693
        %v6742 = vadd.f32 %v2646, %v4694
        %v6743 = vadd.f32 %v2647, %v4695
        %v6744 = vadd.f32 %v2648, %v4696
        %v6745 = vadd.f32 %v2649, %v4697
        %v6746 = vadd.f32 %v2650, %v4698
        %v6747 = vadd.f32 %v2651, %v4699
        %v6748 = vadd.f32 %v2652, %v4700
        %v6749 = vadd.f32 %v2653, %v4701
        %v6750 = vadd.f32 %v2654, %v4702
        %v6751 = vadd.f32 %v2655, %v4703
        %v6752 = vadd.f32 %v2656, %v4704
        %v6753 = vadd.f32 %v2657, %v4705
        %v6754 = vadd.f32 %v2658, %v4706
        %v6755 = vadd.f32 %v2659, %v4707
        %v6756 = vadd.f32 %v2660, %v4708
        %v6757 = vadd.f32 %v2661, %v4709
        %v6758 = vadd.f32 %v2662, %v4710
        %v6759 = vadd.f32 %v2663, %v4711
        %v6760 = vadd.f32 %v2664, %v4712
        %v6761 = vadd.f32 %v2665, %v4713
        %v6762 = vadd.f32 %v2666, %v4714
        %v6763 = vadd.f32 %v2667, %v4715
        %v6764 = vadd.f32 %v2668, %v4716
        %v6765 = vadd.f32 %v2669, %v4717
        %v6766 = vadd.f32 %v2670, %v4718
        %v6767 = vadd.f32 %v2671, %v4719
        %v6768 = vadd.f32 %v2672, %v4720
        %v6769 = vadd.f32 %v2673, %v4721
        %v6770 = vadd.f32 %v2674, %v4722
        %v6771 = vadd.f32 %v2675, %v4723
        %v6772 = vadd.f32 %v2676, %v4724
        %v6773 = vadd.f32 %v2677, %v4725
        %v6774 = vadd.f32 %v2678, %v4726
        %v6775 = vadd.f32 %v2679, %v4727
        %v6776 = vadd.f32 %v2680, %v4728
        %v6777 = vadd.f32 %v2681, %v4729
        %v6778 = vadd.f32 %v2682, %v4730
        %v6779 = vadd.f32 %v2683, %v4731
        %v6780 = vadd.f32 %v2684, %v4732
        %v6781 = vadd.f32 %v2685, %v4733
        %v6782 = vadd.f32 %v2686, %v4734
        %v6783 = vadd.f32 %v2687, %v4735
        %v6784 = vadd.f32 %v2688, %v4736
        %v6785 = vadd.f32 %v2689, %v4737
        %v6786 = vadd.f32 %v2690, %v4738
        %v6787 = vadd.f32 %v2691, %v4739
        %v6788 = vadd.f32 %v2692, %v4740
        %v6789 = vadd.f32 %v2693, %v4741
        %v6790 = vadd.f32 %v2694, %v4742
        %v6791 = vadd.f32 %v2695, %v4743
        %v6792 = vadd.f32 %v2696, %v4744
        %v6793 = vadd.f32 %v2697, %v4745
        %v6794 = vadd.f32 %v2698, %v4746
        %v6795 = vadd.f32 %v2699, %v4747
        %v6796 = vadd.f32 %v2700, %v4748
        %v6797 = vadd.f32 %v2701, %v4749
        %v6798 = vadd.f32 %v2702, %v4750
        %v6799 = vadd.f32 %v2703, %v4751
        %v6800 = vadd.f32 %v2704, %v4752
        %v6801 = vadd.f32 %v2705, %v4753
        %v6802 = vadd.f32 %v2706, %v4754
        %v6803 = vadd.f32 %v2707, %v4755
        %v6804 = vadd.f32 %v2708, %v4756
        %v6805 = vadd.f32 %v2709, %v4757
        %v6806 = vadd.f32 %v2710, %v4758
        %v6807 = vadd.f32 %v2711, %v4759
        %v6808 = vadd.f32 %v2712, %v4760
        %v6809 = vadd.f32 %v2713, %v4761
        %v6810 = vadd.f32 %v2714, %v4762
        %v6811 = vadd.f32 %v2715, %v4763
        %v6812 = vadd.f32 %v2716, %v4764
        %v6813 = vadd.f32 %v2717, %v4765
        %v6814 = vadd.f32 %v2718, %v4766
        %v6815 = vadd.f32 %v2719, %v4767
        %v6816 = vadd.f32 %v2720, %v4768
        %v6817 = vadd.f32 %v2721, %v4769
        %v6818 = vadd.f32 %v2722, %v4770
        %v6819 = vadd.f32 %v2723, %v4771
        %v6820 = vadd.f32 %v2724, %v4772
        %v6821 = vadd.f32 %v2725, %v4773
        %v6822 = vadd.f32 %v2726, %v4774
        %v6823 = vadd.f32 %v2727, %v4775
        %v6824 = vadd.f32 %v2728, %v4776
        %v6825 = vadd.f32 %v2729, %v4777
        %v6826 = vadd.f32 %v2730, %v4778
        %v6827 = vadd.f32 %v2731, %v4779
        %v6828 = vadd.f32 %v2732, %v4780
        %v6829 = vadd.f32 %v2733, %v4781
        %v6830 = vadd.f32 %v2734, %v4782
        %v6831 = vadd.f32 %v2735, %v4783
        %v6832 = vadd.f32 %v2736, %v4784
        %v6833 = vadd.f32 %v2737, %v4785
        %v6834 = vadd.f32 %v2738, %v4786
        %v6835 = vadd.f32 %v2739, %v4787
        %v6836 = vadd.f32 %v2740, %v4788
        %v6837 = vadd.f32 %v2741, %v4789
        %v6838 = vadd.f32 %v2742, %v4790
        %v6839 = vadd.f32 %v2743, %v4791
        %v6840 = vadd.f32 %v2744, %v4792
        %v6841 = vadd.f32 %v2745, %v4793
        %v6842 = vadd.f32 %v2746, %v4794
        %v6843 = vadd.f32 %v2747, %v4795
        %v6844 = vadd.f32 %v2748, %v4796
        %v6845 = vadd.f32 %v2749, %v4797
        %v6846 = vadd.f32 %v2750, %v4798
        %v6847 = vadd.f32 %v2751, %v4799
        %v6848 = vadd.f32 %v2752, %v4800
        %v6849 = vadd.f32 %v2753, %v4801
        %v6850 = vadd.f32 %v2754, %v4802
        %v6851 = vadd.f32 %v2755, %v4803
        %v6852 = vadd.f32 %v2756, %v4804
        %v6853 = vadd.f32 %v2757, %v4805
        %v6854 = vadd.f32 %v2758, %v4806
        %v6855 = vadd.f32 %v2759, %v4807
        %v6856 = vadd.f32 %v2760, %v4808
        %v6857 = vadd.f32 %v2761, %v4809
        %v6858 = vadd.f32 %v2762, %v4810
        %v6859 = vadd.f32 %v2763, %v4811
        %v6860 = vadd.f32 %v2764, %v4812
        %v6861 = vadd.f32 %v2765, %v4813
        %v6862 = vadd.f32 %v2766, %v4814
        %v6863 = vadd.f32 %v2767, %v4815
        %v6864 = vadd.f32 %v2768, %v4816
        %v6865 = vadd.f32 %v2769, %v4817
        %v6866 = vadd.f32 %v2770, %v4818
        %v6867 = vadd.f32 %v2771, %v4819
        %v6868 = vadd.f32 %v2772, %v4820
        %v6869 = vadd.f32 %v2773, %v4821
        %v6870 = vadd.f32 %v2774, %v4822
        %v6871 = vadd.f32 %v2775, %v4823
        %v6872 = vadd.f32 %v2776, %v4824
        %v6873 = vadd.f32 %v2777, %v4825
        %v6874 = vadd.f32 %v2778, %v4826
        %v6875 = vadd.f32 %v2779, %v4827
        %v6876 = vadd.f32 %v2780, %v4828
        %v6877 = vadd.f32 %v2781, %v4829
        %v6878 = vadd.f32 %v2782, %v4830
        %v6879 = vadd.f32 %v2783, %v4831
        %v6880 = vadd.f32 %v2784, %v4832
        %v6881 = vadd.f32 %v2785, %v4833
        %v6882 = vadd.f32 %v2786, %v4834
        %v6883 = vadd.f32 %v2787, %v4835
        %v6884 = vadd.f32 %v2788, %v4836
        %v6885 = vadd.f32 %v2789, %v4837
        %v6886 = vadd.f32 %v2790, %v4838
        %v6887 = vadd.f32 %v2791, %v4839
        %v6888 = vadd.f32 %v2792, %v4840
        %v6889 = vadd.f32 %v2793, %v4841
        %v6890 = vadd.f32 %v2794, %v4842
        %v6891 = vadd.f32 %v2795, %v4843
        %v6892 = vadd.f32 %v2796, %v4844
        %v6893 = vadd.f32 %v2797, %v4845
        %v6894 = vadd.f32 %v2798, %v4846
        %v6895 = vadd.f32 %v2799, %v4847
        %v6896 = vadd.f32 %v2800, %v4848
        %v6897 = vadd.f32 %v2801, %v4849
        %v6898 = vadd.f32 %v2802, %v4850
        %v6899 = vadd.f32 %v2803, %v4851
        %v6900 = vadd.f32 %v2804, %v4852
        %v6901 = vadd.f32 %v2805, %v4853
        %v6902 = vadd.f32 %v2806, %v4854
        %v6903 = vadd.f32 %v2807, %v4855
        %v6904 = vadd.f32 %v2808, %v4856
        %v6905 = vadd.f32 %v2809, %v4857
        %v6906 = vadd.f32 %v2810, %v4858
        %v6907 = vadd.f32 %v2811, %v4859
        %v6908 = vadd.f32 %v2812, %v4860
        %v6909 = vadd.f32 %v2813, %v4861
        %v6910 = vadd.f32 %v2814, %v4862
        %v6911 = vadd.f32 %v2815, %v4863
        %v6912 = vadd.f32 %v2816, %v4864
        %v6913 = vadd.f32 %v2817, %v4865
        %v6914 = vadd.f32 %v2818, %v4866
        %v6915 = vadd.f32 %v2819, %v4867
        %v6916 = vadd.f32 %v2820, %v4868
        %v6917 = vadd.f32 %v2821, %v4869
        %v6918 = vadd.f32 %v2822, %v4870
        %v6919 = vadd.f32 %v2823, %v4871
        %v6920 = vadd.f32 %v2824, %v4872
        %v6921 = vadd.f32 %v2825, %v4873
        %v6922 = vadd.f32 %v2826, %v4874
        %v6923 = vadd.f32 %v2827, %v4875
        %v6924 = vadd.f32 %v2828, %v4876
        %v6925 = vadd.f32 %v2829, %v4877
        %v6926 = vadd.f32 %v2830, %v4878
        %v6927 = vadd.f32 %v2831, %v4879
        %v6928 = vadd.f32 %v2832, %v4880
        %v6929 = vadd.f32 %v2833, %v4881
        %v6930 = vadd.f32 %v2834, %v4882
        %v6931 = vadd.f32 %v2835, %v4883
        %v6932 = vadd.f32 %v2836, %v4884
        %v6933 = vadd.f32 %v2837, %v4885
        %v6934 = vadd.f32 %v2838, %v4886
        %v6935 = vadd.f32 %v2839, %v4887
        %v6936 = vadd.f32 %v2840, %v4888
        %v6937 = vadd.f32 %v2841, %v4889
        %v6938 = vadd.f32 %v2842, %v4890
        %v6939 = vadd.f32 %v2843, %v4891
        %v6940 = vadd.f32 %v2844, %v4892
        %v6941 = vadd.f32 %v2845, %v4893
        %v6942 = vadd.f32 %v2846, %v4894
        %v6943 = vadd.f32 %v2847, %v4895
        %v6944 = vadd.f32 %v2848, %v4896
        %v6945 = vadd.f32 %v2849, %v4897
        %v6946 = vadd.f32 %v2850, %v4898
        %v6947 = vadd.f32 %v2851, %v4899
        %v6948 = vadd.f32 %v2852, %v4900
        %v6949 = vadd.f32 %v2853, %v4901
        %v6950 = vadd.f32 %v2854, %v4902
        %v6951 = vadd.f32 %v2855, %v4903
        %v6952 = vadd.f32 %v2856, %v4904
        %v6953 = vadd.f32 %v2857, %v4905
        %v6954 = vadd.f32 %v2858, %v4906
        %v6955 = vadd.f32 %v2859, %v4907
        %v6956 = vadd.f32 %v2860, %v4908
        %v6957 = vadd.f32 %v2861, %v4909
        %v6958 = vadd.f32 %v2862, %v4910
        %v6959 = vadd.f32 %v2863, %v4911
        %v6960 = vadd.f32 %v2864, %v4912
        %v6961 = vadd.f32 %v2865, %v4913
        %v6962 = vadd.f32 %v2866, %v4914
        %v6963 = vadd.f32 %v2867, %v4915
        %v6964 = vadd.f32 %v2868, %v4916
        %v6965 = vadd.f32 %v2869, %v4917
        %v6966 = vadd.f32 %v2870, %v4918
        %v6967 = vadd.f32 %v2871, %v4919
        %v6968 = vadd.f32 %v2872, %v4920
        %v6969 = vadd.f32 %v2873, %v4921
        %v6970 = vadd.f32 %v2874, %v4922
        %v6971 = vadd.f32 %v2875, %v4923
        %v6972 = vadd.f32 %v2876, %v4924
        %v6973 = vadd.f32 %v2877, %v4925
        %v6974 = vadd.f32 %v2878, %v4926
        %v6975 = vadd.f32 %v2879, %v4927
        %v6976 = vadd.f32 %v2880, %v4928
        %v6977 = vadd.f32 %v2881, %v4929
        %v6978 = vadd.f32 %v2882, %v4930
        %v6979 = vadd.f32 %v2883, %v4931
        %v6980 = vadd.f32 %v2884, %v4932
        %v6981 = vadd.f32 %v2885, %v4933
        %v6982 = vadd.f32 %v2886, %v4934
        %v6983 = vadd.f32 %v2887, %v4935
        %v6984 = vadd.f32 %v2888, %v4936
        %v6985 = vadd.f32 %v2889, %v4937
        %v6986 = vadd.f32 %v2890, %v4938
        %v6987 = vadd.f32 %v2891, %v4939
        %v6988 = vadd.f32 %v2892, %v4940
        %v6989 = vadd.f32 %v2893, %v4941
        %v6990 = vadd.f32 %v2894, %v4942
        %v6991 = vadd.f32 %v2895, %v4943
        %v6992 = vadd.f32 %v2896, %v4944
        %v6993 = vadd.f32 %v2897, %v4945
        %v6994 = vadd.f32 %v2898, %v4946
        %v6995 = vadd.f32 %v2899, %v4947
        %v6996 = vadd.f32 %v2900, %v4948
        %v6997 = vadd.f32 %v2901, %v4949
        %v6998 = vadd.f32 %v2902, %v4950
        %v6999 = vadd.f32 %v2903, %v4951
        %v7000 = vadd.f32 %v2904, %v4952
        %v7001 = vadd.f32 %v2905, %v4953
        %v7002 = vadd.f32 %v2906, %v4954
        %v7003 = vadd.f32 %v2907, %v4955
        %v7004 = vadd.f32 %v2908, %v4956
        %v7005 = vadd.f32 %v2909, %v4957
        %v7006 = vadd.f32 %v2910, %v4958
        %v7007 = vadd.f32 %v2911, %v4959
        %v7008 = vadd.f32 %v2912, %v4960
        %v7009 = vadd.f32 %v2913, %v4961
        %v7010 = vadd.f32 %v2914, %v4962
        %v7011 = vadd.f32 %v2915, %v4963
        %v7012 = vadd.f32 %v2916, %v4964
        %v7013 = vadd.f32 %v2917, %v4965
        %v7014 = vadd.f32 %v2918, %v4966
        %v7015 = vadd.f32 %v2919, %v4967
        %v7016 = vadd.f32 %v2920, %v4968
        %v7017 = vadd.f32 %v2921, %v4969
        %v7018 = vadd.f32 %v2922, %v4970
        %v7019 = vadd.f32 %v2923, %v4971
        %v7020 = vadd.f32 %v2924, %v4972
        %v7021 = vadd.f32 %v2925, %v4973
        %v7022 = vadd.f32 %v2926, %v4974
        %v7023 = vadd.f32 %v2927, %v4975
        %v7024 = vadd.f32 %v2928, %v4976
        %v7025 = vadd.f32 %v2929, %v4977
        %v7026 = vadd.f32 %v2930, %v4978
        %v7027 = vadd.f32 %v2931, %v4979
        %v7028 = vadd.f32 %v2932, %v4980
        %v7029 = vadd.f32 %v2933, %v4981
        %v7030 = vadd.f32 %v2934, %v4982
        %v7031 = vadd.f32 %v2935, %v4983
        %v7032 = vadd.f32 %v2936, %v4984
        %v7033 = vadd.f32 %v2937, %v4985
        %v7034 = vadd.f32 %v2938, %v4986
        %v7035 = vadd.f32 %v2939, %v4987
        %v7036 = vadd.f32 %v2940, %v4988
        %v7037 = vadd.f32 %v2941, %v4989
        %v7038 = vadd.f32 %v2942, %v4990
        %v7039 = vadd.f32 %v2943, %v4991
        %v7040 = vadd.f32 %v2944, %v4992
        %v7041 = vadd.f32 %v2945, %v4993
        %v7042 = vadd.f32 %v2946, %v4994
        %v7043 = vadd.f32 %v2947, %v4995
        %v7044 = vadd.f32 %v2948, %v4996
        %v7045 = vadd.f32 %v2949, %v4997
        %v7046 = vadd.f32 %v2950, %v4998
        %v7047 = vadd.f32 %v2951, %v4999
        %v7048 = vadd.f32 %v2952, %v5000
        %v7049 = vadd.f32 %v2953, %v5001
        %v7050 = vadd.f32 %v2954, %v5002
        %v7051 = vadd.f32 %v2955, %v5003
        %v7052 = vadd.f32 %v2956, %v5004
        %v7053 = vadd.f32 %v2957, %v5005
        %v7054 = vadd.f32 %v2958, %v5006
        %v7055 = vadd.f32 %v2959, %v5007
        %v7056 = vadd.f32 %v2960, %v5008
        %v7057 = vadd.f32 %v2961, %v5009
        %v7058 = vadd.f32 %v2962, %v5010
        %v7059 = vadd.f32 %v2963, %v5011
        %v7060 = vadd.f32 %v2964, %v5012
        %v7061 = vadd.f32 %v2965, %v5013
        %v7062 = vadd.f32 %v2966, %v5014
        %v7063 = vadd.f32 %v2967, %v5015
        %v7064 = vadd.f32 %v2968, %v5016
        %v7065 = vadd.f32 %v2969, %v5017
        %v7066 = vadd.f32 %v2970, %v5018
        %v7067 = vadd.f32 %v2971, %v5019
        %v7068 = vadd.f32 %v2972, %v5020
        %v7069 = vadd.f32 %v2973, %v5021
        %v7070 = vadd.f32 %v2974, %v5022
        %v7071 = vadd.f32 %v2975, %v5023
        %v7072 = vadd.f32 %v2976, %v5024
        %v7073 = vadd.f32 %v2977, %v5025
        %v7074 = vadd.f32 %v2978, %v5026
        %v7075 = vadd.f32 %v2979, %v5027
        %v7076 = vadd.f32 %v2980, %v5028
        %v7077 = vadd.f32 %v2981, %v5029
        %v7078 = vadd.f32 %v2982, %v5030
        %v7079 = vadd.f32 %v2983, %v5031
        %v7080 = vadd.f32 %v2984, %v5032
        %v7081 = vadd.f32 %v2985, %v5033
        %v7082 = vadd.f32 %v2986, %v5034
        %v7083 = vadd.f32 %v2987, %v5035
        %v7084 = vadd.f32 %v2988, %v5036
        %v7085 = vadd.f32 %v2989, %v5037
        %v7086 = vadd.f32 %v2990, %v5038
        %v7087 = vadd.f32 %v2991, %v5039
        %v7088 = vadd.f32 %v2992, %v5040
        %v7089 = vadd.f32 %v2993, %v5041
        %v7090 = vadd.f32 %v2994, %v5042
        %v7091 = vadd.f32 %v2995, %v5043
        %v7092 = vadd.f32 %v2996, %v5044
        %v7093 = vadd.f32 %v2997, %v5045
        %v7094 = vadd.f32 %v2998, %v5046
        %v7095 = vadd.f32 %v2999, %v5047
        %v7096 = vadd.f32 %v3000, %v5048
        %v7097 = vadd.f32 %v3001, %v5049
        %v7098 = vadd.f32 %v3002, %v5050
        %v7099 = vadd.f32 %v3003, %v5051
        %v7100 = vadd.f32 %v3004, %v5052
        %v7101 = vadd.f32 %v3005, %v5053
        %v7102 = vadd.f32 %v3006, %v5054
        %v7103 = vadd.f32 %v3007, %v5055
        %v7104 = vadd.f32 %v3008, %v5056
        %v7105 = vadd.f32 %v3009, %v5057
        %v7106 = vadd.f32 %v3010, %v5058
        %v7107 = vadd.f32 %v3011, %v5059
        %v7108 = vadd.f32 %v3012, %v5060
        %v7109 = vadd.f32 %v3013, %v5061
        %v7110 = vadd.f32 %v3014, %v5062
        %v7111 = vadd.f32 %v3015, %v5063
        %v7112 = vadd.f32 %v3016, %v5064
        %v7113 = vadd.f32 %v3017, %v5065
        %v7114 = vadd.f32 %v3018, %v5066
        %v7115 = vadd.f32 %v3019, %v5067
        %v7116 = vadd.f32 %v3020, %v5068
        %v7117 = vadd.f32 %v3021, %v5069
        %v7118 = vadd.f32 %v3022, %v5070
        %v7119 = vadd.f32 %v3023, %v5071
        %v7120 = vadd.f32 %v3024, %v5072
        %v7121 = vadd.f32 %v3025, %v5073
        %v7122 = vadd.f32 %v3026, %v5074
        %v7123 = vadd.f32 %v3027, %v5075
        %v7124 = vadd.f32 %v3028, %v5076
        %v7125 = vadd.f32 %v3029, %v5077
        %v7126 = vadd.f32 %v3030, %v5078
        %v7127 = vadd.f32 %v3031, %v5079
        %v7128 = vadd.f32 %v3032, %v5080
        %v7129 = vadd.f32 %v3033, %v5081
        %v7130 = vadd.f32 %v3034, %v5082
        %v7131 = vadd.f32 %v3035, %v5083
        %v7132 = vadd.f32 %v3036, %v5084
        %v7133 = vadd.f32 %v3037, %v5085
        %v7134 = vadd.f32 %v3038, %v5086
        %v7135 = vadd.f32 %v3039, %v5087
        %v7136 = vadd.f32 %v3040, %v5088
        %v7137 = vadd.f32 %v3041, %v5089
        %v7138 = vadd.f32 %v3042, %v5090
        %v7139 = vadd.f32 %v3043, %v5091
        %v7140 = vadd.f32 %v3044, %v5092
        %v7141 = vadd.f32 %v3045, %v5093
        %v7142 = vadd.f32 %v3046, %v5094
        %v7143 = vadd.f32 %v3047, %v5095
        %v7144 = vadd.f32 %v3048, %v5096
        %v7145 = vadd.f32 %v3049, %v5097
        %v7146 = vadd.f32 %v3050, %v5098
        %v7147 = vadd.f32 %v3051, %v5099
        %v7148 = vadd.f32 %v3052, %v5100
        %v7149 = vadd.f32 %v3053, %v5101
        %v7150 = vadd.f32 %v3054, %v5102
        %v7151 = vadd.f32 %v3055, %v5103
        %v7152 = vadd.f32 %v3056, %v5104
        %v7153 = vadd.f32 %v3057, %v5105
        %v7154 = vadd.f32 %v3058, %v5106
        %v7155 = vadd.f32 %v3059, %v5107
        %v7156 = vadd.f32 %v3060, %v5108
        %v7157 = vadd.f32 %v3061, %v5109
        %v7158 = vadd.f32 %v3062, %v5110
        %v7159 = vadd.f32 %v3063, %v5111
        %v7160 = vadd.f32 %v3064, %v5112
        %v7161 = vadd.f32 %v3065, %v5113
        %v7162 = vadd.f32 %v3066, %v5114
        %v7163 = vadd.f32 %v3067, %v5115
        %v7164 = vadd.f32 %v3068, %v5116
        %v7165 = vadd.f32 %v3069, %v5117
        %v7166 = vadd.f32 %v3070, %v5118
        %v7167 = vadd.f32 %v3071, %v5119
        %v7168 = vadd.f32 %v3072, %v5120
        %v7169 = vadd.f32 %v3073, %v5121
        %v7170 = vadd.f32 %v3074, %v5122
        %v7171 = vadd.f32 %v3075, %v5123
        %v7172 = vadd.f32 %v3076, %v5124
        %v7173 = vadd.f32 %v3077, %v5125
        %v7174 = vadd.f32 %v3078, %v5126
        %v7175 = vadd.f32 %v3079, %v5127
        %v7176 = vadd.f32 %v3080, %v5128
        %v7177 = vadd.f32 %v3081, %v5129
        %v7178 = vadd.f32 %v3082, %v5130
        %v7179 = vadd.f32 %v3083, %v5131
        %v7180 = vadd.f32 %v3084, %v5132
        %v7181 = vadd.f32 %v3085, %v5133
        %v7182 = vadd.f32 %v3086, %v5134
        %v7183 = vadd.f32 %v3087, %v5135
        %v7184 = vadd.f32 %v3088, %v5136
        %v7185 = vadd.f32 %v3089, %v5137
        %v7186 = vadd.f32 %v3090, %v5138
        %v7187 = vadd.f32 %v3091, %v5139
        %v7188 = vadd.f32 %v3092, %v5140
        %v7189 = vadd.f32 %v3093, %v5141
        %v7190 = vadd.f32 %v3094, %v5142
        %v7191 = vadd.f32 %v3095, %v5143
        %v7192 = vadd.f32 %v3096, %v5144
        %v7193 = vadd.f32 %v3097, %v5145
        %v7194 = vadd.f32 %v3098, %v5146
        %v7195 = vadd.f32 %v3099, %v5147
        %v7196 = vadd.f32 %v3100, %v5148
        %v7197 = vadd.f32 %v3101, %v5149
        %v7198 = vadd.f32 %v3102, %v5150
        %v7199 = vadd.f32 %v3103, %v5151
        %v7200 = vadd.f32 %v3104, %v5152
        %v7201 = vadd.f32 %v3105, %v5153
        %v7202 = vadd.f32 %v3106, %v5154
        %v7203 = vadd.f32 %v3107, %v5155
        %v7204 = vadd.f32 %v3108, %v5156
        %v7205 = vadd.f32 %v3109, %v5157
        %v7206 = vadd.f32 %v3110, %v5158
        %v7207 = vadd.f32 %v3111, %v5159
        %v7208 = vadd.f32 %v3112, %v5160
        %v7209 = vadd.f32 %v3113, %v5161
        %v7210 = vadd.f32 %v3114, %v5162
        %v7211 = vadd.f32 %v3115, %v5163
        %v7212 = vadd.f32 %v3116, %v5164
        %v7213 = vadd.f32 %v3117, %v5165
        %v7214 = vadd.f32 %v3118, %v5166
        %v7215 = vadd.f32 %v3119, %v5167
        %v7216 = vadd.f32 %v3120, %v5168
        %v7217 = vadd.f32 %v3121, %v5169
        %v7218 = vadd.f32 %v3122, %v5170
        %v7219 = vadd.f32 %v3123, %v5171
        %v7220 = vadd.f32 %v3124, %v5172
        %v7221 = vadd.f32 %v3125, %v5173
        %v7222 = vadd.f32 %v3126, %v5174
        %v7223 = vadd.f32 %v3127, %v5175
        %v7224 = vadd.f32 %v3128, %v5176
        %v7225 = vadd.f32 %v3129, %v5177
        %v7226 = vadd.f32 %v3130, %v5178
        %v7227 = vadd.f32 %v3131, %v5179
        %v7228 = vadd.f32 %v3132, %v5180
        %v7229 = vadd.f32 %v3133, %v5181
        %v7230 = vadd.f32 %v3134, %v5182
        %v7231 = vadd.f32 %v3135, %v5183
        %v7232 = vadd.f32 %v3136, %v5184
        %v7233 = vadd.f32 %v3137, %v5185
        %v7234 = vadd.f32 %v3138, %v5186
        %v7235 = vadd.f32 %v3139, %v5187
        %v7236 = vadd.f32 %v3140, %v5188
        %v7237 = vadd.f32 %v3141, %v5189
        %v7238 = vadd.f32 %v3142, %v5190
        %v7239 = vadd.f32 %v3143, %v5191
        %v7240 = vadd.f32 %v3144, %v5192
        %v7241 = vadd.f32 %v3145, %v5193
        %v7242 = vadd.f32 %v3146, %v5194
        %v7243 = vadd.f32 %v3147, %v5195
        %v7244 = vadd.f32 %v3148, %v5196
        %v7245 = vadd.f32 %v3149, %v5197
        %v7246 = vadd.f32 %v3150, %v5198
        %v7247 = vadd.f32 %v3151, %v5199
        %v7248 = vadd.f32 %v3152, %v5200
        %v7249 = vadd.f32 %v3153, %v5201
        %v7250 = vadd.f32 %v3154, %v5202
        %v7251 = vadd.f32 %v3155, %v5203
        %v7252 = vadd.f32 %v3156, %v5204
        %v7253 = vadd.f32 %v3157, %v5205
        %v7254 = vadd.f32 %v3158, %v5206
        %v7255 = vadd.f32 %v3159, %v5207
        %v7256 = vadd.f32 %v3160, %v5208
        %v7257 = vadd.f32 %v3161, %v5209
        %v7258 = vadd.f32 %v3162, %v5210
        %v7259 = vadd.f32 %v3163, %v5211
        %v7260 = vadd.f32 %v3164, %v5212
        %v7261 = vadd.f32 %v3165, %v5213
        %v7262 = vadd.f32 %v3166, %v5214
        %v7263 = vadd.f32 %v3167, %v5215
        %v7264 = vadd.f32 %v3168, %v5216
        %v7265 = vadd.f32 %v3169, %v5217
        %v7266 = vadd.f32 %v3170, %v5218
        %v7267 = vadd.f32 %v3171, %v5219
        %v7268 = vadd.f32 %v3172, %v5220
        %v7269 = vadd.f32 %v3173, %v5221
        %v7270 = vadd.f32 %v3174, %v5222
        %v7271 = vadd.f32 %v3175, %v5223
        %v7272 = vadd.f32 %v3176, %v5224
        %v7273 = vadd.f32 %v3177, %v5225
        %v7274 = vadd.f32 %v3178, %v5226
        %v7275 = vadd.f32 %v3179, %v5227
        %v7276 = vadd.f32 %v3180, %v5228
        %v7277 = vadd.f32 %v3181, %v5229
        %v7278 = vadd.f32 %v3182, %v5230
        %v7279 = vadd.f32 %v3183, %v5231
        %v7280 = vadd.f32 %v3184, %v5232
        %v7281 = vadd.f32 %v3185, %v5233
        %v7282 = vadd.f32 %v3186, %v5234
        %v7283 = vadd.f32 %v3187, %v5235
        %v7284 = vadd.f32 %v3188, %v5236
        %v7285 = vadd.f32 %v3189, %v5237
        %v7286 = vadd.f32 %v3190, %v5238
        %v7287 = vadd.f32 %v3191, %v5239
        %v7288 = vadd.f32 %v3192, %v5240
        %v7289 = vadd.f32 %v3193, %v5241
        %v7290 = vadd.f32 %v3194, %v5242
        %v7291 = vadd.f32 %v3195, %v5243
        %v7292 = vadd.f32 %v3196, %v5244
        %v7293 = vadd.f32 %v3197, %v5245
        %v7294 = vadd.f32 %v3198, %v5246
        %v7295 = vadd.f32 %v3199, %v5247
        %v7296 = vadd.f32 %v3200, %v5248
        %v7297 = vadd.f32 %v3201, %v5249
        %v7298 = vadd.f32 %v3202, %v5250
        %v7299 = vadd.f32 %v3203, %v5251
        %v7300 = vadd.f32 %v3204, %v5252
        %v7301 = vadd.f32 %v3205, %v5253
        %v7302 = vadd.f32 %v3206, %v5254
        %v7303 = vadd.f32 %v3207, %v5255
        %v7304 = vadd.f32 %v3208, %v5256
        %v7305 = vadd.f32 %v3209, %v5257
        %v7306 = vadd.f32 %v3210, %v5258
        %v7307 = vadd.f32 %v3211, %v5259
        %v7308 = vadd.f32 %v3212, %v5260
        %v7309 = vadd.f32 %v3213, %v5261
        %v7310 = vadd.f32 %v3214, %v5262
        %v7311 = vadd.f32 %v3215, %v5263
        %v7312 = vadd.f32 %v3216, %v5264
        %v7313 = vadd.f32 %v3217, %v5265
        %v7314 = vadd.f32 %v3218, %v5266
        %v7315 = vadd.f32 %v3219, %v5267
        %v7316 = vadd.f32 %v3220, %v5268
        %v7317 = vadd.f32 %v3221, %v5269
        %v7318 = vadd.f32 %v3222, %v5270
        %v7319 = vadd.f32 %v3223, %v5271
        %v7320 = vadd.f32 %v3224, %v5272
        %v7321 = vadd.f32 %v3225, %v5273
        %v7322 = vadd.f32 %v3226, %v5274
        %v7323 = vadd.f32 %v3227, %v5275
        %v7324 = vadd.f32 %v3228, %v5276
        %v7325 = vadd.f32 %v3229, %v5277
        %v7326 = vadd.f32 %v3230, %v5278
        %v7327 = vadd.f32 %v3231, %v5279
        %v7328 = vadd.f32 %v3232, %v5280
        %v7329 = vadd.f32 %v3233, %v5281
        %v7330 = vadd.f32 %v3234, %v5282
        %v7331 = vadd.f32 %v3235, %v5283
        %v7332 = vadd.f32 %v3236, %v5284
        %v7333 = vadd.f32 %v3237, %v5285
        %v7334 = vadd.f32 %v3238, %v5286
        %v7335 = vadd.f32 %v3239, %v5287
        %v7336 = vadd.f32 %v3240, %v5288
        %v7337 = vadd.f32 %v3241, %v5289
        %v7338 = vadd.f32 %v3242, %v5290
        %v7339 = vadd.f32 %v3243, %v5291
        %v7340 = vadd.f32 %v3244, %v5292
        %v7341 = vadd.f32 %v3245, %v5293
        %v7342 = vadd.f32 %v3246, %v5294
        %v7343 = vadd.f32 %v3247, %v5295
        %v7344 = vadd.f32 %v3248, %v5296
        %v7345 = vadd.f32 %v3249, %v5297
        %v7346 = vadd.f32 %v3250, %v5298
        %v7347 = vadd.f32 %v3251, %v5299
        %v7348 = vadd.f32 %v3252, %v5300
        %v7349 = vadd.f32 %v3253, %v5301
        %v7350 = vadd.f32 %v3254, %v5302
        %v7351 = vadd.f32 %v3255, %v5303
        %v7352 = vadd.f32 %v3256, %v5304
        %v7353 = vadd.f32 %v3257, %v5305
        %v7354 = vadd.f32 %v3258, %v5306
        %v7355 = vadd.f32 %v3259, %v5307
        %v7356 = vadd.f32 %v3260, %v5308
        %v7357 = vadd.f32 %v3261, %v5309
        %v7358 = vadd.f32 %v3262, %v5310
        %v7359 = vadd.f32 %v3263, %v5311
        %v7360 = vadd.f32 %v3264, %v5312
        %v7361 = vadd.f32 %v3265, %v5313
        %v7362 = vadd.f32 %v3266, %v5314
        %v7363 = vadd.f32 %v3267, %v5315
        %v7364 = vadd.f32 %v3268, %v5316
        %v7365 = vadd.f32 %v3269, %v5317
        %v7366 = vadd.f32 %v3270, %v5318
        %v7367 = vadd.f32 %v3271, %v5319
        %v7368 = vadd.f32 %v3272, %v5320
        %v7369 = vadd.f32 %v3273, %v5321
        %v7370 = vadd.f32 %v3274, %v5322
        %v7371 = vadd.f32 %v3275, %v5323
        %v7372 = vadd.f32 %v3276, %v5324
        %v7373 = vadd.f32 %v3277, %v5325
        %v7374 = vadd.f32 %v3278, %v5326
        %v7375 = vadd.f32 %v3279, %v5327
        %v7376 = vadd.f32 %v3280, %v5328
        %v7377 = vadd.f32 %v3281, %v5329
        %v7378 = vadd.f32 %v3282, %v5330
        %v7379 = vadd.f32 %v3283, %v5331
        %v7380 = vadd.f32 %v3284, %v5332
        %v7381 = vadd.f32 %v3285, %v5333
        %v7382 = vadd.f32 %v3286, %v5334
        %v7383 = vadd.f32 %v3287, %v5335
        %v7384 = vadd.f32 %v3288, %v5336
        %v7385 = vadd.f32 %v3289, %v5337
        %v7386 = vadd.f32 %v3290, %v5338
        %v7387 = vadd.f32 %v3291, %v5339
        %v7388 = vadd.f32 %v3292, %v5340
        %v7389 = vadd.f32 %v3293, %v5341
        %v7390 = vadd.f32 %v3294, %v5342
        %v7391 = vadd.f32 %v3295, %v5343
        %v7392 = vadd.f32 %v3296, %v5344
        %v7393 = vadd.f32 %v3297, %v5345
        %v7394 = vadd.f32 %v3298, %v5346
        %v7395 = vadd.f32 %v3299, %v5347
        %v7396 = vadd.f32 %v3300, %v5348
        %v7397 = vadd.f32 %v3301, %v5349
        %v7398 = vadd.f32 %v3302, %v5350
        %v7399 = vadd.f32 %v3303, %v5351
        %v7400 = vadd.f32 %v3304, %v5352
        %v7401 = vadd.f32 %v3305, %v5353
        %v7402 = vadd.f32 %v3306, %v5354
        %v7403 = vadd.f32 %v3307, %v5355
        %v7404 = vadd.f32 %v3308, %v5356
        %v7405 = vadd.f32 %v3309, %v5357
        %v7406 = vadd.f32 %v3310, %v5358
        %v7407 = vadd.f32 %v3311, %v5359
        %v7408 = vadd.f32 %v3312, %v5360
        %v7409 = vadd.f32 %v3313, %v5361
        %v7410 = vadd.f32 %v3314, %v5362
        %v7411 = vadd.f32 %v3315, %v5363
        %v7412 = vadd.f32 %v3316, %v5364
        %v7413 = vadd.f32 %v3317, %v5365
        %v7414 = vadd.f32 %v3318, %v5366
        %v7415 = vadd.f32 %v3319, %v5367
        %v7416 = vadd.f32 %v3320, %v5368
        %v7417 = vadd.f32 %v3321, %v5369
        %v7418 = vadd.f32 %v3322, %v5370
        %v7419 = vadd.f32 %v3323, %v5371
        %v7420 = vadd.f32 %v3324, %v5372
        %v7421 = vadd.f32 %v3325, %v5373
        %v7422 = vadd.f32 %v3326, %v5374
        %v7423 = vadd.f32 %v3327, %v5375
        %v7424 = vadd.f32 %v3328, %v5376
        %v7425 = vadd.f32 %v3329, %v5377
        %v7426 = vadd.f32 %v3330, %v5378
        %v7427 = vadd.f32 %v3331, %v5379
        %v7428 = vadd.f32 %v3332, %v5380
        %v7429 = vadd.f32 %v3333, %v5381
        %v7430 = vadd.f32 %v3334, %v5382
        %v7431 = vadd.f32 %v3335, %v5383
        %v7432 = vadd.f32 %v3336, %v5384
        %v7433 = vadd.f32 %v3337, %v5385
        %v7434 = vadd.f32 %v3338, %v5386
        %v7435 = vadd.f32 %v3339, %v5387
        %v7436 = vadd.f32 %v3340, %v5388
        %v7437 = vadd.f32 %v3341, %v5389
        %v7438 = vadd.f32 %v3342, %v5390
        %v7439 = vadd.f32 %v3343, %v5391
        %v7440 = vadd.f32 %v3344, %v5392
        %v7441 = vadd.f32 %v3345, %v5393
        %v7442 = vadd.f32 %v3346, %v5394
        %v7443 = vadd.f32 %v3347, %v5395
        %v7444 = vadd.f32 %v3348, %v5396
        %v7445 = vadd.f32 %v3349, %v5397
        %v7446 = vadd.f32 %v3350, %v5398
        %v7447 = vadd.f32 %v3351, %v5399
        %v7448 = vadd.f32 %v3352, %v5400
        %v7449 = vadd.f32 %v3353, %v5401
        %v7450 = vadd.f32 %v3354, %v5402
        %v7451 = vadd.f32 %v3355, %v5403
        %v7452 = vadd.f32 %v3356, %v5404
        %v7453 = vadd.f32 %v3357, %v5405
        %v7454 = vadd.f32 %v3358, %v5406
        %v7455 = vadd.f32 %v3359, %v5407
        %v7456 = vadd.f32 %v3360, %v5408
        %v7457 = vadd.f32 %v3361, %v5409
        %v7458 = vadd.f32 %v3362, %v5410
        %v7459 = vadd.f32 %v3363, %v5411
        %v7460 = vadd.f32 %v3364, %v5412
        %v7461 = vadd.f32 %v3365, %v5413
        %v7462 = vadd.f32 %v3366, %v5414
        %v7463 = vadd.f32 %v3367, %v5415
        %v7464 = vadd.f32 %v3368, %v5416
        %v7465 = vadd.f32 %v3369, %v5417
        %v7466 = vadd.f32 %v3370, %v5418
        %v7467 = vadd.f32 %v3371, %v5419
        %v7468 = vadd.f32 %v3372, %v5420
        %v7469 = vadd.f32 %v3373, %v5421
        %v7470 = vadd.f32 %v3374, %v5422
        %v7471 = vadd.f32 %v3375, %v5423
        %v7472 = vadd.f32 %v3376, %v5424
        %v7473 = vadd.f32 %v3377, %v5425
        %v7474 = vadd.f32 %v3378, %v5426
        %v7475 = vadd.f32 %v3379, %v5427
        %v7476 = vadd.f32 %v3380, %v5428
        %v7477 = vadd.f32 %v3381, %v5429
        %v7478 = vadd.f32 %v3382, %v5430
        %v7479 = vadd.f32 %v3383, %v5431
        %v7480 = vadd.f32 %v3384, %v5432
        %v7481 = vadd.f32 %v3385, %v5433
        %v7482 = vadd.f32 %v3386, %v5434
        %v7483 = vadd.f32 %v3387, %v5435
        %v7484 = vadd.f32 %v3388, %v5436
        %v7485 = vadd.f32 %v3389, %v5437
        %v7486 = vadd.f32 %v3390, %v5438
        %v7487 = vadd.f32 %v3391, %v5439
        %v7488 = vadd.f32 %v3392, %v5440
        %v7489 = vadd.f32 %v3393, %v5441
        %v7490 = vadd.f32 %v3394, %v5442
        %v7491 = vadd.f32 %v3395, %v5443
        %v7492 = vadd.f32 %v3396, %v5444
        %v7493 = vadd.f32 %v3397, %v5445
        %v7494 = vadd.f32 %v3398, %v5446
        %v7495 = vadd.f32 %v3399, %v5447
        %v7496 = vadd.f32 %v3400, %v5448
        %v7497 = vadd.f32 %v3401, %v5449
        %v7498 = vadd.f32 %v3402, %v5450
        %v7499 = vadd.f32 %v3403, %v5451
        %v7500 = vadd.f32 %v3404, %v5452
        %v7501 = vadd.f32 %v3405, %v5453
        %v7502 = vadd.f32 %v3406, %v5454
        %v7503 = vadd.f32 %v3407, %v5455
        %v7504 = vadd.f32 %v3408, %v5456
        %v7505 = vadd.f32 %v3409, %v5457
        %v7506 = vadd.f32 %v3410, %v5458
        %v7507 = vadd.f32 %v3411, %v5459
        %v7508 = vadd.f32 %v3412, %v5460
        %v7509 = vadd.f32 %v3413, %v5461
        %v7510 = vadd.f32 %v3414, %v5462
        %v7511 = vadd.f32 %v3415, %v5463
        %v7512 = vadd.f32 %v3416, %v5464
        %v7513 = vadd.f32 %v3417, %v5465
        %v7514 = vadd.f32 %v3418, %v5466
        %v7515 = vadd.f32 %v3419, %v5467
        %v7516 = vadd.f32 %v3420, %v5468
        %v7517 = vadd.f32 %v3421, %v5469
        %v7518 = vadd.f32 %v3422, %v5470
        %v7519 = vadd.f32 %v3423, %v5471
        %v7520 = vadd.f32 %v3424, %v5472
        %v7521 = vadd.f32 %v3425, %v5473
        %v7522 = vadd.f32 %v3426, %v5474
        %v7523 = vadd.f32 %v3427, %v5475
        %v7524 = vadd.f32 %v3428, %v5476
        %v7525 = vadd.f32 %v3429, %v5477
        %v7526 = vadd.f32 %v3430, %v5478
        %v7527 = vadd.f32 %v3431, %v5479
        %v7528 = vadd.f32 %v3432, %v5480
        %v7529 = vadd.f32 %v3433, %v5481
        %v7530 = vadd.f32 %v3434, %v5482
        %v7531 = vadd.f32 %v3435, %v5483
        %v7532 = vadd.f32 %v3436, %v5484
        %v7533 = vadd.f32 %v3437, %v5485
        %v7534 = vadd.f32 %v3438, %v5486
        %v7535 = vadd.f32 %v3439, %v5487
        %v7536 = vadd.f32 %v3440, %v5488
        %v7537 = vadd.f32 %v3441, %v5489
        %v7538 = vadd.f32 %v3442, %v5490
        %v7539 = vadd.f32 %v3443, %v5491
        %v7540 = vadd.f32 %v3444, %v5492
        %v7541 = vadd.f32 %v3445, %v5493
        %v7542 = vadd.f32 %v3446, %v5494
        %v7543 = vadd.f32 %v3447, %v5495
        %v7544 = vadd.f32 %v3448, %v5496
        %v7545 = vadd.f32 %v3449, %v5497
        %v7546 = vadd.f32 %v3450, %v5498
        %v7547 = vadd.f32 %v3451, %v5499
        %v7548 = vadd.f32 %v3452, %v5500
        %v7549 = vadd.f32 %v3453, %v5501
        %v7550 = vadd.f32 %v3454, %v5502
        %v7551 = vadd.f32 %v3455, %v5503
        %v7552 = vadd.f32 %v3456, %v5504
        %v7553 = vadd.f32 %v3457, %v5505
        %v7554 = vadd.f32 %v3458, %v5506
        %v7555 = vadd.f32 %v3459, %v5507
        %v7556 = vadd.f32 %v3460, %v5508
        %v7557 = vadd.f32 %v3461, %v5509
        %v7558 = vadd.f32 %v3462, %v5510
        %v7559 = vadd.f32 %v3463, %v5511
        %v7560 = vadd.f32 %v3464, %v5512
        %v7561 = vadd.f32 %v3465, %v5513
        %v7562 = vadd.f32 %v3466, %v5514
        %v7563 = vadd.f32 %v3467, %v5515
        %v7564 = vadd.f32 %v3468, %v5516
        %v7565 = vadd.f32 %v3469, %v5517
        %v7566 = vadd.f32 %v3470, %v5518
        %v7567 = vadd.f32 %v3471, %v5519
        %v7568 = vadd.f32 %v3472, %v5520
        %v7569 = vadd.f32 %v3473, %v5521
        %v7570 = vadd.f32 %v3474, %v5522
        %v7571 = vadd.f32 %v3475, %v5523
        %v7572 = vadd.f32 %v3476, %v5524
        %v7573 = vadd.f32 %v3477, %v5525
        %v7574 = vadd.f32 %v3478, %v5526
        %v7575 = vadd.f32 %v3479, %v5527
        %v7576 = vadd.f32 %v3480, %v5528
        %v7577 = vadd.f32 %v3481, %v5529
        %v7578 = vadd.f32 %v3482, %v5530
        %v7579 = vadd.f32 %v3483, %v5531
        %v7580 = vadd.f32 %v3484, %v5532
        %v7581 = vadd.f32 %v3485, %v5533
        %v7582 = vadd.f32 %v3486, %v5534
        %v7583 = vadd.f32 %v3487, %v5535
        %v7584 = vadd.f32 %v3488, %v5536
        %v7585 = vadd.f32 %v3489, %v5537
        %v7586 = vadd.f32 %v3490, %v5538
        %v7587 = vadd.f32 %v3491, %v5539
        %v7588 = vadd.f32 %v3492, %v5540
        %v7589 = vadd.f32 %v3493, %v5541
        %v7590 = vadd.f32 %v3494, %v5542
        %v7591 = vadd.f32 %v3495, %v5543
        %v7592 = vadd.f32 %v3496, %v5544
        %v7593 = vadd.f32 %v3497, %v5545
        %v7594 = vadd.f32 %v3498, %v5546
        %v7595 = vadd.f32 %v3499, %v5547
        %v7596 = vadd.f32 %v3500, %v5548
        %v7597 = vadd.f32 %v3501, %v5549
        %v7598 = vadd.f32 %v3502, %v5550
        %v7599 = vadd.f32 %v3503, %v5551
        %v7600 = vadd.f32 %v3504, %v5552
        %v7601 = vadd.f32 %v3505, %v5553
        %v7602 = vadd.f32 %v3506, %v5554
        %v7603 = vadd.f32 %v3507, %v5555
        %v7604 = vadd.f32 %v3508, %v5556
        %v7605 = vadd.f32 %v3509, %v5557
        %v7606 = vadd.f32 %v3510, %v5558
        %v7607 = vadd.f32 %v3511, %v5559
        %v7608 = vadd.f32 %v3512, %v5560
        %v7609 = vadd.f32 %v3513, %v5561
        %v7610 = vadd.f32 %v3514, %v5562
        %v7611 = vadd.f32 %v3515, %v5563
        %v7612 = vadd.f32 %v3516, %v5564
        %v7613 = vadd.f32 %v3517, %v5565
        %v7614 = vadd.f32 %v3518, %v5566
        %v7615 = vadd.f32 %v3519, %v5567
        %v7616 = vadd.f32 %v3520, %v5568
        %v7617 = vadd.f32 %v3521, %v5569
        %v7618 = vadd.f32 %v3522, %v5570
        %v7619 = vadd.f32 %v3523, %v5571
        %v7620 = vadd.f32 %v3524, %v5572
        %v7621 = vadd.f32 %v3525, %v5573
        %v7622 = vadd.f32 %v3526, %v5574
        %v7623 = vadd.f32 %v3527, %v5575
        %v7624 = vadd.f32 %v3528, %v5576
        %v7625 = vadd.f32 %v3529, %v5577
        %v7626 = vadd.f32 %v3530, %v5578
        %v7627 = vadd.f32 %v3531, %v5579
        %v7628 = vadd.f32 %v3532, %v5580
        %v7629 = vadd.f32 %v3533, %v5581
        %v7630 = vadd.f32 %v3534, %v5582
        %v7631 = vadd.f32 %v3535, %v5583
        %v7632 = vadd.f32 %v3536, %v5584
        %v7633 = vadd.f32 %v3537, %v5585
        %v7634 = vadd.f32 %v3538, %v5586
        %v7635 = vadd.f32 %v3539, %v5587
        %v7636 = vadd.f32 %v3540, %v5588
        %v7637 = vadd.f32 %v3541, %v5589
        %v7638 = vadd.f32 %v3542, %v5590
        %v7639 = vadd.f32 %v3543, %v5591
        %v7640 = vadd.f32 %v3544, %v5592
        %v7641 = vadd.f32 %v3545, %v5593
        %v7642 = vadd.f32 %v3546, %v5594
        %v7643 = vadd.f32 %v3547, %v5595
        %v7644 = vadd.f32 %v3548, %v5596
        %v7645 = vadd.f32 %v3549, %v5597
        %v7646 = vadd.f32 %v3550, %v5598
        %v7647 = vadd.f32 %v3551, %v5599
        %v7648 = vadd.f32 %v3552, %v5600
        %v7649 = vadd.f32 %v3553, %v5601
        %v7650 = vadd.f32 %v3554, %v5602
        %v7651 = vadd.f32 %v3555, %v5603
        %v7652 = vadd.f32 %v3556, %v5604
        %v7653 = vadd.f32 %v3557, %v5605
        %v7654 = vadd.f32 %v3558, %v5606
        %v7655 = vadd.f32 %v3559, %v5607
        %v7656 = vadd.f32 %v3560, %v5608
        %v7657 = vadd.f32 %v3561, %v5609
        %v7658 = vadd.f32 %v3562, %v5610
        %v7659 = vadd.f32 %v3563, %v5611
        %v7660 = vadd.f32 %v3564, %v5612
        %v7661 = vadd.f32 %v3565, %v5613
        %v7662 = vadd.f32 %v3566, %v5614
        %v7663 = vadd.f32 %v3567, %v5615
        %v7664 = vadd.f32 %v3568, %v5616
        %v7665 = vadd.f32 %v3569, %v5617
        %v7666 = vadd.f32 %v3570, %v5618
        %v7667 = vadd.f32 %v3571, %v5619
        %v7668 = vadd.f32 %v3572, %v5620
        %v7669 = vadd.f32 %v3573, %v5621
        %v7670 = vadd.f32 %v3574, %v5622
        %v7671 = vadd.f32 %v3575, %v5623
        %v7672 = vadd.f32 %v3576, %v5624
        %v7673 = vadd.f32 %v3577, %v5625
        %v7674 = vadd.f32 %v3578, %v5626
        %v7675 = vadd.f32 %v3579, %v5627
        %v7676 = vadd.f32 %v3580, %v5628
        %v7677 = vadd.f32 %v3581, %v5629
        %v7678 = vadd.f32 %v3582, %v5630
        %v7679 = vadd.f32 %v3583, %v5631
        %v7680 = vadd.f32 %v3584, %v5632
        %v7681 = vadd.f32 %v3585, %v5633
        %v7682 = vadd.f32 %v3586, %v5634
        %v7683 = vadd.f32 %v3587, %v5635
        %v7684 = vadd.f32 %v3588, %v5636
        %v7685 = vadd.f32 %v3589, %v5637
        %v7686 = vadd.f32 %v3590, %v5638
        %v7687 = vadd.f32 %v3591, %v5639
        %v7688 = vadd.f32 %v3592, %v5640
        %v7689 = vadd.f32 %v3593, %v5641
        %v7690 = vadd.f32 %v3594, %v5642
        %v7691 = vadd.f32 %v3595, %v5643
        %v7692 = vadd.f32 %v3596, %v5644
        %v7693 = vadd.f32 %v3597, %v5645
        %v7694 = vadd.f32 %v3598, %v5646
        %v7695 = vadd.f32 %v3599, %v5647
        %v7696 = vadd.f32 %v3600, %v5648
        %v7697 = vadd.f32 %v3601, %v5649
        %v7698 = vadd.f32 %v3602, %v5650
        %v7699 = vadd.f32 %v3603, %v5651
        %v7700 = vadd.f32 %v3604, %v5652
        %v7701 = vadd.f32 %v3605, %v5653
        %v7702 = vadd.f32 %v3606, %v5654
        %v7703 = vadd.f32 %v3607, %v5655
        %v7704 = vadd.f32 %v3608, %v5656
        %v7705 = vadd.f32 %v3609, %v5657
        %v7706 = vadd.f32 %v3610, %v5658
        %v7707 = vadd.f32 %v3611, %v5659
        %v7708 = vadd.f32 %v3612, %v5660
        %v7709 = vadd.f32 %v3613, %v5661
        %v7710 = vadd.f32 %v3614, %v5662
        %v7711 = vadd.f32 %v3615, %v5663
        %v7712 = vadd.f32 %v3616, %v5664
        %v7713 = vadd.f32 %v3617, %v5665
        %v7714 = vadd.f32 %v3618, %v5666
        %v7715 = vadd.f32 %v3619, %v5667
        %v7716 = vadd.f32 %v3620, %v5668
        %v7717 = vadd.f32 %v3621, %v5669
        %v7718 = vadd.f32 %v3622, %v5670
        %v7719 = vadd.f32 %v3623, %v5671
        %v7720 = vadd.f32 %v3624, %v5672
        %v7721 = vadd.f32 %v3625, %v5673
        %v7722 = vadd.f32 %v3626, %v5674
        %v7723 = vadd.f32 %v3627, %v5675
        %v7724 = vadd.f32 %v3628, %v5676
        %v7725 = vadd.f32 %v3629, %v5677
        %v7726 = vadd.f32 %v3630, %v5678
        %v7727 = vadd.f32 %v3631, %v5679
        %v7728 = vadd.f32 %v3632, %v5680
        %v7729 = vadd.f32 %v3633, %v5681
        %v7730 = vadd.f32 %v3634, %v5682
        %v7731 = vadd.f32 %v3635, %v5683
        %v7732 = vadd.f32 %v3636, %v5684
        %v7733 = vadd.f32 %v3637, %v5685
        %v7734 = vadd.f32 %v3638, %v5686
        %v7735 = vadd.f32 %v3639, %v5687
        %v7736 = vadd.f32 %v3640, %v5688
        %v7737 = vadd.f32 %v3641, %v5689
        %v7738 = vadd.f32 %v3642, %v5690
        %v7739 = vadd.f32 %v3643, %v5691
        %v7740 = vadd.f32 %v3644, %v5692
        %v7741 = vadd.f32 %v3645, %v5693
        %v7742 = vadd.f32 %v3646, %v5694
        %v7743 = vadd.f32 %v3647, %v5695
        %v7744 = vadd.f32 %v3648, %v5696
        %v7745 = vadd.f32 %v3649, %v5697
        %v7746 = vadd.f32 %v3650, %v5698
        %v7747 = vadd.f32 %v3651, %v5699
        %v7748 = vadd.f32 %v3652, %v5700
        %v7749 = vadd.f32 %v3653, %v5701
        %v7750 = vadd.f32 %v3654, %v5702
        %v7751 = vadd.f32 %v3655, %v5703
        %v7752 = vadd.f32 %v3656, %v5704
        %v7753 = vadd.f32 %v3657, %v5705
        %v7754 = vadd.f32 %v3658, %v5706
        %v7755 = vadd.f32 %v3659, %v5707
        %v7756 = vadd.f32 %v3660, %v5708
        %v7757 = vadd.f32 %v3661, %v5709
        %v7758 = vadd.f32 %v3662, %v5710
        %v7759 = vadd.f32 %v3663, %v5711
        %v7760 = vadd.f32 %v3664, %v5712
        %v7761 = vadd.f32 %v3665, %v5713
        %v7762 = vadd.f32 %v3666, %v5714
        %v7763 = vadd.f32 %v3667, %v5715
        %v7764 = vadd.f32 %v3668, %v5716
        %v7765 = vadd.f32 %v3669, %v5717
        %v7766 = vadd.f32 %v3670, %v5718
        %v7767 = vadd.f32 %v3671, %v5719
        %v7768 = vadd.f32 %v3672, %v5720
        %v7769 = vadd.f32 %v3673, %v5721
        %v7770 = vadd.f32 %v3674, %v5722
        %v7771 = vadd.f32 %v3675, %v5723
        %v7772 = vadd.f32 %v3676, %v5724
        %v7773 = vadd.f32 %v3677, %v5725
        %v7774 = vadd.f32 %v3678, %v5726
        %v7775 = vadd.f32 %v3679, %v5727
        %v7776 = vadd.f32 %v3680, %v5728
        %v7777 = vadd.f32 %v3681, %v5729
        %v7778 = vadd.f32 %v3682, %v5730
        %v7779 = vadd.f32 %v3683, %v5731
        %v7780 = vadd.f32 %v3684, %v5732
        %v7781 = vadd.f32 %v3685, %v5733
        %v7782 = vadd.f32 %v3686, %v5734
        %v7783 = vadd.f32 %v3687, %v5735
        %v7784 = vadd.f32 %v3688, %v5736
        %v7785 = vadd.f32 %v3689, %v5737
        %v7786 = vadd.f32 %v3690, %v5738
        %v7787 = vadd.f32 %v3691, %v5739
        %v7788 = vadd.f32 %v3692, %v5740
        %v7789 = vadd.f32 %v3693, %v5741
        %v7790 = vadd.f32 %v3694, %v5742
        %v7791 = vadd.f32 %v3695, %v5743
        %v7792 = vadd.f32 %v3696, %v5744
        %v7793 = vadd.f32 %v3697, %v5745
        %v7794 = vadd.f32 %v3698, %v5746
        %v7795 = vadd.f32 %v3699, %v5747
        %v7796 = vadd.f32 %v3700, %v5748
        %v7797 = vadd.f32 %v3701, %v5749
        %v7798 = vadd.f32 %v3702, %v5750
        %v7799 = vadd.f32 %v3703, %v5751
        %v7800 = vadd.f32 %v3704, %v5752
        %v7801 = vadd.f32 %v3705, %v5753
        %v7802 = vadd.f32 %v3706, %v5754
        %v7803 = vadd.f32 %v3707, %v5755
        %v7804 = vadd.f32 %v3708, %v5756
        %v7805 = vadd.f32 %v3709, %v5757
        %v7806 = vadd.f32 %v3710, %v5758
        %v7807 = vadd.f32 %v3711, %v5759
        %v7808 = vadd.f32 %v3712, %v5760
        %v7809 = vadd.f32 %v3713, %v5761
        %v7810 = vadd.f32 %v3714, %v5762
        %v7811 = vadd.f32 %v3715, %v5763
        %v7812 = vadd.f32 %v3716, %v5764
        %v7813 = vadd.f32 %v3717, %v5765
        %v7814 = vadd.f32 %v3718, %v5766
        %v7815 = vadd.f32 %v3719, %v5767
        %v7816 = vadd.f32 %v3720, %v5768
        %v7817 = vadd.f32 %v3721, %v5769
        %v7818 = vadd.f32 %v3722, %v5770
        %v7819 = vadd.f32 %v3723, %v5771
        %v7820 = vadd.f32 %v3724, %v5772
        %v7821 = vadd.f32 %v3725, %v5773
        %v7822 = vadd.f32 %v3726, %v5774
        %v7823 = vadd.f32 %v3727, %v5775
        %v7824 = vadd.f32 %v3728, %v5776
        %v7825 = vadd.f32 %v3729, %v5777
        %v7826 = vadd.f32 %v3730, %v5778
        %v7827 = vadd.f32 %v3731, %v5779
        %v7828 = vadd.f32 %v3732, %v5780
        %v7829 = vadd.f32 %v3733, %v5781
        %v7830 = vadd.f32 %v3734, %v5782
        %v7831 = vadd.f32 %v3735, %v5783
        %v7832 = vadd.f32 %v3736, %v5784
        %v7833 = vadd.f32 %v3737, %v5785
        %v7834 = vadd.f32 %v3738, %v5786
        %v7835 = vadd.f32 %v3739, %v5787
        %v7836 = vadd.f32 %v3740, %v5788
        %v7837 = vadd.f32 %v3741, %v5789
        %v7838 = vadd.f32 %v3742, %v5790
        %v7839 = vadd.f32 %v3743, %v5791
        %v7840 = vadd.f32 %v3744, %v5792
        %v7841 = vadd.f32 %v3745, %v5793
        %v7842 = vadd.f32 %v3746, %v5794
        %v7843 = vadd.f32 %v3747, %v5795
        %v7844 = vadd.f32 %v3748, %v5796
        %v7845 = vadd.f32 %v3749, %v5797
        %v7846 = vadd.f32 %v3750, %v5798
        %v7847 = vadd.f32 %v3751, %v5799
        %v7848 = vadd.f32 %v3752, %v5800
        %v7849 = vadd.f32 %v3753, %v5801
        %v7850 = vadd.f32 %v3754, %v5802
        %v7851 = vadd.f32 %v3755, %v5803
        %v7852 = vadd.f32 %v3756, %v5804
        %v7853 = vadd.f32 %v3757, %v5805
        %v7854 = vadd.f32 %v3758, %v5806
        %v7855 = vadd.f32 %v3759, %v5807
        %v7856 = vadd.f32 %v3760, %v5808
        %v7857 = vadd.f32 %v3761, %v5809
        %v7858 = vadd.f32 %v3762, %v5810
        %v7859 = vadd.f32 %v3763, %v5811
        %v7860 = vadd.f32 %v3764, %v5812
        %v7861 = vadd.f32 %v3765, %v5813
        %v7862 = vadd.f32 %v3766, %v5814
        %v7863 = vadd.f32 %v3767, %v5815
        %v7864 = vadd.f32 %v3768, %v5816
        %v7865 = vadd.f32 %v3769, %v5817
        %v7866 = vadd.f32 %v3770, %v5818
        %v7867 = vadd.f32 %v3771, %v5819
        %v7868 = vadd.f32 %v3772, %v5820
        %v7869 = vadd.f32 %v3773, %v5821
        %v7870 = vadd.f32 %v3774, %v5822
        %v7871 = vadd.f32 %v3775, %v5823
        %v7872 = vadd.f32 %v3776, %v5824
        %v7873 = vadd.f32 %v3777, %v5825
        %v7874 = vadd.f32 %v3778, %v5826
        %v7875 = vadd.f32 %v3779, %v5827
        %v7876 = vadd.f32 %v3780, %v5828
        %v7877 = vadd.f32 %v3781, %v5829
        %v7878 = vadd.f32 %v3782, %v5830
        %v7879 = vadd.f32 %v3783, %v5831
        %v7880 = vadd.f32 %v3784, %v5832
        %v7881 = vadd.f32 %v3785, %v5833
        %v7882 = vadd.f32 %v3786, %v5834
        %v7883 = vadd.f32 %v3787, %v5835
        %v7884 = vadd.f32 %v3788, %v5836
        %v7885 = vadd.f32 %v3789, %v5837
        %v7886 = vadd.f32 %v3790, %v5838
        %v7887 = vadd.f32 %v3791, %v5839
        %v7888 = vadd.f32 %v3792, %v5840
        %v7889 = vadd.f32 %v3793, %v5841
        %v7890 = vadd.f32 %v3794, %v5842
        %v7891 = vadd.f32 %v3795, %v5843
        %v7892 = vadd.f32 %v3796, %v5844
        %v7893 = vadd.f32 %v3797, %v5845
        %v7894 = vadd.f32 %v3798, %v5846
        %v7895 = vadd.f32 %v3799, %v5847
        %v7896 = vadd.f32 %v3800, %v5848
        %v7897 = vadd.f32 %v3801, %v5849
        %v7898 = vadd.f32 %v3802, %v5850
        %v7899 = vadd.f32 %v3803, %v5851
        %v7900 = vadd.f32 %v3804, %v5852
        %v7901 = vadd.f32 %v3805, %v5853
        %v7902 = vadd.f32 %v3806, %v5854
        %v7903 = vadd.f32 %v3807, %v5855
        %v7904 = vadd.f32 %v3808, %v5856
        %v7905 = vadd.f32 %v3809, %v5857
        %v7906 = vadd.f32 %v3810, %v5858
        %v7907 = vadd.f32 %v3811, %v5859
        %v7908 = vadd.f32 %v3812, %v5860
        %v7909 = vadd.f32 %v3813, %v5861
        %v7910 = vadd.f32 %v3814, %v5862
        %v7911 = vadd.f32 %v3815, %v5863
        %v7912 = vadd.f32 %v3816, %v5864
        %v7913 = vadd.f32 %v3817, %v5865
        %v7914 = vadd.f32 %v3818, %v5866
        %v7915 = vadd.f32 %v3819, %v5867
        %v7916 = vadd.f32 %v3820, %v5868
        %v7917 = vadd.f32 %v3821, %v5869
        %v7918 = vadd.f32 %v3822, %v5870
        %v7919 = vadd.f32 %v3823, %v5871
        %v7920 = vadd.f32 %v3824, %v5872
        %v7921 = vadd.f32 %v3825, %v5873
        %v7922 = vadd.f32 %v3826, %v5874
        %v7923 = vadd.f32 %v3827, %v5875
        %v7924 = vadd.f32 %v3828, %v5876
        %v7925 = vadd.f32 %v3829, %v5877
        %v7926 = vadd.f32 %v3830, %v5878
        %v7927 = vadd.f32 %v3831, %v5879
        %v7928 = vadd.f32 %v3832, %v5880
        %v7929 = vadd.f32 %v3833, %v5881
        %v7930 = vadd.f32 %v3834, %v5882
        %v7931 = vadd.f32 %v3835, %v5883
        %v7932 = vadd.f32 %v3836, %v5884
        %v7933 = vadd.f32 %v3837, %v5885
        %v7934 = vadd.f32 %v3838, %v5886
        %v7935 = vadd.f32 %v3839, %v5887
        %v7936 = vadd.f32 %v3840, %v5888
        %v7937 = vadd.f32 %v3841, %v5889
        %v7938 = vadd.f32 %v3842, %v5890
        %v7939 = vadd.f32 %v3843, %v5891
        %v7940 = vadd.f32 %v3844, %v5892
        %v7941 = vadd.f32 %v3845, %v5893
        %v7942 = vadd.f32 %v3846, %v5894
        %v7943 = vadd.f32 %v3847, %v5895
        %v7944 = vadd.f32 %v3848, %v5896
        %v7945 = vadd.f32 %v3849, %v5897
        %v7946 = vadd.f32 %v3850, %v5898
        %v7947 = vadd.f32 %v3851, %v5899
        %v7948 = vadd.f32 %v3852, %v5900
        %v7949 = vadd.f32 %v3853, %v5901
        %v7950 = vadd.f32 %v3854, %v5902
        %v7951 = vadd.f32 %v3855, %v5903
        %v7952 = vadd.f32 %v3856, %v5904
        %v7953 = vadd.f32 %v3857, %v5905
        %v7954 = vadd.f32 %v3858, %v5906
        %v7955 = vadd.f32 %v3859, %v5907
        %v7956 = vadd.f32 %v3860, %v5908
        %v7957 = vadd.f32 %v3861, %v5909
        %v7958 = vadd.f32 %v3862, %v5910
        %v7959 = vadd.f32 %v3863, %v5911
        %v7960 = vadd.f32 %v3864, %v5912
        %v7961 = vadd.f32 %v3865, %v5913
        %v7962 = vadd.f32 %v3866, %v5914
        %v7963 = vadd.f32 %v3867, %v5915
        %v7964 = vadd.f32 %v3868, %v5916
        %v7965 = vadd.f32 %v3869, %v5917
        %v7966 = vadd.f32 %v3870, %v5918
        %v7967 = vadd.f32 %v3871, %v5919
        %v7968 = vadd.f32 %v3872, %v5920
        %v7969 = vadd.f32 %v3873, %v5921
        %v7970 = vadd.f32 %v3874, %v5922
        %v7971 = vadd.f32 %v3875, %v5923
        %v7972 = vadd.f32 %v3876, %v5924
        %v7973 = vadd.f32 %v3877, %v5925
        %v7974 = vadd.f32 %v3878, %v5926
        %v7975 = vadd.f32 %v3879, %v5927
        %v7976 = vadd.f32 %v3880, %v5928
        %v7977 = vadd.f32 %v3881, %v5929
        %v7978 = vadd.f32 %v3882, %v5930
        %v7979 = vadd.f32 %v3883, %v5931
        %v7980 = vadd.f32 %v3884, %v5932
        %v7981 = vadd.f32 %v3885, %v5933
        %v7982 = vadd.f32 %v3886, %v5934
        %v7983 = vadd.f32 %v3887, %v5935
        %v7984 = vadd.f32 %v3888, %v5936
        %v7985 = vadd.f32 %v3889, %v5937
        %v7986 = vadd.f32 %v3890, %v5938
        %v7987 = vadd.f32 %v3891, %v5939
        %v7988 = vadd.f32 %v3892, %v5940
        %v7989 = vadd.f32 %v3893, %v5941
        %v7990 = vadd.f32 %v3894, %v5942
        %v7991 = vadd.f32 %v3895, %v5943
        %v7992 = vadd.f32 %v3896, %v5944
        %v7993 = vadd.f32 %v3897, %v5945
        %v7994 = vadd.f32 %v3898, %v5946
        %v7995 = vadd.f32 %v3899, %v5947
        %v7996 = vadd.f32 %v3900, %v5948
        %v7997 = vadd.f32 %v3901, %v5949
        %v7998 = vadd.f32 %v3902, %v5950
        %v7999 = vadd.f32 %v3903, %v5951
        %v8000 = vadd.f32 %v3904, %v5952
        %v8001 = vadd.f32 %v3905, %v5953
        %v8002 = vadd.f32 %v3906, %v5954
        %v8003 = vadd.f32 %v3907, %v5955
        %v8004 = vadd.f32 %v3908, %v5956
        %v8005 = vadd.f32 %v3909, %v5957
        %v8006 = vadd.f32 %v3910, %v5958
        %v8007 = vadd.f32 %v3911, %v5959
        %v8008 = vadd.f32 %v3912, %v5960
        %v8009 = vadd.f32 %v3913, %v5961
        %v8010 = vadd.f32 %v3914, %v5962
        %v8011 = vadd.f32 %v3915, %v5963
        %v8012 = vadd.f32 %v3916, %v5964
        %v8013 = vadd.f32 %v3917, %v5965
        %v8014 = vadd.f32 %v3918, %v5966
        %v8015 = vadd.f32 %v3919, %v5967
        %v8016 = vadd.f32 %v3920, %v5968
        %v8017 = vadd.f32 %v3921, %v5969
        %v8018 = vadd.f32 %v3922, %v5970
        %v8019 = vadd.f32 %v3923, %v5971
        %v8020 = vadd.f32 %v3924, %v5972
        %v8021 = vadd.f32 %v3925, %v5973
        %v8022 = vadd.f32 %v3926, %v5974
        %v8023 = vadd.f32 %v3927, %v5975
        %v8024 = vadd.f32 %v3928, %v5976
        %v8025 = vadd.f32 %v3929, %v5977
        %v8026 = vadd.f32 %v3930, %v5978
        %v8027 = vadd.f32 %v3931, %v5979
        %v8028 = vadd.f32 %v3932, %v5980
        %v8029 = vadd.f32 %v3933, %v5981
        %v8030 = vadd.f32 %v3934, %v5982
        %v8031 = vadd.f32 %v3935, %v5983
        %v8032 = vadd.f32 %v3936, %v5984
        %v8033 = vadd.f32 %v3937, %v5985
        %v8034 = vadd.f32 %v3938, %v5986
        %v8035 = vadd.f32 %v3939, %v5987
        %v8036 = vadd.f32 %v3940, %v5988
        %v8037 = vadd.f32 %v3941, %v5989
        %v8038 = vadd.f32 %v3942, %v5990
        %v8039 = vadd.f32 %v3943, %v5991
        %v8040 = vadd.f32 %v3944, %v5992
        %v8041 = vadd.f32 %v3945, %v5993
        %v8042 = vadd.f32 %v3946, %v5994
        %v8043 = vadd.f32 %v3947, %v5995
        %v8044 = vadd.f32 %v3948, %v5996
        %v8045 = vadd.f32 %v3949, %v5997
        %v8046 = vadd.f32 %v3950, %v5998
        %v8047 = vadd.f32 %v3951, %v5999
        %v8048 = vadd.f32 %v3952, %v6000
        %v8049 = vadd.f32 %v3953, %v6001
        %v8050 = vadd.f32 %v3954, %v6002
        %v8051 = vadd.f32 %v3955, %v6003
        %v8052 = vadd.f32 %v3956, %v6004
        %v8053 = vadd.f32 %v3957, %v6005
        %v8054 = vadd.f32 %v3958, %v6006
        %v8055 = vadd.f32 %v3959, %v6007
        %v8056 = vadd.f32 %v3960, %v6008
        %v8057 = vadd.f32 %v3961, %v6009
        %v8058 = vadd.f32 %v3962, %v6010
        %v8059 = vadd.f32 %v3963, %v6011
        %v8060 = vadd.f32 %v3964, %v6012
        %v8061 = vadd.f32 %v3965, %v6013
        %v8062 = vadd.f32 %v3966, %v6014
        %v8063 = vadd.f32 %v3967, %v6015
        %v8064 = vadd.f32 %v3968, %v6016
        %v8065 = vadd.f32 %v3969, %v6017
        %v8066 = vadd.f32 %v3970, %v6018
        %v8067 = vadd.f32 %v3971, %v6019
        %v8068 = vadd.f32 %v3972, %v6020
        %v8069 = vadd.f32 %v3973, %v6021
        %v8070 = vadd.f32 %v3974, %v6022
        %v8071 = vadd.f32 %v3975, %v6023
        %v8072 = vadd.f32 %v3976, %v6024
        %v8073 = vadd.f32 %v3977, %v6025
        %v8074 = vadd.f32 %v3978, %v6026
        %v8075 = vadd.f32 %v3979, %v6027
        %v8076 = vadd.f32 %v3980, %v6028
        %v8077 = vadd.f32 %v3981, %v6029
        %v8078 = vadd.f32 %v3982, %v6030
        %v8079 = vadd.f32 %v3983, %v6031
        %v8080 = vadd.f32 %v3984, %v6032
        %v8081 = vadd.f32 %v3985, %v6033
        %v8082 = vadd.f32 %v3986, %v6034
        %v8083 = vadd.f32 %v3987, %v6035
        %v8084 = vadd.f32 %v3988, %v6036
        %v8085 = vadd.f32 %v3989, %v6037
        %v8086 = vadd.f32 %v3990, %v6038
        %v8087 = vadd.f32 %v3991, %v6039
        %v8088 = vadd.f32 %v3992, %v6040
        %v8089 = vadd.f32 %v3993, %v6041
        %v8090 = vadd.f32 %v3994, %v6042
        %v8091 = vadd.f32 %v3995, %v6043
        %v8092 = vadd.f32 %v3996, %v6044
        %v8093 = vadd.f32 %v3997, %v6045
        %v8094 = vadd.f32 %v3998, %v6046
        %v8095 = vadd.f32 %v3999, %v6047
        %v8096 = vadd.f32 %v4000, %v6048
        %v8097 = vadd.f32 %v4001, %v6049
        %v8098 = vadd.f32 %v4002, %v6050
        %v8099 = vadd.f32 %v4003, %v6051
        %v8100 = vadd.f32 %v4004, %v6052
        %v8101 = vadd.f32 %v4005, %v6053
        %v8102 = vadd.f32 %v4006, %v6054
        %v8103 = vadd.f32 %v4007, %v6055
        %v8104 = vadd.f32 %v4008, %v6056
        %v8105 = vadd.f32 %v4009, %v6057
        %v8106 = vadd.f32 %v4010, %v6058
        %v8107 = vadd.f32 %v4011, %v6059
        %v8108 = vadd.f32 %v4012, %v6060
        %v8109 = vadd.f32 %v4013, %v6061
        %v8110 = vadd.f32 %v4014, %v6062
        %v8111 = vadd.f32 %v4015, %v6063
        %v8112 = vadd.f32 %v4016, %v6064
        %v8113 = vadd.f32 %v4017, %v6065
        %v8114 = vadd.f32 %v4018, %v6066
        %v8115 = vadd.f32 %v4019, %v6067
        %v8116 = vadd.f32 %v4020, %v6068
        %v8117 = vadd.f32 %v4021, %v6069
        %v8118 = vadd.f32 %v4022, %v6070
        %v8119 = vadd.f32 %v4023, %v6071
        %v8120 = vadd.f32 %v4024, %v6072
        %v8121 = vadd.f32 %v4025, %v6073
        %v8122 = vadd.f32 %v4026, %v6074
        %v8123 = vadd.f32 %v4027, %v6075
        %v8124 = vadd.f32 %v4028, %v6076
        %v8125 = vadd.f32 %v4029, %v6077
        %v8126 = vadd.f32 %v4030, %v6078
        %v8127 = vadd.f32 %v4031, %v6079
        %v8128 = vadd.f32 %v4032, %v6080
        %v8129 = vadd.f32 %v4033, %v6081
        %v8130 = vadd.f32 %v4034, %v6082
        %v8131 = vadd.f32 %v4035, %v6083
        %v8132 = vadd.f32 %v4036, %v6084
        %v8133 = vadd.f32 %v4037, %v6085
        %v8134 = vadd.f32 %v4038, %v6086
        %v8135 = vadd.f32 %v4039, %v6087
        %v8136 = vadd.f32 %v4040, %v6088
        %v8137 = vadd.f32 %v4041, %v6089
        %v8138 = vadd.f32 %v4042, %v6090
        %v8139 = vadd.f32 %v4043, %v6091
        %v8140 = vadd.f32 %v4044, %v6092
        %v8141 = vadd.f32 %v4045, %v6093
        %v8142 = vadd.f32 %v4046, %v6094
        %v8143 = vadd.f32 %v4047, %v6095
        %v8144 = vadd.f32 %v4048, %v6096
        %v8145 = vadd.f32 %v4049, %v6097
        %v8146 = vadd.f32 %v4050, %v6098
        %v8147 = vadd.f32 %v4051, %v6099
        %v8148 = vadd.f32 %v4052, %v6100
        %v8149 = vadd.f32 %v4053, %v6101
        %v8150 = vadd.f32 %v4054, %v6102
        %v8151 = vadd.f32 %v4055, %v6103
        %v8152 = vadd.f32 %v4056, %v6104
        %v8153 = vadd.f32 %v4057, %v6105
        %v8154 = vadd.f32 %v4058, %v6106
        %v8155 = vadd.f32 %v4059, %v6107
        %v8156 = vadd.f32 %v4060, %v6108
        %v8157 = vadd.f32 %v4061, %v6109
        %v8158 = vadd.f32 %v4062, %v6110
        %v8159 = vadd.f32 %v4063, %v6111
        %v8160 = vadd.f32 %v4064, %v6112
        %v8161 = vadd.f32 %v4065, %v6113
        %v8162 = vadd.f32 %v4066, %v6114
        %v8163 = vadd.f32 %v4067, %v6115
        %v8164 = vadd.f32 %v4068, %v6116
        %v8165 = vadd.f32 %v4069, %v6117
        %v8166 = vadd.f32 %v4070, %v6118
        %v8167 = vadd.f32 %v4071, %v6119
        %v8168 = vadd.f32 %v4072, %v6120
        %v8169 = vadd.f32 %v4073, %v6121
        %v8170 = vadd.f32 %v4074, %v6122
        %v8171 = vadd.f32 %v4075, %v6123
        %v8172 = vadd.f32 %v4076, %v6124
        %v8173 = vadd.f32 %v4077, %v6125
        %v8174 = vadd.f32 %v4078, %v6126
        %v8175 = vadd.f32 %v4079, %v6127
        %v8176 = vadd.f32 %v4080, %v6128
        %v8177 = vadd.f32 %v4081, %v6129
        %v8178 = vadd.f32 %v4082, %v6130
        %v8179 = vadd.f32 %v4083, %v6131
        %v8180 = vadd.f32 %v4084, %v6132
        %v8181 = vadd.f32 %v4085, %v6133
        %v8182 = vadd.f32 %v4086, %v6134
        %v8183 = vadd.f32 %v4087, %v6135
        %v8184 = vadd.f32 %v4088, %v6136
        %v8185 = vadd.f32 %v4089, %v6137
        %v8186 = vadd.f32 %v4090, %v6138
        %v8187 = vadd.f32 %v4091, %v6139
        %v8188 = vadd.f32 %v4092, %v6140
        %v8189 = vadd.f32 %v4093, %v6141
        %v8190 = vadd.f32 %v4094, %v6142
        %v8191 = vadd.f32 %v4095, %v6143
        %v8192 = vadd.f32 %v4096, %v6144
        %v8193 = vadd.f32 %v4097, %v6145
        %v8194 = vadd.f32 %v4098, %v6146
        %v8195 = vadd.f32 %v4099, %v6147
        %v8196 = vadd.f32 %v4100, %v6148
        %v8197 = vadd.f32 %v4101, %v6149
        %v8198 = vadd.f32 %v4102, %v6150
        %v8199 = vadd.f32 %v4103, %v6151
        %v8200 = vadd.f32 %v4104, %v6152
        %v8201 = vadd.f32 %v4105, %v6153
        %v8202 = vadd.f32 %v4106, %v6154
        %v8203 = vadd.f32 %v4107, %v6155
        %v8204 = vadd.f32 %v4108, %v6156
        %v8205 = vadd.f32 %v4109, %v6157
        %v8206 = vadd.f32 %v4110, %v6158
        %v8207 = vadd.f32 %v4111, %v6159
        %v8208 = vadd.f32 %v4112, %v6160
        %v8209 = vadd.f32 %v4113, %v6161
        %v8210 = vadd.f32 %v4114, %v6162
        %v8211 = vadd.f32 %v4115, %v6163
        %v8212 = vadd.f32 %v4116, %v6164
        %v8213 = vadd.f32 %v4117, %v6165
        %v8214 = vadd.f32 %v4118, %v6166
        %v8215 = vadd.f32 %v4119, %v6167
        %v8216 = vadd.f32 %v4120, %v6168
        %v8217 = vadd.f32 %v4121, %v6169
        %v8218 = vadd.f32 %v4122, %v6170
        %v8219 = vadd.f32 %v4123, %v6171
        %v8220 = vadd.f32 %v4124, %v6172
        %v8221 = vadd.f32 %v4125, %v6173
        %v8222 = vadd.f32 %v4126, %v6174
        %v8223 = vadd.f32 %v4127, %v6175
        %v8224 = vadd.f32 %v4128, %v6176
        %v8225 = vadd.f32 %v4129, %v6177
        %v8226 = vadd.f32 %v4130, %v6178
        %v8227 = vadd.f32 %v4131, %v6179
        %v8228 = vadd.f32 %v4132, %v6180
        %v8229 = vadd.f32 %v4133, %v6181
        %v8230 = vadd.f32 %v4134, %v6182
        %v8231 = vadd.f32 %v4135, %v6183
        %v8232 = vadd.f32 %v4136, %v6184
        %v8233 = vadd.f32 %v4137, %v6185
        %v8234 = vadd.f32 %v4138, %v6186
        %v8235 = vadd.f32 %v4139, %v6187
        %v8236 = vadd.f32 %v4140, %v6188
        %v8237 = vadd.f32 %v4141, %v6189
        %v8238 = vadd.f32 %v4142, %v6190
        %v8239 = vadd.f32 %v4143, %v6191
        %v8240 = vadd.f32 %v4144, %v6192
        %v8241 = vadd.f32 %v4145, %v6193
        %v8242 = vadd.f32 %v4146, %v6194
        %v8243 = vadd.f32 %v4147, %v6195
        %v8244 = vadd.f32 %v4148, %v6196
        %v8245 = vadd.f32 %v4149, %v6197
        %v8246 = vadd.f32 %v4150, %v6198
        %v8247 = vadd.f32 %v4151, %v6199
        %v8248 = vadd.f32 %v4152, %v6200
        %v8249 = vadd.f32 %v4153, %v6201
        %v8250 = vadd.f32 %v4154, %v6202
        %v8251 = vadd.f32 %v4155, %v6203
        %v8252 = vadd.f32 %v4156, %v6204
        %v8253 = vadd.f32 %v4157, %v6205
        %v8254 = vadd.f32 %v4158, %v6206
        %v8255 = vadd.f32 %v4159, %v6207
        %v8256 = vadd.f32 %v4160, %v6208
        %v8257 = vadd.f32 %v4161, %v6209
        %v8258 = vadd.f32 %v4162, %v6210
        %v8259 = vadd.f32 %v4163, %v6211
        %v8260 = vadd.f32 %v4164, %v6212
        %v8261 = vadd.f32 %v4165, %v6213
        %v8262 = vadd.f32 %v4166, %v6214
        %v8263 = vadd.f32 %v4167, %v6215
        %v8264 = vadd.f32 %v4168, %v6216
        %v8265 = vadd.f32 %v4169, %v6217
        %v8266 = vadd.f32 %v4170, %v6218
        %v8267 = vadd.f32 %v4171, %v6219
        %v8268 = vadd.f32 %v4172, %v6220
        %v8269 = vadd.f32 %v4173, %v6221
        %v8270 = vadd.f32 %v4174, %v6222
        %v8271 = vadd.f32 %v4175, %v6223
        %v8272 = vadd.f32 %v4176, %v6224
        %v8273 = vadd.f32 %v4177, %v6225
        %v8274 = vadd.f32 %v4178, %v6226
        %v8275 = vadd.f32 %v4179, %v6227
        %v8276 = vadd.f32 %v4180, %v6228
        %v8277 = vadd.f32 %v4181, %v6229
        %v8278 = vadd.f32 %v4182, %v6230
        %v8279 = vadd.f32 %v4183, %v6231
        %v8280 = vadd.f32 %v4184, %v6232
        %v8281 = vadd.f32 %v4185, %v6233
        %v8282 = vadd.f32 %v4186, %v6234
        %v8283 = vadd.f32 %v4187, %v6235
        %v8284 = vadd.f32 %v4188, %v6236
        %v8285 = vadd.f32 %v4189, %v6237
        %v8286 = vadd.f32 %v4190, %v6238
        %v8287 = vadd.f32 %v4191, %v6239
        %v8288 = vadd.f32 %v4192, %v6240
        %v8289 = vadd.f32 %v4193, %v6241
        %v8290 = vadd.f32 %v4194, %v6242
        %v8291 = vadd.f32 %v4195, %v6243
        %v8292 = vadd.f32 %v4196, %v6244
        %v8293 = vadd.f32 %v4197, %v6245
        %v8294 = vadd.f32 %v4198, %v6246
        %v8295 = vadd.f32 %v4199, %v6247
        %v8296 = vadd.f32 %v4200, %v6248
        %v8297 = vadd.f32 %v4201, %v6249
        %v8298 = vadd.f32 %v4202, %v6250
        %v8299 = vadd.f32 %v4203, %v6251
        %v8300 = vadd.f32 %v4204, %v6252
        %v8301 = vadd.f32 %v4205, %v6253
        %v8302 = vadd.f32 %v4206, %v6254
        %v8303 = vadd.f32 %v4207, %v6255
        %v8304 = vadd.f32 %v4208, %v6256
        %v8305 = vadd.f32 %v4209, %v6257
        %v8306 = vadd.f32 %v4210, %v6258
        %v8307 = vadd.f32 %v4211, %v6259
        %v8308 = vadd.f32 %v4212, %v6260
        %v8309 = vadd.f32 %v4213, %v6261
        %v8310 = vadd.f32 %v4214, %v6262
        %v8311 = vadd.f32 %v4215, %v6263
        %v8312 = vadd.f32 %v4216, %v6264
        %v8313 = vadd.f32 %v4217, %v6265
        %v8314 = vadd.f32 %v4218, %v6266
        %v8315 = vadd.f32 %v4219, %v6267
        %v8316 = vadd.f32 %v4220, %v6268
        %v8317 = vadd.f32 %v4221, %v6269
        %v8318 = vadd.f32 %v4222, %v6270
        %v8319 = vadd.f32 %v4223, %v6271
        %v8320 = vadd.f32 %v4224, %v6272
        %v8321 = vadd.f32 %v4225, %v6273
        %v8322 = vadd.f32 %v4226, %v6274
        %v8323 = vadd.f32 %v4227, %v6275
        %v8324 = vadd.f32 %v4228, %v6276
        %v8325 = vadd.f32 %v4229, %v6277
        %v8326 = vadd.f32 %v4230, %v6278
        %v8327 = vadd.f32 %v4231, %v6279
        %v8328 = vadd.f32 %v4232, %v6280
        %v8329 = vadd.f32 %v4233, %v6281
        %v8330 = vadd.f32 %v4234, %v6282
        %v8331 = vadd.f32 %v4235, %v6283
        %v8332 = vadd.f32 %v4236, %v6284
        %v8333 = vadd.f32 %v4237, %v6285
        %v8334 = vadd.f32 %v4238, %v6286
        %v8335 = vadd.f32 %v4239, %v6287
        %v8336 = vadd.f32 %v4240, %v6288
        %v8337 = vadd.f32 %v4241, %v6289
        %v8338 = vadd.f32 %v4242, %v6290
        %v8339 = vadd.f32 %v4243, %v6291
        %v8340 = vadd.f32 %v4244, %v6292
        %v8341 = vadd.f32 %v4245, %v6293
        %v8342 = vadd.f32 %v4246, %v6294
        %v8343 = vadd.f32 %v4247, %v6295
        %v8344 = vadd.f32 %v4248, %v6296
        %v8345 = vadd.f32 %v4249, %v6297
        %v8346 = vadd.f32 %v4250, %v6298
        %v8347 = vadd.f32 %v4251, %v6299
        %v8348 = vadd.f32 %v4252, %v6300
        %v8349 = vadd.f32 %v4253, %v6301
        %v8350 = vadd.f32 %v4254, %v6302
        %v8351 = vadd.f32 %v4255, %v6303
        %v8352 = vadd.f32 %v4256, %v6304
        %v8353 = vadd.f32 %v4257, %v6305
        %v8354 = vadd.f32 %v4258, %v6306
        %v8355 = vadd.f32 %v4259, %v6307
        %v8356 = vadd.f32 %v4260, %v6308
        %v8357 = vadd.f32 %v4261, %v6309
        %v8358 = vadd.f32 %v4262, %v6310
        %v8359 = vadd.f32 %v4263, %v6311
        %v8360 = vadd.f32 %v4264, %v6312
        %v8361 = vadd.f32 %v4265, %v6313
        %v8362 = vadd.f32 %v4266, %v6314
        %v8363 = vadd.f32 %v4267, %v6315
        %v8364 = vadd.f32 %v4268, %v6316
        %v8365 = vadd.f32 %v4269, %v6317
        %v8366 = vadd.f32 %v4270, %v6318
        %v8367 = vadd.f32 %v4271, %v6319
        %v8368 = vadd.f32 %v4272, %v6320
        %v8369 = vadd.f32 %v4273, %v6321
        %v8370 = vadd.f32 %v4274, %v6322
        %v8371 = vadd.f32 %v4275, %v6323
        %v8372 = vadd.f32 %v4276, %v6324
        %v8373 = vadd.f32 %v4277, %v6325
        %v8374 = vadd.f32 %v4278, %v6326
        %v8375 = vadd.f32 %v4279, %v6327
        %v8376 = vadd.f32 %v4280, %v6328
        %v8377 = vadd.f32 %v4281, %v6329
        %v8378 = vadd.f32 %v4282, %v6330
        %v8379 = vadd.f32 %v4283, %v6331
        %v8380 = vadd.f32 %v4284, %v6332
        %v8381 = vadd.f32 %v4285, %v6333
        %v8382 = vadd.f32 %v4286, %v6334
        %v8383 = vadd.f32 %v4287, %v6335
        %v8384 = vadd.f32 %v4288, %v6336
        %v8385 = vadd.f32 %v4289, %v6337
        %v8386 = vadd.f32 %v4290, %v6338
        %v8387 = vadd.f32 %v4291, %v6339
        %v8388 = vadd.f32 %v4292, %v6340
        %v8389 = vadd.f32 %v4293, %v6341
        %v8390 = vadd.f32 %v4294, %v6342
        %v8391 = vadd.f32 %v4295, %v6343
        %v8392 = vadd.f32 %v4296, %v6344
        %v8393 = vadd.f32 %v4297, %v6345
        %v8394 = vadd.f32 %v4298, %v6346
        %v8395 = vadd.f32 %v4299, %v6347
        %v8396 = vadd.f32 %v4300, %v6348
        %v8397 = vadd.f32 %v4301, %v6349
        %v8398 = vadd.f32 %v4302, %v6350
        %v8399 = vadd.f32 %v4303, %v6351
        %v8400 = vadd.f32 %v4304, %v6352
        %v8401 = vadd.f32 %v4305, %v6353
        %v8402 = vadd.f32 %v4306, %v6354
        %v8403 = vadd.f32 %v4307, %v6355
        %v8404 = vadd.f32 %v4308, %v6356
        %v8405 = vadd.f32 %v4309, %v6357
        %v8406 = vadd.f32 %v4310, %v6358
        %v8407 = vadd.f32 %v4311, %v6359
        %v8408 = vadd.f32 %v4312, %v6360
        %v8409 = vadd.f32 %v4313, %v6361
        %v8410 = vadd.f32 %v4314, %v6362
        %v8411 = vadd.f32 %v4315, %v6363
        %v8412 = vadd.f32 %v4316, %v6364
        %v8413 = vadd.f32 %v4317, %v6365
        %v8414 = vadd.f32 %v4318, %v6366
        %v8415 = vadd.f32 %v4319, %v6367
        %v8416 = vadd.f32 %v4320, %v6368
        %v8417 = vadd.f32 %v4321, %v6369
        %v8418 = vadd.f32 %v4322, %v6370
        %v8419 = vadd.f32 %v4323, %v6371
        %v8420 = vadd.f32 %v4324, %v6372
        %v8421 = vadd.f32 %v4325, %v6373
        %v8422 = vadd.f32 %v4326, %v6374
        %v8423 = vadd.f32 %v4327, %v6375
        %v8424 = vadd.f32 %v4328, %v6376
        %v8425 = vadd.f32 %v4329, %v6377
        %v8426 = vadd.f32 %v4330, %v6378
        %v8427 = vadd.f32 %v4331, %v6379
        %v8428 = vpack.c.bf16 %v6381, %v6380
        %v8429 = vpack.c.bf16 %v6383, %v6382
        %v8430 = vpack.c.bf16 %v6385, %v6384
        %v8431 = vpack.c.bf16 %v6387, %v6386
        %v8432 = vpack.c.bf16 %v6389, %v6388
        %v8433 = vpack.c.bf16 %v6391, %v6390
        %v8434 = vpack.c.bf16 %v6393, %v6392
        %v8435 = vpack.c.bf16 %v6395, %v6394
        %v8436 = vpack.c.bf16 %v6397, %v6396
        %v8437 = vpack.c.bf16 %v6399, %v6398
        %v8438 = vpack.c.bf16 %v6401, %v6400
        %v8439 = vpack.c.bf16 %v6403, %v6402
        %v8440 = vpack.c.bf16 %v6405, %v6404
        %v8441 = vpack.c.bf16 %v6407, %v6406
        %v8442 = vpack.c.bf16 %v6409, %v6408
        %v8443 = vpack.c.bf16 %v6411, %v6410
        %v8444 = vpack.c.bf16 %v6413, %v6412
        %v8445 = vpack.c.bf16 %v6415, %v6414
        %v8446 = vpack.c.bf16 %v6417, %v6416
        %v8447 = vpack.c.bf16 %v6419, %v6418
        %v8448 = vpack.c.bf16 %v6421, %v6420
        %v8449 = vpack.c.bf16 %v6423, %v6422
        %v8450 = vpack.c.bf16 %v6425, %v6424
        %v8451 = vpack.c.bf16 %v6427, %v6426
        %v8452 = vpack.c.bf16 %v6429, %v6428
        %v8453 = vpack.c.bf16 %v6431, %v6430
        %v8454 = vpack.c.bf16 %v6433, %v6432
        %v8455 = vpack.c.bf16 %v6435, %v6434
        %v8456 = vpack.c.bf16 %v6437, %v6436
        %v8457 = vpack.c.bf16 %v6439, %v6438
        %v8458 = vpack.c.bf16 %v6441, %v6440
        %v8459 = vpack.c.bf16 %v6443, %v6442
        %v8460 = vpack.c.bf16 %v6445, %v6444
        %v8461 = vpack.c.bf16 %v6447, %v6446
        %v8462 = vpack.c.bf16 %v6449, %v6448
        %v8463 = vpack.c.bf16 %v6451, %v6450
        %v8464 = vpack.c.bf16 %v6453, %v6452
        %v8465 = vpack.c.bf16 %v6455, %v6454
        %v8466 = vpack.c.bf16 %v6457, %v6456
        %v8467 = vpack.c.bf16 %v6459, %v6458
        %v8468 = vpack.c.bf16 %v6461, %v6460
        %v8469 = vpack.c.bf16 %v6463, %v6462
        %v8470 = vpack.c.bf16 %v6465, %v6464
        %v8471 = vpack.c.bf16 %v6467, %v6466
        %v8472 = vpack.c.bf16 %v6469, %v6468
        %v8473 = vpack.c.bf16 %v6471, %v6470
        %v8474 = vpack.c.bf16 %v6473, %v6472
        %v8475 = vpack.c.bf16 %v6475, %v6474
        %v8476 = vpack.c.bf16 %v6477, %v6476
        %v8477 = vpack.c.bf16 %v6479, %v6478
        %v8478 = vpack.c.bf16 %v6481, %v6480
        %v8479 = vpack.c.bf16 %v6483, %v6482
        %v8480 = vpack.c.bf16 %v6485, %v6484
        %v8481 = vpack.c.bf16 %v6487, %v6486
        %v8482 = vpack.c.bf16 %v6489, %v6488
        %v8483 = vpack.c.bf16 %v6491, %v6490
        %v8484 = vpack.c.bf16 %v6493, %v6492
        %v8485 = vpack.c.bf16 %v6495, %v6494
        %v8486 = vpack.c.bf16 %v6497, %v6496
        %v8487 = vpack.c.bf16 %v6499, %v6498
        %v8488 = vpack.c.bf16 %v6501, %v6500
        %v8489 = vpack.c.bf16 %v6503, %v6502
        %v8490 = vpack.c.bf16 %v6505, %v6504
        %v8491 = vpack.c.bf16 %v6507, %v6506
        %v8492 = vpack.c.bf16 %v6509, %v6508
        %v8493 = vpack.c.bf16 %v6511, %v6510
        %v8494 = vpack.c.bf16 %v6513, %v6512
        %v8495 = vpack.c.bf16 %v6515, %v6514
        %v8496 = vpack.c.bf16 %v6517, %v6516
        %v8497 = vpack.c.bf16 %v6519, %v6518
        %v8498 = vpack.c.bf16 %v6521, %v6520
        %v8499 = vpack.c.bf16 %v6523, %v6522
        %v8500 = vpack.c.bf16 %v6525, %v6524
        %v8501 = vpack.c.bf16 %v6527, %v6526
        %v8502 = vpack.c.bf16 %v6529, %v6528
        %v8503 = vpack.c.bf16 %v6531, %v6530
        %v8504 = vpack.c.bf16 %v6533, %v6532
        %v8505 = vpack.c.bf16 %v6535, %v6534
        %v8506 = vpack.c.bf16 %v6537, %v6536
        %v8507 = vpack.c.bf16 %v6539, %v6538
        %v8508 = vpack.c.bf16 %v6541, %v6540
        %v8509 = vpack.c.bf16 %v6543, %v6542
        %v8510 = vpack.c.bf16 %v6545, %v6544
        %v8511 = vpack.c.bf16 %v6547, %v6546
        %v8512 = vpack.c.bf16 %v6549, %v6548
        %v8513 = vpack.c.bf16 %v6551, %v6550
        %v8514 = vpack.c.bf16 %v6553, %v6552
        %v8515 = vpack.c.bf16 %v6555, %v6554
        %v8516 = vpack.c.bf16 %v6557, %v6556
        %v8517 = vpack.c.bf16 %v6559, %v6558
        %v8518 = vpack.c.bf16 %v6561, %v6560
        %v8519 = vpack.c.bf16 %v6563, %v6562
        %v8520 = vpack.c.bf16 %v6565, %v6564
        %v8521 = vpack.c.bf16 %v6567, %v6566
        %v8522 = vpack.c.bf16 %v6569, %v6568
        %v8523 = vpack.c.bf16 %v6571, %v6570
        %v8524 = vpack.c.bf16 %v6573, %v6572
        %v8525 = vpack.c.bf16 %v6575, %v6574
        %v8526 = vpack.c.bf16 %v6577, %v6576
        %v8527 = vpack.c.bf16 %v6579, %v6578
        %v8528 = vpack.c.bf16 %v6581, %v6580
        %v8529 = vpack.c.bf16 %v6583, %v6582
        %v8530 = vpack.c.bf16 %v6585, %v6584
        %v8531 = vpack.c.bf16 %v6587, %v6586
        %v8532 = vpack.c.bf16 %v6589, %v6588
        %v8533 = vpack.c.bf16 %v6591, %v6590
        %v8534 = vpack.c.bf16 %v6593, %v6592
        %v8535 = vpack.c.bf16 %v6595, %v6594
        %v8536 = vpack.c.bf16 %v6597, %v6596
        %v8537 = vpack.c.bf16 %v6599, %v6598
        %v8538 = vpack.c.bf16 %v6601, %v6600
        %v8539 = vpack.c.bf16 %v6603, %v6602
        %v8540 = vpack.c.bf16 %v6605, %v6604
        %v8541 = vpack.c.bf16 %v6607, %v6606
        %v8542 = vpack.c.bf16 %v6609, %v6608
        %v8543 = vpack.c.bf16 %v6611, %v6610
        %v8544 = vpack.c.bf16 %v6613, %v6612
        %v8545 = vpack.c.bf16 %v6615, %v6614
        %v8546 = vpack.c.bf16 %v6617, %v6616
        %v8547 = vpack.c.bf16 %v6619, %v6618
        %v8548 = vpack.c.bf16 %v6621, %v6620
        %v8549 = vpack.c.bf16 %v6623, %v6622
        %v8550 = vpack.c.bf16 %v6625, %v6624
        %v8551 = vpack.c.bf16 %v6627, %v6626
        %v8552 = vpack.c.bf16 %v6629, %v6628
        %v8553 = vpack.c.bf16 %v6631, %v6630
        %v8554 = vpack.c.bf16 %v6633, %v6632
        %v8555 = vpack.c.bf16 %v6635, %v6634
        %v8556 = vpack.c.bf16 %v6637, %v6636
        %v8557 = vpack.c.bf16 %v6639, %v6638
        %v8558 = vpack.c.bf16 %v6641, %v6640
        %v8559 = vpack.c.bf16 %v6643, %v6642
        %v8560 = vpack.c.bf16 %v6645, %v6644
        %v8561 = vpack.c.bf16 %v6647, %v6646
        %v8562 = vpack.c.bf16 %v6649, %v6648
        %v8563 = vpack.c.bf16 %v6651, %v6650
        %v8564 = vpack.c.bf16 %v6653, %v6652
        %v8565 = vpack.c.bf16 %v6655, %v6654
        %v8566 = vpack.c.bf16 %v6657, %v6656
        %v8567 = vpack.c.bf16 %v6659, %v6658
        %v8568 = vpack.c.bf16 %v6661, %v6660
        %v8569 = vpack.c.bf16 %v6663, %v6662
        %v8570 = vpack.c.bf16 %v6665, %v6664
        %v8571 = vpack.c.bf16 %v6667, %v6666
        %v8572 = vpack.c.bf16 %v6669, %v6668
        %v8573 = vpack.c.bf16 %v6671, %v6670
        %v8574 = vpack.c.bf16 %v6673, %v6672
        %v8575 = vpack.c.bf16 %v6675, %v6674
        %v8576 = vpack.c.bf16 %v6677, %v6676
        %v8577 = vpack.c.bf16 %v6679, %v6678
        %v8578 = vpack.c.bf16 %v6681, %v6680
        %v8579 = vpack.c.bf16 %v6683, %v6682
        %v8580 = vpack.c.bf16 %v6685, %v6684
        %v8581 = vpack.c.bf16 %v6687, %v6686
        %v8582 = vpack.c.bf16 %v6689, %v6688
        %v8583 = vpack.c.bf16 %v6691, %v6690
        %v8584 = vpack.c.bf16 %v6693, %v6692
        %v8585 = vpack.c.bf16 %v6695, %v6694
        %v8586 = vpack.c.bf16 %v6697, %v6696
        %v8587 = vpack.c.bf16 %v6699, %v6698
        %v8588 = vpack.c.bf16 %v6701, %v6700
        %v8589 = vpack.c.bf16 %v6703, %v6702
        %v8590 = vpack.c.bf16 %v6705, %v6704
        %v8591 = vpack.c.bf16 %v6707, %v6706
        %v8592 = vpack.c.bf16 %v6709, %v6708
        %v8593 = vpack.c.bf16 %v6711, %v6710
        %v8594 = vpack.c.bf16 %v6713, %v6712
        %v8595 = vpack.c.bf16 %v6715, %v6714
        %v8596 = vpack.c.bf16 %v6717, %v6716
        %v8597 = vpack.c.bf16 %v6719, %v6718
        %v8598 = vpack.c.bf16 %v6721, %v6720
        %v8599 = vpack.c.bf16 %v6723, %v6722
        %v8600 = vpack.c.bf16 %v6725, %v6724
        %v8601 = vpack.c.bf16 %v6727, %v6726
        %v8602 = vpack.c.bf16 %v6729, %v6728
        %v8603 = vpack.c.bf16 %v6731, %v6730
        %v8604 = vpack.c.bf16 %v6733, %v6732
        %v8605 = vpack.c.bf16 %v6735, %v6734
        %v8606 = vpack.c.bf16 %v6737, %v6736
        %v8607 = vpack.c.bf16 %v6739, %v6738
        %v8608 = vpack.c.bf16 %v6741, %v6740
        %v8609 = vpack.c.bf16 %v6743, %v6742
        %v8610 = vpack.c.bf16 %v6745, %v6744
        %v8611 = vpack.c.bf16 %v6747, %v6746
        %v8612 = vpack.c.bf16 %v6749, %v6748
        %v8613 = vpack.c.bf16 %v6751, %v6750
        %v8614 = vpack.c.bf16 %v6753, %v6752
        %v8615 = vpack.c.bf16 %v6755, %v6754
        %v8616 = vpack.c.bf16 %v6757, %v6756
        %v8617 = vpack.c.bf16 %v6759, %v6758
        %v8618 = vpack.c.bf16 %v6761, %v6760
        %v8619 = vpack.c.bf16 %v6763, %v6762
        %v8620 = vpack.c.bf16 %v6765, %v6764
        %v8621 = vpack.c.bf16 %v6767, %v6766
        %v8622 = vpack.c.bf16 %v6769, %v6768
        %v8623 = vpack.c.bf16 %v6771, %v6770
        %v8624 = vpack.c.bf16 %v6773, %v6772
        %v8625 = vpack.c.bf16 %v6775, %v6774
        %v8626 = vpack.c.bf16 %v6777, %v6776
        %v8627 = vpack.c.bf16 %v6779, %v6778
        %v8628 = vpack.c.bf16 %v6781, %v6780
        %v8629 = vpack.c.bf16 %v6783, %v6782
        %v8630 = vpack.c.bf16 %v6785, %v6784
        %v8631 = vpack.c.bf16 %v6787, %v6786
        %v8632 = vpack.c.bf16 %v6789, %v6788
        %v8633 = vpack.c.bf16 %v6791, %v6790
        %v8634 = vpack.c.bf16 %v6793, %v6792
        %v8635 = vpack.c.bf16 %v6795, %v6794
        %v8636 = vpack.c.bf16 %v6797, %v6796
        %v8637 = vpack.c.bf16 %v6799, %v6798
        %v8638 = vpack.c.bf16 %v6801, %v6800
        %v8639 = vpack.c.bf16 %v6803, %v6802
        %v8640 = vpack.c.bf16 %v6805, %v6804
        %v8641 = vpack.c.bf16 %v6807, %v6806
        %v8642 = vpack.c.bf16 %v6809, %v6808
        %v8643 = vpack.c.bf16 %v6811, %v6810
        %v8644 = vpack.c.bf16 %v6813, %v6812
        %v8645 = vpack.c.bf16 %v6815, %v6814
        %v8646 = vpack.c.bf16 %v6817, %v6816
        %v8647 = vpack.c.bf16 %v6819, %v6818
        %v8648 = vpack.c.bf16 %v6821, %v6820
        %v8649 = vpack.c.bf16 %v6823, %v6822
        %v8650 = vpack.c.bf16 %v6825, %v6824
        %v8651 = vpack.c.bf16 %v6827, %v6826
        %v8652 = vpack.c.bf16 %v6829, %v6828
        %v8653 = vpack.c.bf16 %v6831, %v6830
        %v8654 = vpack.c.bf16 %v6833, %v6832
        %v8655 = vpack.c.bf16 %v6835, %v6834
        %v8656 = vpack.c.bf16 %v6837, %v6836
        %v8657 = vpack.c.bf16 %v6839, %v6838
        %v8658 = vpack.c.bf16 %v6841, %v6840
        %v8659 = vpack.c.bf16 %v6843, %v6842
        %v8660 = vpack.c.bf16 %v6845, %v6844
        %v8661 = vpack.c.bf16 %v6847, %v6846
        %v8662 = vpack.c.bf16 %v6849, %v6848
        %v8663 = vpack.c.bf16 %v6851, %v6850
        %v8664 = vpack.c.bf16 %v6853, %v6852
        %v8665 = vpack.c.bf16 %v6855, %v6854
        %v8666 = vpack.c.bf16 %v6857, %v6856
        %v8667 = vpack.c.bf16 %v6859, %v6858
        %v8668 = vpack.c.bf16 %v6861, %v6860
        %v8669 = vpack.c.bf16 %v6863, %v6862
        %v8670 = vpack.c.bf16 %v6865, %v6864
        %v8671 = vpack.c.bf16 %v6867, %v6866
        %v8672 = vpack.c.bf16 %v6869, %v6868
        %v8673 = vpack.c.bf16 %v6871, %v6870
        %v8674 = vpack.c.bf16 %v6873, %v6872
        %v8675 = vpack.c.bf16 %v6875, %v6874
        %v8676 = vpack.c.bf16 %v6877, %v6876
        %v8677 = vpack.c.bf16 %v6879, %v6878
        %v8678 = vpack.c.bf16 %v6881, %v6880
        %v8679 = vpack.c.bf16 %v6883, %v6882
        %v8680 = vpack.c.bf16 %v6885, %v6884
        %v8681 = vpack.c.bf16 %v6887, %v6886
        %v8682 = vpack.c.bf16 %v6889, %v6888
        %v8683 = vpack.c.bf16 %v6891, %v6890
        %v8684 = vpack.c.bf16 %v6893, %v6892
        %v8685 = vpack.c.bf16 %v6895, %v6894
        %v8686 = vpack.c.bf16 %v6897, %v6896
        %v8687 = vpack.c.bf16 %v6899, %v6898
        %v8688 = vpack.c.bf16 %v6901, %v6900
        %v8689 = vpack.c.bf16 %v6903, %v6902
        %v8690 = vpack.c.bf16 %v6905, %v6904
        %v8691 = vpack.c.bf16 %v6907, %v6906
        %v8692 = vpack.c.bf16 %v6909, %v6908
        %v8693 = vpack.c.bf16 %v6911, %v6910
        %v8694 = vpack.c.bf16 %v6913, %v6912
        %v8695 = vpack.c.bf16 %v6915, %v6914
        %v8696 = vpack.c.bf16 %v6917, %v6916
        %v8697 = vpack.c.bf16 %v6919, %v6918
        %v8698 = vpack.c.bf16 %v6921, %v6920
        %v8699 = vpack.c.bf16 %v6923, %v6922
        %v8700 = vpack.c.bf16 %v6925, %v6924
        %v8701 = vpack.c.bf16 %v6927, %v6926
        %v8702 = vpack.c.bf16 %v6929, %v6928
        %v8703 = vpack.c.bf16 %v6931, %v6930
        %v8704 = vpack.c.bf16 %v6933, %v6932
        %v8705 = vpack.c.bf16 %v6935, %v6934
        %v8706 = vpack.c.bf16 %v6937, %v6936
        %v8707 = vpack.c.bf16 %v6939, %v6938
        %v8708 = vpack.c.bf16 %v6941, %v6940
        %v8709 = vpack.c.bf16 %v6943, %v6942
        %v8710 = vpack.c.bf16 %v6945, %v6944
        %v8711 = vpack.c.bf16 %v6947, %v6946
        %v8712 = vpack.c.bf16 %v6949, %v6948
        %v8713 = vpack.c.bf16 %v6951, %v6950
        %v8714 = vpack.c.bf16 %v6953, %v6952
        %v8715 = vpack.c.bf16 %v6955, %v6954
        %v8716 = vpack.c.bf16 %v6957, %v6956
        %v8717 = vpack.c.bf16 %v6959, %v6958
        %v8718 = vpack.c.bf16 %v6961, %v6960
        %v8719 = vpack.c.bf16 %v6963, %v6962
        %v8720 = vpack.c.bf16 %v6965, %v6964
        %v8721 = vpack.c.bf16 %v6967, %v6966
        %v8722 = vpack.c.bf16 %v6969, %v6968
        %v8723 = vpack.c.bf16 %v6971, %v6970
        %v8724 = vpack.c.bf16 %v6973, %v6972
        %v8725 = vpack.c.bf16 %v6975, %v6974
        %v8726 = vpack.c.bf16 %v6977, %v6976
        %v8727 = vpack.c.bf16 %v6979, %v6978
        %v8728 = vpack.c.bf16 %v6981, %v6980
        %v8729 = vpack.c.bf16 %v6983, %v6982
        %v8730 = vpack.c.bf16 %v6985, %v6984
        %v8731 = vpack.c.bf16 %v6987, %v6986
        %v8732 = vpack.c.bf16 %v6989, %v6988
        %v8733 = vpack.c.bf16 %v6991, %v6990
        %v8734 = vpack.c.bf16 %v6993, %v6992
        %v8735 = vpack.c.bf16 %v6995, %v6994
        %v8736 = vpack.c.bf16 %v6997, %v6996
        %v8737 = vpack.c.bf16 %v6999, %v6998
        %v8738 = vpack.c.bf16 %v7001, %v7000
        %v8739 = vpack.c.bf16 %v7003, %v7002
        %v8740 = vpack.c.bf16 %v7005, %v7004
        %v8741 = vpack.c.bf16 %v7007, %v7006
        %v8742 = vpack.c.bf16 %v7009, %v7008
        %v8743 = vpack.c.bf16 %v7011, %v7010
        %v8744 = vpack.c.bf16 %v7013, %v7012
        %v8745 = vpack.c.bf16 %v7015, %v7014
        %v8746 = vpack.c.bf16 %v7017, %v7016
        %v8747 = vpack.c.bf16 %v7019, %v7018
        %v8748 = vpack.c.bf16 %v7021, %v7020
        %v8749 = vpack.c.bf16 %v7023, %v7022
        %v8750 = vpack.c.bf16 %v7025, %v7024
        %v8751 = vpack.c.bf16 %v7027, %v7026
        %v8752 = vpack.c.bf16 %v7029, %v7028
        %v8753 = vpack.c.bf16 %v7031, %v7030
        %v8754 = vpack.c.bf16 %v7033, %v7032
        %v8755 = vpack.c.bf16 %v7035, %v7034
        %v8756 = vpack.c.bf16 %v7037, %v7036
        %v8757 = vpack.c.bf16 %v7039, %v7038
        %v8758 = vpack.c.bf16 %v7041, %v7040
        %v8759 = vpack.c.bf16 %v7043, %v7042
        %v8760 = vpack.c.bf16 %v7045, %v7044
        %v8761 = vpack.c.bf16 %v7047, %v7046
        %v8762 = vpack.c.bf16 %v7049, %v7048
        %v8763 = vpack.c.bf16 %v7051, %v7050
        %v8764 = vpack.c.bf16 %v7053, %v7052
        %v8765 = vpack.c.bf16 %v7055, %v7054
        %v8766 = vpack.c.bf16 %v7057, %v7056
        %v8767 = vpack.c.bf16 %v7059, %v7058
        %v8768 = vpack.c.bf16 %v7061, %v7060
        %v8769 = vpack.c.bf16 %v7063, %v7062
        %v8770 = vpack.c.bf16 %v7065, %v7064
        %v8771 = vpack.c.bf16 %v7067, %v7066
        %v8772 = vpack.c.bf16 %v7069, %v7068
        %v8773 = vpack.c.bf16 %v7071, %v7070
        %v8774 = vpack.c.bf16 %v7073, %v7072
        %v8775 = vpack.c.bf16 %v7075, %v7074
        %v8776 = vpack.c.bf16 %v7077, %v7076
        %v8777 = vpack.c.bf16 %v7079, %v7078
        %v8778 = vpack.c.bf16 %v7081, %v7080
        %v8779 = vpack.c.bf16 %v7083, %v7082
        %v8780 = vpack.c.bf16 %v7085, %v7084
        %v8781 = vpack.c.bf16 %v7087, %v7086
        %v8782 = vpack.c.bf16 %v7089, %v7088
        %v8783 = vpack.c.bf16 %v7091, %v7090
        %v8784 = vpack.c.bf16 %v7093, %v7092
        %v8785 = vpack.c.bf16 %v7095, %v7094
        %v8786 = vpack.c.bf16 %v7097, %v7096
        %v8787 = vpack.c.bf16 %v7099, %v7098
        %v8788 = vpack.c.bf16 %v7101, %v7100
        %v8789 = vpack.c.bf16 %v7103, %v7102
        %v8790 = vpack.c.bf16 %v7105, %v7104
        %v8791 = vpack.c.bf16 %v7107, %v7106
        %v8792 = vpack.c.bf16 %v7109, %v7108
        %v8793 = vpack.c.bf16 %v7111, %v7110
        %v8794 = vpack.c.bf16 %v7113, %v7112
        %v8795 = vpack.c.bf16 %v7115, %v7114
        %v8796 = vpack.c.bf16 %v7117, %v7116
        %v8797 = vpack.c.bf16 %v7119, %v7118
        %v8798 = vpack.c.bf16 %v7121, %v7120
        %v8799 = vpack.c.bf16 %v7123, %v7122
        %v8800 = vpack.c.bf16 %v7125, %v7124
        %v8801 = vpack.c.bf16 %v7127, %v7126
        %v8802 = vpack.c.bf16 %v7129, %v7128
        %v8803 = vpack.c.bf16 %v7131, %v7130
        %v8804 = vpack.c.bf16 %v7133, %v7132
        %v8805 = vpack.c.bf16 %v7135, %v7134
        %v8806 = vpack.c.bf16 %v7137, %v7136
        %v8807 = vpack.c.bf16 %v7139, %v7138
        %v8808 = vpack.c.bf16 %v7141, %v7140
        %v8809 = vpack.c.bf16 %v7143, %v7142
        %v8810 = vpack.c.bf16 %v7145, %v7144
        %v8811 = vpack.c.bf16 %v7147, %v7146
        %v8812 = vpack.c.bf16 %v7149, %v7148
        %v8813 = vpack.c.bf16 %v7151, %v7150
        %v8814 = vpack.c.bf16 %v7153, %v7152
        %v8815 = vpack.c.bf16 %v7155, %v7154
        %v8816 = vpack.c.bf16 %v7157, %v7156
        %v8817 = vpack.c.bf16 %v7159, %v7158
        %v8818 = vpack.c.bf16 %v7161, %v7160
        %v8819 = vpack.c.bf16 %v7163, %v7162
        %v8820 = vpack.c.bf16 %v7165, %v7164
        %v8821 = vpack.c.bf16 %v7167, %v7166
        %v8822 = vpack.c.bf16 %v7169, %v7168
        %v8823 = vpack.c.bf16 %v7171, %v7170
        %v8824 = vpack.c.bf16 %v7173, %v7172
        %v8825 = vpack.c.bf16 %v7175, %v7174
        %v8826 = vpack.c.bf16 %v7177, %v7176
        %v8827 = vpack.c.bf16 %v7179, %v7178
        %v8828 = vpack.c.bf16 %v7181, %v7180
        %v8829 = vpack.c.bf16 %v7183, %v7182
        %v8830 = vpack.c.bf16 %v7185, %v7184
        %v8831 = vpack.c.bf16 %v7187, %v7186
        %v8832 = vpack.c.bf16 %v7189, %v7188
        %v8833 = vpack.c.bf16 %v7191, %v7190
        %v8834 = vpack.c.bf16 %v7193, %v7192
        %v8835 = vpack.c.bf16 %v7195, %v7194
        %v8836 = vpack.c.bf16 %v7197, %v7196
        %v8837 = vpack.c.bf16 %v7199, %v7198
        %v8838 = vpack.c.bf16 %v7201, %v7200
        %v8839 = vpack.c.bf16 %v7203, %v7202
        %v8840 = vpack.c.bf16 %v7205, %v7204
        %v8841 = vpack.c.bf16 %v7207, %v7206
        %v8842 = vpack.c.bf16 %v7209, %v7208
        %v8843 = vpack.c.bf16 %v7211, %v7210
        %v8844 = vpack.c.bf16 %v7213, %v7212
        %v8845 = vpack.c.bf16 %v7215, %v7214
        %v8846 = vpack.c.bf16 %v7217, %v7216
        %v8847 = vpack.c.bf16 %v7219, %v7218
        %v8848 = vpack.c.bf16 %v7221, %v7220
        %v8849 = vpack.c.bf16 %v7223, %v7222
        %v8850 = vpack.c.bf16 %v7225, %v7224
        %v8851 = vpack.c.bf16 %v7227, %v7226
        %v8852 = vpack.c.bf16 %v7229, %v7228
        %v8853 = vpack.c.bf16 %v7231, %v7230
        %v8854 = vpack.c.bf16 %v7233, %v7232
        %v8855 = vpack.c.bf16 %v7235, %v7234
        %v8856 = vpack.c.bf16 %v7237, %v7236
        %v8857 = vpack.c.bf16 %v7239, %v7238
        %v8858 = vpack.c.bf16 %v7241, %v7240
        %v8859 = vpack.c.bf16 %v7243, %v7242
        %v8860 = vpack.c.bf16 %v7245, %v7244
        %v8861 = vpack.c.bf16 %v7247, %v7246
        %v8862 = vpack.c.bf16 %v7249, %v7248
        %v8863 = vpack.c.bf16 %v7251, %v7250
        %v8864 = vpack.c.bf16 %v7253, %v7252
        %v8865 = vpack.c.bf16 %v7255, %v7254
        %v8866 = vpack.c.bf16 %v7257, %v7256
        %v8867 = vpack.c.bf16 %v7259, %v7258
        %v8868 = vpack.c.bf16 %v7261, %v7260
        %v8869 = vpack.c.bf16 %v7263, %v7262
        %v8870 = vpack.c.bf16 %v7265, %v7264
        %v8871 = vpack.c.bf16 %v7267, %v7266
        %v8872 = vpack.c.bf16 %v7269, %v7268
        %v8873 = vpack.c.bf16 %v7271, %v7270
        %v8874 = vpack.c.bf16 %v7273, %v7272
        %v8875 = vpack.c.bf16 %v7275, %v7274
        %v8876 = vpack.c.bf16 %v7277, %v7276
        %v8877 = vpack.c.bf16 %v7279, %v7278
        %v8878 = vpack.c.bf16 %v7281, %v7280
        %v8879 = vpack.c.bf16 %v7283, %v7282
        %v8880 = vpack.c.bf16 %v7285, %v7284
        %v8881 = vpack.c.bf16 %v7287, %v7286
        %v8882 = vpack.c.bf16 %v7289, %v7288
        %v8883 = vpack.c.bf16 %v7291, %v7290
        %v8884 = vpack.c.bf16 %v7293, %v7292
        %v8885 = vpack.c.bf16 %v7295, %v7294
        %v8886 = vpack.c.bf16 %v7297, %v7296
        %v8887 = vpack.c.bf16 %v7299, %v7298
        %v8888 = vpack.c.bf16 %v7301, %v7300
        %v8889 = vpack.c.bf16 %v7303, %v7302
        %v8890 = vpack.c.bf16 %v7305, %v7304
        %v8891 = vpack.c.bf16 %v7307, %v7306
        %v8892 = vpack.c.bf16 %v7309, %v7308
        %v8893 = vpack.c.bf16 %v7311, %v7310
        %v8894 = vpack.c.bf16 %v7313, %v7312
        %v8895 = vpack.c.bf16 %v7315, %v7314
        %v8896 = vpack.c.bf16 %v7317, %v7316
        %v8897 = vpack.c.bf16 %v7319, %v7318
        %v8898 = vpack.c.bf16 %v7321, %v7320
        %v8899 = vpack.c.bf16 %v7323, %v7322
        %v8900 = vpack.c.bf16 %v7325, %v7324
        %v8901 = vpack.c.bf16 %v7327, %v7326
        %v8902 = vpack.c.bf16 %v7329, %v7328
        %v8903 = vpack.c.bf16 %v7331, %v7330
        %v8904 = vpack.c.bf16 %v7333, %v7332
        %v8905 = vpack.c.bf16 %v7335, %v7334
        %v8906 = vpack.c.bf16 %v7337, %v7336
        %v8907 = vpack.c.bf16 %v7339, %v7338
        %v8908 = vpack.c.bf16 %v7341, %v7340
        %v8909 = vpack.c.bf16 %v7343, %v7342
        %v8910 = vpack.c.bf16 %v7345, %v7344
        %v8911 = vpack.c.bf16 %v7347, %v7346
        %v8912 = vpack.c.bf16 %v7349, %v7348
        %v8913 = vpack.c.bf16 %v7351, %v7350
        %v8914 = vpack.c.bf16 %v7353, %v7352
        %v8915 = vpack.c.bf16 %v7355, %v7354
        %v8916 = vpack.c.bf16 %v7357, %v7356
        %v8917 = vpack.c.bf16 %v7359, %v7358
        %v8918 = vpack.c.bf16 %v7361, %v7360
        %v8919 = vpack.c.bf16 %v7363, %v7362
        %v8920 = vpack.c.bf16 %v7365, %v7364
        %v8921 = vpack.c.bf16 %v7367, %v7366
        %v8922 = vpack.c.bf16 %v7369, %v7368
        %v8923 = vpack.c.bf16 %v7371, %v7370
        %v8924 = vpack.c.bf16 %v7373, %v7372
        %v8925 = vpack.c.bf16 %v7375, %v7374
        %v8926 = vpack.c.bf16 %v7377, %v7376
        %v8927 = vpack.c.bf16 %v7379, %v7378
        %v8928 = vpack.c.bf16 %v7381, %v7380
        %v8929 = vpack.c.bf16 %v7383, %v7382
        %v8930 = vpack.c.bf16 %v7385, %v7384
        %v8931 = vpack.c.bf16 %v7387, %v7386
        %v8932 = vpack.c.bf16 %v7389, %v7388
        %v8933 = vpack.c.bf16 %v7391, %v7390
        %v8934 = vpack.c.bf16 %v7393, %v7392
        %v8935 = vpack.c.bf16 %v7395, %v7394
        %v8936 = vpack.c.bf16 %v7397, %v7396
        %v8937 = vpack.c.bf16 %v7399, %v7398
        %v8938 = vpack.c.bf16 %v7401, %v7400
        %v8939 = vpack.c.bf16 %v7403, %v7402
        %v8940 = vpack.c.bf16 %v7405, %v7404
        %v8941 = vpack.c.bf16 %v7407, %v7406
        %v8942 = vpack.c.bf16 %v7409, %v7408
        %v8943 = vpack.c.bf16 %v7411, %v7410
        %v8944 = vpack.c.bf16 %v7413, %v7412
        %v8945 = vpack.c.bf16 %v7415, %v7414
        %v8946 = vpack.c.bf16 %v7417, %v7416
        %v8947 = vpack.c.bf16 %v7419, %v7418
        %v8948 = vpack.c.bf16 %v7421, %v7420
        %v8949 = vpack.c.bf16 %v7423, %v7422
        %v8950 = vpack.c.bf16 %v7425, %v7424
        %v8951 = vpack.c.bf16 %v7427, %v7426
        %v8952 = vpack.c.bf16 %v7429, %v7428
        %v8953 = vpack.c.bf16 %v7431, %v7430
        %v8954 = vpack.c.bf16 %v7433, %v7432
        %v8955 = vpack.c.bf16 %v7435, %v7434
        %v8956 = vpack.c.bf16 %v7437, %v7436
        %v8957 = vpack.c.bf16 %v7439, %v7438
        %v8958 = vpack.c.bf16 %v7441, %v7440
        %v8959 = vpack.c.bf16 %v7443, %v7442
        %v8960 = vpack.c.bf16 %v7445, %v7444
        %v8961 = vpack.c.bf16 %v7447, %v7446
        %v8962 = vpack.c.bf16 %v7449, %v7448
        %v8963 = vpack.c.bf16 %v7451, %v7450
        %v8964 = vpack.c.bf16 %v7453, %v7452
        %v8965 = vpack.c.bf16 %v7455, %v7454
        %v8966 = vpack.c.bf16 %v7457, %v7456
        %v8967 = vpack.c.bf16 %v7459, %v7458
        %v8968 = vpack.c.bf16 %v7461, %v7460
        %v8969 = vpack.c.bf16 %v7463, %v7462
        %v8970 = vpack.c.bf16 %v7465, %v7464
        %v8971 = vpack.c.bf16 %v7467, %v7466
        %v8972 = vpack.c.bf16 %v7469, %v7468
        %v8973 = vpack.c.bf16 %v7471, %v7470
        %v8974 = vpack.c.bf16 %v7473, %v7472
        %v8975 = vpack.c.bf16 %v7475, %v7474
        %v8976 = vpack.c.bf16 %v7477, %v7476
        %v8977 = vpack.c.bf16 %v7479, %v7478
        %v8978 = vpack.c.bf16 %v7481, %v7480
        %v8979 = vpack.c.bf16 %v7483, %v7482
        %v8980 = vpack.c.bf16 %v7485, %v7484
        %v8981 = vpack.c.bf16 %v7487, %v7486
        %v8982 = vpack.c.bf16 %v7489, %v7488
        %v8983 = vpack.c.bf16 %v7491, %v7490
        %v8984 = vpack.c.bf16 %v7493, %v7492
        %v8985 = vpack.c.bf16 %v7495, %v7494
        %v8986 = vpack.c.bf16 %v7497, %v7496
        %v8987 = vpack.c.bf16 %v7499, %v7498
        %v8988 = vpack.c.bf16 %v7501, %v7500
        %v8989 = vpack.c.bf16 %v7503, %v7502
        %v8990 = vpack.c.bf16 %v7505, %v7504
        %v8991 = vpack.c.bf16 %v7507, %v7506
        %v8992 = vpack.c.bf16 %v7509, %v7508
        %v8993 = vpack.c.bf16 %v7511, %v7510
        %v8994 = vpack.c.bf16 %v7513, %v7512
        %v8995 = vpack.c.bf16 %v7515, %v7514
        %v8996 = vpack.c.bf16 %v7517, %v7516
        %v8997 = vpack.c.bf16 %v7519, %v7518
        %v8998 = vpack.c.bf16 %v7521, %v7520
        %v8999 = vpack.c.bf16 %v7523, %v7522
        %v9000 = vpack.c.bf16 %v7525, %v7524
        %v9001 = vpack.c.bf16 %v7527, %v7526
        %v9002 = vpack.c.bf16 %v7529, %v7528
        %v9003 = vpack.c.bf16 %v7531, %v7530
        %v9004 = vpack.c.bf16 %v7533, %v7532
        %v9005 = vpack.c.bf16 %v7535, %v7534
        %v9006 = vpack.c.bf16 %v7537, %v7536
        %v9007 = vpack.c.bf16 %v7539, %v7538
        %v9008 = vpack.c.bf16 %v7541, %v7540
        %v9009 = vpack.c.bf16 %v7543, %v7542
        %v9010 = vpack.c.bf16 %v7545, %v7544
        %v9011 = vpack.c.bf16 %v7547, %v7546
        %v9012 = vpack.c.bf16 %v7549, %v7548
        %v9013 = vpack.c.bf16 %v7551, %v7550
        %v9014 = vpack.c.bf16 %v7553, %v7552
        %v9015 = vpack.c.bf16 %v7555, %v7554
        %v9016 = vpack.c.bf16 %v7557, %v7556
        %v9017 = vpack.c.bf16 %v7559, %v7558
        %v9018 = vpack.c.bf16 %v7561, %v7560
        %v9019 = vpack.c.bf16 %v7563, %v7562
        %v9020 = vpack.c.bf16 %v7565, %v7564
        %v9021 = vpack.c.bf16 %v7567, %v7566
        %v9022 = vpack.c.bf16 %v7569, %v7568
        %v9023 = vpack.c.bf16 %v7571, %v7570
        %v9024 = vpack.c.bf16 %v7573, %v7572
        %v9025 = vpack.c.bf16 %v7575, %v7574
        %v9026 = vpack.c.bf16 %v7577, %v7576
        %v9027 = vpack.c.bf16 %v7579, %v7578
        %v9028 = vpack.c.bf16 %v7581, %v7580
        %v9029 = vpack.c.bf16 %v7583, %v7582
        %v9030 = vpack.c.bf16 %v7585, %v7584
        %v9031 = vpack.c.bf16 %v7587, %v7586
        %v9032 = vpack.c.bf16 %v7589, %v7588
        %v9033 = vpack.c.bf16 %v7591, %v7590
        %v9034 = vpack.c.bf16 %v7593, %v7592
        %v9035 = vpack.c.bf16 %v7595, %v7594
        %v9036 = vpack.c.bf16 %v7597, %v7596
        %v9037 = vpack.c.bf16 %v7599, %v7598
        %v9038 = vpack.c.bf16 %v7601, %v7600
        %v9039 = vpack.c.bf16 %v7603, %v7602
        %v9040 = vpack.c.bf16 %v7605, %v7604
        %v9041 = vpack.c.bf16 %v7607, %v7606
        %v9042 = vpack.c.bf16 %v7609, %v7608
        %v9043 = vpack.c.bf16 %v7611, %v7610
        %v9044 = vpack.c.bf16 %v7613, %v7612
        %v9045 = vpack.c.bf16 %v7615, %v7614
        %v9046 = vpack.c.bf16 %v7617, %v7616
        %v9047 = vpack.c.bf16 %v7619, %v7618
        %v9048 = vpack.c.bf16 %v7621, %v7620
        %v9049 = vpack.c.bf16 %v7623, %v7622
        %v9050 = vpack.c.bf16 %v7625, %v7624
        %v9051 = vpack.c.bf16 %v7627, %v7626
        %v9052 = vpack.c.bf16 %v7629, %v7628
        %v9053 = vpack.c.bf16 %v7631, %v7630
        %v9054 = vpack.c.bf16 %v7633, %v7632
        %v9055 = vpack.c.bf16 %v7635, %v7634
        %v9056 = vpack.c.bf16 %v7637, %v7636
        %v9057 = vpack.c.bf16 %v7639, %v7638
        %v9058 = vpack.c.bf16 %v7641, %v7640
        %v9059 = vpack.c.bf16 %v7643, %v7642
        %v9060 = vpack.c.bf16 %v7645, %v7644
        %v9061 = vpack.c.bf16 %v7647, %v7646
        %v9062 = vpack.c.bf16 %v7649, %v7648
        %v9063 = vpack.c.bf16 %v7651, %v7650
        %v9064 = vpack.c.bf16 %v7653, %v7652
        %v9065 = vpack.c.bf16 %v7655, %v7654
        %v9066 = vpack.c.bf16 %v7657, %v7656
        %v9067 = vpack.c.bf16 %v7659, %v7658
        %v9068 = vpack.c.bf16 %v7661, %v7660
        %v9069 = vpack.c.bf16 %v7663, %v7662
        %v9070 = vpack.c.bf16 %v7665, %v7664
        %v9071 = vpack.c.bf16 %v7667, %v7666
        %v9072 = vpack.c.bf16 %v7669, %v7668
        %v9073 = vpack.c.bf16 %v7671, %v7670
        %v9074 = vpack.c.bf16 %v7673, %v7672
        %v9075 = vpack.c.bf16 %v7675, %v7674
        %v9076 = vpack.c.bf16 %v7677, %v7676
        %v9077 = vpack.c.bf16 %v7679, %v7678
        %v9078 = vpack.c.bf16 %v7681, %v7680
        %v9079 = vpack.c.bf16 %v7683, %v7682
        %v9080 = vpack.c.bf16 %v7685, %v7684
        %v9081 = vpack.c.bf16 %v7687, %v7686
        %v9082 = vpack.c.bf16 %v7689, %v7688
        %v9083 = vpack.c.bf16 %v7691, %v7690
        %v9084 = vpack.c.bf16 %v7693, %v7692
        %v9085 = vpack.c.bf16 %v7695, %v7694
        %v9086 = vpack.c.bf16 %v7697, %v7696
        %v9087 = vpack.c.bf16 %v7699, %v7698
        %v9088 = vpack.c.bf16 %v7701, %v7700
        %v9089 = vpack.c.bf16 %v7703, %v7702
        %v9090 = vpack.c.bf16 %v7705, %v7704
        %v9091 = vpack.c.bf16 %v7707, %v7706
        %v9092 = vpack.c.bf16 %v7709, %v7708
        %v9093 = vpack.c.bf16 %v7711, %v7710
        %v9094 = vpack.c.bf16 %v7713, %v7712
        %v9095 = vpack.c.bf16 %v7715, %v7714
        %v9096 = vpack.c.bf16 %v7717, %v7716
        %v9097 = vpack.c.bf16 %v7719, %v7718
        %v9098 = vpack.c.bf16 %v7721, %v7720
        %v9099 = vpack.c.bf16 %v7723, %v7722
        %v9100 = vpack.c.bf16 %v7725, %v7724
        %v9101 = vpack.c.bf16 %v7727, %v7726
        %v9102 = vpack.c.bf16 %v7729, %v7728
        %v9103 = vpack.c.bf16 %v7731, %v7730
        %v9104 = vpack.c.bf16 %v7733, %v7732
        %v9105 = vpack.c.bf16 %v7735, %v7734
        %v9106 = vpack.c.bf16 %v7737, %v7736
        %v9107 = vpack.c.bf16 %v7739, %v7738
        %v9108 = vpack.c.bf16 %v7741, %v7740
        %v9109 = vpack.c.bf16 %v7743, %v7742
        %v9110 = vpack.c.bf16 %v7745, %v7744
        %v9111 = vpack.c.bf16 %v7747, %v7746
        %v9112 = vpack.c.bf16 %v7749, %v7748
        %v9113 = vpack.c.bf16 %v7751, %v7750
        %v9114 = vpack.c.bf16 %v7753, %v7752
        %v9115 = vpack.c.bf16 %v7755, %v7754
        %v9116 = vpack.c.bf16 %v7757, %v7756
        %v9117 = vpack.c.bf16 %v7759, %v7758
        %v9118 = vpack.c.bf16 %v7761, %v7760
        %v9119 = vpack.c.bf16 %v7763, %v7762
        %v9120 = vpack.c.bf16 %v7765, %v7764
        %v9121 = vpack.c.bf16 %v7767, %v7766
        %v9122 = vpack.c.bf16 %v7769, %v7768
        %v9123 = vpack.c.bf16 %v7771, %v7770
        %v9124 = vpack.c.bf16 %v7773, %v7772
        %v9125 = vpack.c.bf16 %v7775, %v7774
        %v9126 = vpack.c.bf16 %v7777, %v7776
        %v9127 = vpack.c.bf16 %v7779, %v7778
        %v9128 = vpack.c.bf16 %v7781, %v7780
        %v9129 = vpack.c.bf16 %v7783, %v7782
        %v9130 = vpack.c.bf16 %v7785, %v7784
        %v9131 = vpack.c.bf16 %v7787, %v7786
        %v9132 = vpack.c.bf16 %v7789, %v7788
        %v9133 = vpack.c.bf16 %v7791, %v7790
        %v9134 = vpack.c.bf16 %v7793, %v7792
        %v9135 = vpack.c.bf16 %v7795, %v7794
        %v9136 = vpack.c.bf16 %v7797, %v7796
        %v9137 = vpack.c.bf16 %v7799, %v7798
        %v9138 = vpack.c.bf16 %v7801, %v7800
        %v9139 = vpack.c.bf16 %v7803, %v7802
        %v9140 = vpack.c.bf16 %v7805, %v7804
        %v9141 = vpack.c.bf16 %v7807, %v7806
        %v9142 = vpack.c.bf16 %v7809, %v7808
        %v9143 = vpack.c.bf16 %v7811, %v7810
        %v9144 = vpack.c.bf16 %v7813, %v7812
        %v9145 = vpack.c.bf16 %v7815, %v7814
        %v9146 = vpack.c.bf16 %v7817, %v7816
        %v9147 = vpack.c.bf16 %v7819, %v7818
        %v9148 = vpack.c.bf16 %v7821, %v7820
        %v9149 = vpack.c.bf16 %v7823, %v7822
        %v9150 = vpack.c.bf16 %v7825, %v7824
        %v9151 = vpack.c.bf16 %v7827, %v7826
        %v9152 = vpack.c.bf16 %v7829, %v7828
        %v9153 = vpack.c.bf16 %v7831, %v7830
        %v9154 = vpack.c.bf16 %v7833, %v7832
        %v9155 = vpack.c.bf16 %v7835, %v7834
        %v9156 = vpack.c.bf16 %v7837, %v7836
        %v9157 = vpack.c.bf16 %v7839, %v7838
        %v9158 = vpack.c.bf16 %v7841, %v7840
        %v9159 = vpack.c.bf16 %v7843, %v7842
        %v9160 = vpack.c.bf16 %v7845, %v7844
        %v9161 = vpack.c.bf16 %v7847, %v7846
        %v9162 = vpack.c.bf16 %v7849, %v7848
        %v9163 = vpack.c.bf16 %v7851, %v7850
        %v9164 = vpack.c.bf16 %v7853, %v7852
        %v9165 = vpack.c.bf16 %v7855, %v7854
        %v9166 = vpack.c.bf16 %v7857, %v7856
        %v9167 = vpack.c.bf16 %v7859, %v7858
        %v9168 = vpack.c.bf16 %v7861, %v7860
        %v9169 = vpack.c.bf16 %v7863, %v7862
        %v9170 = vpack.c.bf16 %v7865, %v7864
        %v9171 = vpack.c.bf16 %v7867, %v7866
        %v9172 = vpack.c.bf16 %v7869, %v7868
        %v9173 = vpack.c.bf16 %v7871, %v7870
        %v9174 = vpack.c.bf16 %v7873, %v7872
        %v9175 = vpack.c.bf16 %v7875, %v7874
        %v9176 = vpack.c.bf16 %v7877, %v7876
        %v9177 = vpack.c.bf16 %v7879, %v7878
        %v9178 = vpack.c.bf16 %v7881, %v7880
        %v9179 = vpack.c.bf16 %v7883, %v7882
        %v9180 = vpack.c.bf16 %v7885, %v7884
        %v9181 = vpack.c.bf16 %v7887, %v7886
        %v9182 = vpack.c.bf16 %v7889, %v7888
        %v9183 = vpack.c.bf16 %v7891, %v7890
        %v9184 = vpack.c.bf16 %v7893, %v7892
        %v9185 = vpack.c.bf16 %v7895, %v7894
        %v9186 = vpack.c.bf16 %v7897, %v7896
        %v9187 = vpack.c.bf16 %v7899, %v7898
        %v9188 = vpack.c.bf16 %v7901, %v7900
        %v9189 = vpack.c.bf16 %v7903, %v7902
        %v9190 = vpack.c.bf16 %v7905, %v7904
        %v9191 = vpack.c.bf16 %v7907, %v7906
        %v9192 = vpack.c.bf16 %v7909, %v7908
        %v9193 = vpack.c.bf16 %v7911, %v7910
        %v9194 = vpack.c.bf16 %v7913, %v7912
        %v9195 = vpack.c.bf16 %v7915, %v7914
        %v9196 = vpack.c.bf16 %v7917, %v7916
        %v9197 = vpack.c.bf16 %v7919, %v7918
        %v9198 = vpack.c.bf16 %v7921, %v7920
        %v9199 = vpack.c.bf16 %v7923, %v7922
        %v9200 = vpack.c.bf16 %v7925, %v7924
        %v9201 = vpack.c.bf16 %v7927, %v7926
        %v9202 = vpack.c.bf16 %v7929, %v7928
        %v9203 = vpack.c.bf16 %v7931, %v7930
        %v9204 = vpack.c.bf16 %v7933, %v7932
        %v9205 = vpack.c.bf16 %v7935, %v7934
        %v9206 = vpack.c.bf16 %v7937, %v7936
        %v9207 = vpack.c.bf16 %v7939, %v7938
        %v9208 = vpack.c.bf16 %v7941, %v7940
        %v9209 = vpack.c.bf16 %v7943, %v7942
        %v9210 = vpack.c.bf16 %v7945, %v7944
        %v9211 = vpack.c.bf16 %v7947, %v7946
        %v9212 = vpack.c.bf16 %v7949, %v7948
        %v9213 = vpack.c.bf16 %v7951, %v7950
        %v9214 = vpack.c.bf16 %v7953, %v7952
        %v9215 = vpack.c.bf16 %v7955, %v7954
        %v9216 = vpack.c.bf16 %v7957, %v7956
        %v9217 = vpack.c.bf16 %v7959, %v7958
        %v9218 = vpack.c.bf16 %v7961, %v7960
        %v9219 = vpack.c.bf16 %v7963, %v7962
        %v9220 = vpack.c.bf16 %v7965, %v7964
        %v9221 = vpack.c.bf16 %v7967, %v7966
        %v9222 = vpack.c.bf16 %v7969, %v7968
        %v9223 = vpack.c.bf16 %v7971, %v7970
        %v9224 = vpack.c.bf16 %v7973, %v7972
        %v9225 = vpack.c.bf16 %v7975, %v7974
        %v9226 = vpack.c.bf16 %v7977, %v7976
        %v9227 = vpack.c.bf16 %v7979, %v7978
        %v9228 = vpack.c.bf16 %v7981, %v7980
        %v9229 = vpack.c.bf16 %v7983, %v7982
        %v9230 = vpack.c.bf16 %v7985, %v7984
        %v9231 = vpack.c.bf16 %v7987, %v7986
        %v9232 = vpack.c.bf16 %v7989, %v7988
        %v9233 = vpack.c.bf16 %v7991, %v7990
        %v9234 = vpack.c.bf16 %v7993, %v7992
        %v9235 = vpack.c.bf16 %v7995, %v7994
        %v9236 = vpack.c.bf16 %v7997, %v7996
        %v9237 = vpack.c.bf16 %v7999, %v7998
        %v9238 = vpack.c.bf16 %v8001, %v8000
        %v9239 = vpack.c.bf16 %v8003, %v8002
        %v9240 = vpack.c.bf16 %v8005, %v8004
        %v9241 = vpack.c.bf16 %v8007, %v8006
        %v9242 = vpack.c.bf16 %v8009, %v8008
        %v9243 = vpack.c.bf16 %v8011, %v8010
        %v9244 = vpack.c.bf16 %v8013, %v8012
        %v9245 = vpack.c.bf16 %v8015, %v8014
        %v9246 = vpack.c.bf16 %v8017, %v8016
        %v9247 = vpack.c.bf16 %v8019, %v8018
        %v9248 = vpack.c.bf16 %v8021, %v8020
        %v9249 = vpack.c.bf16 %v8023, %v8022
        %v9250 = vpack.c.bf16 %v8025, %v8024
        %v9251 = vpack.c.bf16 %v8027, %v8026
        %v9252 = vpack.c.bf16 %v8029, %v8028
        %v9253 = vpack.c.bf16 %v8031, %v8030
        %v9254 = vpack.c.bf16 %v8033, %v8032
        %v9255 = vpack.c.bf16 %v8035, %v8034
        %v9256 = vpack.c.bf16 %v8037, %v8036
        %v9257 = vpack.c.bf16 %v8039, %v8038
        %v9258 = vpack.c.bf16 %v8041, %v8040
        %v9259 = vpack.c.bf16 %v8043, %v8042
        %v9260 = vpack.c.bf16 %v8045, %v8044
        %v9261 = vpack.c.bf16 %v8047, %v8046
        %v9262 = vpack.c.bf16 %v8049, %v8048
        %v9263 = vpack.c.bf16 %v8051, %v8050
        %v9264 = vpack.c.bf16 %v8053, %v8052
        %v9265 = vpack.c.bf16 %v8055, %v8054
        %v9266 = vpack.c.bf16 %v8057, %v8056
        %v9267 = vpack.c.bf16 %v8059, %v8058
        %v9268 = vpack.c.bf16 %v8061, %v8060
        %v9269 = vpack.c.bf16 %v8063, %v8062
        %v9270 = vpack.c.bf16 %v8065, %v8064
        %v9271 = vpack.c.bf16 %v8067, %v8066
        %v9272 = vpack.c.bf16 %v8069, %v8068
        %v9273 = vpack.c.bf16 %v8071, %v8070
        %v9274 = vpack.c.bf16 %v8073, %v8072
        %v9275 = vpack.c.bf16 %v8075, %v8074
        %v9276 = vpack.c.bf16 %v8077, %v8076
        %v9277 = vpack.c.bf16 %v8079, %v8078
        %v9278 = vpack.c.bf16 %v8081, %v8080
        %v9279 = vpack.c.bf16 %v8083, %v8082
        %v9280 = vpack.c.bf16 %v8085, %v8084
        %v9281 = vpack.c.bf16 %v8087, %v8086
        %v9282 = vpack.c.bf16 %v8089, %v8088
        %v9283 = vpack.c.bf16 %v8091, %v8090
        %v9284 = vpack.c.bf16 %v8093, %v8092
        %v9285 = vpack.c.bf16 %v8095, %v8094
        %v9286 = vpack.c.bf16 %v8097, %v8096
        %v9287 = vpack.c.bf16 %v8099, %v8098
        %v9288 = vpack.c.bf16 %v8101, %v8100
        %v9289 = vpack.c.bf16 %v8103, %v8102
        %v9290 = vpack.c.bf16 %v8105, %v8104
        %v9291 = vpack.c.bf16 %v8107, %v8106
        %v9292 = vpack.c.bf16 %v8109, %v8108
        %v9293 = vpack.c.bf16 %v8111, %v8110
        %v9294 = vpack.c.bf16 %v8113, %v8112
        %v9295 = vpack.c.bf16 %v8115, %v8114
        %v9296 = vpack.c.bf16 %v8117, %v8116
        %v9297 = vpack.c.bf16 %v8119, %v8118
        %v9298 = vpack.c.bf16 %v8121, %v8120
        %v9299 = vpack.c.bf16 %v8123, %v8122
        %v9300 = vpack.c.bf16 %v8125, %v8124
        %v9301 = vpack.c.bf16 %v8127, %v8126
        %v9302 = vpack.c.bf16 %v8129, %v8128
        %v9303 = vpack.c.bf16 %v8131, %v8130
        %v9304 = vpack.c.bf16 %v8133, %v8132
        %v9305 = vpack.c.bf16 %v8135, %v8134
        %v9306 = vpack.c.bf16 %v8137, %v8136
        %v9307 = vpack.c.bf16 %v8139, %v8138
        %v9308 = vpack.c.bf16 %v8141, %v8140
        %v9309 = vpack.c.bf16 %v8143, %v8142
        %v9310 = vpack.c.bf16 %v8145, %v8144
        %v9311 = vpack.c.bf16 %v8147, %v8146
        %v9312 = vpack.c.bf16 %v8149, %v8148
        %v9313 = vpack.c.bf16 %v8151, %v8150
        %v9314 = vpack.c.bf16 %v8153, %v8152
        %v9315 = vpack.c.bf16 %v8155, %v8154
        %v9316 = vpack.c.bf16 %v8157, %v8156
        %v9317 = vpack.c.bf16 %v8159, %v8158
        %v9318 = vpack.c.bf16 %v8161, %v8160
        %v9319 = vpack.c.bf16 %v8163, %v8162
        %v9320 = vpack.c.bf16 %v8165, %v8164
        %v9321 = vpack.c.bf16 %v8167, %v8166
        %v9322 = vpack.c.bf16 %v8169, %v8168
        %v9323 = vpack.c.bf16 %v8171, %v8170
        %v9324 = vpack.c.bf16 %v8173, %v8172
        %v9325 = vpack.c.bf16 %v8175, %v8174
        %v9326 = vpack.c.bf16 %v8177, %v8176
        %v9327 = vpack.c.bf16 %v8179, %v8178
        %v9328 = vpack.c.bf16 %v8181, %v8180
        %v9329 = vpack.c.bf16 %v8183, %v8182
        %v9330 = vpack.c.bf16 %v8185, %v8184
        %v9331 = vpack.c.bf16 %v8187, %v8186
        %v9332 = vpack.c.bf16 %v8189, %v8188
        %v9333 = vpack.c.bf16 %v8191, %v8190
        %v9334 = vpack.c.bf16 %v8193, %v8192
        %v9335 = vpack.c.bf16 %v8195, %v8194
        %v9336 = vpack.c.bf16 %v8197, %v8196
        %v9337 = vpack.c.bf16 %v8199, %v8198
        %v9338 = vpack.c.bf16 %v8201, %v8200
        %v9339 = vpack.c.bf16 %v8203, %v8202
        %v9340 = vpack.c.bf16 %v8205, %v8204
        %v9341 = vpack.c.bf16 %v8207, %v8206
        %v9342 = vpack.c.bf16 %v8209, %v8208
        %v9343 = vpack.c.bf16 %v8211, %v8210
        %v9344 = vpack.c.bf16 %v8213, %v8212
        %v9345 = vpack.c.bf16 %v8215, %v8214
        %v9346 = vpack.c.bf16 %v8217, %v8216
        %v9347 = vpack.c.bf16 %v8219, %v8218
        %v9348 = vpack.c.bf16 %v8221, %v8220
        %v9349 = vpack.c.bf16 %v8223, %v8222
        %v9350 = vpack.c.bf16 %v8225, %v8224
        %v9351 = vpack.c.bf16 %v8227, %v8226
        %v9352 = vpack.c.bf16 %v8229, %v8228
        %v9353 = vpack.c.bf16 %v8231, %v8230
        %v9354 = vpack.c.bf16 %v8233, %v8232
        %v9355 = vpack.c.bf16 %v8235, %v8234
        %v9356 = vpack.c.bf16 %v8237, %v8236
        %v9357 = vpack.c.bf16 %v8239, %v8238
        %v9358 = vpack.c.bf16 %v8241, %v8240
        %v9359 = vpack.c.bf16 %v8243, %v8242
        %v9360 = vpack.c.bf16 %v8245, %v8244
        %v9361 = vpack.c.bf16 %v8247, %v8246
        %v9362 = vpack.c.bf16 %v8249, %v8248
        %v9363 = vpack.c.bf16 %v8251, %v8250
        %v9364 = vpack.c.bf16 %v8253, %v8252
        %v9365 = vpack.c.bf16 %v8255, %v8254
        %v9366 = vpack.c.bf16 %v8257, %v8256
        %v9367 = vpack.c.bf16 %v8259, %v8258
        %v9368 = vpack.c.bf16 %v8261, %v8260
        %v9369 = vpack.c.bf16 %v8263, %v8262
        %v9370 = vpack.c.bf16 %v8265, %v8264
        %v9371 = vpack.c.bf16 %v8267, %v8266
        %v9372 = vpack.c.bf16 %v8269, %v8268
        %v9373 = vpack.c.bf16 %v8271, %v8270
        %v9374 = vpack.c.bf16 %v8273, %v8272
        %v9375 = vpack.c.bf16 %v8275, %v8274
        %v9376 = vpack.c.bf16 %v8277, %v8276
        %v9377 = vpack.c.bf16 %v8279, %v8278
        %v9378 = vpack.c.bf16 %v8281, %v8280
        %v9379 = vpack.c.bf16 %v8283, %v8282
        %v9380 = vpack.c.bf16 %v8285, %v8284
        %v9381 = vpack.c.bf16 %v8287, %v8286
        %v9382 = vpack.c.bf16 %v8289, %v8288
        %v9383 = vpack.c.bf16 %v8291, %v8290
        %v9384 = vpack.c.bf16 %v8293, %v8292
        %v9385 = vpack.c.bf16 %v8295, %v8294
        %v9386 = vpack.c.bf16 %v8297, %v8296
        %v9387 = vpack.c.bf16 %v8299, %v8298
        %v9388 = vpack.c.bf16 %v8301, %v8300
        %v9389 = vpack.c.bf16 %v8303, %v8302
        %v9390 = vpack.c.bf16 %v8305, %v8304
        %v9391 = vpack.c.bf16 %v8307, %v8306
        %v9392 = vpack.c.bf16 %v8309, %v8308
        %v9393 = vpack.c.bf16 %v8311, %v8310
        %v9394 = vpack.c.bf16 %v8313, %v8312
        %v9395 = vpack.c.bf16 %v8315, %v8314
        %v9396 = vpack.c.bf16 %v8317, %v8316
        %v9397 = vpack.c.bf16 %v8319, %v8318
        %v9398 = vpack.c.bf16 %v8321, %v8320
        %v9399 = vpack.c.bf16 %v8323, %v8322
        %v9400 = vpack.c.bf16 %v8325, %v8324
        %v9401 = vpack.c.bf16 %v8327, %v8326
        %v9402 = vpack.c.bf16 %v8329, %v8328
        %v9403 = vpack.c.bf16 %v8331, %v8330
        %v9404 = vpack.c.bf16 %v8333, %v8332
        %v9405 = vpack.c.bf16 %v8335, %v8334
        %v9406 = vpack.c.bf16 %v8337, %v8336
        %v9407 = vpack.c.bf16 %v8339, %v8338
        %v9408 = vpack.c.bf16 %v8341, %v8340
        %v9409 = vpack.c.bf16 %v8343, %v8342
        %v9410 = vpack.c.bf16 %v8345, %v8344
        %v9411 = vpack.c.bf16 %v8347, %v8346
        %v9412 = vpack.c.bf16 %v8349, %v8348
        %v9413 = vpack.c.bf16 %v8351, %v8350
        %v9414 = vpack.c.bf16 %v8353, %v8352
        %v9415 = vpack.c.bf16 %v8355, %v8354
        %v9416 = vpack.c.bf16 %v8357, %v8356
        %v9417 = vpack.c.bf16 %v8359, %v8358
        %v9418 = vpack.c.bf16 %v8361, %v8360
        %v9419 = vpack.c.bf16 %v8363, %v8362
        %v9420 = vpack.c.bf16 %v8365, %v8364
        %v9421 = vpack.c.bf16 %v8367, %v8366
        %v9422 = vpack.c.bf16 %v8369, %v8368
        %v9423 = vpack.c.bf16 %v8371, %v8370
        %v9424 = vpack.c.bf16 %v8373, %v8372
        %v9425 = vpack.c.bf16 %v8375, %v8374
        %v9426 = vpack.c.bf16 %v8377, %v8376
        %v9427 = vpack.c.bf16 %v8379, %v8378
        %v9428 = vpack.c.bf16 %v8381, %v8380
        %v9429 = vpack.c.bf16 %v8383, %v8382
        %v9430 = vpack.c.bf16 %v8385, %v8384
        %v9431 = vpack.c.bf16 %v8387, %v8386
        %v9432 = vpack.c.bf16 %v8389, %v8388
        %v9433 = vpack.c.bf16 %v8391, %v8390
        %v9434 = vpack.c.bf16 %v8393, %v8392
        %v9435 = vpack.c.bf16 %v8395, %v8394
        %v9436 = vpack.c.bf16 %v8397, %v8396
        %v9437 = vpack.c.bf16 %v8399, %v8398
        %v9438 = vpack.c.bf16 %v8401, %v8400
        %v9439 = vpack.c.bf16 %v8403, %v8402
        %v9440 = vpack.c.bf16 %v8405, %v8404
        %v9441 = vpack.c.bf16 %v8407, %v8406
        %v9442 = vpack.c.bf16 %v8409, %v8408
        %v9443 = vpack.c.bf16 %v8411, %v8410
        %v9444 = vpack.c.bf16 %v8413, %v8412
        %v9445 = vpack.c.bf16 %v8415, %v8414
        %v9446 = vpack.c.bf16 %v8417, %v8416
        %v9447 = vpack.c.bf16 %v8419, %v8418
        %v9448 = vpack.c.bf16 %v8421, %v8420
        %v9449 = vpack.c.bf16 %v8423, %v8422
        %v9450 = vpack.c.bf16 %v8425, %v8424
        %v9451 = vpack.c.bf16 %v8427, %v8426
        %9452 = vst [vmem:[%s229] sm:$0xff] %v8428
        %9453 = vst [vmem:[%s229 + $0x8] sm:$0xff] %v8429
        %9454 = vst [vmem:[%s229 + $0x10] sm:$0xff] %v8430
        %9455 = vst [vmem:[%s229 + $0x18] sm:$0xff] %v8431
        %9456 = vst [vmem:[%s229 + $0x20] sm:$0xff] %v8432
        %9457 = vst [vmem:[%s229 + $0x28] sm:$0xff] %v8433
        %9458 = vst [vmem:[%s229 + $0x30] sm:$0xff] %v8434
        %9459 = vst [vmem:[%s229 + $0x38] sm:$0xff] %v8435
        %9460 = vst [vmem:[%s229 + $0x40] sm:$0xff] %v8436
        %9461 = vst [vmem:[%s229 + $0x48] sm:$0xff] %v8437
        %9462 = vst [vmem:[%s229 + $0x50] sm:$0xff] %v8438
        %9463 = vst [vmem:[%s229 + $0x58] sm:$0xff] %v8439
        %9464 = vst [vmem:[%s229 + $0x60] sm:$0xff] %v8440
        %9465 = vst [vmem:[%s229 + $0x68] sm:$0xff] %v8441
        %9466 = vst [vmem:[%s229 + $0x70] sm:$0xff] %v8442
        %9467 = vst [vmem:[%s229 + $0x78] sm:$0xff] %v8443
        %9468 = vst [vmem:[%s229 + $0x80] sm:$0xff] %v8444
        %9469 = vst [vmem:[%s229 + $0x88] sm:$0xff] %v8445
        %9470 = vst [vmem:[%s229 + $0x90] sm:$0xff] %v8446
        %9471 = vst [vmem:[%s229 + $0x98] sm:$0xff] %v8447
        %9472 = vst [vmem:[%s229 + $0xa0] sm:$0xff] %v8448
        %9473 = vst [vmem:[%s229 + $0xa8] sm:$0xff] %v8449
        %9474 = vst [vmem:[%s229 + $0xb0] sm:$0xff] %v8450
        %9475 = vst [vmem:[%s229 + $0xb8] sm:$0xff] %v8451
        %9476 = vst [vmem:[%s229 + $0xc0] sm:$0xff] %v8452
        %9477 = vst [vmem:[%s229 + $0xc8] sm:$0xff] %v8453
        %9478 = vst [vmem:[%s229 + $0xd0] sm:$0xff] %v8454
        %9479 = vst [vmem:[%s229 + $0xd8] sm:$0xff] %v8455
        %9480 = vst [vmem:[%s229 + $0xe0] sm:$0xff] %v8456
        %9481 = vst [vmem:[%s229 + $0xe8] sm:$0xff] %v8457
        %9482 = vst [vmem:[%s229 + $0xf0] sm:$0xff] %v8458
        %9483 = vst [vmem:[%s229 + $0xf8] sm:$0xff] %v8459
        %9484 = vst [vmem:[%s229 + $0x100] sm:$0xff] %v8460
        %9485 = vst [vmem:[%s229 + $0x108] sm:$0xff] %v8461
        %9486 = vst [vmem:[%s229 + $0x110] sm:$0xff] %v8462
        %9487 = vst [vmem:[%s229 + $0x118] sm:$0xff] %v8463
        %9488 = vst [vmem:[%s229 + $0x120] sm:$0xff] %v8464
        %9489 = vst [vmem:[%s229 + $0x128] sm:$0xff] %v8465
        %9490 = vst [vmem:[%s229 + $0x130] sm:$0xff] %v8466
        %9491 = vst [vmem:[%s229 + $0x138] sm:$0xff] %v8467
        %9492 = vst [vmem:[%s229 + $0x140] sm:$0xff] %v8468
        %9493 = vst [vmem:[%s229 + $0x148] sm:$0xff] %v8469
        %9494 = vst [vmem:[%s229 + $0x150] sm:$0xff] %v8470
        %9495 = vst [vmem:[%s229 + $0x158] sm:$0xff] %v8471
        %9496 = vst [vmem:[%s229 + $0x160] sm:$0xff] %v8472
        %9497 = vst [vmem:[%s229 + $0x168] sm:$0xff] %v8473
        %9498 = vst [vmem:[%s229 + $0x170] sm:$0xff] %v8474
        %9499 = vst [vmem:[%s229 + $0x178] sm:$0xff] %v8475
        %9500 = vst [vmem:[%s229 + $0x180] sm:$0xff] %v8476
        %9501 = vst [vmem:[%s229 + $0x188] sm:$0xff] %v8477
        %9502 = vst [vmem:[%s229 + $0x190] sm:$0xff] %v8478
        %9503 = vst [vmem:[%s229 + $0x198] sm:$0xff] %v8479
        %9504 = vst [vmem:[%s229 + $0x1a0] sm:$0xff] %v8480
        %9505 = vst [vmem:[%s229 + $0x1a8] sm:$0xff] %v8481
        %9506 = vst [vmem:[%s229 + $0x1b0] sm:$0xff] %v8482
        %9507 = vst [vmem:[%s229 + $0x1b8] sm:$0xff] %v8483
        %9508 = vst [vmem:[%s229 + $0x1c0] sm:$0xff] %v8484
        %9509 = vst [vmem:[%s229 + $0x1c8] sm:$0xff] %v8485
        %9510 = vst [vmem:[%s229 + $0x1d0] sm:$0xff] %v8486
        %9511 = vst [vmem:[%s229 + $0x1d8] sm:$0xff] %v8487
        %9512 = vst [vmem:[%s229 + $0x1e0] sm:$0xff] %v8488
        %9513 = vst [vmem:[%s229 + $0x1e8] sm:$0xff] %v8489
        %9514 = vst [vmem:[%s229 + $0x1f0] sm:$0xff] %v8490
        %9515 = vst [vmem:[%s229 + $0x1f8] sm:$0xff] %v8491
        %9516 = vst [vmem:[%s229 + $0x200] sm:$0xff] %v8492
        %9517 = vst [vmem:[%s229 + $0x208] sm:$0xff] %v8493
        %9518 = vst [vmem:[%s229 + $0x210] sm:$0xff] %v8494
        %9519 = vst [vmem:[%s229 + $0x218] sm:$0xff] %v8495
        %9520 = vst [vmem:[%s229 + $0x220] sm:$0xff] %v8496
        %9521 = vst [vmem:[%s229 + $0x228] sm:$0xff] %v8497
        %9522 = vst [vmem:[%s229 + $0x230] sm:$0xff] %v8498
        %9523 = vst [vmem:[%s229 + $0x238] sm:$0xff] %v8499
        %9524 = vst [vmem:[%s229 + $0x240] sm:$0xff] %v8500
        %9525 = vst [vmem:[%s229 + $0x248] sm:$0xff] %v8501
        %9526 = vst [vmem:[%s229 + $0x250] sm:$0xff] %v8502
        %9527 = vst [vmem:[%s229 + $0x258] sm:$0xff] %v8503
        %9528 = vst [vmem:[%s229 + $0x260] sm:$0xff] %v8504
        %9529 = vst [vmem:[%s229 + $0x268] sm:$0xff] %v8505
        %9530 = vst [vmem:[%s229 + $0x270] sm:$0xff] %v8506
        %9531 = vst [vmem:[%s229 + $0x278] sm:$0xff] %v8507
        %9532 = vst [vmem:[%s229 + $0x280] sm:$0xff] %v8508
        %9533 = vst [vmem:[%s229 + $0x288] sm:$0xff] %v8509
        %9534 = vst [vmem:[%s229 + $0x290] sm:$0xff] %v8510
        %9535 = vst [vmem:[%s229 + $0x298] sm:$0xff] %v8511
        %9536 = vst [vmem:[%s229 + $0x2a0] sm:$0xff] %v8512
        %9537 = vst [vmem:[%s229 + $0x2a8] sm:$0xff] %v8513
        %9538 = vst [vmem:[%s229 + $0x2b0] sm:$0xff] %v8514
        %9539 = vst [vmem:[%s229 + $0x2b8] sm:$0xff] %v8515
        %9540 = vst [vmem:[%s229 + $0x2c0] sm:$0xff] %v8516
        %9541 = vst [vmem:[%s229 + $0x2c8] sm:$0xff] %v8517
        %9542 = vst [vmem:[%s229 + $0x2d0] sm:$0xff] %v8518
        %9543 = vst [vmem:[%s229 + $0x2d8] sm:$0xff] %v8519
        %9544 = vst [vmem:[%s229 + $0x2e0] sm:$0xff] %v8520
        %9545 = vst [vmem:[%s229 + $0x2e8] sm:$0xff] %v8521
        %9546 = vst [vmem:[%s229 + $0x2f0] sm:$0xff] %v8522
        %9547 = vst [vmem:[%s229 + $0x2f8] sm:$0xff] %v8523
        %9548 = vst [vmem:[%s229 + $0x300] sm:$0xff] %v8524
        %9549 = vst [vmem:[%s229 + $0x308] sm:$0xff] %v8525
        %9550 = vst [vmem:[%s229 + $0x310] sm:$0xff] %v8526
        %9551 = vst [vmem:[%s229 + $0x318] sm:$0xff] %v8527
        %9552 = vst [vmem:[%s229 + $0x320] sm:$0xff] %v8528
        %9553 = vst [vmem:[%s229 + $0x328] sm:$0xff] %v8529
        %9554 = vst [vmem:[%s229 + $0x330] sm:$0xff] %v8530
        %9555 = vst [vmem:[%s229 + $0x338] sm:$0xff] %v8531
        %9556 = vst [vmem:[%s229 + $0x340] sm:$0xff] %v8532
        %9557 = vst [vmem:[%s229 + $0x348] sm:$0xff] %v8533
        %9558 = vst [vmem:[%s229 + $0x350] sm:$0xff] %v8534
        %9559 = vst [vmem:[%s229 + $0x358] sm:$0xff] %v8535
        %9560 = vst [vmem:[%s229 + $0x360] sm:$0xff] %v8536
        %9561 = vst [vmem:[%s229 + $0x368] sm:$0xff] %v8537
        %9562 = vst [vmem:[%s229 + $0x370] sm:$0xff] %v8538
        %9563 = vst [vmem:[%s229 + $0x378] sm:$0xff] %v8539
        %9564 = vst [vmem:[%s229 + $0x380] sm:$0xff] %v8540
        %9565 = vst [vmem:[%s229 + $0x388] sm:$0xff] %v8541
        %9566 = vst [vmem:[%s229 + $0x390] sm:$0xff] %v8542
        %9567 = vst [vmem:[%s229 + $0x398] sm:$0xff] %v8543
        %9568 = vst [vmem:[%s229 + $0x3a0] sm:$0xff] %v8544
        %9569 = vst [vmem:[%s229 + $0x3a8] sm:$0xff] %v8545
        %9570 = vst [vmem:[%s229 + $0x3b0] sm:$0xff] %v8546
        %9571 = vst [vmem:[%s229 + $0x3b8] sm:$0xff] %v8547
        %9572 = vst [vmem:[%s229 + $0x3c0] sm:$0xff] %v8548
        %9573 = vst [vmem:[%s229 + $0x3c8] sm:$0xff] %v8549
        %9574 = vst [vmem:[%s229 + $0x3d0] sm:$0xff] %v8550
        %9575 = vst [vmem:[%s229 + $0x3d8] sm:$0xff] %v8551
        %9576 = vst [vmem:[%s229 + $0x3e0] sm:$0xff] %v8552
        %9577 = vst [vmem:[%s229 + $0x3e8] sm:$0xff] %v8553
        %9578 = vst [vmem:[%s229 + $0x3f0] sm:$0xff] %v8554
        %9579 = vst [vmem:[%s229 + $0x3f8] sm:$0xff] %v8555
        %9580 = vst [vmem:[%s229 + $0x400] sm:$0xff] %v8556
        %9581 = vst [vmem:[%s229 + $0x408] sm:$0xff] %v8557
        %9582 = vst [vmem:[%s229 + $0x410] sm:$0xff] %v8558
        %9583 = vst [vmem:[%s229 + $0x418] sm:$0xff] %v8559
        %9584 = vst [vmem:[%s229 + $0x420] sm:$0xff] %v8560
        %9585 = vst [vmem:[%s229 + $0x428] sm:$0xff] %v8561
        %9586 = vst [vmem:[%s229 + $0x430] sm:$0xff] %v8562
        %9587 = vst [vmem:[%s229 + $0x438] sm:$0xff] %v8563
        %9588 = vst [vmem:[%s229 + $0x440] sm:$0xff] %v8564
        %9589 = vst [vmem:[%s229 + $0x448] sm:$0xff] %v8565
        %9590 = vst [vmem:[%s229 + $0x450] sm:$0xff] %v8566
        %9591 = vst [vmem:[%s229 + $0x458] sm:$0xff] %v8567
        %9592 = vst [vmem:[%s229 + $0x460] sm:$0xff] %v8568
        %9593 = vst [vmem:[%s229 + $0x468] sm:$0xff] %v8569
        %9594 = vst [vmem:[%s229 + $0x470] sm:$0xff] %v8570
        %9595 = vst [vmem:[%s229 + $0x478] sm:$0xff] %v8571
        %9596 = vst [vmem:[%s229 + $0x480] sm:$0xff] %v8572
        %9597 = vst [vmem:[%s229 + $0x488] sm:$0xff] %v8573
        %9598 = vst [vmem:[%s229 + $0x490] sm:$0xff] %v8574
        %9599 = vst [vmem:[%s229 + $0x498] sm:$0xff] %v8575
        %9600 = vst [vmem:[%s229 + $0x4a0] sm:$0xff] %v8576
        %9601 = vst [vmem:[%s229 + $0x4a8] sm:$0xff] %v8577
        %9602 = vst [vmem:[%s229 + $0x4b0] sm:$0xff] %v8578
        %9603 = vst [vmem:[%s229 + $0x4b8] sm:$0xff] %v8579
        %9604 = vst [vmem:[%s229 + $0x4c0] sm:$0xff] %v8580
        %9605 = vst [vmem:[%s229 + $0x4c8] sm:$0xff] %v8581
        %9606 = vst [vmem:[%s229 + $0x4d0] sm:$0xff] %v8582
        %9607 = vst [vmem:[%s229 + $0x4d8] sm:$0xff] %v8583
        %9608 = vst [vmem:[%s229 + $0x4e0] sm:$0xff] %v8584
        %9609 = vst [vmem:[%s229 + $0x4e8] sm:$0xff] %v8585
        %9610 = vst [vmem:[%s229 + $0x4f0] sm:$0xff] %v8586
        %9611 = vst [vmem:[%s229 + $0x4f8] sm:$0xff] %v8587
        %9612 = vst [vmem:[%s229 + $0x500] sm:$0xff] %v8588
        %9613 = vst [vmem:[%s229 + $0x508] sm:$0xff] %v8589
        %9614 = vst [vmem:[%s229 + $0x510] sm:$0xff] %v8590
        %9615 = vst [vmem:[%s229 + $0x518] sm:$0xff] %v8591
        %9616 = vst [vmem:[%s229 + $0x520] sm:$0xff] %v8592
        %9617 = vst [vmem:[%s229 + $0x528] sm:$0xff] %v8593
        %9618 = vst [vmem:[%s229 + $0x530] sm:$0xff] %v8594
        %9619 = vst [vmem:[%s229 + $0x538] sm:$0xff] %v8595
        %9620 = vst [vmem:[%s229 + $0x540] sm:$0xff] %v8596
        %9621 = vst [vmem:[%s229 + $0x548] sm:$0xff] %v8597
        %9622 = vst [vmem:[%s229 + $0x550] sm:$0xff] %v8598
        %9623 = vst [vmem:[%s229 + $0x558] sm:$0xff] %v8599
        %9624 = vst [vmem:[%s229 + $0x560] sm:$0xff] %v8600
        %9625 = vst [vmem:[%s229 + $0x568] sm:$0xff] %v8601
        %9626 = vst [vmem:[%s229 + $0x570] sm:$0xff] %v8602
        %9627 = vst [vmem:[%s229 + $0x578] sm:$0xff] %v8603
        %9628 = vst [vmem:[%s229 + $0x580] sm:$0xff] %v8604
        %9629 = vst [vmem:[%s229 + $0x588] sm:$0xff] %v8605
        %9630 = vst [vmem:[%s229 + $0x590] sm:$0xff] %v8606
        %9631 = vst [vmem:[%s229 + $0x598] sm:$0xff] %v8607
        %9632 = vst [vmem:[%s229 + $0x5a0] sm:$0xff] %v8608
        %9633 = vst [vmem:[%s229 + $0x5a8] sm:$0xff] %v8609
        %9634 = vst [vmem:[%s229 + $0x5b0] sm:$0xff] %v8610
        %9635 = vst [vmem:[%s229 + $0x5b8] sm:$0xff] %v8611
        %9636 = vst [vmem:[%s229 + $0x5c0] sm:$0xff] %v8612
        %9637 = vst [vmem:[%s229 + $0x5c8] sm:$0xff] %v8613
        %9638 = vst [vmem:[%s229 + $0x5d0] sm:$0xff] %v8614
        %9639 = vst [vmem:[%s229 + $0x5d8] sm:$0xff] %v8615
        %9640 = vst [vmem:[%s229 + $0x5e0] sm:$0xff] %v8616
        %9641 = vst [vmem:[%s229 + $0x5e8] sm:$0xff] %v8617
        %9642 = vst [vmem:[%s229 + $0x5f0] sm:$0xff] %v8618
        %9643 = vst [vmem:[%s229 + $0x5f8] sm:$0xff] %v8619
        %9644 = vst [vmem:[%s229 + $0x600] sm:$0xff] %v8620
        %9645 = vst [vmem:[%s229 + $0x608] sm:$0xff] %v8621
        %9646 = vst [vmem:[%s229 + $0x610] sm:$0xff] %v8622
        %9647 = vst [vmem:[%s229 + $0x618] sm:$0xff] %v8623
        %9648 = vst [vmem:[%s229 + $0x620] sm:$0xff] %v8624
        %9649 = vst [vmem:[%s229 + $0x628] sm:$0xff] %v8625
        %9650 = vst [vmem:[%s229 + $0x630] sm:$0xff] %v8626
        %9651 = vst [vmem:[%s229 + $0x638] sm:$0xff] %v8627
        %9652 = vst [vmem:[%s229 + $0x640] sm:$0xff] %v8628
        %9653 = vst [vmem:[%s229 + $0x648] sm:$0xff] %v8629
        %9654 = vst [vmem:[%s229 + $0x650] sm:$0xff] %v8630
        %9655 = vst [vmem:[%s229 + $0x658] sm:$0xff] %v8631
        %9656 = vst [vmem:[%s229 + $0x660] sm:$0xff] %v8632
        %9657 = vst [vmem:[%s229 + $0x668] sm:$0xff] %v8633
        %9658 = vst [vmem:[%s229 + $0x670] sm:$0xff] %v8634
        %9659 = vst [vmem:[%s229 + $0x678] sm:$0xff] %v8635
        %9660 = vst [vmem:[%s229 + $0x680] sm:$0xff] %v8636
        %9661 = vst [vmem:[%s229 + $0x688] sm:$0xff] %v8637
        %9662 = vst [vmem:[%s229 + $0x690] sm:$0xff] %v8638
        %9663 = vst [vmem:[%s229 + $0x698] sm:$0xff] %v8639
        %9664 = vst [vmem:[%s229 + $0x6a0] sm:$0xff] %v8640
        %9665 = vst [vmem:[%s229 + $0x6a8] sm:$0xff] %v8641
        %9666 = vst [vmem:[%s229 + $0x6b0] sm:$0xff] %v8642
        %9667 = vst [vmem:[%s229 + $0x6b8] sm:$0xff] %v8643
        %9668 = vst [vmem:[%s229 + $0x6c0] sm:$0xff] %v8644
        %9669 = vst [vmem:[%s229 + $0x6c8] sm:$0xff] %v8645
        %9670 = vst [vmem:[%s229 + $0x6d0] sm:$0xff] %v8646
        %9671 = vst [vmem:[%s229 + $0x6d8] sm:$0xff] %v8647
        %9672 = vst [vmem:[%s229 + $0x6e0] sm:$0xff] %v8648
        %9673 = vst [vmem:[%s229 + $0x6e8] sm:$0xff] %v8649
        %9674 = vst [vmem:[%s229 + $0x6f0] sm:$0xff] %v8650
        %9675 = vst [vmem:[%s229 + $0x6f8] sm:$0xff] %v8651
        %9676 = vst [vmem:[%s229 + $0x700] sm:$0xff] %v8652
        %9677 = vst [vmem:[%s229 + $0x708] sm:$0xff] %v8653
        %9678 = vst [vmem:[%s229 + $0x710] sm:$0xff] %v8654
        %9679 = vst [vmem:[%s229 + $0x718] sm:$0xff] %v8655
        %9680 = vst [vmem:[%s229 + $0x720] sm:$0xff] %v8656
        %9681 = vst [vmem:[%s229 + $0x728] sm:$0xff] %v8657
        %9682 = vst [vmem:[%s229 + $0x730] sm:$0xff] %v8658
        %9683 = vst [vmem:[%s229 + $0x738] sm:$0xff] %v8659
        %9684 = vst [vmem:[%s229 + $0x740] sm:$0xff] %v8660
        %9685 = vst [vmem:[%s229 + $0x748] sm:$0xff] %v8661
        %9686 = vst [vmem:[%s229 + $0x750] sm:$0xff] %v8662
        %9687 = vst [vmem:[%s229 + $0x758] sm:$0xff] %v8663
        %9688 = vst [vmem:[%s229 + $0x760] sm:$0xff] %v8664
        %9689 = vst [vmem:[%s229 + $0x768] sm:$0xff] %v8665
        %9690 = vst [vmem:[%s229 + $0x770] sm:$0xff] %v8666
        %9691 = vst [vmem:[%s229 + $0x778] sm:$0xff] %v8667
        %9692 = vst [vmem:[%s229 + $0x780] sm:$0xff] %v8668
        %9693 = vst [vmem:[%s229 + $0x788] sm:$0xff] %v8669
        %9694 = vst [vmem:[%s229 + $0x790] sm:$0xff] %v8670
        %9695 = vst [vmem:[%s229 + $0x798] sm:$0xff] %v8671
        %9696 = vst [vmem:[%s229 + $0x7a0] sm:$0xff] %v8672
        %9697 = vst [vmem:[%s229 + $0x7a8] sm:$0xff] %v8673
        %9698 = vst [vmem:[%s229 + $0x7b0] sm:$0xff] %v8674
        %9699 = vst [vmem:[%s229 + $0x7b8] sm:$0xff] %v8675
        %9700 = vst [vmem:[%s229 + $0x7c0] sm:$0xff] %v8676
        %9701 = vst [vmem:[%s229 + $0x7c8] sm:$0xff] %v8677
        %9702 = vst [vmem:[%s229 + $0x7d0] sm:$0xff] %v8678
        %9703 = vst [vmem:[%s229 + $0x7d8] sm:$0xff] %v8679
        %9704 = vst [vmem:[%s229 + $0x7e0] sm:$0xff] %v8680
        %9705 = vst [vmem:[%s229 + $0x7e8] sm:$0xff] %v8681
        %9706 = vst [vmem:[%s229 + $0x7f0] sm:$0xff] %v8682
        %9707 = vst [vmem:[%s229 + $0x7f8] sm:$0xff] %v8683
        %9708 = vst [vmem:[%s229 + $0x800] sm:$0xff] %v8684
        %9709 = vst [vmem:[%s229 + $0x808] sm:$0xff] %v8685
        %9710 = vst [vmem:[%s229 + $0x810] sm:$0xff] %v8686
        %9711 = vst [vmem:[%s229 + $0x818] sm:$0xff] %v8687
        %9712 = vst [vmem:[%s229 + $0x820] sm:$0xff] %v8688
        %9713 = vst [vmem:[%s229 + $0x828] sm:$0xff] %v8689
        %9714 = vst [vmem:[%s229 + $0x830] sm:$0xff] %v8690
        %9715 = vst [vmem:[%s229 + $0x838] sm:$0xff] %v8691
        %9716 = vst [vmem:[%s229 + $0x840] sm:$0xff] %v8692
        %9717 = vst [vmem:[%s229 + $0x848] sm:$0xff] %v8693
        %9718 = vst [vmem:[%s229 + $0x850] sm:$0xff] %v8694
        %9719 = vst [vmem:[%s229 + $0x858] sm:$0xff] %v8695
        %9720 = vst [vmem:[%s229 + $0x860] sm:$0xff] %v8696
        %9721 = vst [vmem:[%s229 + $0x868] sm:$0xff] %v8697
        %9722 = vst [vmem:[%s229 + $0x870] sm:$0xff] %v8698
        %9723 = vst [vmem:[%s229 + $0x878] sm:$0xff] %v8699
        %9724 = vst [vmem:[%s229 + $0x880] sm:$0xff] %v8700
        %9725 = vst [vmem:[%s229 + $0x888] sm:$0xff] %v8701
        %9726 = vst [vmem:[%s229 + $0x890] sm:$0xff] %v8702
        %9727 = vst [vmem:[%s229 + $0x898] sm:$0xff] %v8703
        %9728 = vst [vmem:[%s229 + $0x8a0] sm:$0xff] %v8704
        %9729 = vst [vmem:[%s229 + $0x8a8] sm:$0xff] %v8705
        %9730 = vst [vmem:[%s229 + $0x8b0] sm:$0xff] %v8706
        %9731 = vst [vmem:[%s229 + $0x8b8] sm:$0xff] %v8707
        %9732 = vst [vmem:[%s229 + $0x8c0] sm:$0xff] %v8708
        %9733 = vst [vmem:[%s229 + $0x8c8] sm:$0xff] %v8709
        %9734 = vst [vmem:[%s229 + $0x8d0] sm:$0xff] %v8710
        %9735 = vst [vmem:[%s229 + $0x8d8] sm:$0xff] %v8711
        %9736 = vst [vmem:[%s229 + $0x8e0] sm:$0xff] %v8712
        %9737 = vst [vmem:[%s229 + $0x8e8] sm:$0xff] %v8713
        %9738 = vst [vmem:[%s229 + $0x8f0] sm:$0xff] %v8714
        %9739 = vst [vmem:[%s229 + $0x8f8] sm:$0xff] %v8715
        %9740 = vst [vmem:[%s229 + $0x900] sm:$0xff] %v8716
        %9741 = vst [vmem:[%s229 + $0x908] sm:$0xff] %v8717
        %9742 = vst [vmem:[%s229 + $0x910] sm:$0xff] %v8718
        %9743 = vst [vmem:[%s229 + $0x918] sm:$0xff] %v8719
        %9744 = vst [vmem:[%s229 + $0x920] sm:$0xff] %v8720
        %9745 = vst [vmem:[%s229 + $0x928] sm:$0xff] %v8721
        %9746 = vst [vmem:[%s229 + $0x930] sm:$0xff] %v8722
        %9747 = vst [vmem:[%s229 + $0x938] sm:$0xff] %v8723
        %9748 = vst [vmem:[%s229 + $0x940] sm:$0xff] %v8724
        %9749 = vst [vmem:[%s229 + $0x948] sm:$0xff] %v8725
        %9750 = vst [vmem:[%s229 + $0x950] sm:$0xff] %v8726
        %9751 = vst [vmem:[%s229 + $0x958] sm:$0xff] %v8727
        %9752 = vst [vmem:[%s229 + $0x960] sm:$0xff] %v8728
        %9753 = vst [vmem:[%s229 + $0x968] sm:$0xff] %v8729
        %9754 = vst [vmem:[%s229 + $0x970] sm:$0xff] %v8730
        %9755 = vst [vmem:[%s229 + $0x978] sm:$0xff] %v8731
        %9756 = vst [vmem:[%s229 + $0x980] sm:$0xff] %v8732
        %9757 = vst [vmem:[%s229 + $0x988] sm:$0xff] %v8733
        %9758 = vst [vmem:[%s229 + $0x990] sm:$0xff] %v8734
        %9759 = vst [vmem:[%s229 + $0x998] sm:$0xff] %v8735
        %9760 = vst [vmem:[%s229 + $0x9a0] sm:$0xff] %v8736
        %9761 = vst [vmem:[%s229 + $0x9a8] sm:$0xff] %v8737
        %9762 = vst [vmem:[%s229 + $0x9b0] sm:$0xff] %v8738
        %9763 = vst [vmem:[%s229 + $0x9b8] sm:$0xff] %v8739
        %9764 = vst [vmem:[%s229 + $0x9c0] sm:$0xff] %v8740
        %9765 = vst [vmem:[%s229 + $0x9c8] sm:$0xff] %v8741
        %9766 = vst [vmem:[%s229 + $0x9d0] sm:$0xff] %v8742
        %9767 = vst [vmem:[%s229 + $0x9d8] sm:$0xff] %v8743
        %9768 = vst [vmem:[%s229 + $0x9e0] sm:$0xff] %v8744
        %9769 = vst [vmem:[%s229 + $0x9e8] sm:$0xff] %v8745
        %9770 = vst [vmem:[%s229 + $0x9f0] sm:$0xff] %v8746
        %9771 = vst [vmem:[%s229 + $0x9f8] sm:$0xff] %v8747
        %9772 = vst [vmem:[%s229 + $0xa00] sm:$0xff] %v8748
        %9773 = vst [vmem:[%s229 + $0xa08] sm:$0xff] %v8749
        %9774 = vst [vmem:[%s229 + $0xa10] sm:$0xff] %v8750
        %9775 = vst [vmem:[%s229 + $0xa18] sm:$0xff] %v8751
        %9776 = vst [vmem:[%s229 + $0xa20] sm:$0xff] %v8752
        %9777 = vst [vmem:[%s229 + $0xa28] sm:$0xff] %v8753
        %9778 = vst [vmem:[%s229 + $0xa30] sm:$0xff] %v8754
        %9779 = vst [vmem:[%s229 + $0xa38] sm:$0xff] %v8755
        %9780 = vst [vmem:[%s229 + $0xa40] sm:$0xff] %v8756
        %9781 = vst [vmem:[%s229 + $0xa48] sm:$0xff] %v8757
        %9782 = vst [vmem:[%s229 + $0xa50] sm:$0xff] %v8758
        %9783 = vst [vmem:[%s229 + $0xa58] sm:$0xff] %v8759
        %9784 = vst [vmem:[%s229 + $0xa60] sm:$0xff] %v8760
        %9785 = vst [vmem:[%s229 + $0xa68] sm:$0xff] %v8761
        %9786 = vst [vmem:[%s229 + $0xa70] sm:$0xff] %v8762
        %9787 = vst [vmem:[%s229 + $0xa78] sm:$0xff] %v8763
        %9788 = vst [vmem:[%s229 + $0xa80] sm:$0xff] %v8764
        %9789 = vst [vmem:[%s229 + $0xa88] sm:$0xff] %v8765
        %9790 = vst [vmem:[%s229 + $0xa90] sm:$0xff] %v8766
        %9791 = vst [vmem:[%s229 + $0xa98] sm:$0xff] %v8767
        %9792 = vst [vmem:[%s229 + $0xaa0] sm:$0xff] %v8768
        %9793 = vst [vmem:[%s229 + $0xaa8] sm:$0xff] %v8769
        %9794 = vst [vmem:[%s229 + $0xab0] sm:$0xff] %v8770
        %9795 = vst [vmem:[%s229 + $0xab8] sm:$0xff] %v8771
        %9796 = vst [vmem:[%s229 + $0xac0] sm:$0xff] %v8772
        %9797 = vst [vmem:[%s229 + $0xac8] sm:$0xff] %v8773
        %9798 = vst [vmem:[%s229 + $0xad0] sm:$0xff] %v8774
        %9799 = vst [vmem:[%s229 + $0xad8] sm:$0xff] %v8775
        %9800 = vst [vmem:[%s229 + $0xae0] sm:$0xff] %v8776
        %9801 = vst [vmem:[%s229 + $0xae8] sm:$0xff] %v8777
        %9802 = vst [vmem:[%s229 + $0xaf0] sm:$0xff] %v8778
        %9803 = vst [vmem:[%s229 + $0xaf8] sm:$0xff] %v8779
        %9804 = vst [vmem:[%s229 + $0xb00] sm:$0xff] %v8780
        %9805 = vst [vmem:[%s229 + $0xb08] sm:$0xff] %v8781
        %9806 = vst [vmem:[%s229 + $0xb10] sm:$0xff] %v8782
        %9807 = vst [vmem:[%s229 + $0xb18] sm:$0xff] %v8783
        %9808 = vst [vmem:[%s229 + $0xb20] sm:$0xff] %v8784
        %9809 = vst [vmem:[%s229 + $0xb28] sm:$0xff] %v8785
        %9810 = vst [vmem:[%s229 + $0xb30] sm:$0xff] %v8786
        %9811 = vst [vmem:[%s229 + $0xb38] sm:$0xff] %v8787
        %9812 = vst [vmem:[%s229 + $0xb40] sm:$0xff] %v8788
        %9813 = vst [vmem:[%s229 + $0xb48] sm:$0xff] %v8789
        %9814 = vst [vmem:[%s229 + $0xb50] sm:$0xff] %v8790
        %9815 = vst [vmem:[%s229 + $0xb58] sm:$0xff] %v8791
        %9816 = vst [vmem:[%s229 + $0xb60] sm:$0xff] %v8792
        %9817 = vst [vmem:[%s229 + $0xb68] sm:$0xff] %v8793
        %9818 = vst [vmem:[%s229 + $0xb70] sm:$0xff] %v8794
        %9819 = vst [vmem:[%s229 + $0xb78] sm:$0xff] %v8795
        %9820 = vst [vmem:[%s229 + $0xb80] sm:$0xff] %v8796
        %9821 = vst [vmem:[%s229 + $0xb88] sm:$0xff] %v8797
        %9822 = vst [vmem:[%s229 + $0xb90] sm:$0xff] %v8798
        %9823 = vst [vmem:[%s229 + $0xb98] sm:$0xff] %v8799
        %9824 = vst [vmem:[%s229 + $0xba0] sm:$0xff] %v8800
        %9825 = vst [vmem:[%s229 + $0xba8] sm:$0xff] %v8801
        %9826 = vst [vmem:[%s229 + $0xbb0] sm:$0xff] %v8802
        %9827 = vst [vmem:[%s229 + $0xbb8] sm:$0xff] %v8803
        %9828 = vst [vmem:[%s229 + $0xbc0] sm:$0xff] %v8804
        %9829 = vst [vmem:[%s229 + $0xbc8] sm:$0xff] %v8805
        %9830 = vst [vmem:[%s229 + $0xbd0] sm:$0xff] %v8806
        %9831 = vst [vmem:[%s229 + $0xbd8] sm:$0xff] %v8807
        %9832 = vst [vmem:[%s229 + $0xbe0] sm:$0xff] %v8808
        %9833 = vst [vmem:[%s229 + $0xbe8] sm:$0xff] %v8809
        %9834 = vst [vmem:[%s229 + $0xbf0] sm:$0xff] %v8810
        %9835 = vst [vmem:[%s229 + $0xbf8] sm:$0xff] %v8811
        %9836 = vst [vmem:[%s229 + $0xc00] sm:$0xff] %v8812
        %9837 = vst [vmem:[%s229 + $0xc08] sm:$0xff] %v8813
        %9838 = vst [vmem:[%s229 + $0xc10] sm:$0xff] %v8814
        %9839 = vst [vmem:[%s229 + $0xc18] sm:$0xff] %v8815
        %9840 = vst [vmem:[%s229 + $0xc20] sm:$0xff] %v8816
        %9841 = vst [vmem:[%s229 + $0xc28] sm:$0xff] %v8817
        %9842 = vst [vmem:[%s229 + $0xc30] sm:$0xff] %v8818
        %9843 = vst [vmem:[%s229 + $0xc38] sm:$0xff] %v8819
        %9844 = vst [vmem:[%s229 + $0xc40] sm:$0xff] %v8820
        %9845 = vst [vmem:[%s229 + $0xc48] sm:$0xff] %v8821
        %9846 = vst [vmem:[%s229 + $0xc50] sm:$0xff] %v8822
        %9847 = vst [vmem:[%s229 + $0xc58] sm:$0xff] %v8823
        %9848 = vst [vmem:[%s229 + $0xc60] sm:$0xff] %v8824
        %9849 = vst [vmem:[%s229 + $0xc68] sm:$0xff] %v8825
        %9850 = vst [vmem:[%s229 + $0xc70] sm:$0xff] %v8826
        %9851 = vst [vmem:[%s229 + $0xc78] sm:$0xff] %v8827
        %9852 = vst [vmem:[%s229 + $0xc80] sm:$0xff] %v8828
        %9853 = vst [vmem:[%s229 + $0xc88] sm:$0xff] %v8829
        %9854 = vst [vmem:[%s229 + $0xc90] sm:$0xff] %v8830
        %9855 = vst [vmem:[%s229 + $0xc98] sm:$0xff] %v8831
        %9856 = vst [vmem:[%s229 + $0xca0] sm:$0xff] %v8832
        %9857 = vst [vmem:[%s229 + $0xca8] sm:$0xff] %v8833
        %9858 = vst [vmem:[%s229 + $0xcb0] sm:$0xff] %v8834
        %9859 = vst [vmem:[%s229 + $0xcb8] sm:$0xff] %v8835
        %9860 = vst [vmem:[%s229 + $0xcc0] sm:$0xff] %v8836
        %9861 = vst [vmem:[%s229 + $0xcc8] sm:$0xff] %v8837
        %9862 = vst [vmem:[%s229 + $0xcd0] sm:$0xff] %v8838
        %9863 = vst [vmem:[%s229 + $0xcd8] sm:$0xff] %v8839
        %9864 = vst [vmem:[%s229 + $0xce0] sm:$0xff] %v8840
        %9865 = vst [vmem:[%s229 + $0xce8] sm:$0xff] %v8841
        %9866 = vst [vmem:[%s229 + $0xcf0] sm:$0xff] %v8842
        %9867 = vst [vmem:[%s229 + $0xcf8] sm:$0xff] %v8843
        %9868 = vst [vmem:[%s229 + $0xd00] sm:$0xff] %v8844
        %9869 = vst [vmem:[%s229 + $0xd08] sm:$0xff] %v8845
        %9870 = vst [vmem:[%s229 + $0xd10] sm:$0xff] %v8846
        %9871 = vst [vmem:[%s229 + $0xd18] sm:$0xff] %v8847
        %9872 = vst [vmem:[%s229 + $0xd20] sm:$0xff] %v8848
        %9873 = vst [vmem:[%s229 + $0xd28] sm:$0xff] %v8849
        %9874 = vst [vmem:[%s229 + $0xd30] sm:$0xff] %v8850
        %9875 = vst [vmem:[%s229 + $0xd38] sm:$0xff] %v8851
        %9876 = vst [vmem:[%s229 + $0xd40] sm:$0xff] %v8852
        %9877 = vst [vmem:[%s229 + $0xd48] sm:$0xff] %v8853
        %9878 = vst [vmem:[%s229 + $0xd50] sm:$0xff] %v8854
        %9879 = vst [vmem:[%s229 + $0xd58] sm:$0xff] %v8855
        %9880 = vst [vmem:[%s229 + $0xd60] sm:$0xff] %v8856
        %9881 = vst [vmem:[%s229 + $0xd68] sm:$0xff] %v8857
        %9882 = vst [vmem:[%s229 + $0xd70] sm:$0xff] %v8858
        %9883 = vst [vmem:[%s229 + $0xd78] sm:$0xff] %v8859
        %9884 = vst [vmem:[%s229 + $0xd80] sm:$0xff] %v8860
        %9885 = vst [vmem:[%s229 + $0xd88] sm:$0xff] %v8861
        %9886 = vst [vmem:[%s229 + $0xd90] sm:$0xff] %v8862
        %9887 = vst [vmem:[%s229 + $0xd98] sm:$0xff] %v8863
        %9888 = vst [vmem:[%s229 + $0xda0] sm:$0xff] %v8864
        %9889 = vst [vmem:[%s229 + $0xda8] sm:$0xff] %v8865
        %9890 = vst [vmem:[%s229 + $0xdb0] sm:$0xff] %v8866
        %9891 = vst [vmem:[%s229 + $0xdb8] sm:$0xff] %v8867
        %9892 = vst [vmem:[%s229 + $0xdc0] sm:$0xff] %v8868
        %9893 = vst [vmem:[%s229 + $0xdc8] sm:$0xff] %v8869
        %9894 = vst [vmem:[%s229 + $0xdd0] sm:$0xff] %v8870
        %9895 = vst [vmem:[%s229 + $0xdd8] sm:$0xff] %v8871
        %9896 = vst [vmem:[%s229 + $0xde0] sm:$0xff] %v8872
        %9897 = vst [vmem:[%s229 + $0xde8] sm:$0xff] %v8873
        %9898 = vst [vmem:[%s229 + $0xdf0] sm:$0xff] %v8874
        %9899 = vst [vmem:[%s229 + $0xdf8] sm:$0xff] %v8875
        %9900 = vst [vmem:[%s229 + $0xe00] sm:$0xff] %v8876
        %9901 = vst [vmem:[%s229 + $0xe08] sm:$0xff] %v8877
        %9902 = vst [vmem:[%s229 + $0xe10] sm:$0xff] %v8878
        %9903 = vst [vmem:[%s229 + $0xe18] sm:$0xff] %v8879
        %9904 = vst [vmem:[%s229 + $0xe20] sm:$0xff] %v8880
        %9905 = vst [vmem:[%s229 + $0xe28] sm:$0xff] %v8881
        %9906 = vst [vmem:[%s229 + $0xe30] sm:$0xff] %v8882
        %9907 = vst [vmem:[%s229 + $0xe38] sm:$0xff] %v8883
        %9908 = vst [vmem:[%s229 + $0xe40] sm:$0xff] %v8884
        %9909 = vst [vmem:[%s229 + $0xe48] sm:$0xff] %v8885
        %9910 = vst [vmem:[%s229 + $0xe50] sm:$0xff] %v8886
        %9911 = vst [vmem:[%s229 + $0xe58] sm:$0xff] %v8887
        %9912 = vst [vmem:[%s229 + $0xe60] sm:$0xff] %v8888
        %9913 = vst [vmem:[%s229 + $0xe68] sm:$0xff] %v8889
        %9914 = vst [vmem:[%s229 + $0xe70] sm:$0xff] %v8890
        %9915 = vst [vmem:[%s229 + $0xe78] sm:$0xff] %v8891
        %9916 = vst [vmem:[%s229 + $0xe80] sm:$0xff] %v8892
        %9917 = vst [vmem:[%s229 + $0xe88] sm:$0xff] %v8893
        %9918 = vst [vmem:[%s229 + $0xe90] sm:$0xff] %v8894
        %9919 = vst [vmem:[%s229 + $0xe98] sm:$0xff] %v8895
        %9920 = vst [vmem:[%s229 + $0xea0] sm:$0xff] %v8896
        %9921 = vst [vmem:[%s229 + $0xea8] sm:$0xff] %v8897
        %9922 = vst [vmem:[%s229 + $0xeb0] sm:$0xff] %v8898
        %9923 = vst [vmem:[%s229 + $0xeb8] sm:$0xff] %v8899
        %9924 = vst [vmem:[%s229 + $0xec0] sm:$0xff] %v8900
        %9925 = vst [vmem:[%s229 + $0xec8] sm:$0xff] %v8901
        %9926 = vst [vmem:[%s229 + $0xed0] sm:$0xff] %v8902
        %9927 = vst [vmem:[%s229 + $0xed8] sm:$0xff] %v8903
        %9928 = vst [vmem:[%s229 + $0xee0] sm:$0xff] %v8904
        %9929 = vst [vmem:[%s229 + $0xee8] sm:$0xff] %v8905
        %9930 = vst [vmem:[%s229 + $0xef0] sm:$0xff] %v8906
        %9931 = vst [vmem:[%s229 + $0xef8] sm:$0xff] %v8907
        %9932 = vst [vmem:[%s229 + $0xf00] sm:$0xff] %v8908
        %9933 = vst [vmem:[%s229 + $0xf08] sm:$0xff] %v8909
        %9934 = vst [vmem:[%s229 + $0xf10] sm:$0xff] %v8910
        %9935 = vst [vmem:[%s229 + $0xf18] sm:$0xff] %v8911
        %9936 = vst [vmem:[%s229 + $0xf20] sm:$0xff] %v8912
        %9937 = vst [vmem:[%s229 + $0xf28] sm:$0xff] %v8913
        %9938 = vst [vmem:[%s229 + $0xf30] sm:$0xff] %v8914
        %9939 = vst [vmem:[%s229 + $0xf38] sm:$0xff] %v8915
        %9940 = vst [vmem:[%s229 + $0xf40] sm:$0xff] %v8916
        %9941 = vst [vmem:[%s229 + $0xf48] sm:$0xff] %v8917
        %9942 = vst [vmem:[%s229 + $0xf50] sm:$0xff] %v8918
        %9943 = vst [vmem:[%s229 + $0xf58] sm:$0xff] %v8919
        %9944 = vst [vmem:[%s229 + $0xf60] sm:$0xff] %v8920
        %9945 = vst [vmem:[%s229 + $0xf68] sm:$0xff] %v8921
        %9946 = vst [vmem:[%s229 + $0xf70] sm:$0xff] %v8922
        %9947 = vst [vmem:[%s229 + $0xf78] sm:$0xff] %v8923
        %9948 = vst [vmem:[%s229 + $0xf80] sm:$0xff] %v8924
        %9949 = vst [vmem:[%s229 + $0xf88] sm:$0xff] %v8925
        %9950 = vst [vmem:[%s229 + $0xf90] sm:$0xff] %v8926
        %9951 = vst [vmem:[%s229 + $0xf98] sm:$0xff] %v8927
        %9952 = vst [vmem:[%s229 + $0xfa0] sm:$0xff] %v8928
        %9953 = vst [vmem:[%s229 + $0xfa8] sm:$0xff] %v8929
        %9954 = vst [vmem:[%s229 + $0xfb0] sm:$0xff] %v8930
        %9955 = vst [vmem:[%s229 + $0xfb8] sm:$0xff] %v8931
        %9956 = vst [vmem:[%s229 + $0xfc0] sm:$0xff] %v8932
        %9957 = vst [vmem:[%s229 + $0xfc8] sm:$0xff] %v8933
        %9958 = vst [vmem:[%s229 + $0xfd0] sm:$0xff] %v8934
        %9959 = vst [vmem:[%s229 + $0xfd8] sm:$0xff] %v8935
        %9960 = vst [vmem:[%s229 + $0xfe0] sm:$0xff] %v8936
        %9961 = vst [vmem:[%s229 + $0xfe8] sm:$0xff] %v8937
        %9962 = vst [vmem:[%s229 + $0xff0] sm:$0xff] %v8938
        %9963 = vst [vmem:[%s229 + $0xff8] sm:$0xff] %v8939
        %9964 = vst [vmem:[%s229 + $0x1000] sm:$0xff] %v8940
        %9965 = vst [vmem:[%s229 + $0x1008] sm:$0xff] %v8941
        %9966 = vst [vmem:[%s229 + $0x1010] sm:$0xff] %v8942
        %9967 = vst [vmem:[%s229 + $0x1018] sm:$0xff] %v8943
        %9968 = vst [vmem:[%s229 + $0x1020] sm:$0xff] %v8944
        %9969 = vst [vmem:[%s229 + $0x1028] sm:$0xff] %v8945
        %9970 = vst [vmem:[%s229 + $0x1030] sm:$0xff] %v8946
        %9971 = vst [vmem:[%s229 + $0x1038] sm:$0xff] %v8947
        %9972 = vst [vmem:[%s229 + $0x1040] sm:$0xff] %v8948
        %9973 = vst [vmem:[%s229 + $0x1048] sm:$0xff] %v8949
        %9974 = vst [vmem:[%s229 + $0x1050] sm:$0xff] %v8950
        %9975 = vst [vmem:[%s229 + $0x1058] sm:$0xff] %v8951
        %9976 = vst [vmem:[%s229 + $0x1060] sm:$0xff] %v8952
        %9977 = vst [vmem:[%s229 + $0x1068] sm:$0xff] %v8953
        %9978 = vst [vmem:[%s229 + $0x1070] sm:$0xff] %v8954
        %9979 = vst [vmem:[%s229 + $0x1078] sm:$0xff] %v8955
        %9980 = vst [vmem:[%s229 + $0x1080] sm:$0xff] %v8956
        %9981 = vst [vmem:[%s229 + $0x1088] sm:$0xff] %v8957
        %9982 = vst [vmem:[%s229 + $0x1090] sm:$0xff] %v8958
        %9983 = vst [vmem:[%s229 + $0x1098] sm:$0xff] %v8959
        %9984 = vst [vmem:[%s229 + $0x10a0] sm:$0xff] %v8960
        %9985 = vst [vmem:[%s229 + $0x10a8] sm:$0xff] %v8961
        %9986 = vst [vmem:[%s229 + $0x10b0] sm:$0xff] %v8962
        %9987 = vst [vmem:[%s229 + $0x10b8] sm:$0xff] %v8963
        %9988 = vst [vmem:[%s229 + $0x10c0] sm:$0xff] %v8964
        %9989 = vst [vmem:[%s229 + $0x10c8] sm:$0xff] %v8965
        %9990 = vst [vmem:[%s229 + $0x10d0] sm:$0xff] %v8966
        %9991 = vst [vmem:[%s229 + $0x10d8] sm:$0xff] %v8967
        %9992 = vst [vmem:[%s229 + $0x10e0] sm:$0xff] %v8968
        %9993 = vst [vmem:[%s229 + $0x10e8] sm:$0xff] %v8969
        %9994 = vst [vmem:[%s229 + $0x10f0] sm:$0xff] %v8970
        %9995 = vst [vmem:[%s229 + $0x10f8] sm:$0xff] %v8971
        %9996 = vst [vmem:[%s229 + $0x1100] sm:$0xff] %v8972
        %9997 = vst [vmem:[%s229 + $0x1108] sm:$0xff] %v8973
        %9998 = vst [vmem:[%s229 + $0x1110] sm:$0xff] %v8974
        %9999 = vst [vmem:[%s229 + $0x1118] sm:$0xff] %v8975
        %10000 = vst [vmem:[%s229 + $0x1120] sm:$0xff] %v8976
        %10001 = vst [vmem:[%s229 + $0x1128] sm:$0xff] %v8977
        %10002 = vst [vmem:[%s229 + $0x1130] sm:$0xff] %v8978
        %10003 = vst [vmem:[%s229 + $0x1138] sm:$0xff] %v8979
        %10004 = vst [vmem:[%s229 + $0x1140] sm:$0xff] %v8980
        %10005 = vst [vmem:[%s229 + $0x1148] sm:$0xff] %v8981
        %10006 = vst [vmem:[%s229 + $0x1150] sm:$0xff] %v8982
        %10007 = vst [vmem:[%s229 + $0x1158] sm:$0xff] %v8983
        %10008 = vst [vmem:[%s229 + $0x1160] sm:$0xff] %v8984
        %10009 = vst [vmem:[%s229 + $0x1168] sm:$0xff] %v8985
        %10010 = vst [vmem:[%s229 + $0x1170] sm:$0xff] %v8986
        %10011 = vst [vmem:[%s229 + $0x1178] sm:$0xff] %v8987
        %10012 = vst [vmem:[%s229 + $0x1180] sm:$0xff] %v8988
        %10013 = vst [vmem:[%s229 + $0x1188] sm:$0xff] %v8989
        %10014 = vst [vmem:[%s229 + $0x1190] sm:$0xff] %v8990
        %10015 = vst [vmem:[%s229 + $0x1198] sm:$0xff] %v8991
        %10016 = vst [vmem:[%s229 + $0x11a0] sm:$0xff] %v8992
        %10017 = vst [vmem:[%s229 + $0x11a8] sm:$0xff] %v8993
        %10018 = vst [vmem:[%s229 + $0x11b0] sm:$0xff] %v8994
        %10019 = vst [vmem:[%s229 + $0x11b8] sm:$0xff] %v8995
        %10020 = vst [vmem:[%s229 + $0x11c0] sm:$0xff] %v8996
        %10021 = vst [vmem:[%s229 + $0x11c8] sm:$0xff] %v8997
        %10022 = vst [vmem:[%s229 + $0x11d0] sm:$0xff] %v8998
        %10023 = vst [vmem:[%s229 + $0x11d8] sm:$0xff] %v8999
        %10024 = vst [vmem:[%s229 + $0x11e0] sm:$0xff] %v9000
        %10025 = vst [vmem:[%s229 + $0x11e8] sm:$0xff] %v9001
        %10026 = vst [vmem:[%s229 + $0x11f0] sm:$0xff] %v9002
        %10027 = vst [vmem:[%s229 + $0x11f8] sm:$0xff] %v9003
        %10028 = vst [vmem:[%s229 + $0x1200] sm:$0xff] %v9004
        %10029 = vst [vmem:[%s229 + $0x1208] sm:$0xff] %v9005
        %10030 = vst [vmem:[%s229 + $0x1210] sm:$0xff] %v9006
        %10031 = vst [vmem:[%s229 + $0x1218] sm:$0xff] %v9007
        %10032 = vst [vmem:[%s229 + $0x1220] sm:$0xff] %v9008
        %10033 = vst [vmem:[%s229 + $0x1228] sm:$0xff] %v9009
        %10034 = vst [vmem:[%s229 + $0x1230] sm:$0xff] %v9010
        %10035 = vst [vmem:[%s229 + $0x1238] sm:$0xff] %v9011
        %10036 = vst [vmem:[%s229 + $0x1240] sm:$0xff] %v9012
        %10037 = vst [vmem:[%s229 + $0x1248] sm:$0xff] %v9013
        %10038 = vst [vmem:[%s229 + $0x1250] sm:$0xff] %v9014
        %10039 = vst [vmem:[%s229 + $0x1258] sm:$0xff] %v9015
        %10040 = vst [vmem:[%s229 + $0x1260] sm:$0xff] %v9016
        %10041 = vst [vmem:[%s229 + $0x1268] sm:$0xff] %v9017
        %10042 = vst [vmem:[%s229 + $0x1270] sm:$0xff] %v9018
        %10043 = vst [vmem:[%s229 + $0x1278] sm:$0xff] %v9019
        %10044 = vst [vmem:[%s229 + $0x1280] sm:$0xff] %v9020
        %10045 = vst [vmem:[%s229 + $0x1288] sm:$0xff] %v9021
        %10046 = vst [vmem:[%s229 + $0x1290] sm:$0xff] %v9022
        %10047 = vst [vmem:[%s229 + $0x1298] sm:$0xff] %v9023
        %10048 = vst [vmem:[%s229 + $0x12a0] sm:$0xff] %v9024
        %10049 = vst [vmem:[%s229 + $0x12a8] sm:$0xff] %v9025
        %10050 = vst [vmem:[%s229 + $0x12b0] sm:$0xff] %v9026
        %10051 = vst [vmem:[%s229 + $0x12b8] sm:$0xff] %v9027
        %10052 = vst [vmem:[%s229 + $0x12c0] sm:$0xff] %v9028
        %10053 = vst [vmem:[%s229 + $0x12c8] sm:$0xff] %v9029
        %10054 = vst [vmem:[%s229 + $0x12d0] sm:$0xff] %v9030
        %10055 = vst [vmem:[%s229 + $0x12d8] sm:$0xff] %v9031
        %10056 = vst [vmem:[%s229 + $0x12e0] sm:$0xff] %v9032
        %10057 = vst [vmem:[%s229 + $0x12e8] sm:$0xff] %v9033
        %10058 = vst [vmem:[%s229 + $0x12f0] sm:$0xff] %v9034
        %10059 = vst [vmem:[%s229 + $0x12f8] sm:$0xff] %v9035
        %10060 = vst [vmem:[%s229 + $0x1300] sm:$0xff] %v9036
        %10061 = vst [vmem:[%s229 + $0x1308] sm:$0xff] %v9037
        %10062 = vst [vmem:[%s229 + $0x1310] sm:$0xff] %v9038
        %10063 = vst [vmem:[%s229 + $0x1318] sm:$0xff] %v9039
        %10064 = vst [vmem:[%s229 + $0x1320] sm:$0xff] %v9040
        %10065 = vst [vmem:[%s229 + $0x1328] sm:$0xff] %v9041
        %10066 = vst [vmem:[%s229 + $0x1330] sm:$0xff] %v9042
        %10067 = vst [vmem:[%s229 + $0x1338] sm:$0xff] %v9043
        %10068 = vst [vmem:[%s229 + $0x1340] sm:$0xff] %v9044
        %10069 = vst [vmem:[%s229 + $0x1348] sm:$0xff] %v9045
        %10070 = vst [vmem:[%s229 + $0x1350] sm:$0xff] %v9046
        %10071 = vst [vmem:[%s229 + $0x1358] sm:$0xff] %v9047
        %10072 = vst [vmem:[%s229 + $0x1360] sm:$0xff] %v9048
        %10073 = vst [vmem:[%s229 + $0x1368] sm:$0xff] %v9049
        %10074 = vst [vmem:[%s229 + $0x1370] sm:$0xff] %v9050
        %10075 = vst [vmem:[%s229 + $0x1378] sm:$0xff] %v9051
        %10076 = vst [vmem:[%s229 + $0x1380] sm:$0xff] %v9052
        %10077 = vst [vmem:[%s229 + $0x1388] sm:$0xff] %v9053
        %10078 = vst [vmem:[%s229 + $0x1390] sm:$0xff] %v9054
        %10079 = vst [vmem:[%s229 + $0x1398] sm:$0xff] %v9055
        %10080 = vst [vmem:[%s229 + $0x13a0] sm:$0xff] %v9056
        %10081 = vst [vmem:[%s229 + $0x13a8] sm:$0xff] %v9057
        %10082 = vst [vmem:[%s229 + $0x13b0] sm:$0xff] %v9058
        %10083 = vst [vmem:[%s229 + $0x13b8] sm:$0xff] %v9059
        %10084 = vst [vmem:[%s229 + $0x13c0] sm:$0xff] %v9060
        %10085 = vst [vmem:[%s229 + $0x13c8] sm:$0xff] %v9061
        %10086 = vst [vmem:[%s229 + $0x13d0] sm:$0xff] %v9062
        %10087 = vst [vmem:[%s229 + $0x13d8] sm:$0xff] %v9063
        %10088 = vst [vmem:[%s229 + $0x13e0] sm:$0xff] %v9064
        %10089 = vst [vmem:[%s229 + $0x13e8] sm:$0xff] %v9065
        %10090 = vst [vmem:[%s229 + $0x13f0] sm:$0xff] %v9066
        %10091 = vst [vmem:[%s229 + $0x13f8] sm:$0xff] %v9067
        %10092 = vst [vmem:[%s229 + $0x1400] sm:$0xff] %v9068
        %10093 = vst [vmem:[%s229 + $0x1408] sm:$0xff] %v9069
        %10094 = vst [vmem:[%s229 + $0x1410] sm:$0xff] %v9070
        %10095 = vst [vmem:[%s229 + $0x1418] sm:$0xff] %v9071
        %10096 = vst [vmem:[%s229 + $0x1420] sm:$0xff] %v9072
        %10097 = vst [vmem:[%s229 + $0x1428] sm:$0xff] %v9073
        %10098 = vst [vmem:[%s229 + $0x1430] sm:$0xff] %v9074
        %10099 = vst [vmem:[%s229 + $0x1438] sm:$0xff] %v9075
        %10100 = vst [vmem:[%s229 + $0x1440] sm:$0xff] %v9076
        %10101 = vst [vmem:[%s229 + $0x1448] sm:$0xff] %v9077
        %10102 = vst [vmem:[%s229 + $0x1450] sm:$0xff] %v9078
        %10103 = vst [vmem:[%s229 + $0x1458] sm:$0xff] %v9079
        %10104 = vst [vmem:[%s229 + $0x1460] sm:$0xff] %v9080
        %10105 = vst [vmem:[%s229 + $0x1468] sm:$0xff] %v9081
        %10106 = vst [vmem:[%s229 + $0x1470] sm:$0xff] %v9082
        %10107 = vst [vmem:[%s229 + $0x1478] sm:$0xff] %v9083
        %10108 = vst [vmem:[%s229 + $0x1480] sm:$0xff] %v9084
        %10109 = vst [vmem:[%s229 + $0x1488] sm:$0xff] %v9085
        %10110 = vst [vmem:[%s229 + $0x1490] sm:$0xff] %v9086
        %10111 = vst [vmem:[%s229 + $0x1498] sm:$0xff] %v9087
        %10112 = vst [vmem:[%s229 + $0x14a0] sm:$0xff] %v9088
        %10113 = vst [vmem:[%s229 + $0x14a8] sm:$0xff] %v9089
        %10114 = vst [vmem:[%s229 + $0x14b0] sm:$0xff] %v9090
        %10115 = vst [vmem:[%s229 + $0x14b8] sm:$0xff] %v9091
        %10116 = vst [vmem:[%s229 + $0x14c0] sm:$0xff] %v9092
        %10117 = vst [vmem:[%s229 + $0x14c8] sm:$0xff] %v9093
        %10118 = vst [vmem:[%s229 + $0x14d0] sm:$0xff] %v9094
        %10119 = vst [vmem:[%s229 + $0x14d8] sm:$0xff] %v9095
        %10120 = vst [vmem:[%s229 + $0x14e0] sm:$0xff] %v9096
        %10121 = vst [vmem:[%s229 + $0x14e8] sm:$0xff] %v9097
        %10122 = vst [vmem:[%s229 + $0x14f0] sm:$0xff] %v9098
        %10123 = vst [vmem:[%s229 + $0x14f8] sm:$0xff] %v9099
        %10124 = vst [vmem:[%s229 + $0x1500] sm:$0xff] %v9100
        %10125 = vst [vmem:[%s229 + $0x1508] sm:$0xff] %v9101
        %10126 = vst [vmem:[%s229 + $0x1510] sm:$0xff] %v9102
        %10127 = vst [vmem:[%s229 + $0x1518] sm:$0xff] %v9103
        %10128 = vst [vmem:[%s229 + $0x1520] sm:$0xff] %v9104
        %10129 = vst [vmem:[%s229 + $0x1528] sm:$0xff] %v9105
        %10130 = vst [vmem:[%s229 + $0x1530] sm:$0xff] %v9106
        %10131 = vst [vmem:[%s229 + $0x1538] sm:$0xff] %v9107
        %10132 = vst [vmem:[%s229 + $0x1540] sm:$0xff] %v9108
        %10133 = vst [vmem:[%s229 + $0x1548] sm:$0xff] %v9109
        %10134 = vst [vmem:[%s229 + $0x1550] sm:$0xff] %v9110
        %10135 = vst [vmem:[%s229 + $0x1558] sm:$0xff] %v9111
        %10136 = vst [vmem:[%s229 + $0x1560] sm:$0xff] %v9112
        %10137 = vst [vmem:[%s229 + $0x1568] sm:$0xff] %v9113
        %10138 = vst [vmem:[%s229 + $0x1570] sm:$0xff] %v9114
        %10139 = vst [vmem:[%s229 + $0x1578] sm:$0xff] %v9115
        %10140 = vst [vmem:[%s229 + $0x1580] sm:$0xff] %v9116
        %10141 = vst [vmem:[%s229 + $0x1588] sm:$0xff] %v9117
        %10142 = vst [vmem:[%s229 + $0x1590] sm:$0xff] %v9118
        %10143 = vst [vmem:[%s229 + $0x1598] sm:$0xff] %v9119
        %10144 = vst [vmem:[%s229 + $0x15a0] sm:$0xff] %v9120
        %10145 = vst [vmem:[%s229 + $0x15a8] sm:$0xff] %v9121
        %10146 = vst [vmem:[%s229 + $0x15b0] sm:$0xff] %v9122
        %10147 = vst [vmem:[%s229 + $0x15b8] sm:$0xff] %v9123
        %10148 = vst [vmem:[%s229 + $0x15c0] sm:$0xff] %v9124
        %10149 = vst [vmem:[%s229 + $0x15c8] sm:$0xff] %v9125
        %10150 = vst [vmem:[%s229 + $0x15d0] sm:$0xff] %v9126
        %10151 = vst [vmem:[%s229 + $0x15d8] sm:$0xff] %v9127
        %10152 = vst [vmem:[%s229 + $0x15e0] sm:$0xff] %v9128
        %10153 = vst [vmem:[%s229 + $0x15e8] sm:$0xff] %v9129
        %10154 = vst [vmem:[%s229 + $0x15f0] sm:$0xff] %v9130
        %10155 = vst [vmem:[%s229 + $0x15f8] sm:$0xff] %v9131
        %10156 = vst [vmem:[%s229 + $0x1600] sm:$0xff] %v9132
        %10157 = vst [vmem:[%s229 + $0x1608] sm:$0xff] %v9133
        %10158 = vst [vmem:[%s229 + $0x1610] sm:$0xff] %v9134
        %10159 = vst [vmem:[%s229 + $0x1618] sm:$0xff] %v9135
        %10160 = vst [vmem:[%s229 + $0x1620] sm:$0xff] %v9136
        %10161 = vst [vmem:[%s229 + $0x1628] sm:$0xff] %v9137
        %10162 = vst [vmem:[%s229 + $0x1630] sm:$0xff] %v9138
        %10163 = vst [vmem:[%s229 + $0x1638] sm:$0xff] %v9139
        %10164 = vst [vmem:[%s229 + $0x1640] sm:$0xff] %v9140
        %10165 = vst [vmem:[%s229 + $0x1648] sm:$0xff] %v9141
        %10166 = vst [vmem:[%s229 + $0x1650] sm:$0xff] %v9142
        %10167 = vst [vmem:[%s229 + $0x1658] sm:$0xff] %v9143
        %10168 = vst [vmem:[%s229 + $0x1660] sm:$0xff] %v9144
        %10169 = vst [vmem:[%s229 + $0x1668] sm:$0xff] %v9145
        %10170 = vst [vmem:[%s229 + $0x1670] sm:$0xff] %v9146
        %10171 = vst [vmem:[%s229 + $0x1678] sm:$0xff] %v9147
        %10172 = vst [vmem:[%s229 + $0x1680] sm:$0xff] %v9148
        %10173 = vst [vmem:[%s229 + $0x1688] sm:$0xff] %v9149
        %10174 = vst [vmem:[%s229 + $0x1690] sm:$0xff] %v9150
        %10175 = vst [vmem:[%s229 + $0x1698] sm:$0xff] %v9151
        %10176 = vst [vmem:[%s229 + $0x16a0] sm:$0xff] %v9152
        %10177 = vst [vmem:[%s229 + $0x16a8] sm:$0xff] %v9153
        %10178 = vst [vmem:[%s229 + $0x16b0] sm:$0xff] %v9154
        %10179 = vst [vmem:[%s229 + $0x16b8] sm:$0xff] %v9155
        %10180 = vst [vmem:[%s229 + $0x16c0] sm:$0xff] %v9156
        %10181 = vst [vmem:[%s229 + $0x16c8] sm:$0xff] %v9157
        %10182 = vst [vmem:[%s229 + $0x16d0] sm:$0xff] %v9158
        %10183 = vst [vmem:[%s229 + $0x16d8] sm:$0xff] %v9159
        %10184 = vst [vmem:[%s229 + $0x16e0] sm:$0xff] %v9160
        %10185 = vst [vmem:[%s229 + $0x16e8] sm:$0xff] %v9161
        %10186 = vst [vmem:[%s229 + $0x16f0] sm:$0xff] %v9162
        %10187 = vst [vmem:[%s229 + $0x16f8] sm:$0xff] %v9163
        %10188 = vst [vmem:[%s229 + $0x1700] sm:$0xff] %v9164
        %10189 = vst [vmem:[%s229 + $0x1708] sm:$0xff] %v9165
        %10190 = vst [vmem:[%s229 + $0x1710] sm:$0xff] %v9166
        %10191 = vst [vmem:[%s229 + $0x1718] sm:$0xff] %v9167
        %10192 = vst [vmem:[%s229 + $0x1720] sm:$0xff] %v9168
        %10193 = vst [vmem:[%s229 + $0x1728] sm:$0xff] %v9169
        %10194 = vst [vmem:[%s229 + $0x1730] sm:$0xff] %v9170
        %10195 = vst [vmem:[%s229 + $0x1738] sm:$0xff] %v9171
        %10196 = vst [vmem:[%s229 + $0x1740] sm:$0xff] %v9172
        %10197 = vst [vmem:[%s229 + $0x1748] sm:$0xff] %v9173
        %10198 = vst [vmem:[%s229 + $0x1750] sm:$0xff] %v9174
        %10199 = vst [vmem:[%s229 + $0x1758] sm:$0xff] %v9175
        %10200 = vst [vmem:[%s229 + $0x1760] sm:$0xff] %v9176
        %10201 = vst [vmem:[%s229 + $0x1768] sm:$0xff] %v9177
        %10202 = vst [vmem:[%s229 + $0x1770] sm:$0xff] %v9178
        %10203 = vst [vmem:[%s229 + $0x1778] sm:$0xff] %v9179
        %10204 = vst [vmem:[%s229 + $0x1780] sm:$0xff] %v9180
        %10205 = vst [vmem:[%s229 + $0x1788] sm:$0xff] %v9181
        %10206 = vst [vmem:[%s229 + $0x1790] sm:$0xff] %v9182
        %10207 = vst [vmem:[%s229 + $0x1798] sm:$0xff] %v9183
        %10208 = vst [vmem:[%s229 + $0x17a0] sm:$0xff] %v9184
        %10209 = vst [vmem:[%s229 + $0x17a8] sm:$0xff] %v9185
        %10210 = vst [vmem:[%s229 + $0x17b0] sm:$0xff] %v9186
        %10211 = vst [vmem:[%s229 + $0x17b8] sm:$0xff] %v9187
        %10212 = vst [vmem:[%s229 + $0x17c0] sm:$0xff] %v9188
        %10213 = vst [vmem:[%s229 + $0x17c8] sm:$0xff] %v9189
        %10214 = vst [vmem:[%s229 + $0x17d0] sm:$0xff] %v9190
        %10215 = vst [vmem:[%s229 + $0x17d8] sm:$0xff] %v9191
        %10216 = vst [vmem:[%s229 + $0x17e0] sm:$0xff] %v9192
        %10217 = vst [vmem:[%s229 + $0x17e8] sm:$0xff] %v9193
        %10218 = vst [vmem:[%s229 + $0x17f0] sm:$0xff] %v9194
        %10219 = vst [vmem:[%s229 + $0x17f8] sm:$0xff] %v9195
        %10220 = vst [vmem:[%s229 + $0x1800] sm:$0xff] %v9196
        %10221 = vst [vmem:[%s229 + $0x1808] sm:$0xff] %v9197
        %10222 = vst [vmem:[%s229 + $0x1810] sm:$0xff] %v9198
        %10223 = vst [vmem:[%s229 + $0x1818] sm:$0xff] %v9199
        %10224 = vst [vmem:[%s229 + $0x1820] sm:$0xff] %v9200
        %10225 = vst [vmem:[%s229 + $0x1828] sm:$0xff] %v9201
        %10226 = vst [vmem:[%s229 + $0x1830] sm:$0xff] %v9202
        %10227 = vst [vmem:[%s229 + $0x1838] sm:$0xff] %v9203
        %10228 = vst [vmem:[%s229 + $0x1840] sm:$0xff] %v9204
        %10229 = vst [vmem:[%s229 + $0x1848] sm:$0xff] %v9205
        %10230 = vst [vmem:[%s229 + $0x1850] sm:$0xff] %v9206
        %10231 = vst [vmem:[%s229 + $0x1858] sm:$0xff] %v9207
        %10232 = vst [vmem:[%s229 + $0x1860] sm:$0xff] %v9208
        %10233 = vst [vmem:[%s229 + $0x1868] sm:$0xff] %v9209
        %10234 = vst [vmem:[%s229 + $0x1870] sm:$0xff] %v9210
        %10235 = vst [vmem:[%s229 + $0x1878] sm:$0xff] %v9211
        %10236 = vst [vmem:[%s229 + $0x1880] sm:$0xff] %v9212
        %10237 = vst [vmem:[%s229 + $0x1888] sm:$0xff] %v9213
        %10238 = vst [vmem:[%s229 + $0x1890] sm:$0xff] %v9214
        %10239 = vst [vmem:[%s229 + $0x1898] sm:$0xff] %v9215
        %10240 = vst [vmem:[%s229 + $0x18a0] sm:$0xff] %v9216
        %10241 = vst [vmem:[%s229 + $0x18a8] sm:$0xff] %v9217
        %10242 = vst [vmem:[%s229 + $0x18b0] sm:$0xff] %v9218
        %10243 = vst [vmem:[%s229 + $0x18b8] sm:$0xff] %v9219
        %10244 = vst [vmem:[%s229 + $0x18c0] sm:$0xff] %v9220
        %10245 = vst [vmem:[%s229 + $0x18c8] sm:$0xff] %v9221
        %10246 = vst [vmem:[%s229 + $0x18d0] sm:$0xff] %v9222
        %10247 = vst [vmem:[%s229 + $0x18d8] sm:$0xff] %v9223
        %10248 = vst [vmem:[%s229 + $0x18e0] sm:$0xff] %v9224
        %10249 = vst [vmem:[%s229 + $0x18e8] sm:$0xff] %v9225
        %10250 = vst [vmem:[%s229 + $0x18f0] sm:$0xff] %v9226
        %10251 = vst [vmem:[%s229 + $0x18f8] sm:$0xff] %v9227
        %10252 = vst [vmem:[%s229 + $0x1900] sm:$0xff] %v9228
        %10253 = vst [vmem:[%s229 + $0x1908] sm:$0xff] %v9229
        %10254 = vst [vmem:[%s229 + $0x1910] sm:$0xff] %v9230
        %10255 = vst [vmem:[%s229 + $0x1918] sm:$0xff] %v9231
        %10256 = vst [vmem:[%s229 + $0x1920] sm:$0xff] %v9232
        %10257 = vst [vmem:[%s229 + $0x1928] sm:$0xff] %v9233
        %10258 = vst [vmem:[%s229 + $0x1930] sm:$0xff] %v9234
        %10259 = vst [vmem:[%s229 + $0x1938] sm:$0xff] %v9235
        %10260 = vst [vmem:[%s229 + $0x1940] sm:$0xff] %v9236
        %10261 = vst [vmem:[%s229 + $0x1948] sm:$0xff] %v9237
        %10262 = vst [vmem:[%s229 + $0x1950] sm:$0xff] %v9238
        %10263 = vst [vmem:[%s229 + $0x1958] sm:$0xff] %v9239
        %10264 = vst [vmem:[%s229 + $0x1960] sm:$0xff] %v9240
        %10265 = vst [vmem:[%s229 + $0x1968] sm:$0xff] %v9241
        %10266 = vst [vmem:[%s229 + $0x1970] sm:$0xff] %v9242
        %10267 = vst [vmem:[%s229 + $0x1978] sm:$0xff] %v9243
        %10268 = vst [vmem:[%s229 + $0x1980] sm:$0xff] %v9244
        %10269 = vst [vmem:[%s229 + $0x1988] sm:$0xff] %v9245
        %10270 = vst [vmem:[%s229 + $0x1990] sm:$0xff] %v9246
        %10271 = vst [vmem:[%s229 + $0x1998] sm:$0xff] %v9247
        %10272 = vst [vmem:[%s229 + $0x19a0] sm:$0xff] %v9248
        %10273 = vst [vmem:[%s229 + $0x19a8] sm:$0xff] %v9249
        %10274 = vst [vmem:[%s229 + $0x19b0] sm:$0xff] %v9250
        %10275 = vst [vmem:[%s229 + $0x19b8] sm:$0xff] %v9251
        %10276 = vst [vmem:[%s229 + $0x19c0] sm:$0xff] %v9252
        %10277 = vst [vmem:[%s229 + $0x19c8] sm:$0xff] %v9253
        %10278 = vst [vmem:[%s229 + $0x19d0] sm:$0xff] %v9254
        %10279 = vst [vmem:[%s229 + $0x19d8] sm:$0xff] %v9255
        %10280 = vst [vmem:[%s229 + $0x19e0] sm:$0xff] %v9256
        %10281 = vst [vmem:[%s229 + $0x19e8] sm:$0xff] %v9257
        %10282 = vst [vmem:[%s229 + $0x19f0] sm:$0xff] %v9258
        %10283 = vst [vmem:[%s229 + $0x19f8] sm:$0xff] %v9259
        %10284 = vst [vmem:[%s229 + $0x1a00] sm:$0xff] %v9260
        %10285 = vst [vmem:[%s229 + $0x1a08] sm:$0xff] %v9261
        %10286 = vst [vmem:[%s229 + $0x1a10] sm:$0xff] %v9262
        %10287 = vst [vmem:[%s229 + $0x1a18] sm:$0xff] %v9263
        %10288 = vst [vmem:[%s229 + $0x1a20] sm:$0xff] %v9264
        %10289 = vst [vmem:[%s229 + $0x1a28] sm:$0xff] %v9265
        %10290 = vst [vmem:[%s229 + $0x1a30] sm:$0xff] %v9266
        %10291 = vst [vmem:[%s229 + $0x1a38] sm:$0xff] %v9267
        %10292 = vst [vmem:[%s229 + $0x1a40] sm:$0xff] %v9268
        %10293 = vst [vmem:[%s229 + $0x1a48] sm:$0xff] %v9269
        %10294 = vst [vmem:[%s229 + $0x1a50] sm:$0xff] %v9270
        %10295 = vst [vmem:[%s229 + $0x1a58] sm:$0xff] %v9271
        %10296 = vst [vmem:[%s229 + $0x1a60] sm:$0xff] %v9272
        %10297 = vst [vmem:[%s229 + $0x1a68] sm:$0xff] %v9273
        %10298 = vst [vmem:[%s229 + $0x1a70] sm:$0xff] %v9274
        %10299 = vst [vmem:[%s229 + $0x1a78] sm:$0xff] %v9275
        %10300 = vst [vmem:[%s229 + $0x1a80] sm:$0xff] %v9276
        %10301 = vst [vmem:[%s229 + $0x1a88] sm:$0xff] %v9277
        %10302 = vst [vmem:[%s229 + $0x1a90] sm:$0xff] %v9278
        %10303 = vst [vmem:[%s229 + $0x1a98] sm:$0xff] %v9279
        %10304 = vst [vmem:[%s229 + $0x1aa0] sm:$0xff] %v9280
        %10305 = vst [vmem:[%s229 + $0x1aa8] sm:$0xff] %v9281
        %10306 = vst [vmem:[%s229 + $0x1ab0] sm:$0xff] %v9282
        %10307 = vst [vmem:[%s229 + $0x1ab8] sm:$0xff] %v9283
        %10308 = vst [vmem:[%s229 + $0x1ac0] sm:$0xff] %v9284
        %10309 = vst [vmem:[%s229 + $0x1ac8] sm:$0xff] %v9285
        %10310 = vst [vmem:[%s229 + $0x1ad0] sm:$0xff] %v9286
        %10311 = vst [vmem:[%s229 + $0x1ad8] sm:$0xff] %v9287
        %10312 = vst [vmem:[%s229 + $0x1ae0] sm:$0xff] %v9288
        %10313 = vst [vmem:[%s229 + $0x1ae8] sm:$0xff] %v9289
        %10314 = vst [vmem:[%s229 + $0x1af0] sm:$0xff] %v9290
        %10315 = vst [vmem:[%s229 + $0x1af8] sm:$0xff] %v9291
        %10316 = vst [vmem:[%s229 + $0x1b00] sm:$0xff] %v9292
        %10317 = vst [vmem:[%s229 + $0x1b08] sm:$0xff] %v9293
        %10318 = vst [vmem:[%s229 + $0x1b10] sm:$0xff] %v9294
        %10319 = vst [vmem:[%s229 + $0x1b18] sm:$0xff] %v9295
        %10320 = vst [vmem:[%s229 + $0x1b20] sm:$0xff] %v9296
        %10321 = vst [vmem:[%s229 + $0x1b28] sm:$0xff] %v9297
        %10322 = vst [vmem:[%s229 + $0x1b30] sm:$0xff] %v9298
        %10323 = vst [vmem:[%s229 + $0x1b38] sm:$0xff] %v9299
        %10324 = vst [vmem:[%s229 + $0x1b40] sm:$0xff] %v9300
        %10325 = vst [vmem:[%s229 + $0x1b48] sm:$0xff] %v9301
        %10326 = vst [vmem:[%s229 + $0x1b50] sm:$0xff] %v9302
        %10327 = vst [vmem:[%s229 + $0x1b58] sm:$0xff] %v9303
        %10328 = vst [vmem:[%s229 + $0x1b60] sm:$0xff] %v9304
        %10329 = vst [vmem:[%s229 + $0x1b68] sm:$0xff] %v9305
        %10330 = vst [vmem:[%s229 + $0x1b70] sm:$0xff] %v9306
        %10331 = vst [vmem:[%s229 + $0x1b78] sm:$0xff] %v9307
        %10332 = vst [vmem:[%s229 + $0x1b80] sm:$0xff] %v9308
        %10333 = vst [vmem:[%s229 + $0x1b88] sm:$0xff] %v9309
        %10334 = vst [vmem:[%s229 + $0x1b90] sm:$0xff] %v9310
        %10335 = vst [vmem:[%s229 + $0x1b98] sm:$0xff] %v9311
        %10336 = vst [vmem:[%s229 + $0x1ba0] sm:$0xff] %v9312
        %10337 = vst [vmem:[%s229 + $0x1ba8] sm:$0xff] %v9313
        %10338 = vst [vmem:[%s229 + $0x1bb0] sm:$0xff] %v9314
        %10339 = vst [vmem:[%s229 + $0x1bb8] sm:$0xff] %v9315
        %10340 = vst [vmem:[%s229 + $0x1bc0] sm:$0xff] %v9316
        %10341 = vst [vmem:[%s229 + $0x1bc8] sm:$0xff] %v9317
        %10342 = vst [vmem:[%s229 + $0x1bd0] sm:$0xff] %v9318
        %10343 = vst [vmem:[%s229 + $0x1bd8] sm:$0xff] %v9319
        %10344 = vst [vmem:[%s229 + $0x1be0] sm:$0xff] %v9320
        %10345 = vst [vmem:[%s229 + $0x1be8] sm:$0xff] %v9321
        %10346 = vst [vmem:[%s229 + $0x1bf0] sm:$0xff] %v9322
        %10347 = vst [vmem:[%s229 + $0x1bf8] sm:$0xff] %v9323
        %10348 = vst [vmem:[%s229 + $0x1c00] sm:$0xff] %v9324
        %10349 = vst [vmem:[%s229 + $0x1c08] sm:$0xff] %v9325
        %10350 = vst [vmem:[%s229 + $0x1c10] sm:$0xff] %v9326
        %10351 = vst [vmem:[%s229 + $0x1c18] sm:$0xff] %v9327
        %10352 = vst [vmem:[%s229 + $0x1c20] sm:$0xff] %v9328
        %10353 = vst [vmem:[%s229 + $0x1c28] sm:$0xff] %v9329
        %10354 = vst [vmem:[%s229 + $0x1c30] sm:$0xff] %v9330
        %10355 = vst [vmem:[%s229 + $0x1c38] sm:$0xff] %v9331
        %10356 = vst [vmem:[%s229 + $0x1c40] sm:$0xff] %v9332
        %10357 = vst [vmem:[%s229 + $0x1c48] sm:$0xff] %v9333
        %10358 = vst [vmem:[%s229 + $0x1c50] sm:$0xff] %v9334
        %10359 = vst [vmem:[%s229 + $0x1c58] sm:$0xff] %v9335
        %10360 = vst [vmem:[%s229 + $0x1c60] sm:$0xff] %v9336
        %10361 = vst [vmem:[%s229 + $0x1c68] sm:$0xff] %v9337
        %10362 = vst [vmem:[%s229 + $0x1c70] sm:$0xff] %v9338
        %10363 = vst [vmem:[%s229 + $0x1c78] sm:$0xff] %v9339
        %10364 = vst [vmem:[%s229 + $0x1c80] sm:$0xff] %v9340
        %10365 = vst [vmem:[%s229 + $0x1c88] sm:$0xff] %v9341
        %10366 = vst [vmem:[%s229 + $0x1c90] sm:$0xff] %v9342
        %10367 = vst [vmem:[%s229 + $0x1c98] sm:$0xff] %v9343
        %10368 = vst [vmem:[%s229 + $0x1ca0] sm:$0xff] %v9344
        %10369 = vst [vmem:[%s229 + $0x1ca8] sm:$0xff] %v9345
        %10370 = vst [vmem:[%s229 + $0x1cb0] sm:$0xff] %v9346
        %10371 = vst [vmem:[%s229 + $0x1cb8] sm:$0xff] %v9347
        %10372 = vst [vmem:[%s229 + $0x1cc0] sm:$0xff] %v9348
        %10373 = vst [vmem:[%s229 + $0x1cc8] sm:$0xff] %v9349
        %10374 = vst [vmem:[%s229 + $0x1cd0] sm:$0xff] %v9350
        %10375 = vst [vmem:[%s229 + $0x1cd8] sm:$0xff] %v9351
        %10376 = vst [vmem:[%s229 + $0x1ce0] sm:$0xff] %v9352
        %10377 = vst [vmem:[%s229 + $0x1ce8] sm:$0xff] %v9353
        %10378 = vst [vmem:[%s229 + $0x1cf0] sm:$0xff] %v9354
        %10379 = vst [vmem:[%s229 + $0x1cf8] sm:$0xff] %v9355
        %10380 = vst [vmem:[%s229 + $0x1d00] sm:$0xff] %v9356
        %10381 = vst [vmem:[%s229 + $0x1d08] sm:$0xff] %v9357
        %10382 = vst [vmem:[%s229 + $0x1d10] sm:$0xff] %v9358
        %10383 = vst [vmem:[%s229 + $0x1d18] sm:$0xff] %v9359
        %10384 = vst [vmem:[%s229 + $0x1d20] sm:$0xff] %v9360
        %10385 = vst [vmem:[%s229 + $0x1d28] sm:$0xff] %v9361
        %10386 = vst [vmem:[%s229 + $0x1d30] sm:$0xff] %v9362
        %10387 = vst [vmem:[%s229 + $0x1d38] sm:$0xff] %v9363
        %10388 = vst [vmem:[%s229 + $0x1d40] sm:$0xff] %v9364
        %10389 = vst [vmem:[%s229 + $0x1d48] sm:$0xff] %v9365
        %10390 = vst [vmem:[%s229 + $0x1d50] sm:$0xff] %v9366
        %10391 = vst [vmem:[%s229 + $0x1d58] sm:$0xff] %v9367
        %10392 = vst [vmem:[%s229 + $0x1d60] sm:$0xff] %v9368
        %10393 = vst [vmem:[%s229 + $0x1d68] sm:$0xff] %v9369
        %10394 = vst [vmem:[%s229 + $0x1d70] sm:$0xff] %v9370
        %10395 = vst [vmem:[%s229 + $0x1d78] sm:$0xff] %v9371
        %10396 = vst [vmem:[%s229 + $0x1d80] sm:$0xff] %v9372
        %10397 = vst [vmem:[%s229 + $0x1d88] sm:$0xff] %v9373
        %10398 = vst [vmem:[%s229 + $0x1d90] sm:$0xff] %v9374
        %10399 = vst [vmem:[%s229 + $0x1d98] sm:$0xff] %v9375
        %10400 = vst [vmem:[%s229 + $0x1da0] sm:$0xff] %v9376
        %10401 = vst [vmem:[%s229 + $0x1da8] sm:$0xff] %v9377
        %10402 = vst [vmem:[%s229 + $0x1db0] sm:$0xff] %v9378
        %10403 = vst [vmem:[%s229 + $0x1db8] sm:$0xff] %v9379
        %10404 = vst [vmem:[%s229 + $0x1dc0] sm:$0xff] %v9380
        %10405 = vst [vmem:[%s229 + $0x1dc8] sm:$0xff] %v9381
        %10406 = vst [vmem:[%s229 + $0x1dd0] sm:$0xff] %v9382
        %10407 = vst [vmem:[%s229 + $0x1dd8] sm:$0xff] %v9383
        %10408 = vst [vmem:[%s229 + $0x1de0] sm:$0xff] %v9384
        %10409 = vst [vmem:[%s229 + $0x1de8] sm:$0xff] %v9385
        %10410 = vst [vmem:[%s229 + $0x1df0] sm:$0xff] %v9386
        %10411 = vst [vmem:[%s229 + $0x1df8] sm:$0xff] %v9387
        %10412 = vst [vmem:[%s229 + $0x1e00] sm:$0xff] %v9388
        %10413 = vst [vmem:[%s229 + $0x1e08] sm:$0xff] %v9389
        %10414 = vst [vmem:[%s229 + $0x1e10] sm:$0xff] %v9390
        %10415 = vst [vmem:[%s229 + $0x1e18] sm:$0xff] %v9391
        %10416 = vst [vmem:[%s229 + $0x1e20] sm:$0xff] %v9392
        %10417 = vst [vmem:[%s229 + $0x1e28] sm:$0xff] %v9393
        %10418 = vst [vmem:[%s229 + $0x1e30] sm:$0xff] %v9394
        %10419 = vst [vmem:[%s229 + $0x1e38] sm:$0xff] %v9395
        %10420 = vst [vmem:[%s229 + $0x1e40] sm:$0xff] %v9396
        %10421 = vst [vmem:[%s229 + $0x1e48] sm:$0xff] %v9397
        %10422 = vst [vmem:[%s229 + $0x1e50] sm:$0xff] %v9398
        %10423 = vst [vmem:[%s229 + $0x1e58] sm:$0xff] %v9399
        %10424 = vst [vmem:[%s229 + $0x1e60] sm:$0xff] %v9400
        %10425 = vst [vmem:[%s229 + $0x1e68] sm:$0xff] %v9401
        %10426 = vst [vmem:[%s229 + $0x1e70] sm:$0xff] %v9402
        %10427 = vst [vmem:[%s229 + $0x1e78] sm:$0xff] %v9403
        %10428 = vst [vmem:[%s229 + $0x1e80] sm:$0xff] %v9404
        %10429 = vst [vmem:[%s229 + $0x1e88] sm:$0xff] %v9405
        %10430 = vst [vmem:[%s229 + $0x1e90] sm:$0xff] %v9406
        %10431 = vst [vmem:[%s229 + $0x1e98] sm:$0xff] %v9407
        %10432 = vst [vmem:[%s229 + $0x1ea0] sm:$0xff] %v9408
        %10433 = vst [vmem:[%s229 + $0x1ea8] sm:$0xff] %v9409
        %10434 = vst [vmem:[%s229 + $0x1eb0] sm:$0xff] %v9410
        %10435 = vst [vmem:[%s229 + $0x1eb8] sm:$0xff] %v9411
        %10436 = vst [vmem:[%s229 + $0x1ec0] sm:$0xff] %v9412
        %10437 = vst [vmem:[%s229 + $0x1ec8] sm:$0xff] %v9413
        %10438 = vst [vmem:[%s229 + $0x1ed0] sm:$0xff] %v9414
        %10439 = vst [vmem:[%s229 + $0x1ed8] sm:$0xff] %v9415
        %10440 = vst [vmem:[%s229 + $0x1ee0] sm:$0xff] %v9416
        %10441 = vst [vmem:[%s229 + $0x1ee8] sm:$0xff] %v9417
        %10442 = vst [vmem:[%s229 + $0x1ef0] sm:$0xff] %v9418
        %10443 = vst [vmem:[%s229 + $0x1ef8] sm:$0xff] %v9419
        %10444 = vst [vmem:[%s229 + $0x1f00] sm:$0xff] %v9420
        %10445 = vst [vmem:[%s229 + $0x1f08] sm:$0xff] %v9421
        %10446 = vst [vmem:[%s229 + $0x1f10] sm:$0xff] %v9422
        %10447 = vst [vmem:[%s229 + $0x1f18] sm:$0xff] %v9423
        %10448 = vst [vmem:[%s229 + $0x1f20] sm:$0xff] %v9424
        %10449 = vst [vmem:[%s229 + $0x1f28] sm:$0xff] %v9425
        %10450 = vst [vmem:[%s229 + $0x1f30] sm:$0xff] %v9426
        %10451 = vst [vmem:[%s229 + $0x1f38] sm:$0xff] %v9427
        %10452 = vst [vmem:[%s229 + $0x1f40] sm:$0xff] %v9428
        %10453 = vst [vmem:[%s229 + $0x1f48] sm:$0xff] %v9429
        %10454 = vst [vmem:[%s229 + $0x1f50] sm:$0xff] %v9430
        %10455 = vst [vmem:[%s229 + $0x1f58] sm:$0xff] %v9431
        %10456 = vst [vmem:[%s229 + $0x1f60] sm:$0xff] %v9432
        %10457 = vst [vmem:[%s229 + $0x1f68] sm:$0xff] %v9433
        %10458 = vst [vmem:[%s229 + $0x1f70] sm:$0xff] %v9434
        %10459 = vst [vmem:[%s229 + $0x1f78] sm:$0xff] %v9435
        %10460 = vst [vmem:[%s229 + $0x1f80] sm:$0xff] %v9436
        %10461 = vst [vmem:[%s229 + $0x1f88] sm:$0xff] %v9437
        %10462 = vst [vmem:[%s229 + $0x1f90] sm:$0xff] %v9438
        %10463 = vst [vmem:[%s229 + $0x1f98] sm:$0xff] %v9439
        %10464 = vst [vmem:[%s229 + $0x1fa0] sm:$0xff] %v9440
        %10465 = vst [vmem:[%s229 + $0x1fa8] sm:$0xff] %v9441
        %10466 = vst [vmem:[%s229 + $0x1fb0] sm:$0xff] %v9442
        %10467 = vst [vmem:[%s229 + $0x1fb8] sm:$0xff] %v9443
        %10468 = vst [vmem:[%s229 + $0x1fc0] sm:$0xff] %v9444
        %10469 = vst [vmem:[%s229 + $0x1fc8] sm:$0xff] %v9445
        %10470 = vst [vmem:[%s229 + $0x1fd0] sm:$0xff] %v9446
        %10471 = vst [vmem:[%s229 + $0x1fd8] sm:$0xff] %v9447
        %10472 = vst [vmem:[%s229 + $0x1fe0] sm:$0xff] %v9448
        %10473 = vst [vmem:[%s229 + $0x1fe8] sm:$0xff] %v9449
        %10474 = vst [vmem:[%s229 + $0x1ff0] sm:$0xff] %v9450
        %10475 = vst [vmem:[%s229 + $0x1ff8] sm:$0xff] %v9451
        %s10476 = sand.u32 %s100, 1
        %s10477 = scalar_lea.sflag [#allocation4], %s10476
        %s10478 = sand.u32 %s100, 1
        %s10479 = smul.addr %s10478, 8192
        %s10480 = scalar_lea.vmem [#allocation7], %s10479
        // Predicated region
        $region37: #{tpu_custom_call.1} parent=27 // pred_check
          %p10481 = pneg %p110
        $region38: #{tpu_custom_call.1} parent=27 // pred_check_branch
          %10483 = sbr.rel (%p10481) target = $region40
        $region39: #{tpu_custom_call.1} parent=27 // pred_region
          %s10484 = smul.u32 64, %s26
          %s10485 = smul.u32 32, %s27
          %10487 = vsyncadd %s10477, 0
          %s10488 = smul.addr %s10484, 32
          %s10489 = sadd.s32 %s10485, %s10488
          %s10490 = smul.addr %s10489, 4
          %s10491 = scalar_lea.hbm %s2, %s10490
          %s10492 = sshll.u32 %s10480, 4
          %s10493 = int_to_ptr.vmem [resolvable:$true] %s10492
          %s10494 = sshll.u32 %s10491, 4
          %s10495 = int_to_ptr.hbm [resolvable:$true] %s10494
          %10500 = dma.vmem_to_hbm [thread:$0]  %s10493, 131072, %s10495, %s10477, 2048, 2048, 128
        $region40: #{tpu_custom_call.1} parent=27 // pred_fallthru
          _
      $region28: #{tpu_custom_call.1} parent=5 // pred_fallthru
        _
      %p10501 = scmp.le.s32.totalorder 2, %s17
      // Predicated region
      $region41: #{tpu_custom_call.1} parent=5 // pred_check
        %p10502 = pneg %p10501
      $region42: #{tpu_custom_call.1} parent=5 // pred_check_branch
        %10504 = sbr.rel (%p10502) target = $region44
      $region43: #{tpu_custom_call.1} parent=5 // pred_region
        %s10505 = ssub.s32 %s17, 2
        // Predicated region
        $region45: #{tpu_custom_call.1} parent=43 // pred_check
          %p10506 = pneg %p116
        $region46: #{tpu_custom_call.1} parent=43 // pred_check_branch
          %10508 = sbr.rel (%p10506) target = $region48
        $region47: #{tpu_custom_call.1} parent=43 // pred_region
          %s10509 = sand.u32 %s101, 1
          %s10510 = scalar_lea.sflag [#allocation4], %s10509
          %s10511 = sand.u32 %s101, 1
          %s10512 = smul.addr %s10511, 8192
          %s10513 = scalar_lea.vmem [#allocation7], %s10512
          %10515 = dma.done %s10510, 131072
        $region48: #{tpu_custom_call.1} parent=43 // pred_fallthru
          _
      $region44: #{tpu_custom_call.1} parent=5 // pred_fallthru
        _
    $region6: #{tpu_custom_call.1} parent=1 // loop_footer
      %s21 = sadd.s32 1, %s17
    $region7: #{tpu_custom_call.1} parent=1 // loop_footer_branch
      %16 = sbr.rel target = $region3
    $region8: #{tpu_custom_call.1} parent=1 // loop_exit
      _
    %10516 = vsyncpa [#allocation3], 1
    %s10517 = scalar_lea.sflag [#allocation3], 1
    %10518 = vsyncpa %s10517, 1
    %10519 = vsyncpa [#allocation6], 1
    %s10520 = scalar_lea.sflag [#allocation6], 1
    %10521 = vsyncpa %s10520, 1
    %10522 = vsyncpa [#allocation4], 1
    %s10523 = scalar_lea.sflag [#allocation4], 1
    %10524 = vsyncpa %s10523, 1

</llo_original>
